<compile_context>
chip_gen: v7x
topology: tpu7x:2x2x1
jax: 0.10.0
libtpu: 0.0.40
codegen_flags: <defaults>
</compile_context>

<pallas_src>
import jax
import jax.numpy as jnp
from jax.experimental import pallas as pl
from jax.experimental.pallas import tpu as pltpu

# ---------------- NeRF config ----------------
D = 8
W = 256
INPUT_CH = 3
INPUT_CH_VIEWS = 3
XIN_CH = INPUT_CH + INPUT_CH_VIEWS   # packed [pts | viewdirs] per-point input
SKIP = 4          # concat input_pts after layer index 4 -> layer 5 input is W + 3
RAW_LANES = 128   # lane-dense rgb head: lanes 0:3 rgb, remaining weight cols zero

_VMEM_LIMIT = 48 * 1024 * 1024   # headroom under v7x's 64 MiB physical VMEM


def _full_spec(shape):
    # Grid-invariant operand (weights / mask): block index is always all-zeros.
    return pl.BlockSpec(shape, lambda i, _n=len(shape): (0,) * _n)


# ---------------- fused MLP + raw2outputs kernel ----------------
def _nerf_fused_kernel(xin_ref, z_ref, znext_ref, raysd_ref, mask_ref,
                       w_in_ref, w_skip_pts_ref, w_hidden_ref, b_pts_ref,
                       w_feat_ref, b_feat_ref, w_alpha_ref, b_alpha_ref,
                       w_vf_ref, w_vd_ref, b_v_ref, w_rgb_ref, b_rgb_ref,
                       out_ref, wout_ref, fmap_ref):
    f32 = jnp.float32
    bf16 = jnp.bfloat16
    block_r, s_count = z_ref.shape
    xin = xin_ref[...].astype(f32)            # [n_pts, 6], n_pts = block_r * S

    def small_k(w_ref, off):
        # K=3 "matmul" as VPU broadcast multiply-adds (keeps the MXU free).
        w = w_ref[...].astype(f32)
        acc = xin[:, off:off + 1] * w[0:1, :]
        for t in range(1, w.shape[0]):
            acc = acc + xin[:, off + t:off + t + 1] * w[t:t + 1, :]
        return acc

    # ------------- MLP (self.eval) on the flattened block_r*S points -------------
    h = jnp.maximum(small_k(w_in_ref, 0) + b_pts_ref[0:1, :], 0.0)
    for j in range(1, D):   # static python loop -> fully unrolled; bf16 MXU, f32 acc
        zlin = (jnp.dot(h.astype(bf16), w_hidden_ref[j - 1],
                        preferred_element_type=f32) + b_pts_ref[j:j + 1, :])
        if j == SKIP + 1:
            # this layer's input is concat([input_pts, h]) -> split matmul,
            # the pts part (K=3) done on the VPU
            zlin = zlin + small_k(w_skip_pts_ref, 0)
        h = jnp.maximum(zlin, 0.0)

    # feature_linear  (extract_feature == 'after_linear')
    feature = (jnp.dot(h.astype(bf16), w_feat_ref[...],
                       preferred_element_type=f32) + b_feat_ref[...])        # [n_pts, W]

    # views_linears[0] on concat([feature, input_views]) -> split matmul,
    # the views part (K=3) on the VPU
    hv = jnp.maximum(
        jnp.dot(feature.astype(bf16), w_vf_ref[...], preferred_element_type=f32)
        + small_k(w_vd_ref, INPUT_CH) + b_v_ref[...], 0.0)                   # [n_pts, W//2]

    # rgb head with the weight zero-padded to 128 output lanes -> lane-dense math
    rgb_raw = (jnp.dot(hv.astype(bf16), w_rgb_ref[...],
                       preferred_element_type=f32) + b_rgb_ref[...])         # [n_pts, 128]

    # alpha head (W -> 1): VPU multiply + lane reduce, landing directly in [R, S]
    sigma_raw = (jnp.sum((h * w_alpha_ref[...]).reshape(block_r, s_count, W), axis=-1)
                 + b_alpha_ref[...])                                         # [R, S]

    # ------------- raw2outputs (volume compositing) on in-VMEM activations -------------
    z = z_ref[...]                                                           # [R, S]
    ray_norm = jnp.sqrt(jnp.sum(raysd_ref[...] * raysd_ref[...],
                                axis=-1, keepdims=True))                     # [R, 1]
    dists = (znext_ref[...] - z) * ray_norm                                  # last col == 0
    density = jnp.maximum(sigma_raw, 0.0)                                    # sigma_activate=relu
    alpha = 1.0 - jnp.exp(-density * dists)
    col = jax.lax.broadcasted_iota(jnp.int32, alpha.shape, 1)
    alpha = jnp.where(col == s_count - 1, 1.0, alpha)        # reference appends ones column

    # exclusive cumprod over samples of (1 + 1e-10 - alpha), done in log space
    # with a strictly-lower-triangular mask matmul; clamp the log input so the
    # forced alpha==1 sample cannot produce (-inf * 0) = NaN.
    log_t = jnp.log(jnp.maximum(1.0 + 1e-10 - alpha, 1e-30))
    trans = jnp.exp(jnp.dot(log_t, mask_ref[...], preferred_element_type=f32))
    weights = alpha * trans                                                  # [R, S]
    w3 = weights[:, :, None]

    rgb3 = jax.nn.sigmoid(rgb_raw).reshape(block_r, s_count, RAW_LANES)      # rgb_activate
    slab = jnp.sum(w3 * rgb3, axis=1)                                        # lanes 0:3 rgb_map
    depth = jnp.sum(weights * z, axis=-1, keepdims=True)                     # [R, 1]
    acc = jnp.sum(weights, axis=-1, keepdims=True)                           # [R, 1]
    lane = jax.lax.broadcasted_iota(jnp.int32, slab.shape, 1)
    slab = jnp.where(lane == 3, depth, slab)
    slab = jnp.where(lane == 4, acc, slab)

    out_ref[...] = slab                                                      # packed per-ray slab
    wout_ref[...] = weights
    fmap_ref[...] = jnp.sum(w3 * feature.reshape(block_r, s_count, W), axis=1)


# ---------------- full forward (glue) ----------------
def nerf_forward(params, pts, viewdirs, z_vals, rays_d, *, block_r=None):
    r, s, _ = pts.shape
    assert s % 8 == 0, "samples per ray must be a multiple of 8"
    if block_r is None:
        # target ~2K MLP points per grid step, at least 8 rays, multiple of 8
        block_r = max(8, min(128, ((2048 // s) // 8) * 8))
    r_pad = ((r + block_r - 1) // block_r) * block_r
    pad = r_pad - r
    if pad:
        pts = jnp.pad(pts, ((0, pad), (0, 0), (0, 0)))
        viewdirs = jnp.pad(viewdirs, ((0, pad), (0, 0)))
        z_vals = jnp.pad(z_vals, ((0, pad), (0, 0)))
        rays_d = jnp.pad(rays_d, ((0, pad), (0, 0)))

    # mlpforward prep: identity embeds, expand viewdirs per sample, pack [pts|dirs]
    dirs = jnp.broadcast_to(viewdirs[:, None, :], (r_pad, s, INPUT_CH_VIEWS))
    xin = jnp.concatenate([pts, dirs], axis=-1).reshape(r_pad * s, XIN_CH)
    # z shifted left by one sample (last dists column becomes 0; overridden in-kernel)
    z_next = jnp.concatenate([z_vals[:, 1:], z_vals[:, -1:]], axis=-1)
    # hoisted strictly-lower-triangular mask: mask[t, s] = 1 iff t < s
    mask = (jnp.arange(s)[:, None] < jnp.arange(s)[None, :]).astype(jnp.float32)

    n_blk = block_r * s
    grid = (r_pad // block_r,)
    in_specs = [
        pl.BlockSpec((n_blk, XIN_CH), lambda i: (i, 0)),        # packed pts|dirs
        pl.BlockSpec((block_r, s), lambda i: (i, 0)),           # z_vals
        pl.BlockSpec((block_r, s), lambda i: (i, 0)),           # z_next
        pl.BlockSpec((block_r, 3), lambda i: (i, 0)),           # rays_d
        _full_spec((s, s)),                                     # cumprod mask
        _full_spec((INPUT_CH, W)),                              # w_in
        _full_spec((INPUT_CH, W)),                              # w_skip_pts
        _full_spec((D - 1, W, W)),                              # w_hidden (bf16)
        _full_spec((D, W)),                                     # b_pts
        _full_spec((W, W)),                                     # w_feat (bf16)
        _full_spec((1, W)),                                     # b_feat
        _full_spec((1, W)),                                     # w_alpha (row layout)
        _full_spec((1, 1)),                                     # b_alpha
        _full_spec((W, W // 2)),                                # w_vf (bf16)
        _full_spec((INPUT_CH_VIEWS, W // 2)),                   # w_vd
        _full_spec((1, W // 2)),                                # b_v
        _full_spec((W // 2, RAW_LANES)),                        # w_rgb_pad (bf16)
        _full_spec((1, RAW_LANES)),                             # b_rgb_pad
    ]
    out_specs = [
        pl.BlockSpec((block_r, RAW_LANES), lambda i: (i, 0)),   # rgb/depth/acc slab
        pl.BlockSpec((block_r, s), lambda i: (i, 0)),           # weights
        pl.BlockSpec((block_r, W), lambda i: (i, 0)),           # feature_map
    ]
    out_shape = [
        jax.ShapeDtypeStruct((r_pad, RAW_LANES), jnp.float32),
        jax.ShapeDtypeStruct((r_pad, s), jnp.float32),
        jax.ShapeDtypeStruct((r_pad, W), jnp.float32),
    ]
    slab, weights, feature_map = pl.pallas_call(
        _nerf_fused_kernel,
        grid=grid,
        in_specs=in_specs,
        out_specs=out_specs,
        out_shape=out_shape,
        compiler_params=pltpu.CompilerParams(
            dimension_semantics=("parallel",),
            vmem_limit_bytes=_VMEM_LIMIT),
    )(xin, z_vals, z_next, rays_d, mask,
      params["w_in"], params["w_skip_pts"], params["w_hidden"], params["b_pts"],
      params["w_feat"], params["b_feat"], params["w_alpha"], params["b_alpha"],
      params["w_vf"], params["w_vd"], params["b_v"],
      params["w_rgb_pad"], params["b_rgb_pad"])

    rgb_map = slab[:r, 0:3]
    depth_map = slab[:r, 3]
    acc_map = slab[:r, 4]
    # forward returns (rgb_map, depth_map, acc_map, weights, feature_map)
    return rgb_map, depth_map, acc_map, weights[:r], feature_map[:r]


# ---------------- deterministic parameter init ----------------
def init_params(key):
    keys = jax.random.split(key, 24)
    bf16 = jnp.bfloat16

    def lin(k, cin, cout, dtype=jnp.float32):
        return ((1.0 / jnp.sqrt(cin))
                * jax.random.normal(k, (cin, cout), jnp.float32)).astype(dtype)

    def bias(k, cout):
        return 0.01 * jax.random.normal(k, (1, cout), jnp.float32)

    w_hidden = jnp.stack([lin(keys[2 + j], W, W) for j in range(D - 1)], axis=0).astype(bf16)
    b_pts = 0.01 * jax.random.normal(keys[9], (D, W), jnp.float32)

    w_rgb = lin(keys[17], W // 2, 3)
    w_rgb_pad = jnp.zeros((W // 2, RAW_LANES), jnp.float32).at[:, :3].set(w_rgb).astype(bf16)
    b_rgb = bias(keys[18], 3)
    b_rgb_pad = jnp.zeros((1, RAW_LANES), jnp.float32).at[:, :3].set(b_rgb)

    return {
        "w_in": lin(keys[0], INPUT_CH, W),                       # VPU path, f32
        "w_skip_pts": lin(keys[1], INPUT_CH, W),                 # pts part of the (W+3, W) skip layer
        "w_hidden": w_hidden,                                    # bf16 MXU
        "b_pts": b_pts,
        "w_feat": lin(keys[10], W, W, bf16),
        "b_feat": bias(keys[11], W),
        "w_alpha": lin(keys[12], W, 1).reshape(1, W),            # row layout for VPU reduce
        "b_alpha": bias(keys[13], 1),
        "w_vf": lin(keys[14], W, W // 2, bf16),
        "w_vd": lin(keys[15], INPUT_CH_VIEWS, W // 2),           # VPU path, f32
        "b_v": bias(keys[16], W // 2),
        "w_rgb_pad": w_rgb_pad,                                  # lane-dense padded rgb head
        "b_rgb_pad": b_rgb_pad,
    }


if __name__ == "__main__":
    key = jax.random.PRNGKey(0)
    pkey, dkey = jax.random.split(key)
    params = init_params(pkey)

    R, S = 16, 32  # 16 rays x 32 samples; block_r=8 -> 2 grid steps of 256 MLP points
    k1, k2, k3, k4 = jax.random.split(dkey, 4)
    pts = jax.random.normal(k1, (R, S, INPUT_CH), jnp.float32)
    viewdirs = jax.random.normal(k2, (R, 3), jnp.float32)
    viewdirs = viewdirs / jnp.linalg.norm(viewdirs, axis=-1, keepdims=True)
    rays_d = jax.random.normal(k3, (R, 3), jnp.float32)
    z_vals = jnp.sort(jax.random.uniform(k4, (R, S), jnp.float32, 2.0, 6.0), axis=-1)

    outs = jax.block_until_ready(
        nerf_forward(params, pts, viewdirs, z_vals, rays_d, block_r=8))
    rgb_map, depth_map, acc_map, weights, feature_map = outs

    assert rgb_map.shape == (R, 3)
    assert depth_map.shape == (R,)
    assert acc_map.shape == (R,)
    assert weights.shape == (R, S)
    assert feature_map.shape == (R, W)
    assert all(bool(jnp.all(jnp.isfinite(o))) for o in outs)

    print("KERNEL_OK")
</pallas_src>

<mosaic_0001>
module attributes {stable_mosaic.version = 11 : i64} {
  func.func @_nerf_fused_kernel(%arg0: i32, %arg1: memref<256x6xf32, #tpu.memory_space<vmem>>, %arg2: memref<8x32xf32, #tpu.memory_space<vmem>>, %arg3: memref<8x32xf32, #tpu.memory_space<vmem>>, %arg4: memref<8x3xf32, #tpu.memory_space<vmem>>, %arg5: memref<32x32xf32, #tpu.memory_space<vmem>>, %arg6: memref<3x256xf32, #tpu.memory_space<vmem>>, %arg7: memref<3x256xf32, #tpu.memory_space<vmem>>, %arg8: memref<7x256x256xbf16, #tpu.memory_space<vmem>>, %arg9: memref<8x256xf32, #tpu.memory_space<vmem>>, %arg10: memref<256x256xbf16, #tpu.memory_space<vmem>>, %arg11: memref<1x256xf32, #tpu.memory_space<vmem>>, %arg12: memref<1x256xf32, #tpu.memory_space<vmem>>, %arg13: memref<1x1xf32, #tpu.memory_space<vmem>>, %arg14: memref<256x128xbf16, #tpu.memory_space<vmem>>, %arg15: memref<3x128xf32, #tpu.memory_space<vmem>>, %arg16: memref<1x128xf32, #tpu.memory_space<vmem>>, %arg17: memref<128x128xbf16, #tpu.memory_space<vmem>>, %arg18: memref<1x128xf32, #tpu.memory_space<vmem>>, %arg19: memref<8x128xf32, #tpu.memory_space<vmem>>, %arg20: memref<8x32xf32, #tpu.memory_space<vmem>>, %arg21: memref<8x256xf32, #tpu.memory_space<vmem>>) attributes {dimension_semantics = [#tpu.dimension_semantics<parallel>], iteration_bounds = array<i64: 2>, scalar_prefetch = 0 : i64, scratch_operands = 0 : i64, tpu.core_type = #tpu.core_type<tc>, window_params = [{transform_indices = @transform_0, window_bounds = array<i64: 256, 6>}, {transform_indices = @transform_1, window_bounds = array<i64: 8, 32>}, {transform_indices = @transform_2, window_bounds = array<i64: 8, 32>}, {transform_indices = @transform_3, window_bounds = array<i64: 8, 3>}, {pipeline_mode = #tpu.pipeline_mode<synchronous>, transform_indices = @transform_4, window_bounds = array<i64: 32, 32>}, {pipeline_mode = #tpu.pipeline_mode<synchronous>, transform_indices = @transform_5, window_bounds = array<i64: 3, 256>}, {pipeline_mode = #tpu.pipeline_mode<synchronous>, transform_indices = @transform_6, window_bounds = array<i64: 3, 256>}, {pipeline_mode = #tpu.pipeline_mode<synchronous>, transform_indices = @transform_7, window_bounds = array<i64: 7, 256, 256>}, {pipeline_mode = #tpu.pipeline_mode<synchronous>, transform_indices = @transform_8, window_bounds = array<i64: 8, 256>}, {pipeline_mode = #tpu.pipeline_mode<synchronous>, transform_indices = @transform_9, window_bounds = array<i64: 256, 256>}, {pipeline_mode = #tpu.pipeline_mode<synchronous>, transform_indices = @transform_10, window_bounds = array<i64: 1, 256>}, {pipeline_mode = #tpu.pipeline_mode<synchronous>, transform_indices = @transform_11, window_bounds = array<i64: 1, 256>}, {pipeline_mode = #tpu.pipeline_mode<synchronous>, transform_indices = @transform_12, window_bounds = array<i64: 1, 1>}, {pipeline_mode = #tpu.pipeline_mode<synchronous>, transform_indices = @transform_13, window_bounds = array<i64: 256, 128>}, {pipeline_mode = #tpu.pipeline_mode<synchronous>, transform_indices = @transform_14, window_bounds = array<i64: 3, 128>}, {pipeline_mode = #tpu.pipeline_mode<synchronous>, transform_indices = @transform_15, window_bounds = array<i64: 1, 128>}, {pipeline_mode = #tpu.pipeline_mode<synchronous>, transform_indices = @transform_16, window_bounds = array<i64: 128, 128>}, {pipeline_mode = #tpu.pipeline_mode<synchronous>, transform_indices = @transform_17, window_bounds = array<i64: 1, 128>}, {transform_indices = @transform_18, window_bounds = array<i64: 8, 128>}, {transform_indices = @transform_19, window_bounds = array<i64: 8, 32>}, {transform_indices = @transform_20, window_bounds = array<i64: 8, 256>}]} {
    %c0 = arith.constant 0 : index
    %c0_0 = arith.constant 0 : index
    %0 = vector.load %arg1[%c0, %c0_0] : memref<256x6xf32, #tpu.memory_space<vmem>>, vector<256x6xf32>
    %c0_1 = arith.constant 0 : index
    %c0_2 = arith.constant 0 : index
    %1 = vector.load %arg6[%c0_1, %c0_2] : memref<3x256xf32, #tpu.memory_space<vmem>>, vector<3x256xf32>
    %2 = vector.extract_strided_slice %0 {offsets = [0, 0], sizes = [256, 1], strides = [1, 1]} : vector<256x6xf32> to vector<256x1xf32>
    %3 = vector.extract_strided_slice %1 {offsets = [0, 0], sizes = [1, 256], strides = [1, 1]} : vector<3x256xf32> to vector<1x256xf32>
    %4 = vector.broadcast %2 : vector<256x1xf32> to vector<256x256xf32>
    %5 = vector.broadcast %3 : vector<1x256xf32> to vector<256x256xf32>
    %6 = arith.mulf %4, %5 : vector<256x256xf32>
    %7 = vector.extract_strided_slice %0 {offsets = [0, 1], sizes = [256, 1], strides = [1, 1]} : vector<256x6xf32> to vector<256x1xf32>
    %8 = vector.extract_strided_slice %1 {offsets = [1, 0], sizes = [1, 256], strides = [1, 1]} : vector<3x256xf32> to vector<1x256xf32>
    %9 = vector.broadcast %7 : vector<256x1xf32> to vector<256x256xf32>
    %10 = vector.broadcast %8 : vector<1x256xf32> to vector<256x256xf32>
    %11 = arith.mulf %9, %10 : vector<256x256xf32>
    %12 = arith.addf %6, %11 : vector<256x256xf32>
    %13 = vector.extract_strided_slice %0 {offsets = [0, 2], sizes = [256, 1], strides = [1, 1]} : vector<256x6xf32> to vector<256x1xf32>
    %14 = vector.extract_strided_slice %1 {offsets = [2, 0], sizes = [1, 256], strides = [1, 1]} : vector<3x256xf32> to vector<1x256xf32>
    %15 = vector.broadcast %13 : vector<256x1xf32> to vector<256x256xf32>
    %16 = vector.broadcast %14 : vector<1x256xf32> to vector<256x256xf32>
    %17 = arith.mulf %15, %16 : vector<256x256xf32>
    %18 = arith.addf %12, %17 : vector<256x256xf32>
    %c0_3 = arith.constant 0 : index
    %c0_4 = arith.constant 0 : index
    %19 = vector.load %arg9[%c0_3, %c0_4] : memref<8x256xf32, #tpu.memory_space<vmem>>, vector<1x256xf32>
    %20 = vector.broadcast %19 : vector<1x256xf32> to vector<256x256xf32>
    %21 = arith.addf %18, %20 : vector<256x256xf32>
    %cst = arith.constant 0.000000e+00 : f32
    %22 = vector.broadcast %cst : f32 to vector<256x256xf32>
    %23 = arith.maximumf %21, %22 : vector<256x256xf32>
    %24 = arith.truncf %23 : vector<256x256xf32> to vector<256x256xbf16>
    %c0_5 = arith.constant 0 : index
    %c0_6 = arith.constant 0 : index
    %c0_7 = arith.constant 0 : index
    %25 = vector.load %arg8[%c0_5, %c0_6, %c0_7] : memref<7x256x256xbf16, #tpu.memory_space<vmem>>, vector<1x256x256xbf16>
    %26 = vector.shape_cast %25 : vector<1x256x256xbf16> to vector<256x256xbf16>
    %cst_8 = arith.constant dense<0.000000e+00> : vector<256x256xf32>
    %27 = tpu.matmul %24, %26, %cst_8 {dimension_numbers = #tpu.dot_dimension_numbers<[1], [0], [0], [1], [0, 0, 1, 1], [], []>} : vector<256x256xbf16>, vector<256x256xbf16>, vector<256x256xf32> -> vector<256x256xf32>
    %c1 = arith.constant 1 : index
    %c0_9 = arith.constant 0 : index
    %28 = vector.load %arg9[%c1, %c0_9] : memref<8x256xf32, #tpu.memory_space<vmem>>, vector<1x256xf32>
    %29 = vector.broadcast %28 : vector<1x256xf32> to vector<256x256xf32>
    %30 = arith.addf %27, %29 : vector<256x256xf32>
    %cst_10 = arith.constant 0.000000e+00 : f32
    %31 = vector.broadcast %cst_10 : f32 to vector<256x256xf32>
    %32 = arith.maximumf %30, %31 : vector<256x256xf32>
    %33 = arith.truncf %32 : vector<256x256xf32> to vector<256x256xbf16>
    %c1_11 = arith.constant 1 : index
    %c0_12 = arith.constant 0 : index
    %c0_13 = arith.constant 0 : index
    %34 = vector.load %arg8[%c1_11, %c0_12, %c0_13] : memref<7x256x256xbf16, #tpu.memory_space<vmem>>, vector<1x256x256xbf16>
    %35 = vector.shape_cast %34 : vector<1x256x256xbf16> to vector<256x256xbf16>
    %cst_14 = arith.constant dense<0.000000e+00> : vector<256x256xf32>
    %36 = tpu.matmul %33, %35, %cst_14 {dimension_numbers = #tpu.dot_dimension_numbers<[1], [0], [0], [1], [0, 0, 1, 1], [], []>} : vector<256x256xbf16>, vector<256x256xbf16>, vector<256x256xf32> -> vector<256x256xf32>
    %c2 = arith.constant 2 : index
    %c0_15 = arith.constant 0 : index
    %37 = vector.load %arg9[%c2, %c0_15] : memref<8x256xf32, #tpu.memory_space<vmem>>, vector<1x256xf32>
    %38 = vector.broadcast %37 : vector<1x256xf32> to vector<256x256xf32>
    %39 = arith.addf %36, %38 : vector<256x256xf32>
    %cst_16 = arith.constant 0.000000e+00 : f32
    %40 = vector.broadcast %cst_16 : f32 to vector<256x256xf32>
    %41 = arith.maximumf %39, %40 : vector<256x256xf32>
    %42 = arith.truncf %41 : vector<256x256xf32> to vector<256x256xbf16>
    %c2_17 = arith.constant 2 : index
    %c0_18 = arith.constant 0 : index
    %c0_19 = arith.constant 0 : index
    %43 = vector.load %arg8[%c2_17, %c0_18, %c0_19] : memref<7x256x256xbf16, #tpu.memory_space<vmem>>, vector<1x256x256xbf16>
    %44 = vector.shape_cast %43 : vector<1x256x256xbf16> to vector<256x256xbf16>
    %cst_20 = arith.constant dense<0.000000e+00> : vector<256x256xf32>
    %45 = tpu.matmul %42, %44, %cst_20 {dimension_numbers = #tpu.dot_dimension_numbers<[1], [0], [0], [1], [0, 0, 1, 1], [], []>} : vector<256x256xbf16>, vector<256x256xbf16>, vector<256x256xf32> -> vector<256x256xf32>
    %c3 = arith.constant 3 : index
    %c0_21 = arith.constant 0 : index
    %46 = vector.load %arg9[%c3, %c0_21] : memref<8x256xf32, #tpu.memory_space<vmem>>, vector<1x256xf32>
    %47 = vector.broadcast %46 : vector<1x256xf32> to vector<256x256xf32>
    %48 = arith.addf %45, %47 : vector<256x256xf32>
    %cst_22 = arith.constant 0.000000e+00 : f32
    %49 = vector.broadcast %cst_22 : f32 to vector<256x256xf32>
    %50 = arith.maximumf %48, %49 : vector<256x256xf32>
    %51 = arith.truncf %50 : vector<256x256xf32> to vector<256x256xbf16>
    %c3_23 = arith.constant 3 : index
    %c0_24 = arith.constant 0 : index
    %c0_25 = arith.constant 0 : index
    %52 = vector.load %arg8[%c3_23, %c0_24, %c0_25] : memref<7x256x256xbf16, #tpu.memory_space<vmem>>, vector<1x256x256xbf16>
    %53 = vector.shape_cast %52 : vector<1x256x256xbf16> to vector<256x256xbf16>
    %cst_26 = arith.constant dense<0.000000e+00> : vector<256x256xf32>
    %54 = tpu.matmul %51, %53, %cst_26 {dimension_numbers = #tpu.dot_dimension_numbers<[1], [0], [0], [1], [0, 0, 1, 1], [], []>} : vector<256x256xbf16>, vector<256x256xbf16>, vector<256x256xf32> -> vector<256x256xf32>
    %c4 = arith.constant 4 : index
    %c0_27 = arith.constant 0 : index
    %55 = vector.load %arg9[%c4, %c0_27] : memref<8x256xf32, #tpu.memory_space<vmem>>, vector<1x256xf32>
    %56 = vector.broadcast %55 : vector<1x256xf32> to vector<256x256xf32>
    %57 = arith.addf %54, %56 : vector<256x256xf32>
    %cst_28 = arith.constant 0.000000e+00 : f32
    %58 = vector.broadcast %cst_28 : f32 to vector<256x256xf32>
    %59 = arith.maximumf %57, %58 : vector<256x256xf32>
    %60 = arith.truncf %59 : vector<256x256xf32> to vector<256x256xbf16>
    %c4_29 = arith.constant 4 : index
    %c0_30 = arith.constant 0 : index
    %c0_31 = arith.constant 0 : index
    %61 = vector.load %arg8[%c4_29, %c0_30, %c0_31] : memref<7x256x256xbf16, #tpu.memory_space<vmem>>, vector<1x256x256xbf16>
    %62 = vector.shape_cast %61 : vector<1x256x256xbf16> to vector<256x256xbf16>
    %cst_32 = arith.constant dense<0.000000e+00> : vector<256x256xf32>
    %63 = tpu.matmul %60, %62, %cst_32 {dimension_numbers = #tpu.dot_dimension_numbers<[1], [0], [0], [1], [0, 0, 1, 1], [], []>} : vector<256x256xbf16>, vector<256x256xbf16>, vector<256x256xf32> -> vector<256x256xf32>
    %c5 = arith.constant 5 : index
    %c0_33 = arith.constant 0 : index
    %64 = vector.load %arg9[%c5, %c0_33] : memref<8x256xf32, #tpu.memory_space<vmem>>, vector<1x256xf32>
    %65 = vector.broadcast %64 : vector<1x256xf32> to vector<256x256xf32>
    %66 = arith.addf %63, %65 : vector<256x256xf32>
    %c0_34 = arith.constant 0 : index
    %c0_35 = arith.constant 0 : index
    %67 = vector.load %arg7[%c0_34, %c0_35] : memref<3x256xf32, #tpu.memory_space<vmem>>, vector<3x256xf32>
    %68 = vector.extract_strided_slice %0 {offsets = [0, 0], sizes = [256, 1], strides = [1, 1]} : vector<256x6xf32> to vector<256x1xf32>
    %69 = vector.extract_strided_slice %67 {offsets = [0, 0], sizes = [1, 256], strides = [1, 1]} : vector<3x256xf32> to vector<1x256xf32>
    %70 = vector.broadcast %68 : vector<256x1xf32> to vector<256x256xf32>
    %71 = vector.broadcast %69 : vector<1x256xf32> to vector<256x256xf32>
    %72 = arith.mulf %70, %71 : vector<256x256xf32>
    %73 = vector.extract_strided_slice %0 {offsets = [0, 1], sizes = [256, 1], strides = [1, 1]} : vector<256x6xf32> to vector<256x1xf32>
    %74 = vector.extract_strided_slice %67 {offsets = [1, 0], sizes = [1, 256], strides = [1, 1]} : vector<3x256xf32> to vector<1x256xf32>
    %75 = vector.broadcast %73 : vector<256x1xf32> to vector<256x256xf32>
    %76 = vector.broadcast %74 : vector<1x256xf32> to vector<256x256xf32>
    %77 = arith.mulf %75, %76 : vector<256x256xf32>
    %78 = arith.addf %72, %77 : vector<256x256xf32>
    %79 = vector.extract_strided_slice %0 {offsets = [0, 2], sizes = [256, 1], strides = [1, 1]} : vector<256x6xf32> to vector<256x1xf32>
    %80 = vector.extract_strided_slice %67 {offsets = [2, 0], sizes = [1, 256], strides = [1, 1]} : vector<3x256xf32> to vector<1x256xf32>
    %81 = vector.broadcast %79 : vector<256x1xf32> to vector<256x256xf32>
    %82 = vector.broadcast %80 : vector<1x256xf32> to vector<256x256xf32>
    %83 = arith.mulf %81, %82 : vector<256x256xf32>
    %84 = arith.addf %78, %83 : vector<256x256xf32>
    %85 = arith.addf %66, %84 : vector<256x256xf32>
    %cst_36 = arith.constant 0.000000e+00 : f32
    %86 = vector.broadcast %cst_36 : f32 to vector<256x256xf32>
    %87 = arith.maximumf %85, %86 : vector<256x256xf32>
    %88 = arith.truncf %87 : vector<256x256xf32> to vector<256x256xbf16>
    %c5_37 = arith.constant 5 : index
    %c0_38 = arith.constant 0 : index
    %c0_39 = arith.constant 0 : index
    %89 = vector.load %arg8[%c5_37, %c0_38, %c0_39] : memref<7x256x256xbf16, #tpu.memory_space<vmem>>, vector<1x256x256xbf16>
    %90 = vector.shape_cast %89 : vector<1x256x256xbf16> to vector<256x256xbf16>
    %cst_40 = arith.constant dense<0.000000e+00> : vector<256x256xf32>
    %91 = tpu.matmul %88, %90, %cst_40 {dimension_numbers = #tpu.dot_dimension_numbers<[1], [0], [0], [1], [0, 0, 1, 1], [], []>} : vector<256x256xbf16>, vector<256x256xbf16>, vector<256x256xf32> -> vector<256x256xf32>
    %c6 = arith.constant 6 : index
    %c0_41 = arith.constant 0 : index
    %92 = vector.load %arg9[%c6, %c0_41] : memref<8x256xf32, #tpu.memory_space<vmem>>, vector<1x256xf32>
    %93 = vector.broadcast %92 : vector<1x256xf32> to vector<256x256xf32>
    %94 = arith.addf %91, %93 : vector<256x256xf32>
    %cst_42 = arith.constant 0.000000e+00 : f32
    %95 = vector.broadcast %cst_42 : f32 to vector<256x256xf32>
    %96 = arith.maximumf %94, %95 : vector<256x256xf32>
    %97 = arith.truncf %96 : vector<256x256xf32> to vector<256x256xbf16>
    %c6_43 = arith.constant 6 : index
    %c0_44 = arith.constant 0 : index
    %c0_45 = arith.constant 0 : index
    %98 = vector.load %arg8[%c6_43, %c0_44, %c0_45] : memref<7x256x256xbf16, #tpu.memory_space<vmem>>, vector<1x256x256xbf16>
    %99 = vector.shape_cast %98 : vector<1x256x256xbf16> to vector<256x256xbf16>
    %cst_46 = arith.constant dense<0.000000e+00> : vector<256x256xf32>
    %100 = tpu.matmul %97, %99, %cst_46 {dimension_numbers = #tpu.dot_dimension_numbers<[1], [0], [0], [1], [0, 0, 1, 1], [], []>} : vector<256x256xbf16>, vector<256x256xbf16>, vector<256x256xf32> -> vector<256x256xf32>
    %c7 = arith.constant 7 : index
    %c0_47 = arith.constant 0 : index
    %101 = vector.load %arg9[%c7, %c0_47] : memref<8x256xf32, #tpu.memory_space<vmem>>, vector<1x256xf32>
    %102 = vector.broadcast %101 : vector<1x256xf32> to vector<256x256xf32>
    %103 = arith.addf %100, %102 : vector<256x256xf32>
    %cst_48 = arith.constant 0.000000e+00 : f32
    %104 = vector.broadcast %cst_48 : f32 to vector<256x256xf32>
    %105 = arith.maximumf %103, %104 : vector<256x256xf32>
    %106 = arith.truncf %105 : vector<256x256xf32> to vector<256x256xbf16>
    %c0_49 = arith.constant 0 : index
    %c0_50 = arith.constant 0 : index
    %107 = vector.load %arg10[%c0_49, %c0_50] : memref<256x256xbf16, #tpu.memory_space<vmem>>, vector<256x256xbf16>
    %cst_51 = arith.constant dense<0.000000e+00> : vector<256x256xf32>
    %108 = tpu.matmul %106, %107, %cst_51 {dimension_numbers = #tpu.dot_dimension_numbers<[1], [0], [0], [1], [0, 0, 1, 1], [], []>} : vector<256x256xbf16>, vector<256x256xbf16>, vector<256x256xf32> -> vector<256x256xf32>
    %c0_52 = arith.constant 0 : index
    %c0_53 = arith.constant 0 : index
    %109 = vector.load %arg11[%c0_52, %c0_53] : memref<1x256xf32, #tpu.memory_space<vmem>>, vector<1x256xf32>
    %110 = vector.broadcast %109 : vector<1x256xf32> to vector<256x256xf32>
    %111 = arith.addf %108, %110 : vector<256x256xf32>
    %112 = arith.truncf %111 : vector<256x256xf32> to vector<256x256xbf16>
    %c0_54 = arith.constant 0 : index
    %c0_55 = arith.constant 0 : index
    %113 = vector.load %arg14[%c0_54, %c0_55] : memref<256x128xbf16, #tpu.memory_space<vmem>>, vector<256x128xbf16>
    %cst_56 = arith.constant dense<0.000000e+00> : vector<256x128xf32>
    %114 = tpu.matmul %112, %113, %cst_56 {dimension_numbers = #tpu.dot_dimension_numbers<[1], [0], [0], [1], [0, 0, 1, 1], [], []>} : vector<256x256xbf16>, vector<256x128xbf16>, vector<256x128xf32> -> vector<256x128xf32>
    %c0_57 = arith.constant 0 : index
    %c0_58 = arith.constant 0 : index
    %115 = vector.load %arg15[%c0_57, %c0_58] : memref<3x128xf32, #tpu.memory_space<vmem>>, vector<3x128xf32>
    %116 = vector.extract_strided_slice %0 {offsets = [0, 3], sizes = [256, 1], strides = [1, 1]} : vector<256x6xf32> to vector<256x1xf32>
    %117 = vector.extract_strided_slice %115 {offsets = [0, 0], sizes = [1, 128], strides = [1, 1]} : vector<3x128xf32> to vector<1x128xf32>
    %118 = vector.broadcast %116 : vector<256x1xf32> to vector<256x128xf32>
    %119 = vector.broadcast %117 : vector<1x128xf32> to vector<256x128xf32>
    %120 = arith.mulf %118, %119 : vector<256x128xf32>
    %121 = vector.extract_strided_slice %0 {offsets = [0, 4], sizes = [256, 1], strides = [1, 1]} : vector<256x6xf32> to vector<256x1xf32>
    %122 = vector.extract_strided_slice %115 {offsets = [1, 0], sizes = [1, 128], strides = [1, 1]} : vector<3x128xf32> to vector<1x128xf32>
    %123 = vector.broadcast %121 : vector<256x1xf32> to vector<256x128xf32>
    %124 = vector.broadcast %122 : vector<1x128xf32> to vector<256x128xf32>
    %125 = arith.mulf %123, %124 : vector<256x128xf32>
    %126 = arith.addf %120, %125 : vector<256x128xf32>
    %127 = vector.extract_strided_slice %0 {offsets = [0, 5], sizes = [256, 1], strides = [1, 1]} : vector<256x6xf32> to vector<256x1xf32>
    %128 = vector.extract_strided_slice %115 {offsets = [2, 0], sizes = [1, 128], strides = [1, 1]} : vector<3x128xf32> to vector<1x128xf32>
    %129 = vector.broadcast %127 : vector<256x1xf32> to vector<256x128xf32>
    %130 = vector.broadcast %128 : vector<1x128xf32> to vector<256x128xf32>
    %131 = arith.mulf %129, %130 : vector<256x128xf32>
    %132 = arith.addf %126, %131 : vector<256x128xf32>
    %133 = arith.addf %114, %132 : vector<256x128xf32>
    %c0_59 = arith.constant 0 : index
    %c0_60 = arith.constant 0 : index
    %134 = vector.load %arg16[%c0_59, %c0_60] : memref<1x128xf32, #tpu.memory_space<vmem>>, vector<1x128xf32>
    %135 = vector.broadcast %134 : vector<1x128xf32> to vector<256x128xf32>
    %136 = arith.addf %133, %135 : vector<256x128xf32>
    %cst_61 = arith.constant 0.000000e+00 : f32
    %137 = vector.broadcast %cst_61 : f32 to vector<256x128xf32>
    %138 = arith.maximumf %136, %137 : vector<256x128xf32>
    %139 = arith.truncf %138 : vector<256x128xf32> to vector<256x128xbf16>
    %c0_62 = arith.constant 0 : index
    %c0_63 = arith.constant 0 : index
    %140 = vector.load %arg17[%c0_62, %c0_63] : memref<128x128xbf16, #tpu.memory_space<vmem>>, vector<128x128xbf16>
    %cst_64 = arith.constant dense<0.000000e+00> : vector<256x128xf32>
    %141 = tpu.matmul %139, %140, %cst_64 {dimension_numbers = #tpu.dot_dimension_numbers<[1], [0], [0], [1], [0, 0, 1, 1], [], []>} : vector<256x128xbf16>, vector<128x128xbf16>, vector<256x128xf32> -> vector<256x128xf32>
    %c0_65 = arith.constant 0 : index
    %c0_66 = arith.constant 0 : index
    %142 = vector.load %arg18[%c0_65, %c0_66] : memref<1x128xf32, #tpu.memory_space<vmem>>, vector<1x128xf32>
    %143 = vector.broadcast %142 : vector<1x128xf32> to vector<256x128xf32>
    %144 = arith.addf %141, %143 : vector<256x128xf32>
    %c0_67 = arith.constant 0 : index
    %c0_68 = arith.constant 0 : index
    %145 = vector.load %arg12[%c0_67, %c0_68] : memref<1x256xf32, #tpu.memory_space<vmem>>, vector<1x256xf32>
    %146 = vector.broadcast %145 : vector<1x256xf32> to vector<256x256xf32>
    %147 = arith.mulf %105, %146 : vector<256x256xf32>
    %148 = vector.shape_cast %147 : vector<256x256xf32> to vector<8x32x256xf32>
    %cst_69 = arith.constant dense<0.000000e+00> : vector<8x32xf32>
    %149 = vector.multi_reduction <add>, %148, %cst_69 [2] : vector<8x32x256xf32> to vector<8x32xf32>
    %c0_70 = arith.constant 0 : index
    %c0_71 = arith.constant 0 : index
    %150 = vector.load %arg13[%c0_70, %c0_71] : memref<1x1xf32, #tpu.memory_space<vmem>>, vector<1x1xf32>
    %151 = vector.broadcast %150 : vector<1x1xf32> to vector<8x32xf32>
    %152 = arith.addf %149, %151 : vector<8x32xf32>
    %c0_72 = arith.constant 0 : index
    %c0_73 = arith.constant 0 : index
    %153 = vector.load %arg2[%c0_72, %c0_73] : memref<8x32xf32, #tpu.memory_space<vmem>>, vector<8x32xf32>
    %c0_74 = arith.constant 0 : index
    %c0_75 = arith.constant 0 : index
    %154 = vector.load %arg4[%c0_74, %c0_75] : memref<8x3xf32, #tpu.memory_space<vmem>>, vector<8x3xf32>
    %c0_76 = arith.constant 0 : index
    %c0_77 = arith.constant 0 : index
    %155 = vector.load %arg4[%c0_76, %c0_77] : memref<8x3xf32, #tpu.memory_space<vmem>>, vector<8x3xf32>
    %156 = arith.mulf %154, %155 : vector<8x3xf32>
    %cst_78 = arith.constant dense<0.000000e+00> : vector<8xf32>
    %157 = vector.multi_reduction <add>, %156, %cst_78 [1] : vector<8x3xf32> to vector<8xf32>
    %158 = vector.shape_cast %157 : vector<8xf32> to vector<8x1xf32>
    %159 = math.sqrt %158 : vector<8x1xf32>
    %c0_79 = arith.constant 0 : index
    %c0_80 = arith.constant 0 : index
    %160 = vector.load %arg3[%c0_79, %c0_80] : memref<8x32xf32, #tpu.memory_space<vmem>>, vector<8x32xf32>
    %161 = arith.subf %160, %153 : vector<8x32xf32>
    %162 = vector.broadcast %159 : vector<8x1xf32> to vector<8x32xf32>
    %163 = arith.mulf %161, %162 : vector<8x32xf32>
    %cst_81 = arith.constant 0.000000e+00 : f32
    %164 = vector.broadcast %cst_81 : f32 to vector<8x32xf32>
    %165 = arith.maximumf %152, %164 : vector<8x32xf32>
    %cst_82 = arith.constant 0.000000e+00 : f32
    %166 = vector.broadcast %cst_82 : f32 to vector<8x32xf32>
    %167 = arith.subf %166, %165 : vector<8x32xf32>
    %168 = arith.mulf %167, %163 : vector<8x32xf32>
    %169 = math.exp %168 : vector<8x32xf32>
    %cst_83 = arith.constant 1.000000e+00 : f32
    %170 = vector.broadcast %cst_83 : f32 to vector<8x32xf32>
    %171 = arith.subf %170, %169 : vector<8x32xf32>
    %172 = tpu.iota {dimensions = array<i32: 1>} : vector<8x32xi32>
    %c31_i32 = arith.constant 31 : i32
    %173 = vector.broadcast %c31_i32 : i32 to vector<8x32xi32>
    %174 = arith.cmpi eq, %172, %173 : vector<8x32xi32>
    %cst_84 = arith.constant 1.000000e+00 : f32
    %175 = vector.broadcast %cst_84 : f32 to vector<8x32xf32>
    %176 = arith.select %174, %175, %171 : vector<8x32xi1>, vector<8x32xf32>
    %cst_85 = arith.constant 1.000000e+00 : f32
    %177 = vector.broadcast %cst_85 : f32 to vector<8x32xf32>
    %178 = arith.subf %177, %176 : vector<8x32xf32>
    %cst_86 = arith.constant 1.000000e-30 : f32
    %179 = vector.broadcast %cst_86 : f32 to vector<8x32xf32>
    %180 = arith.maximumf %178, %179 : vector<8x32xf32>
    %181 = math.log %180 : vector<8x32xf32>
    %c0_87 = arith.constant 0 : index
    %c0_88 = arith.constant 0 : index
    %182 = vector.load %arg5[%c0_87, %c0_88] : memref<32x32xf32, #tpu.memory_space<vmem>>, vector<32x32xf32>
    %cst_89 = arith.constant dense<0.000000e+00> : vector<8x32xf32>
    %183 = tpu.matmul %181, %182, %cst_89 {dimension_numbers = #tpu.dot_dimension_numbers<[1], [0], [0], [1], [0, 0, 1, 1], [], []>} : vector<8x32xf32>, vector<32x32xf32>, vector<8x32xf32> -> vector<8x32xf32>
    %184 = math.exp %183 : vector<8x32xf32>
    %185 = arith.mulf %176, %184 : vector<8x32xf32>
    %186 = vector.shape_cast %185 : vector<8x32xf32> to vector<8x32x1xf32>
    %187 = arith.negf %144 : vector<256x128xf32>
    %188 = math.exp %187 : vector<256x128xf32>
    %cst_90 = arith.constant 1.000000e+00 : f32
    %189 = vector.broadcast %cst_90 : f32 to vector<256x128xf32>
    %190 = arith.addf %189, %188 : vector<256x128xf32>
    %191 = arith.divf %189, %190 : vector<256x128xf32>
    %192 = vector.shape_cast %191 : vector<256x128xf32> to vector<8x32x128xf32>
    %193 = vector.broadcast %186 : vector<8x32x1xf32> to vector<8x32x128xf32>
    %194 = arith.mulf %193, %192 : vector<8x32x128xf32>
    %cst_91 = arith.constant dense<0.000000e+00> : vector<8x128xf32>
    %195 = vector.multi_reduction <add>, %194, %cst_91 [1] : vector<8x32x128xf32> to vector<8x128xf32>
    %196 = arith.mulf %185, %153 : vector<8x32xf32>
    %cst_92 = arith.constant dense<0.000000e+00> : vector<8xf32>
    %197 = vector.multi_reduction <add>, %196, %cst_92 [1] : vector<8x32xf32> to vector<8xf32>
    %198 = vector.shape_cast %197 : vector<8xf32> to vector<8x1xf32>
    %cst_93 = arith.constant dense<0.000000e+00> : vector<8xf32>
    %199 = vector.multi_reduction <add>, %185, %cst_93 [1] : vector<8x32xf32> to vector<8xf32>
    %200 = vector.shape_cast %199 : vector<8xf32> to vector<8x1xf32>
    %201 = tpu.iota {dimensions = array<i32: 1>} : vector<8x128xi32>
    %c3_i32 = arith.constant 3 : i32
    %202 = vector.broadcast %c3_i32 : i32 to vector<8x128xi32>
    %203 = arith.cmpi eq, %201, %202 : vector<8x128xi32>
    %204 = vector.shape_cast %198 : vector<8x1xf32> to vector<8x1xf32>
    %205 = vector.broadcast %204 : vector<8x1xf32> to vector<8x128xf32>
    %206 = arith.select %203, %205, %195 : vector<8x128xi1>, vector<8x128xf32>
    %c4_i32 = arith.constant 4 : i32
    %207 = vector.broadcast %c4_i32 : i32 to vector<8x128xi32>
    %208 = arith.cmpi eq, %201, %207 : vector<8x128xi32>
    %209 = vector.shape_cast %200 : vector<8x1xf32> to vector<8x1xf32>
    %210 = vector.broadcast %209 : vector<8x1xf32> to vector<8x128xf32>
    %211 = arith.select %208, %210, %206 : vector<8x128xi1>, vector<8x128xf32>
    %c0_94 = arith.constant 0 : index
    %c0_95 = arith.constant 0 : index
    %212 = vector.load %arg19[%c0_94, %c0_95] : memref<8x128xf32, #tpu.memory_space<vmem>>, vector<8x128xf32>
    tpu.vector_store %arg19[%c0_94, %c0_95], %211 {strides = array<i32>} : memref<8x128xf32, #tpu.memory_space<vmem>>, vector<8x128xf32>,
    %c0_96 = arith.constant 0 : index
    %c0_97 = arith.constant 0 : index
    %213 = vector.load %arg20[%c0_96, %c0_97] : memref<8x32xf32, #tpu.memory_space<vmem>>, vector<8x32xf32>
    tpu.vector_store %arg20[%c0_96, %c0_97], %185 {strides = array<i32>} : memref<8x32xf32, #tpu.memory_space<vmem>>, vector<8x32xf32>,
    %214 = vector.shape_cast %111 : vector<256x256xf32> to vector<8x32x256xf32>
    %215 = vector.broadcast %186 : vector<8x32x1xf32> to vector<8x32x256xf32>
    %216 = arith.mulf %215, %214 : vector<8x32x256xf32>
    %cst_98 = arith.constant dense<0.000000e+00> : vector<8x256xf32>
    %217 = vector.multi_reduction <add>, %216, %cst_98 [1] : vector<8x32x256xf32> to vector<8x256xf32>
    %c0_99 = arith.constant 0 : index
    %c0_100 = arith.constant 0 : index
    %218 = vector.load %arg21[%c0_99, %c0_100] : memref<8x256xf32, #tpu.memory_space<vmem>>, vector<8x256xf32>
    tpu.vector_store %arg21[%c0_99, %c0_100], %217 {strides = array<i32>} : memref<8x256xf32, #tpu.memory_space<vmem>>, vector<8x256xf32>,
    return
  }
  func.func @transform_0(%arg0: i32) -> (i32, i32) {
    %c0_i32 = arith.constant 0 : i32
    %c0_i32_0 = arith.constant 0 : i32
    return %arg0, %c0_i32 : i32, i32
  }
  func.func @transform_1(%arg0: i32) -> (i32, i32) {
    %c0_i32 = arith.constant 0 : i32
    %c0_i32_0 = arith.constant 0 : i32
    return %arg0, %c0_i32 : i32, i32
  }
  func.func @transform_2(%arg0: i32) -> (i32, i32) {
    %c0_i32 = arith.constant 0 : i32
    %c0_i32_0 = arith.constant 0 : i32
    return %arg0, %c0_i32 : i32, i32
  }
  func.func @transform_3(%arg0: i32) -> (i32, i32) {
    %c0_i32 = arith.constant 0 : i32
    %c0_i32_0 = arith.constant 0 : i32
    return %arg0, %c0_i32 : i32, i32
  }
  func.func @transform_4(%arg0: i32) -> (i32, i32) {
    %c0_i32 = arith.constant 0 : i32
    %c0_i32_0 = arith.constant 0 : i32
    %c0_i32_1 = arith.constant 0 : i32
    return %c0_i32, %c0_i32_0 : i32, i32
  }
  func.func @transform_5(%arg0: i32) -> (i32, i32) {
    %c0_i32 = arith.constant 0 : i32
    %c0_i32_0 = arith.constant 0 : i32
    %c0_i32_1 = arith.constant 0 : i32
    return %c0_i32, %c0_i32_0 : i32, i32
  }
  func.func @transform_6(%arg0: i32) -> (i32, i32) {
    %c0_i32 = arith.constant 0 : i32
    %c0_i32_0 = arith.constant 0 : i32
    %c0_i32_1 = arith.constant 0 : i32
    return %c0_i32, %c0_i32_0 : i32, i32
  }
  func.func @transform_7(%arg0: i32) -> (i32, i32, i32) {
    %c0_i32 = arith.constant 0 : i32
    %c0_i32_0 = arith.constant 0 : i32
    %c0_i32_1 = arith.constant 0 : i32
    %c0_i32_2 = arith.constant 0 : i32
    return %c0_i32, %c0_i32_0, %c0_i32_1 : i32, i32, i32
  }
  func.func @transform_8(%arg0: i32) -> (i32, i32) {
    %c0_i32 = arith.constant 0 : i32
    %c0_i32_0 = arith.constant 0 : i32
    %c0_i32_1 = arith.constant 0 : i32
    return %c0_i32, %c0_i32_0 : i32, i32
  }
  func.func @transform_9(%arg0: i32) -> (i32, i32) {
    %c0_i32 = arith.constant 0 : i32
    %c0_i32_0 = arith.constant 0 : i32
    %c0_i32_1 = arith.constant 0 : i32
    return %c0_i32, %c0_i32_0 : i32, i32
  }
  func.func @transform_10(%arg0: i32) -> (i32, i32) {
    %c0_i32 = arith.constant 0 : i32
    %c0_i32_0 = arith.constant 0 : i32
    %c0_i32_1 = arith.constant 0 : i32
    return %c0_i32, %c0_i32_0 : i32, i32
  }
  func.func @transform_11(%arg0: i32) -> (i32, i32) {
    %c0_i32 = arith.constant 0 : i32
    %c0_i32_0 = arith.constant 0 : i32
    %c0_i32_1 = arith.constant 0 : i32
    return %c0_i32, %c0_i32_0 : i32, i32
  }
  func.func @transform_12(%arg0: i32) -> (i32, i32) {
    %c0_i32 = arith.constant 0 : i32
    %c0_i32_0 = arith.constant 0 : i32
    %c0_i32_1 = arith.constant 0 : i32
    return %c0_i32, %c0_i32_0 : i32, i32
  }
  func.func @transform_13(%arg0: i32) -> (i32, i32) {
    %c0_i32 = arith.constant 0 : i32
    %c0_i32_0 = arith.constant 0 : i32
    %c0_i32_1 = arith.constant 0 : i32
    return %c0_i32, %c0_i32_0 : i32, i32
  }
  func.func @transform_14(%arg0: i32) -> (i32, i32) {
    %c0_i32 = arith.constant 0 : i32
    %c0_i32_0 = arith.constant 0 : i32
    %c0_i32_1 = arith.constant 0 : i32
    return %c0_i32, %c0_i32_0 : i32, i32
  }
  func.func @transform_15(%arg0: i32) -> (i32, i32) {
    %c0_i32 = arith.constant 0 : i32
    %c0_i32_0 = arith.constant 0 : i32
    %c0_i32_1 = arith.constant 0 : i32
    return %c0_i32, %c0_i32_0 : i32, i32
  }
  func.func @transform_16(%arg0: i32) -> (i32, i32) {
    %c0_i32 = arith.constant 0 : i32
    %c0_i32_0 = arith.constant 0 : i32
    %c0_i32_1 = arith.constant 0 : i32
    return %c0_i32, %c0_i32_0 : i32, i32
  }
  func.func @transform_17(%arg0: i32) -> (i32, i32) {
    %c0_i32 = arith.constant 0 : i32
    %c0_i32_0 = arith.constant 0 : i32
    %c0_i32_1 = arith.constant 0 : i32
    return %c0_i32, %c0_i32_0 : i32, i32
  }
  func.func @transform_18(%arg0: i32) -> (i32, i32) {
    %c0_i32 = arith.constant 0 : i32
    %c0_i32_0 = arith.constant 0 : i32
    return %arg0, %c0_i32 : i32, i32
  }
  func.func @transform_19(%arg0: i32) -> (i32, i32) {
    %c0_i32 = arith.constant 0 : i32
    %c0_i32_0 = arith.constant 0 : i32
    return %arg0, %c0_i32 : i32, i32
  }
  func.func @transform_20(%arg0: i32) -> (i32, i32) {
    %c0_i32 = arith.constant 0 : i32
    %c0_i32_0 = arith.constant 0 : i32
    return %arg0, %c0_i32 : i32, i32
  }
}

</mosaic_0001>

<llo_original>
// kernel: tpu_custom_call.1
$region0: #{tpu_custom_call.1}
  #allocation0 [shape = 'u32[]', space=smem, size = 0x4, offset = 0x4, fixed_abs, tag = 'smem constant byte address 0x4 - core index']
  #allocation1 [shape = 'u32[144,128]{1,0:T(1,128)}', space=vmem, size = 0x12000, scoped, tag = 'internal scratch']
  #allocation2 [shape = 'f32[1,1]{1,0:T(1,128)S(1)}', space=vmem, size = 0x200, scoped, tag = 'scoped memory for tpu_custom_call.1']
  %s0 = inlined_call_operand.vmem [shape: f32[512,6], index: 0, kind: input, shape index: {}]
  %s1 = inlined_call_operand.vmem [shape: f32[16,32], index: 1, kind: input, shape index: {}]
  %s2 = inlined_call_operand.vmem [shape: f32[16,32], index: 2, kind: input, shape index: {}]
  %s3 = inlined_call_operand.vmem [shape: f32[16,3], index: 3, kind: input, shape index: {}]
  %s4 = inlined_call_operand.vmem [shape: f32[32,32], index: 4, kind: input, shape index: {}]
  %s5 = inlined_call_operand.vmem [shape: f32[3,256], index: 5, kind: input, shape index: {}]
  %s6 = inlined_call_operand.vmem [shape: f32[3,256], index: 6, kind: input, shape index: {}]
  %s7 = inlined_call_operand.hbm [shape: bf16[7,256,256], index: 7, kind: input, shape index: {}]
  %s8 = inlined_call_operand.vmem [shape: f32[8,256], index: 8, kind: input, shape index: {}]
  %s9 = inlined_call_operand.vmem [shape: bf16[256,256], index: 9, kind: input, shape index: {}]
  %s10 = inlined_call_operand.vmem [shape: f32[1,256], index: 10, kind: input, shape index: {}]
  %s11 = inlined_call_operand.vmem [shape: f32[1,256], index: 11, kind: input, shape index: {}]
  %s12 = inlined_call_operand.<no memory space> [shape: f32[1,1], index: 12, kind: input, shape index: {}]
  %s13 = inlined_call_operand.vmem [shape: bf16[256,128], index: 13, kind: input, shape index: {}]
  %s14 = inlined_call_operand.vmem [shape: f32[3,128], index: 14, kind: input, shape index: {}]
  %s15 = inlined_call_operand.vmem [shape: f32[1,128], index: 15, kind: input, shape index: {}]
  %s16 = inlined_call_operand.vmem [shape: bf16[128,128], index: 16, kind: input, shape index: {}]
  %s17 = inlined_call_operand.vmem [shape: f32[1,128], index: 17, kind: input, shape index: {}]
  %s18 = inlined_call_operand.hbm [shape: f32[16,128], index: 18, kind: output, shape index: {0}]
  %s19 = inlined_call_operand.hbm [shape: f32[16,32], index: 19, kind: output, shape index: {1}]
  %s20 = inlined_call_operand.hbm [shape: f32[16,256], index: 20, kind: output, shape index: {2}]
  %21 = xla_tuple %s18, %s19, %s20
  %s22 = sld [smem:[#allocation0]]
  $region125: #{tpu_custom_call.1} parent=0
    _
  %s24 = ssub.s32 1, %s22
  %s25 = scalar_select 0, %s24, %s22
  %v26 = vstv %s12
  %27 = vst [vmem:[#allocation2] sm:$0x1] %v26
  $region1: #{tpu_custom_call.1} parent=0
    #allocation3 [shape = 'u8[917504]{0}', space=vmem, size = 0xe0000, scoped, tag = 'input window, operand 7, single buffered']
    #allocation4 [shape = 's32[2]{0}', space=sflag, size = 0x8, scoped, tag = 'scoped memory for tpu_custom_call.1']
    #allocation5 [shape = 's32[2]{0}', space=sflag, size = 0x8, scoped, tag = 'scoped memory for tpu_custom_call.1']
    #allocation6 [shape = 'u8[8192]{0}', space=vmem, size = 0x2000, scoped, tag = 'output window, operand 0']
    #allocation7 [shape = 'u8[8192]{0}', space=vmem, size = 0x2000, scoped, tag = 'output window, operand 1']
    #allocation8 [shape = 's32[2]{0}', space=sflag, size = 0x8, scoped, tag = 'scoped memory for tpu_custom_call.1']
    #allocation9 [shape = 'u8[16384]{0}', space=vmem, size = 0x4000, scoped, tag = 'output window, operand 2']
    %28 = vsyncpa [#allocation4], 0
    %29 = vsyncpa [#allocation5], 0
    %s30 = scalar_lea.sflag [#allocation5], 1
    %31 = vsyncpa %s30, 0
    %32 = vsyncpa [#allocation8], 0
    %s33 = scalar_lea.sflag [#allocation8], 1
    %34 = vsyncpa %s33, 0
    loop: start=0, step=1, limit=4
    $region2: #{tpu_custom_call.1} parent=1 // loop_pre_header
      _
    $region3: #{tpu_custom_call.1} parent=1 // loop_header
      %s36 = sphi 0, %s40
      %p37 = scmp.ge.s32.totalorder %s36, 4
      %s46 = sphi 0, %s48
      %s49 = sphi 0, %s46
      %s50 = sphi 0, %s49
      %s66 = sphi 0, %s50
      %s72 = sphi 0, %s74
      %s75 = sphi 0, %s72
      %s76 = sphi 0, %s75
      %s92 = sphi 0, %s76
      %s98 = sphi 0, %s100
      %s101 = sphi 0, %s98
      %s102 = sphi 0, %s101
      %s118 = sphi 0, %s102
      %s124 = sphi 0, %s126
      %s127 = sphi 0, %s124
      %s128 = sphi 0, %s127
      %s144 = sphi 0, %s128
      %s148 = sphi 0, %s148
      %s150 = sphi 0, %s148
      %s151 = sphi 0, %s150
      %s165 = sphi 0, %s151
      %s169 = sphi 0, %s169
      %s171 = sphi 0, %s169
      %s172 = sphi 0, %s171
      %s186 = sphi 0, %s172
      %s190 = sphi 0, %s190
      %s192 = sphi 0, %s190
      %s193 = sphi 0, %s192
      %s207 = sphi 0, %s193
      %s211 = sphi 0, %s211
      %s213 = sphi 0, %s211
      %s214 = sphi 0, %s213
      %s228 = sphi 0, %s214
      %s232 = sphi 0, %s232
      %s234 = sphi 0, %s232
      %s235 = sphi 0, %s234
      %s249 = sphi 0, %s235
      %s253 = sphi 0, %s253
      %s255 = sphi 0, %s253
      %s256 = sphi 0, %s255
      %s270 = sphi 0, %s256
      %s274 = sphi 0, %s274
      %s276 = sphi 0, %s274
      %s277 = sphi 0, %s276
      %s291 = sphi 0, %s277
      %s295 = sphi 0, %s295
      %s297 = sphi 0, %s295
      %s298 = sphi 0, %s297
      %s312 = sphi 0, %s298
      %s316 = sphi 0, %s316
      %s318 = sphi 0, %s316
      %s319 = sphi 0, %s318
      %s333 = sphi 0, %s319
      %s337 = sphi 0, %s337
      %s339 = sphi 0, %s337
      %s340 = sphi 0, %s339
      %s354 = sphi 0, %s340
      %s358 = sphi 0, %s358
      %s360 = sphi 0, %s358
      %s361 = sphi 0, %s360
      %s375 = sphi 0, %s361
      %s379 = sphi 0, %s379
      %s381 = sphi 0, %s379
      %s382 = sphi 0, %s381
      %s396 = sphi 0, %s382
      %s400 = sphi 0, %s400
      %s402 = sphi 0, %s400
      %s403 = sphi 0, %s402
      %s417 = sphi 0, %s403
      %s421 = sphi 0, %s421
      %s423 = sphi 0, %s421
      %s424 = sphi 0, %s423
      %s438 = sphi 0, %s424
      %s444 = sphi 0, %s446
      %s447 = sphi 0, %s444
      %s448 = sphi 0, %s447
      %s464 = sphi 0, %s448
      %s470 = sphi 0, %s472
      %s473 = sphi 0, %s470
      %s474 = sphi 0, %s473
      %s490 = sphi 0, %s474
      %s496 = sphi 0, %s498
      %s499 = sphi 0, %s496
      %s500 = sphi 0, %s499
      %s516 = sphi 0, %s500
    $region4: #{tpu_custom_call.1} parent=1 // loop_header_branch
      %39 = sbr.rel (%p37) target = $region8
    $region5: #{tpu_custom_call.1} parent=1 // loop_body
      %s41 = ssub.s32 %s36, 1
      %s42 = ssub.s32 %s36, 2
      %s43 = sadd.s32 %s36, 1
      %s44 = ssub.s32 %s36, %s43
      %p45 = scmp.eq.s32.totalorder %s44, 0
      %s47 = sadd.s32 %s46, 1
      %s48 = scalar_select %p45, %s46, %s47
      %p51 = pneg %p45
      %p52 = scmp.eq.s32.totalorder %s36, 1
      %p53 = por %p51, %p52
      %p54 = scmp.ne.s32.totalorder %s46, %s49
      %p55 = scmp.eq.s32.totalorder %s36, 0
      %p56 = por %p54, %p55
      %p57 = scmp.ne.s32.totalorder %s46, %s49
      %p58 = scmp.eq.s32.totalorder %s41, 1
      %p59 = por %p57, %p58
      %p60 = scmp.ne.s32.totalorder %s49, %s50
      %p61 = scmp.eq.s32.totalorder %s41, 0
      %p62 = por %p60, %p61
      %p63 = scmp.ne.s32.totalorder %s49, %s50
      %p64 = scmp.eq.s32.totalorder %s42, 1
      %p65 = por %p63, %p64
      %p67 = scmp.ne.s32.totalorder %s50, %s66
      %p68 = scmp.eq.s32.totalorder %s42, 0
      %p69 = por %p67, %p68
      %s70 = ssub.s32 %s36, %s43
      %p71 = scmp.eq.s32.totalorder %s70, 0
      %s73 = sadd.s32 %s72, 1
      %s74 = scalar_select %p71, %s72, %s73
      %p77 = pneg %p71
      %p78 = scmp.eq.s32.totalorder %s36, 1
      %p79 = por %p77, %p78
      %p80 = scmp.ne.s32.totalorder %s72, %s75
      %p81 = scmp.eq.s32.totalorder %s36, 0
      %p82 = por %p80, %p81
      %p83 = scmp.ne.s32.totalorder %s72, %s75
      %p84 = scmp.eq.s32.totalorder %s41, 1
      %p85 = por %p83, %p84
      %p86 = scmp.ne.s32.totalorder %s75, %s76
      %p87 = scmp.eq.s32.totalorder %s41, 0
      %p88 = por %p86, %p87
      %p89 = scmp.ne.s32.totalorder %s75, %s76
      %p90 = scmp.eq.s32.totalorder %s42, 1
      %p91 = por %p89, %p90
      %p93 = scmp.ne.s32.totalorder %s76, %s92
      %p94 = scmp.eq.s32.totalorder %s42, 0
      %p95 = por %p93, %p94
      %s96 = ssub.s32 %s36, %s43
      %p97 = scmp.eq.s32.totalorder %s96, 0
      %s99 = sadd.s32 %s98, 1
      %s100 = scalar_select %p97, %s98, %s99
      %p103 = pneg %p97
      %p104 = scmp.eq.s32.totalorder %s36, 1
      %p105 = por %p103, %p104
      %p106 = scmp.ne.s32.totalorder %s98, %s101
      %p107 = scmp.eq.s32.totalorder %s36, 0
      %p108 = por %p106, %p107
      %p109 = scmp.ne.s32.totalorder %s98, %s101
      %p110 = scmp.eq.s32.totalorder %s41, 1
      %p111 = por %p109, %p110
      %p112 = scmp.ne.s32.totalorder %s101, %s102
      %p113 = scmp.eq.s32.totalorder %s41, 0
      %p114 = por %p112, %p113
      %p115 = scmp.ne.s32.totalorder %s101, %s102
      %p116 = scmp.eq.s32.totalorder %s42, 1
      %p117 = por %p115, %p116
      %p119 = scmp.ne.s32.totalorder %s102, %s118
      %p120 = scmp.eq.s32.totalorder %s42, 0
      %p121 = por %p119, %p120
      %s122 = ssub.s32 %s36, %s43
      %p123 = scmp.eq.s32.totalorder %s122, 0
      %s125 = sadd.s32 %s124, 1
      %s126 = scalar_select %p123, %s124, %s125
      %p129 = pneg %p123
      %p130 = scmp.eq.s32.totalorder %s36, 1
      %p131 = por %p129, %p130
      %p132 = scmp.ne.s32.totalorder %s124, %s127
      %p133 = scmp.eq.s32.totalorder %s36, 0
      %p134 = por %p132, %p133
      %p135 = scmp.ne.s32.totalorder %s124, %s127
      %p136 = scmp.eq.s32.totalorder %s41, 1
      %p137 = por %p135, %p136
      %p138 = scmp.ne.s32.totalorder %s127, %s128
      %p139 = scmp.eq.s32.totalorder %s41, 0
      %p140 = por %p138, %p139
      %p141 = scmp.ne.s32.totalorder %s127, %s128
      %p142 = scmp.eq.s32.totalorder %s42, 1
      %p143 = por %p141, %p142
      %p145 = scmp.ne.s32.totalorder %s128, %s144
      %p146 = scmp.eq.s32.totalorder %s42, 0
      %p147 = por %p145, %p146
      %s149 = sadd.s32 %s148, 1
      %p152 = scmp.eq.s32.totalorder %s36, 1
      %p153 = scmp.ne.s32.totalorder %s148, %s150
      %p154 = scmp.eq.s32.totalorder %s36, 0
      %p155 = por %p153, %p154
      %p156 = scmp.ne.s32.totalorder %s148, %s150
      %p157 = scmp.eq.s32.totalorder %s41, 1
      %p158 = por %p156, %p157
      %p159 = scmp.ne.s32.totalorder %s150, %s151
      %p160 = scmp.eq.s32.totalorder %s41, 0
      %p161 = por %p159, %p160
      %p162 = scmp.ne.s32.totalorder %s150, %s151
      %p163 = scmp.eq.s32.totalorder %s42, 1
      %p164 = por %p162, %p163
      %p166 = scmp.ne.s32.totalorder %s151, %s165
      %p167 = scmp.eq.s32.totalorder %s42, 0
      %p168 = por %p166, %p167
      %s170 = sadd.s32 %s169, 1
      %p173 = scmp.eq.s32.totalorder %s36, 1
      %p174 = scmp.ne.s32.totalorder %s169, %s171
      %p175 = scmp.eq.s32.totalorder %s36, 0
      %p176 = por %p174, %p175
      %p177 = scmp.ne.s32.totalorder %s169, %s171
      %p178 = scmp.eq.s32.totalorder %s41, 1
      %p179 = por %p177, %p178
      %p180 = scmp.ne.s32.totalorder %s171, %s172
      %p181 = scmp.eq.s32.totalorder %s41, 0
      %p182 = por %p180, %p181
      %p183 = scmp.ne.s32.totalorder %s171, %s172
      %p184 = scmp.eq.s32.totalorder %s42, 1
      %p185 = por %p183, %p184
      %p187 = scmp.ne.s32.totalorder %s172, %s186
      %p188 = scmp.eq.s32.totalorder %s42, 0
      %p189 = por %p187, %p188
      %s191 = sadd.s32 %s190, 1
      %p194 = scmp.eq.s32.totalorder %s36, 1
      %p195 = scmp.ne.s32.totalorder %s190, %s192
      %p196 = scmp.eq.s32.totalorder %s36, 0
      %p197 = por %p195, %p196
      %p198 = scmp.ne.s32.totalorder %s190, %s192
      %p199 = scmp.eq.s32.totalorder %s41, 1
      %p200 = por %p198, %p199
      %p201 = scmp.ne.s32.totalorder %s192, %s193
      %p202 = scmp.eq.s32.totalorder %s41, 0
      %p203 = por %p201, %p202
      %p204 = scmp.ne.s32.totalorder %s192, %s193
      %p205 = scmp.eq.s32.totalorder %s42, 1
      %p206 = por %p204, %p205
      %p208 = scmp.ne.s32.totalorder %s193, %s207
      %p209 = scmp.eq.s32.totalorder %s42, 0
      %p210 = por %p208, %p209
      %s212 = sadd.s32 %s211, 1
      %p215 = scmp.eq.s32.totalorder %s36, 1
      %p216 = scmp.ne.s32.totalorder %s211, %s213
      %p217 = scmp.eq.s32.totalorder %s36, 0
      %p218 = por %p216, %p217
      %p219 = scmp.ne.s32.totalorder %s211, %s213
      %p220 = scmp.eq.s32.totalorder %s41, 1
      %p221 = por %p219, %p220
      %p222 = scmp.ne.s32.totalorder %s213, %s214
      %p223 = scmp.eq.s32.totalorder %s41, 0
      %p224 = por %p222, %p223
      %p225 = scmp.ne.s32.totalorder %s213, %s214
      %p226 = scmp.eq.s32.totalorder %s42, 1
      %p227 = por %p225, %p226
      %p229 = scmp.ne.s32.totalorder %s214, %s228
      %p230 = scmp.eq.s32.totalorder %s42, 0
      %p231 = por %p229, %p230
      %s233 = sadd.s32 %s232, 1
      %p236 = scmp.eq.s32.totalorder %s36, 1
      %p237 = scmp.ne.s32.totalorder %s232, %s234
      %p238 = scmp.eq.s32.totalorder %s36, 0
      %p239 = por %p237, %p238
      %p240 = scmp.ne.s32.totalorder %s232, %s234
      %p241 = scmp.eq.s32.totalorder %s41, 1
      %p242 = por %p240, %p241
      %p243 = scmp.ne.s32.totalorder %s234, %s235
      %p244 = scmp.eq.s32.totalorder %s41, 0
      %p245 = por %p243, %p244
      %p246 = scmp.ne.s32.totalorder %s234, %s235
      %p247 = scmp.eq.s32.totalorder %s42, 1
      %p248 = por %p246, %p247
      %p250 = scmp.ne.s32.totalorder %s235, %s249
      %p251 = scmp.eq.s32.totalorder %s42, 0
      %p252 = por %p250, %p251
      %s254 = sadd.s32 %s253, 1
      %p257 = scmp.eq.s32.totalorder %s36, 1
      %p258 = scmp.ne.s32.totalorder %s253, %s255
      %p259 = scmp.eq.s32.totalorder %s36, 0
      %p260 = por %p258, %p259
      %p261 = scmp.ne.s32.totalorder %s253, %s255
      %p262 = scmp.eq.s32.totalorder %s41, 1
      %p263 = por %p261, %p262
      %p264 = scmp.ne.s32.totalorder %s255, %s256
      %p265 = scmp.eq.s32.totalorder %s41, 0
      %p266 = por %p264, %p265
      %p267 = scmp.ne.s32.totalorder %s255, %s256
      %p268 = scmp.eq.s32.totalorder %s42, 1
      %p269 = por %p267, %p268
      %p271 = scmp.ne.s32.totalorder %s256, %s270
      %p272 = scmp.eq.s32.totalorder %s42, 0
      %p273 = por %p271, %p272
      %s275 = sadd.s32 %s274, 1
      %p278 = scmp.eq.s32.totalorder %s36, 1
      %p279 = scmp.ne.s32.totalorder %s274, %s276
      %p280 = scmp.eq.s32.totalorder %s36, 0
      %p281 = por %p279, %p280
      %p282 = scmp.ne.s32.totalorder %s274, %s276
      %p283 = scmp.eq.s32.totalorder %s41, 1
      %p284 = por %p282, %p283
      %p285 = scmp.ne.s32.totalorder %s276, %s277
      %p286 = scmp.eq.s32.totalorder %s41, 0
      %p287 = por %p285, %p286
      %p288 = scmp.ne.s32.totalorder %s276, %s277
      %p289 = scmp.eq.s32.totalorder %s42, 1
      %p290 = por %p288, %p289
      %p292 = scmp.ne.s32.totalorder %s277, %s291
      %p293 = scmp.eq.s32.totalorder %s42, 0
      %p294 = por %p292, %p293
      %s296 = sadd.s32 %s295, 1
      %p299 = scmp.eq.s32.totalorder %s36, 1
      %p300 = scmp.ne.s32.totalorder %s295, %s297
      %p301 = scmp.eq.s32.totalorder %s36, 0
      %p302 = por %p300, %p301
      %p303 = scmp.ne.s32.totalorder %s295, %s297
      %p304 = scmp.eq.s32.totalorder %s41, 1
      %p305 = por %p303, %p304
      %p306 = scmp.ne.s32.totalorder %s297, %s298
      %p307 = scmp.eq.s32.totalorder %s41, 0
      %p308 = por %p306, %p307
      %p309 = scmp.ne.s32.totalorder %s297, %s298
      %p310 = scmp.eq.s32.totalorder %s42, 1
      %p311 = por %p309, %p310
      %p313 = scmp.ne.s32.totalorder %s298, %s312
      %p314 = scmp.eq.s32.totalorder %s42, 0
      %p315 = por %p313, %p314
      %s317 = sadd.s32 %s316, 1
      %p320 = scmp.eq.s32.totalorder %s36, 1
      %p321 = scmp.ne.s32.totalorder %s316, %s318
      %p322 = scmp.eq.s32.totalorder %s36, 0
      %p323 = por %p321, %p322
      %p324 = scmp.ne.s32.totalorder %s316, %s318
      %p325 = scmp.eq.s32.totalorder %s41, 1
      %p326 = por %p324, %p325
      %p327 = scmp.ne.s32.totalorder %s318, %s319
      %p328 = scmp.eq.s32.totalorder %s41, 0
      %p329 = por %p327, %p328
      %p330 = scmp.ne.s32.totalorder %s318, %s319
      %p331 = scmp.eq.s32.totalorder %s42, 1
      %p332 = por %p330, %p331
      %p334 = scmp.ne.s32.totalorder %s319, %s333
      %p335 = scmp.eq.s32.totalorder %s42, 0
      %p336 = por %p334, %p335
      %s338 = sadd.s32 %s337, 1
      %p341 = scmp.eq.s32.totalorder %s36, 1
      %p342 = scmp.ne.s32.totalorder %s337, %s339
      %p343 = scmp.eq.s32.totalorder %s36, 0
      %p344 = por %p342, %p343
      %p345 = scmp.ne.s32.totalorder %s337, %s339
      %p346 = scmp.eq.s32.totalorder %s41, 1
      %p347 = por %p345, %p346
      %p348 = scmp.ne.s32.totalorder %s339, %s340
      %p349 = scmp.eq.s32.totalorder %s41, 0
      %p350 = por %p348, %p349
      %p351 = scmp.ne.s32.totalorder %s339, %s340
      %p352 = scmp.eq.s32.totalorder %s42, 1
      %p353 = por %p351, %p352
      %p355 = scmp.ne.s32.totalorder %s340, %s354
      %p356 = scmp.eq.s32.totalorder %s42, 0
      %p357 = por %p355, %p356
      %s359 = sadd.s32 %s358, 1
      %p362 = scmp.eq.s32.totalorder %s36, 1
      %p363 = scmp.ne.s32.totalorder %s358, %s360
      %p364 = scmp.eq.s32.totalorder %s36, 0
      %p365 = por %p363, %p364
      %p366 = scmp.ne.s32.totalorder %s358, %s360
      %p367 = scmp.eq.s32.totalorder %s41, 1
      %p368 = por %p366, %p367
      %p369 = scmp.ne.s32.totalorder %s360, %s361
      %p370 = scmp.eq.s32.totalorder %s41, 0
      %p371 = por %p369, %p370
      %p372 = scmp.ne.s32.totalorder %s360, %s361
      %p373 = scmp.eq.s32.totalorder %s42, 1
      %p374 = por %p372, %p373
      %p376 = scmp.ne.s32.totalorder %s361, %s375
      %p377 = scmp.eq.s32.totalorder %s42, 0
      %p378 = por %p376, %p377
      %s380 = sadd.s32 %s379, 1
      %p383 = scmp.eq.s32.totalorder %s36, 1
      %p384 = scmp.ne.s32.totalorder %s379, %s381
      %p385 = scmp.eq.s32.totalorder %s36, 0
      %p386 = por %p384, %p385
      %p387 = scmp.ne.s32.totalorder %s379, %s381
      %p388 = scmp.eq.s32.totalorder %s41, 1
      %p389 = por %p387, %p388
      %p390 = scmp.ne.s32.totalorder %s381, %s382
      %p391 = scmp.eq.s32.totalorder %s41, 0
      %p392 = por %p390, %p391
      %p393 = scmp.ne.s32.totalorder %s381, %s382
      %p394 = scmp.eq.s32.totalorder %s42, 1
      %p395 = por %p393, %p394
      %p397 = scmp.ne.s32.totalorder %s382, %s396
      %p398 = scmp.eq.s32.totalorder %s42, 0
      %p399 = por %p397, %p398
      %s401 = sadd.s32 %s400, 1
      %p404 = scmp.eq.s32.totalorder %s36, 1
      %p405 = scmp.ne.s32.totalorder %s400, %s402
      %p406 = scmp.eq.s32.totalorder %s36, 0
      %p407 = por %p405, %p406
      %p408 = scmp.ne.s32.totalorder %s400, %s402
      %p409 = scmp.eq.s32.totalorder %s41, 1
      %p410 = por %p408, %p409
      %p411 = scmp.ne.s32.totalorder %s402, %s403
      %p412 = scmp.eq.s32.totalorder %s41, 0
      %p413 = por %p411, %p412
      %p414 = scmp.ne.s32.totalorder %s402, %s403
      %p415 = scmp.eq.s32.totalorder %s42, 1
      %p416 = por %p414, %p415
      %p418 = scmp.ne.s32.totalorder %s403, %s417
      %p419 = scmp.eq.s32.totalorder %s42, 0
      %p420 = por %p418, %p419
      %s422 = sadd.s32 %s421, 1
      %p425 = scmp.eq.s32.totalorder %s36, 1
      %p426 = scmp.ne.s32.totalorder %s421, %s423
      %p427 = scmp.eq.s32.totalorder %s36, 0
      %p428 = por %p426, %p427
      %p429 = scmp.ne.s32.totalorder %s421, %s423
      %p430 = scmp.eq.s32.totalorder %s41, 1
      %p431 = por %p429, %p430
      %p432 = scmp.ne.s32.totalorder %s423, %s424
      %p433 = scmp.eq.s32.totalorder %s41, 0
      %p434 = por %p432, %p433
      %p435 = scmp.ne.s32.totalorder %s423, %s424
      %p436 = scmp.eq.s32.totalorder %s42, 1
      %p437 = por %p435, %p436
      %p439 = scmp.ne.s32.totalorder %s424, %s438
      %p440 = scmp.eq.s32.totalorder %s42, 0
      %p441 = por %p439, %p440
      %s442 = ssub.s32 %s36, %s43
      %p443 = scmp.eq.s32.totalorder %s442, 0
      %s445 = sadd.s32 %s444, 1
      %s446 = scalar_select %p443, %s444, %s445
      %p449 = pneg %p443
      %p450 = scmp.eq.s32.totalorder %s36, 1
      %p451 = por %p449, %p450
      %p452 = scmp.ne.s32.totalorder %s444, %s447
      %p453 = scmp.eq.s32.totalorder %s36, 0
      %p454 = por %p452, %p453
      %p455 = scmp.ne.s32.totalorder %s444, %s447
      %p456 = scmp.eq.s32.totalorder %s41, 1
      %p457 = por %p455, %p456
      %p458 = scmp.ne.s32.totalorder %s447, %s448
      %p459 = scmp.eq.s32.totalorder %s41, 0
      %p460 = por %p458, %p459
      %p461 = scmp.ne.s32.totalorder %s447, %s448
      %p462 = scmp.eq.s32.totalorder %s42, 1
      %p463 = por %p461, %p462
      %p465 = scmp.ne.s32.totalorder %s448, %s464
      %p466 = scmp.eq.s32.totalorder %s42, 0
      %p467 = por %p465, %p466
      %s468 = ssub.s32 %s36, %s43
      %p469 = scmp.eq.s32.totalorder %s468, 0
      %s471 = sadd.s32 %s470, 1
      %s472 = scalar_select %p469, %s470, %s471
      %p475 = pneg %p469
      %p476 = scmp.eq.s32.totalorder %s36, 1
      %p477 = por %p475, %p476
      %p478 = scmp.ne.s32.totalorder %s470, %s473
      %p479 = scmp.eq.s32.totalorder %s36, 0
      %p480 = por %p478, %p479
      %p481 = scmp.ne.s32.totalorder %s470, %s473
      %p482 = scmp.eq.s32.totalorder %s41, 1
      %p483 = por %p481, %p482
      %p484 = scmp.ne.s32.totalorder %s473, %s474
      %p485 = scmp.eq.s32.totalorder %s41, 0
      %p486 = por %p484, %p485
      %p487 = scmp.ne.s32.totalorder %s473, %s474
      %p488 = scmp.eq.s32.totalorder %s42, 1
      %p489 = por %p487, %p488
      %p491 = scmp.ne.s32.totalorder %s474, %s490
      %p492 = scmp.eq.s32.totalorder %s42, 0
      %p493 = por %p491, %p492
      %s494 = ssub.s32 %s36, %s43
      %p495 = scmp.eq.s32.totalorder %s494, 0
      %s497 = sadd.s32 %s496, 1
      %s498 = scalar_select %p495, %s496, %s497
      %p501 = pneg %p495
      %p502 = scmp.eq.s32.totalorder %s36, 1
      %p503 = por %p501, %p502
      %p504 = scmp.ne.s32.totalorder %s496, %s499
      %p505 = scmp.eq.s32.totalorder %s36, 0
      %p506 = por %p504, %p505
      %p507 = scmp.ne.s32.totalorder %s496, %s499
      %p508 = scmp.eq.s32.totalorder %s41, 1
      %p509 = por %p507, %p508
      %p510 = scmp.ne.s32.totalorder %s499, %s500
      %p511 = scmp.eq.s32.totalorder %s41, 0
      %p512 = por %p510, %p511
      %p513 = scmp.ne.s32.totalorder %s499, %s500
      %p514 = scmp.eq.s32.totalorder %s42, 1
      %p515 = por %p513, %p514
      %p517 = scmp.ne.s32.totalorder %s500, %s516
      %p518 = scmp.eq.s32.totalorder %s42, 0
      %p519 = por %p517, %p518
      %p520 = scmp.le.s32.totalorder 1, %s36
      %p521 = scmp.lt.s32.totalorder %s36, 3
      %p522 = pnand %p520, %p521
      %p523 = pneg %p522
      // Predicated region
      $region9: #{tpu_custom_call.1} parent=5 // pred_check
        _
      $region10: #{tpu_custom_call.1} parent=5 // pred_check_branch
        %525 = sbr.rel (%p522) target = $region12
      $region11: #{tpu_custom_call.1} parent=5 // pred_region
        %s526 = ssub.s32 %s36, 1
        // Predicated region
        $region13: #{tpu_custom_call.1} parent=11 // pred_check
          %p527 = pneg %p161
        $region14: #{tpu_custom_call.1} parent=11 // pred_check_branch
          %529 = sbr.rel (%p527) target = $region16
        $region15: #{tpu_custom_call.1} parent=11 // pred_region
          _
        $region16: #{tpu_custom_call.1} parent=11 // pred_fallthru
          _
        // Predicated region
        $region17: #{tpu_custom_call.1} parent=11 // pred_check
          %p530 = pneg %p182
        $region18: #{tpu_custom_call.1} parent=11 // pred_check_branch
          %532 = sbr.rel (%p530) target = $region20
        $region19: #{tpu_custom_call.1} parent=11 // pred_region
          _
        $region20: #{tpu_custom_call.1} parent=11 // pred_fallthru
          _
        // Predicated region
        $region21: #{tpu_custom_call.1} parent=11 // pred_check
          %p533 = pneg %p203
        $region22: #{tpu_custom_call.1} parent=11 // pred_check_branch
          %535 = sbr.rel (%p533) target = $region24
        $region23: #{tpu_custom_call.1} parent=11 // pred_region
          _
        $region24: #{tpu_custom_call.1} parent=11 // pred_fallthru
          _
        // Predicated region
        $region25: #{tpu_custom_call.1} parent=11 // pred_check
          %p536 = pneg %p224
        $region26: #{tpu_custom_call.1} parent=11 // pred_check_branch
          %538 = sbr.rel (%p536) target = $region28
        $region27: #{tpu_custom_call.1} parent=11 // pred_region
          %s540 = ssub.s32 28672, 28672
          %541 = vsyncadd [#allocation4], %s540
          %s542 = sshll.u32 [#allocation3], 4
          %s543 = int_to_ptr.vmem [resolvable:$true] %s542
          %548 = dma.hbm_to_vmem [thread:$0]  %s7, 28672, %s543, [#allocation4], 128, 128, 8
        $region28: #{tpu_custom_call.1} parent=11 // pred_fallthru
          _
        // Predicated region
        $region29: #{tpu_custom_call.1} parent=11 // pred_check
          %p549 = pneg %p245
        $region30: #{tpu_custom_call.1} parent=11 // pred_check_branch
          %551 = sbr.rel (%p549) target = $region32
        $region31: #{tpu_custom_call.1} parent=11 // pred_region
          _
        $region32: #{tpu_custom_call.1} parent=11 // pred_fallthru
          _
        // Predicated region
        $region33: #{tpu_custom_call.1} parent=11 // pred_check
          %p552 = pneg %p266
        $region34: #{tpu_custom_call.1} parent=11 // pred_check_branch
          %554 = sbr.rel (%p552) target = $region36
        $region35: #{tpu_custom_call.1} parent=11 // pred_region
          _
        $region36: #{tpu_custom_call.1} parent=11 // pred_fallthru
          _
        // Predicated region
        $region37: #{tpu_custom_call.1} parent=11 // pred_check
          %p555 = pneg %p287
        $region38: #{tpu_custom_call.1} parent=11 // pred_check_branch
          %557 = sbr.rel (%p555) target = $region40
        $region39: #{tpu_custom_call.1} parent=11 // pred_region
          _
        $region40: #{tpu_custom_call.1} parent=11 // pred_fallthru
          _
        // Predicated region
        $region41: #{tpu_custom_call.1} parent=11 // pred_check
          %p558 = pneg %p308
        $region42: #{tpu_custom_call.1} parent=11 // pred_check_branch
          %560 = sbr.rel (%p558) target = $region44
        $region43: #{tpu_custom_call.1} parent=11 // pred_region
          _
        $region44: #{tpu_custom_call.1} parent=11 // pred_fallthru
          _
        // Predicated region
        $region45: #{tpu_custom_call.1} parent=11 // pred_check
          %p561 = pneg %p329
        $region46: #{tpu_custom_call.1} parent=11 // pred_check_branch
          %563 = sbr.rel (%p561) target = $region48
        $region47: #{tpu_custom_call.1} parent=11 // pred_region
          _
        $region48: #{tpu_custom_call.1} parent=11 // pred_fallthru
          _
        // Predicated region
        $region49: #{tpu_custom_call.1} parent=11 // pred_check
          %p564 = pneg %p350
        $region50: #{tpu_custom_call.1} parent=11 // pred_check_branch
          %566 = sbr.rel (%p564) target = $region52
        $region51: #{tpu_custom_call.1} parent=11 // pred_region
          _
        $region52: #{tpu_custom_call.1} parent=11 // pred_fallthru
          _
        // Predicated region
        $region53: #{tpu_custom_call.1} parent=11 // pred_check
          %p567 = pneg %p371
        $region54: #{tpu_custom_call.1} parent=11 // pred_check_branch
          %569 = sbr.rel (%p567) target = $region56
        $region55: #{tpu_custom_call.1} parent=11 // pred_region
          _
        $region56: #{tpu_custom_call.1} parent=11 // pred_fallthru
          _
        // Predicated region
        $region57: #{tpu_custom_call.1} parent=11 // pred_check
          %p570 = pneg %p392
        $region58: #{tpu_custom_call.1} parent=11 // pred_check_branch
          %572 = sbr.rel (%p570) target = $region60
        $region59: #{tpu_custom_call.1} parent=11 // pred_region
          _
        $region60: #{tpu_custom_call.1} parent=11 // pred_fallthru
          _
        // Predicated region
        $region61: #{tpu_custom_call.1} parent=11 // pred_check
          %p573 = pneg %p413
        $region62: #{tpu_custom_call.1} parent=11 // pred_check_branch
          %575 = sbr.rel (%p573) target = $region64
        $region63: #{tpu_custom_call.1} parent=11 // pred_region
          _
        $region64: #{tpu_custom_call.1} parent=11 // pred_fallthru
          _
        // Predicated region
        $region65: #{tpu_custom_call.1} parent=11 // pred_check
          %p576 = pneg %p434
        $region66: #{tpu_custom_call.1} parent=11 // pred_check_branch
          %578 = sbr.rel (%p576) target = $region68
        $region67: #{tpu_custom_call.1} parent=11 // pred_region
          _
        $region68: #{tpu_custom_call.1} parent=11 // pred_fallthru
          _
      $region12: #{tpu_custom_call.1} parent=5 // pred_fallthru
        _
      %p579 = scmp.lt.s32.totalorder %s36, 2
      // Predicated region
      $region69: #{tpu_custom_call.1} parent=5 // pred_check
        %p580 = pneg %p579
      $region70: #{tpu_custom_call.1} parent=5 // pred_check_branch
        %582 = sbr.rel (%p580) target = $region72
      $region71: #{tpu_custom_call.1} parent=5 // pred_region
        // Predicated region
        $region73: #{tpu_custom_call.1} parent=71 // pred_check
          %p583 = pneg %p56
        $region74: #{tpu_custom_call.1} parent=71 // pred_check_branch
          %585 = sbr.rel (%p583) target = $region76
        $region75: #{tpu_custom_call.1} parent=71 // pred_region
          %s586 = smul.u32 32, %s36
          %p587 = scmp.lt.s32.totalorder %s586, 63
          %s588 = scalar_select %p587, %s586, 63
          %s589 = smul.addr %s588, 8
          %s590 = scalar_lea.vmem %s0, %s589
          %s591 = smul.u32 32, %s36
        $region76: #{tpu_custom_call.1} parent=71 // pred_fallthru
          _
        // Predicated region
        $region77: #{tpu_custom_call.1} parent=71 // pred_check
          %p592 = pneg %p82
        $region78: #{tpu_custom_call.1} parent=71 // pred_check_branch
          %594 = sbr.rel (%p592) target = $region80
        $region79: #{tpu_custom_call.1} parent=71 // pred_region
          %p595 = scmp.lt.s32.totalorder %s36, 1
          %s596 = scalar_select %p595, %s36, 1
          %s597 = smul.addr %s596, 8
          %s598 = scalar_lea.vmem %s1, %s597
        $region80: #{tpu_custom_call.1} parent=71 // pred_fallthru
          _
        // Predicated region
        $region81: #{tpu_custom_call.1} parent=71 // pred_check
          %p599 = pneg %p108
        $region82: #{tpu_custom_call.1} parent=71 // pred_check_branch
          %601 = sbr.rel (%p599) target = $region84
        $region83: #{tpu_custom_call.1} parent=71 // pred_region
          %p602 = scmp.lt.s32.totalorder %s36, 1
          %s603 = scalar_select %p602, %s36, 1
          %s604 = smul.addr %s603, 8
          %s605 = scalar_lea.vmem %s2, %s604
        $region84: #{tpu_custom_call.1} parent=71 // pred_fallthru
          _
        // Predicated region
        $region85: #{tpu_custom_call.1} parent=71 // pred_check
          %p606 = pneg %p134
        $region86: #{tpu_custom_call.1} parent=71 // pred_check_branch
          %608 = sbr.rel (%p606) target = $region88
        $region87: #{tpu_custom_call.1} parent=71 // pred_region
          %p609 = scmp.lt.s32.totalorder %s36, 1
          %s610 = scalar_select %p609, %s36, 1
          %s611 = smul.addr %s610, 8
          %s612 = scalar_lea.vmem %s3, %s611
        $region88: #{tpu_custom_call.1} parent=71 // pred_fallthru
          _
      $region72: #{tpu_custom_call.1} parent=5 // pred_fallthru
        _
      %p613 = scmp.le.s32.totalorder 1, %s36
      %p614 = scmp.lt.s32.totalorder %s36, 3
      %p615 = pnand %p613, %p614
      %p616 = pneg %p615
      // Predicated region
      $region89: #{tpu_custom_call.1} parent=5 // pred_check
        _
      $region90: #{tpu_custom_call.1} parent=5 // pred_check_branch
        %618 = sbr.rel (%p615) target = $region92
      $region91: #{tpu_custom_call.1} parent=5 // pred_region
        %s619 = ssub.s32 %s36, 1
        // Predicated region
        $region93: #{tpu_custom_call.1} parent=91 // pred_check
          %p620 = pneg %p224
        $region94: #{tpu_custom_call.1} parent=91 // pred_check_branch
          %622 = sbr.rel (%p620) target = $region96
        $region95: #{tpu_custom_call.1} parent=91 // pred_region
          %623 = dma.done [#allocation4], 28672
        $region96: #{tpu_custom_call.1} parent=91 // pred_fallthru
          _
        %s624 = smul.u32 32, %s41
        %p625 = scmp.lt.s32.totalorder %s624, 63
        %s626 = scalar_select %p625, %s624, 63
        %s627 = smul.addr %s626, 8
        %s628 = scalar_lea.vmem %s0, %s627
        %p629 = pneg %p62
        %p630 = pneg %p59
        %p631 = scmp.lt.s32.totalorder %s41, 1
        %s632 = scalar_select %p631, %s41, 1
        %s633 = smul.addr %s632, 8
        %s634 = scalar_lea.vmem %s1, %s633
        %p635 = pneg %p88
        %p636 = pneg %p85
        %p637 = scmp.lt.s32.totalorder %s41, 1
        %s638 = scalar_select %p637, %s41, 1
        %s639 = smul.addr %s638, 8
        %s640 = scalar_lea.vmem %s2, %s639
        %p641 = pneg %p114
        %p642 = pneg %p111
        %p643 = scmp.lt.s32.totalorder %s41, 1
        %s644 = scalar_select %p643, %s41, 1
        %s645 = smul.addr %s644, 8
        %s646 = scalar_lea.vmem %s3, %s645
        %p647 = pneg %p140
        %p648 = pneg %p137
        %p649 = pneg %p161
        %p650 = pneg %p158
        %p651 = pneg %p182
        %p652 = pneg %p179
        %p653 = pneg %p203
        %p654 = pneg %p200
        %p655 = pneg %p224
        %p656 = pneg %p221
        %p657 = pneg %p245
        %p658 = pneg %p242
        %p659 = pneg %p266
        %p660 = pneg %p263
        %p661 = pneg %p287
        %p662 = pneg %p284
        %p663 = pneg %p308
        %p664 = pneg %p305
        %p665 = pneg %p329
        %p666 = pneg %p326
        %p667 = pneg %p350
        %p668 = pneg %p347
        %p669 = pneg %p371
        %p670 = pneg %p368
        %p671 = pneg %p392
        %p672 = pneg %p389
        %p673 = pneg %p413
        %p674 = pneg %p410
        %p675 = pneg %p434
        %p676 = pneg %p431
        %p677 = pneg %p460
        %p678 = pneg %p457
        %s679 = sand.u32 %s447, 1
        %s680 = scalar_lea.sflag [#allocation5], %s679
        %s681 = sand.u32 %s447, 1
        %s682 = smul.addr %s681, 8
        %s683 = scalar_lea.vmem [#allocation6], %s682
        %p684 = pneg %p486
        %p685 = pneg %p483
        %s686 = sand.u32 %s41, 1
        %s687 = scalar_lea.sflag [#allocation8], %s686
        %s688 = sand.u32 %s473, 1
        %s689 = smul.addr %s688, 8
        %s690 = scalar_lea.vmem [#allocation7], %s689
        %p691 = pneg %p512
        %p692 = pneg %p509
        %s693 = sand.u32 %s41, 1
        %s694 = scalar_lea.sflag [#allocation8], %s693
        %s695 = sand.u32 %s499, 1
        %s696 = smul.addr %s695, 16
        %s697 = scalar_lea.vmem [#allocation9], %s696
        %s698 = smul.u32 32, %s41
        %p699 = scmp.lt.s32.totalorder %s698, 63
        %s700 = scalar_select %p699, %s698, 63
        %s701 = smul.addr %s700, 8
        %s702 = scalar_lea.vmem %s0, %s701
        %s703 = smul.u32 32, %s41
        %p704 = scmp.lt.s32.totalorder %s41, 1
        %s705 = scalar_select %p704, %s41, 1
        %s706 = smul.addr %s705, 8
        %s707 = scalar_lea.vmem %s1, %s706
        %p708 = scmp.lt.s32.totalorder %s41, 1
        %s709 = scalar_select %p708, %s41, 1
        %s710 = smul.addr %s709, 8
        %s711 = scalar_lea.vmem %s2, %s710
        %p712 = scmp.lt.s32.totalorder %s41, 1
        %s713 = scalar_select %p712, %s41, 1
        %s714 = smul.addr %s713, 8
        %s715 = scalar_lea.vmem %s3, %s714
        %v717 = vld [vmem:[%s702] sm:$0xff]
        %v718 = vld [vmem:[%s702 + $0x8] sm:$0xff]
        %v719 = vld [vmem:[%s702 + $0x10] sm:$0xff]
        %v720 = vld [vmem:[%s702 + $0x18] sm:$0xff]
        %v721 = vld [vmem:[%s702 + $0x20] sm:$0xff]
        %v722 = vld [vmem:[%s702 + $0x28] sm:$0xff]
        %v723 = vld [vmem:[%s702 + $0x30] sm:$0xff]
        %v724 = vld [vmem:[%s702 + $0x38] sm:$0xff]
        %v725 = vld [vmem:[%s702 + $0x40] sm:$0xff]
        %v726 = vld [vmem:[%s702 + $0x48] sm:$0xff]
        %v727 = vld [vmem:[%s702 + $0x50] sm:$0xff]
        %v728 = vld [vmem:[%s702 + $0x58] sm:$0xff]
        %v729 = vld [vmem:[%s702 + $0x60] sm:$0xff]
        %v730 = vld [vmem:[%s702 + $0x68] sm:$0xff]
        %v731 = vld [vmem:[%s702 + $0x70] sm:$0xff]
        %v732 = vld [vmem:[%s702 + $0x78] sm:$0xff]
        %v733 = vld [vmem:[%s702 + $0x80] sm:$0xff]
        %v734 = vld [vmem:[%s702 + $0x88] sm:$0xff]
        %v735 = vld [vmem:[%s702 + $0x90] sm:$0xff]
        %v736 = vld [vmem:[%s702 + $0x98] sm:$0xff]
        %v737 = vld [vmem:[%s702 + $0xa0] sm:$0xff]
        %v738 = vld [vmem:[%s702 + $0xa8] sm:$0xff]
        %v739 = vld [vmem:[%s702 + $0xb0] sm:$0xff]
        %v740 = vld [vmem:[%s702 + $0xb8] sm:$0xff]
        %v741 = vld [vmem:[%s702 + $0xc0] sm:$0xff]
        %v742 = vld [vmem:[%s702 + $0xc8] sm:$0xff]
        %v743 = vld [vmem:[%s702 + $0xd0] sm:$0xff]
        %v744 = vld [vmem:[%s702 + $0xd8] sm:$0xff]
        %v745 = vld [vmem:[%s702 + $0xe0] sm:$0xff]
        %v746 = vld [vmem:[%s702 + $0xe8] sm:$0xff]
        %v747 = vld [vmem:[%s702 + $0xf0] sm:$0xff]
        %v748 = vld [vmem:[%s702 + $0xf8] sm:$0xff]
        %v749 = vld [vmem:[%s5] sm:$0x77]
        %751 = vset.pattern.permute.xlu0 0
        %752 = vperm.xlu0 %751, %v717
        %v753 = vpop.permute.xlu0 %752
        %756 = vset.pattern.permute.xlu0 0
        %757 = vperm.xlu0 %756, %v718
        %v758 = vpop.permute.xlu0 %757
        %761 = vset.pattern.permute.xlu0 0
        %762 = vperm.xlu0 %761, %v719
        %v763 = vpop.permute.xlu0 %762
        %766 = vset.pattern.permute.xlu0 0
        %767 = vperm.xlu0 %766, %v720
        %v768 = vpop.permute.xlu0 %767
        %771 = vset.pattern.permute.xlu0 0
        %772 = vperm.xlu0 %771, %v721
        %v773 = vpop.permute.xlu0 %772
        %776 = vset.pattern.permute.xlu0 0
        %777 = vperm.xlu0 %776, %v722
        %v778 = vpop.permute.xlu0 %777
        %781 = vset.pattern.permute.xlu0 0
        %782 = vperm.xlu0 %781, %v723
        %v783 = vpop.permute.xlu0 %782
        %786 = vset.pattern.permute.xlu0 0
        %787 = vperm.xlu0 %786, %v724
        %v788 = vpop.permute.xlu0 %787
        %791 = vset.pattern.permute.xlu0 0
        %792 = vperm.xlu0 %791, %v725
        %v793 = vpop.permute.xlu0 %792
        %796 = vset.pattern.permute.xlu0 0
        %797 = vperm.xlu0 %796, %v726
        %v798 = vpop.permute.xlu0 %797
        %801 = vset.pattern.permute.xlu0 0
        %802 = vperm.xlu0 %801, %v727
        %v803 = vpop.permute.xlu0 %802
        %806 = vset.pattern.permute.xlu0 0
        %807 = vperm.xlu0 %806, %v728
        %v808 = vpop.permute.xlu0 %807
        %811 = vset.pattern.permute.xlu0 0
        %812 = vperm.xlu0 %811, %v729
        %v813 = vpop.permute.xlu0 %812
        %816 = vset.pattern.permute.xlu0 0
        %817 = vperm.xlu0 %816, %v730
        %v818 = vpop.permute.xlu0 %817
        %821 = vset.pattern.permute.xlu0 0
        %822 = vperm.xlu0 %821, %v731
        %v823 = vpop.permute.xlu0 %822
        %826 = vset.pattern.permute.xlu0 0
        %827 = vperm.xlu0 %826, %v732
        %v828 = vpop.permute.xlu0 %827
        %831 = vset.pattern.permute.xlu0 0
        %832 = vperm.xlu0 %831, %v733
        %v833 = vpop.permute.xlu0 %832
        %836 = vset.pattern.permute.xlu0 0
        %837 = vperm.xlu0 %836, %v734
        %v838 = vpop.permute.xlu0 %837
        %841 = vset.pattern.permute.xlu0 0
        %842 = vperm.xlu0 %841, %v735
        %v843 = vpop.permute.xlu0 %842
        %846 = vset.pattern.permute.xlu0 0
        %847 = vperm.xlu0 %846, %v736
        %v848 = vpop.permute.xlu0 %847
        %851 = vset.pattern.permute.xlu0 0
        %852 = vperm.xlu0 %851, %v737
        %v853 = vpop.permute.xlu0 %852
        %856 = vset.pattern.permute.xlu0 0
        %857 = vperm.xlu0 %856, %v738
        %v858 = vpop.permute.xlu0 %857
        %861 = vset.pattern.permute.xlu0 0
        %862 = vperm.xlu0 %861, %v739
        %v863 = vpop.permute.xlu0 %862
        %866 = vset.pattern.permute.xlu0 0
        %867 = vperm.xlu0 %866, %v740
        %v868 = vpop.permute.xlu0 %867
        %871 = vset.pattern.permute.xlu0 0
        %872 = vperm.xlu0 %871, %v741
        %v873 = vpop.permute.xlu0 %872
        %876 = vset.pattern.permute.xlu0 0
        %877 = vperm.xlu0 %876, %v742
        %v878 = vpop.permute.xlu0 %877
        %881 = vset.pattern.permute.xlu0 0
        %882 = vperm.xlu0 %881, %v743
        %v883 = vpop.permute.xlu0 %882
        %886 = vset.pattern.permute.xlu0 0
        %887 = vperm.xlu0 %886, %v744
        %v888 = vpop.permute.xlu0 %887
        %891 = vset.pattern.permute.xlu0 0
        %892 = vperm.xlu0 %891, %v745
        %v893 = vpop.permute.xlu0 %892
        %896 = vset.pattern.permute.xlu0 0
        %897 = vperm.xlu0 %896, %v746
        %v898 = vpop.permute.xlu0 %897
        %901 = vset.pattern.permute.xlu0 0
        %902 = vperm.xlu0 %901, %v747
        %v903 = vpop.permute.xlu0 %902
        %906 = vset.pattern.permute.xlu0 0
        %907 = vperm.xlu0 %906, %v748
        %v908 = vpop.permute.xlu0 %907
        %v911 = vlaneseq
        %v912 = vshrl.u32 %v911, 7
        %v913 = vsub.s32 0, %v912
        %v914 = vrot.slane %v749, %v913
        %v915 = vlaneseq
        %v916 = vshrl.u32 %v915, 7
        %v917 = vsub.s32 4, %v916
        %v918 = vrot.slane %v749, %v917
        %v921 = vlaneseq
        %v922 = vshrl.u32 %v921, 7
        %v923 = vsub.s32 0, %v922
        %v924 = vrot.slane %v914, %v923
        %v925 = vlaneseq
        %v926 = vshrl.u32 %v925, 7
        %v927 = vsub.s32 0, %v926
        %v928 = vrot.slane %v918, %v927
        %v929 = vmul.f32 %v753, %v924
        %v930 = vmul.f32 %v753, %v928
        %v931 = vmul.f32 %v758, %v924
        %v932 = vmul.f32 %v758, %v928
        %v933 = vmul.f32 %v763, %v924
        %v934 = vmul.f32 %v763, %v928
        %v935 = vmul.f32 %v768, %v924
        %v936 = vmul.f32 %v768, %v928
        %v937 = vmul.f32 %v773, %v924
        %v938 = vmul.f32 %v773, %v928
        %v939 = vmul.f32 %v778, %v924
        %v940 = vmul.f32 %v778, %v928
        %v941 = vmul.f32 %v783, %v924
        %v942 = vmul.f32 %v783, %v928
        %v943 = vmul.f32 %v788, %v924
        %v944 = vmul.f32 %v788, %v928
        %v945 = vmul.f32 %v793, %v924
        %v946 = vmul.f32 %v793, %v928
        %v947 = vmul.f32 %v798, %v924
        %v948 = vmul.f32 %v798, %v928
        %v949 = vmul.f32 %v803, %v924
        %v950 = vmul.f32 %v803, %v928
        %v951 = vmul.f32 %v808, %v924
        %v952 = vmul.f32 %v808, %v928
        %v953 = vmul.f32 %v813, %v924
        %v954 = vmul.f32 %v813, %v928
        %v955 = vmul.f32 %v818, %v924
        %v956 = vmul.f32 %v818, %v928
        %v957 = vmul.f32 %v823, %v924
        %v958 = vmul.f32 %v823, %v928
        %v959 = vmul.f32 %v828, %v924
        %v960 = vmul.f32 %v828, %v928
        %v961 = vmul.f32 %v833, %v924
        %v962 = vmul.f32 %v833, %v928
        %v963 = vmul.f32 %v838, %v924
        %v964 = vmul.f32 %v838, %v928
        %v965 = vmul.f32 %v843, %v924
        %v966 = vmul.f32 %v843, %v928
        %v967 = vmul.f32 %v848, %v924
        %v968 = vmul.f32 %v848, %v928
        %v969 = vmul.f32 %v853, %v924
        %v970 = vmul.f32 %v853, %v928
        %v971 = vmul.f32 %v858, %v924
        %v972 = vmul.f32 %v858, %v928
        %v973 = vmul.f32 %v863, %v924
        %v974 = vmul.f32 %v863, %v928
        %v975 = vmul.f32 %v868, %v924
        %v976 = vmul.f32 %v868, %v928
        %v977 = vmul.f32 %v873, %v924
        %v978 = vmul.f32 %v873, %v928
        %v979 = vmul.f32 %v878, %v924
        %v980 = vmul.f32 %v878, %v928
        %v981 = vmul.f32 %v883, %v924
        %v982 = vmul.f32 %v883, %v928
        %v983 = vmul.f32 %v888, %v924
        %v984 = vmul.f32 %v888, %v928
        %v985 = vmul.f32 %v893, %v924
        %v986 = vmul.f32 %v893, %v928
        %v987 = vmul.f32 %v898, %v924
        %v988 = vmul.f32 %v898, %v928
        %v989 = vmul.f32 %v903, %v924
        %v990 = vmul.f32 %v903, %v928
        %v991 = vmul.f32 %v908, %v924
        %v992 = vmul.f32 %v908, %v928
        %993 = vset.pattern.permute.xlu0 1
        %994 = vperm.xlu0 %993, %v717
        %v995 = vpop.permute.xlu0 %994
        %997 = vset.pattern.permute.xlu0 1
        %998 = vperm.xlu0 %997, %v718
        %v999 = vpop.permute.xlu0 %998
        %1001 = vset.pattern.permute.xlu0 1
        %1002 = vperm.xlu0 %1001, %v719
        %v1003 = vpop.permute.xlu0 %1002
        %1005 = vset.pattern.permute.xlu0 1
        %1006 = vperm.xlu0 %1005, %v720
        %v1007 = vpop.permute.xlu0 %1006
        %1009 = vset.pattern.permute.xlu0 1
        %1010 = vperm.xlu0 %1009, %v721
        %v1011 = vpop.permute.xlu0 %1010
        %1013 = vset.pattern.permute.xlu0 1
        %1014 = vperm.xlu0 %1013, %v722
        %v1015 = vpop.permute.xlu0 %1014
        %1017 = vset.pattern.permute.xlu0 1
        %1018 = vperm.xlu0 %1017, %v723
        %v1019 = vpop.permute.xlu0 %1018
        %1021 = vset.pattern.permute.xlu0 1
        %1022 = vperm.xlu0 %1021, %v724
        %v1023 = vpop.permute.xlu0 %1022
        %1025 = vset.pattern.permute.xlu0 1
        %1026 = vperm.xlu0 %1025, %v725
        %v1027 = vpop.permute.xlu0 %1026
        %1029 = vset.pattern.permute.xlu0 1
        %1030 = vperm.xlu0 %1029, %v726
        %v1031 = vpop.permute.xlu0 %1030
        %1033 = vset.pattern.permute.xlu0 1
        %1034 = vperm.xlu0 %1033, %v727
        %v1035 = vpop.permute.xlu0 %1034
        %1037 = vset.pattern.permute.xlu0 1
        %1038 = vperm.xlu0 %1037, %v728
        %v1039 = vpop.permute.xlu0 %1038
        %1041 = vset.pattern.permute.xlu0 1
        %1042 = vperm.xlu0 %1041, %v729
        %v1043 = vpop.permute.xlu0 %1042
        %1045 = vset.pattern.permute.xlu0 1
        %1046 = vperm.xlu0 %1045, %v730
        %v1047 = vpop.permute.xlu0 %1046
        %1049 = vset.pattern.permute.xlu0 1
        %1050 = vperm.xlu0 %1049, %v731
        %v1051 = vpop.permute.xlu0 %1050
        %1053 = vset.pattern.permute.xlu0 1
        %1054 = vperm.xlu0 %1053, %v732
        %v1055 = vpop.permute.xlu0 %1054
        %1057 = vset.pattern.permute.xlu0 1
        %1058 = vperm.xlu0 %1057, %v733
        %v1059 = vpop.permute.xlu0 %1058
        %1061 = vset.pattern.permute.xlu0 1
        %1062 = vperm.xlu0 %1061, %v734
        %v1063 = vpop.permute.xlu0 %1062
        %1065 = vset.pattern.permute.xlu0 1
        %1066 = vperm.xlu0 %1065, %v735
        %v1067 = vpop.permute.xlu0 %1066
        %1069 = vset.pattern.permute.xlu0 1
        %1070 = vperm.xlu0 %1069, %v736
        %v1071 = vpop.permute.xlu0 %1070
        %1073 = vset.pattern.permute.xlu0 1
        %1074 = vperm.xlu0 %1073, %v737
        %v1075 = vpop.permute.xlu0 %1074
        %1077 = vset.pattern.permute.xlu0 1
        %1078 = vperm.xlu0 %1077, %v738
        %v1079 = vpop.permute.xlu0 %1078
        %1081 = vset.pattern.permute.xlu0 1
        %1082 = vperm.xlu0 %1081, %v739
        %v1083 = vpop.permute.xlu0 %1082
        %1085 = vset.pattern.permute.xlu0 1
        %1086 = vperm.xlu0 %1085, %v740
        %v1087 = vpop.permute.xlu0 %1086
        %1089 = vset.pattern.permute.xlu0 1
        %1090 = vperm.xlu0 %1089, %v741
        %v1091 = vpop.permute.xlu0 %1090
        %1093 = vset.pattern.permute.xlu0 1
        %1094 = vperm.xlu0 %1093, %v742
        %v1095 = vpop.permute.xlu0 %1094
        %1097 = vset.pattern.permute.xlu0 1
        %1098 = vperm.xlu0 %1097, %v743
        %v1099 = vpop.permute.xlu0 %1098
        %1101 = vset.pattern.permute.xlu0 1
        %1102 = vperm.xlu0 %1101, %v744
        %v1103 = vpop.permute.xlu0 %1102
        %1105 = vset.pattern.permute.xlu0 1
        %1106 = vperm.xlu0 %1105, %v745
        %v1107 = vpop.permute.xlu0 %1106
        %1109 = vset.pattern.permute.xlu0 1
        %1110 = vperm.xlu0 %1109, %v746
        %v1111 = vpop.permute.xlu0 %1110
        %1113 = vset.pattern.permute.xlu0 1
        %1114 = vperm.xlu0 %1113, %v747
        %v1115 = vpop.permute.xlu0 %1114
        %1117 = vset.pattern.permute.xlu0 1
        %1118 = vperm.xlu0 %1117, %v748
        %v1119 = vpop.permute.xlu0 %1118
        %v1121 = vlaneseq
        %v1122 = vshrl.u32 %v1121, 7
        %v1123 = vsub.s32 1, %v1122
        %v1124 = vrot.slane %v749, %v1123
        %v1125 = vlaneseq
        %v1126 = vshrl.u32 %v1125, 7
        %v1127 = vsub.s32 5, %v1126
        %v1128 = vrot.slane %v749, %v1127
        %v1131 = vlaneseq
        %v1132 = vshrl.u32 %v1131, 7
        %v1133 = vsub.s32 1, %v1132
        %v1134 = vrot.slane %v1124, %v1133
        %v1135 = vlaneseq
        %v1136 = vshrl.u32 %v1135, 7
        %v1137 = vsub.s32 1, %v1136
        %v1138 = vrot.slane %v1128, %v1137
        %v1139 = vmul.f32 %v995, %v1134
        %v1140 = vmul.f32 %v995, %v1138
        %v1141 = vmul.f32 %v999, %v1134
        %v1142 = vmul.f32 %v999, %v1138
        %v1143 = vmul.f32 %v1003, %v1134
        %v1144 = vmul.f32 %v1003, %v1138
        %v1145 = vmul.f32 %v1007, %v1134
        %v1146 = vmul.f32 %v1007, %v1138
        %v1147 = vmul.f32 %v1011, %v1134
        %v1148 = vmul.f32 %v1011, %v1138
        %v1149 = vmul.f32 %v1015, %v1134
        %v1150 = vmul.f32 %v1015, %v1138
        %v1151 = vmul.f32 %v1019, %v1134
        %v1152 = vmul.f32 %v1019, %v1138
        %v1153 = vmul.f32 %v1023, %v1134
        %v1154 = vmul.f32 %v1023, %v1138
        %v1155 = vmul.f32 %v1027, %v1134
        %v1156 = vmul.f32 %v1027, %v1138
        %v1157 = vmul.f32 %v1031, %v1134
        %v1158 = vmul.f32 %v1031, %v1138
        %v1159 = vmul.f32 %v1035, %v1134
        %v1160 = vmul.f32 %v1035, %v1138
        %v1161 = vmul.f32 %v1039, %v1134
        %v1162 = vmul.f32 %v1039, %v1138
        %v1163 = vmul.f32 %v1043, %v1134
        %v1164 = vmul.f32 %v1043, %v1138
        %v1165 = vmul.f32 %v1047, %v1134
        %v1166 = vmul.f32 %v1047, %v1138
        %v1167 = vmul.f32 %v1051, %v1134
        %v1168 = vmul.f32 %v1051, %v1138
        %v1169 = vmul.f32 %v1055, %v1134
        %v1170 = vmul.f32 %v1055, %v1138
        %v1171 = vmul.f32 %v1059, %v1134
        %v1172 = vmul.f32 %v1059, %v1138
        %v1173 = vmul.f32 %v1063, %v1134
        %v1174 = vmul.f32 %v1063, %v1138
        %v1175 = vmul.f32 %v1067, %v1134
        %v1176 = vmul.f32 %v1067, %v1138
        %v1177 = vmul.f32 %v1071, %v1134
        %v1178 = vmul.f32 %v1071, %v1138
        %v1179 = vmul.f32 %v1075, %v1134
        %v1180 = vmul.f32 %v1075, %v1138
        %v1181 = vmul.f32 %v1079, %v1134
        %v1182 = vmul.f32 %v1079, %v1138
        %v1183 = vmul.f32 %v1083, %v1134
        %v1184 = vmul.f32 %v1083, %v1138
        %v1185 = vmul.f32 %v1087, %v1134
        %v1186 = vmul.f32 %v1087, %v1138
        %v1187 = vmul.f32 %v1091, %v1134
        %v1188 = vmul.f32 %v1091, %v1138
        %v1189 = vmul.f32 %v1095, %v1134
        %v1190 = vmul.f32 %v1095, %v1138
        %v1191 = vmul.f32 %v1099, %v1134
        %v1192 = vmul.f32 %v1099, %v1138
        %v1193 = vmul.f32 %v1103, %v1134
        %v1194 = vmul.f32 %v1103, %v1138
        %v1195 = vmul.f32 %v1107, %v1134
        %v1196 = vmul.f32 %v1107, %v1138
        %v1197 = vmul.f32 %v1111, %v1134
        %v1198 = vmul.f32 %v1111, %v1138
        %v1199 = vmul.f32 %v1115, %v1134
        %v1200 = vmul.f32 %v1115, %v1138
        %v1201 = vmul.f32 %v1119, %v1134
        %v1202 = vmul.f32 %v1119, %v1138
        %v1203 = vadd.f32 %v929, %v1139
        %v1204 = vadd.f32 %v930, %v1140
        %v1205 = vadd.f32 %v931, %v1141
        %v1206 = vadd.f32 %v932, %v1142
        %v1207 = vadd.f32 %v933, %v1143
        %v1208 = vadd.f32 %v934, %v1144
        %v1209 = vadd.f32 %v935, %v1145
        %v1210 = vadd.f32 %v936, %v1146
        %v1211 = vadd.f32 %v937, %v1147
        %v1212 = vadd.f32 %v938, %v1148
        %v1213 = vadd.f32 %v939, %v1149
        %v1214 = vadd.f32 %v940, %v1150
        %v1215 = vadd.f32 %v941, %v1151
        %v1216 = vadd.f32 %v942, %v1152
        %v1217 = vadd.f32 %v943, %v1153
        %v1218 = vadd.f32 %v944, %v1154
        %v1219 = vadd.f32 %v945, %v1155
        %v1220 = vadd.f32 %v946, %v1156
        %v1221 = vadd.f32 %v947, %v1157
        %v1222 = vadd.f32 %v948, %v1158
        %v1223 = vadd.f32 %v949, %v1159
        %v1224 = vadd.f32 %v950, %v1160
        %v1225 = vadd.f32 %v951, %v1161
        %v1226 = vadd.f32 %v952, %v1162
        %v1227 = vadd.f32 %v953, %v1163
        %v1228 = vadd.f32 %v954, %v1164
        %v1229 = vadd.f32 %v955, %v1165
        %v1230 = vadd.f32 %v956, %v1166
        %v1231 = vadd.f32 %v957, %v1167
        %v1232 = vadd.f32 %v958, %v1168
        %v1233 = vadd.f32 %v959, %v1169
        %v1234 = vadd.f32 %v960, %v1170
        %v1235 = vadd.f32 %v961, %v1171
        %v1236 = vadd.f32 %v962, %v1172
        %v1237 = vadd.f32 %v963, %v1173
        %v1238 = vadd.f32 %v964, %v1174
        %v1239 = vadd.f32 %v965, %v1175
        %v1240 = vadd.f32 %v966, %v1176
        %v1241 = vadd.f32 %v967, %v1177
        %v1242 = vadd.f32 %v968, %v1178
        %v1243 = vadd.f32 %v969, %v1179
        %v1244 = vadd.f32 %v970, %v1180
        %v1245 = vadd.f32 %v971, %v1181
        %v1246 = vadd.f32 %v972, %v1182
        %v1247 = vadd.f32 %v973, %v1183
        %v1248 = vadd.f32 %v974, %v1184
        %v1249 = vadd.f32 %v975, %v1185
        %v1250 = vadd.f32 %v976, %v1186
        %v1251 = vadd.f32 %v977, %v1187
        %v1252 = vadd.f32 %v978, %v1188
        %v1253 = vadd.f32 %v979, %v1189
        %v1254 = vadd.f32 %v980, %v1190
        %v1255 = vadd.f32 %v981, %v1191
        %v1256 = vadd.f32 %v982, %v1192
        %v1257 = vadd.f32 %v983, %v1193
        %v1258 = vadd.f32 %v984, %v1194
        %v1259 = vadd.f32 %v985, %v1195
        %v1260 = vadd.f32 %v986, %v1196
        %v1261 = vadd.f32 %v987, %v1197
        %v1262 = vadd.f32 %v988, %v1198
        %v1263 = vadd.f32 %v989, %v1199
        %v1264 = vadd.f32 %v990, %v1200
        %v1265 = vadd.f32 %v991, %v1201
        %v1266 = vadd.f32 %v992, %v1202
        %1267 = vset.pattern.permute.xlu0 2
        %1268 = vperm.xlu0 %1267, %v717
        %v1269 = vpop.permute.xlu0 %1268
        %1271 = vset.pattern.permute.xlu0 2
        %1272 = vperm.xlu0 %1271, %v718
        %v1273 = vpop.permute.xlu0 %1272
        %1275 = vset.pattern.permute.xlu0 2
        %1276 = vperm.xlu0 %1275, %v719
        %v1277 = vpop.permute.xlu0 %1276
        %1279 = vset.pattern.permute.xlu0 2
        %1280 = vperm.xlu0 %1279, %v720
        %v1281 = vpop.permute.xlu0 %1280
        %1283 = vset.pattern.permute.xlu0 2
        %1284 = vperm.xlu0 %1283, %v721
        %v1285 = vpop.permute.xlu0 %1284
        %1287 = vset.pattern.permute.xlu0 2
        %1288 = vperm.xlu0 %1287, %v722
        %v1289 = vpop.permute.xlu0 %1288
        %1291 = vset.pattern.permute.xlu0 2
        %1292 = vperm.xlu0 %1291, %v723
        %v1293 = vpop.permute.xlu0 %1292
        %1295 = vset.pattern.permute.xlu0 2
        %1296 = vperm.xlu0 %1295, %v724
        %v1297 = vpop.permute.xlu0 %1296
        %1299 = vset.pattern.permute.xlu0 2
        %1300 = vperm.xlu0 %1299, %v725
        %v1301 = vpop.permute.xlu0 %1300
        %1303 = vset.pattern.permute.xlu0 2
        %1304 = vperm.xlu0 %1303, %v726
        %v1305 = vpop.permute.xlu0 %1304
        %1307 = vset.pattern.permute.xlu0 2
        %1308 = vperm.xlu0 %1307, %v727
        %v1309 = vpop.permute.xlu0 %1308
        %1311 = vset.pattern.permute.xlu0 2
        %1312 = vperm.xlu0 %1311, %v728
        %v1313 = vpop.permute.xlu0 %1312
        %1315 = vset.pattern.permute.xlu0 2
        %1316 = vperm.xlu0 %1315, %v729
        %v1317 = vpop.permute.xlu0 %1316
        %1319 = vset.pattern.permute.xlu0 2
        %1320 = vperm.xlu0 %1319, %v730
        %v1321 = vpop.permute.xlu0 %1320
        %1323 = vset.pattern.permute.xlu0 2
        %1324 = vperm.xlu0 %1323, %v731
        %v1325 = vpop.permute.xlu0 %1324
        %1327 = vset.pattern.permute.xlu0 2
        %1328 = vperm.xlu0 %1327, %v732
        %v1329 = vpop.permute.xlu0 %1328
        %1331 = vset.pattern.permute.xlu0 2
        %1332 = vperm.xlu0 %1331, %v733
        %v1333 = vpop.permute.xlu0 %1332
        %1335 = vset.pattern.permute.xlu0 2
        %1336 = vperm.xlu0 %1335, %v734
        %v1337 = vpop.permute.xlu0 %1336
        %1339 = vset.pattern.permute.xlu0 2
        %1340 = vperm.xlu0 %1339, %v735
        %v1341 = vpop.permute.xlu0 %1340
        %1343 = vset.pattern.permute.xlu0 2
        %1344 = vperm.xlu0 %1343, %v736
        %v1345 = vpop.permute.xlu0 %1344
        %1347 = vset.pattern.permute.xlu0 2
        %1348 = vperm.xlu0 %1347, %v737
        %v1349 = vpop.permute.xlu0 %1348
        %1351 = vset.pattern.permute.xlu0 2
        %1352 = vperm.xlu0 %1351, %v738
        %v1353 = vpop.permute.xlu0 %1352
        %1355 = vset.pattern.permute.xlu0 2
        %1356 = vperm.xlu0 %1355, %v739
        %v1357 = vpop.permute.xlu0 %1356
        %1359 = vset.pattern.permute.xlu0 2
        %1360 = vperm.xlu0 %1359, %v740
        %v1361 = vpop.permute.xlu0 %1360
        %1363 = vset.pattern.permute.xlu0 2
        %1364 = vperm.xlu0 %1363, %v741
        %v1365 = vpop.permute.xlu0 %1364
        %1367 = vset.pattern.permute.xlu0 2
        %1368 = vperm.xlu0 %1367, %v742
        %v1369 = vpop.permute.xlu0 %1368
        %1371 = vset.pattern.permute.xlu0 2
        %1372 = vperm.xlu0 %1371, %v743
        %v1373 = vpop.permute.xlu0 %1372
        %1375 = vset.pattern.permute.xlu0 2
        %1376 = vperm.xlu0 %1375, %v744
        %v1377 = vpop.permute.xlu0 %1376
        %1379 = vset.pattern.permute.xlu0 2
        %1380 = vperm.xlu0 %1379, %v745
        %v1381 = vpop.permute.xlu0 %1380
        %1383 = vset.pattern.permute.xlu0 2
        %1384 = vperm.xlu0 %1383, %v746
        %v1385 = vpop.permute.xlu0 %1384
        %1387 = vset.pattern.permute.xlu0 2
        %1388 = vperm.xlu0 %1387, %v747
        %v1389 = vpop.permute.xlu0 %1388
        %1391 = vset.pattern.permute.xlu0 2
        %1392 = vperm.xlu0 %1391, %v748
        %v1393 = vpop.permute.xlu0 %1392
        %v1395 = vlaneseq
        %v1396 = vshrl.u32 %v1395, 7
        %v1397 = vsub.s32 2, %v1396
        %v1398 = vrot.slane %v749, %v1397
        %v1399 = vlaneseq
        %v1400 = vshrl.u32 %v1399, 7
        %v1401 = vsub.s32 6, %v1400
        %v1402 = vrot.slane %v749, %v1401
        %v1405 = vlaneseq
        %v1406 = vshrl.u32 %v1405, 7
        %v1407 = vsub.s32 2, %v1406
        %v1408 = vrot.slane %v1398, %v1407
        %v1409 = vlaneseq
        %v1410 = vshrl.u32 %v1409, 7
        %v1411 = vsub.s32 2, %v1410
        %v1412 = vrot.slane %v1402, %v1411
        %v1413 = vmul.f32 %v1269, %v1408
        %v1414 = vmul.f32 %v1269, %v1412
        %v1415 = vmul.f32 %v1273, %v1408
        %v1416 = vmul.f32 %v1273, %v1412
        %v1417 = vmul.f32 %v1277, %v1408
        %v1418 = vmul.f32 %v1277, %v1412
        %v1419 = vmul.f32 %v1281, %v1408
        %v1420 = vmul.f32 %v1281, %v1412
        %v1421 = vmul.f32 %v1285, %v1408
        %v1422 = vmul.f32 %v1285, %v1412
        %v1423 = vmul.f32 %v1289, %v1408
        %v1424 = vmul.f32 %v1289, %v1412
        %v1425 = vmul.f32 %v1293, %v1408
        %v1426 = vmul.f32 %v1293, %v1412
        %v1427 = vmul.f32 %v1297, %v1408
        %v1428 = vmul.f32 %v1297, %v1412
        %v1429 = vmul.f32 %v1301, %v1408
        %v1430 = vmul.f32 %v1301, %v1412
        %v1431 = vmul.f32 %v1305, %v1408
        %v1432 = vmul.f32 %v1305, %v1412
        %v1433 = vmul.f32 %v1309, %v1408
        %v1434 = vmul.f32 %v1309, %v1412
        %v1435 = vmul.f32 %v1313, %v1408
        %v1436 = vmul.f32 %v1313, %v1412
        %v1437 = vmul.f32 %v1317, %v1408
        %v1438 = vmul.f32 %v1317, %v1412
        %v1439 = vmul.f32 %v1321, %v1408
        %v1440 = vmul.f32 %v1321, %v1412
        %v1441 = vmul.f32 %v1325, %v1408
        %v1442 = vmul.f32 %v1325, %v1412
        %v1443 = vmul.f32 %v1329, %v1408
        %v1444 = vmul.f32 %v1329, %v1412
        %v1445 = vmul.f32 %v1333, %v1408
        %v1446 = vmul.f32 %v1333, %v1412
        %v1447 = vmul.f32 %v1337, %v1408
        %v1448 = vmul.f32 %v1337, %v1412
        %v1449 = vmul.f32 %v1341, %v1408
        %v1450 = vmul.f32 %v1341, %v1412
        %v1451 = vmul.f32 %v1345, %v1408
        %v1452 = vmul.f32 %v1345, %v1412
        %v1453 = vmul.f32 %v1349, %v1408
        %v1454 = vmul.f32 %v1349, %v1412
        %v1455 = vmul.f32 %v1353, %v1408
        %v1456 = vmul.f32 %v1353, %v1412
        %v1457 = vmul.f32 %v1357, %v1408
        %v1458 = vmul.f32 %v1357, %v1412
        %v1459 = vmul.f32 %v1361, %v1408
        %v1460 = vmul.f32 %v1361, %v1412
        %v1461 = vmul.f32 %v1365, %v1408
        %v1462 = vmul.f32 %v1365, %v1412
        %v1463 = vmul.f32 %v1369, %v1408
        %v1464 = vmul.f32 %v1369, %v1412
        %v1465 = vmul.f32 %v1373, %v1408
        %v1466 = vmul.f32 %v1373, %v1412
        %v1467 = vmul.f32 %v1377, %v1408
        %v1468 = vmul.f32 %v1377, %v1412
        %v1469 = vmul.f32 %v1381, %v1408
        %v1470 = vmul.f32 %v1381, %v1412
        %v1471 = vmul.f32 %v1385, %v1408
        %v1472 = vmul.f32 %v1385, %v1412
        %v1473 = vmul.f32 %v1389, %v1408
        %v1474 = vmul.f32 %v1389, %v1412
        %v1475 = vmul.f32 %v1393, %v1408
        %v1476 = vmul.f32 %v1393, %v1412
        %v1477 = vadd.f32 %v1203, %v1413
        %v1478 = vadd.f32 %v1204, %v1414
        %v1479 = vadd.f32 %v1205, %v1415
        %v1480 = vadd.f32 %v1206, %v1416
        %v1481 = vadd.f32 %v1207, %v1417
        %v1482 = vadd.f32 %v1208, %v1418
        %v1483 = vadd.f32 %v1209, %v1419
        %v1484 = vadd.f32 %v1210, %v1420
        %v1485 = vadd.f32 %v1211, %v1421
        %v1486 = vadd.f32 %v1212, %v1422
        %v1487 = vadd.f32 %v1213, %v1423
        %v1488 = vadd.f32 %v1214, %v1424
        %v1489 = vadd.f32 %v1215, %v1425
        %v1490 = vadd.f32 %v1216, %v1426
        %v1491 = vadd.f32 %v1217, %v1427
        %v1492 = vadd.f32 %v1218, %v1428
        %v1493 = vadd.f32 %v1219, %v1429
        %v1494 = vadd.f32 %v1220, %v1430
        %v1495 = vadd.f32 %v1221, %v1431
        %v1496 = vadd.f32 %v1222, %v1432
        %v1497 = vadd.f32 %v1223, %v1433
        %v1498 = vadd.f32 %v1224, %v1434
        %v1499 = vadd.f32 %v1225, %v1435
        %v1500 = vadd.f32 %v1226, %v1436
        %v1501 = vadd.f32 %v1227, %v1437
        %v1502 = vadd.f32 %v1228, %v1438
        %v1503 = vadd.f32 %v1229, %v1439
        %v1504 = vadd.f32 %v1230, %v1440
        %v1505 = vadd.f32 %v1231, %v1441
        %v1506 = vadd.f32 %v1232, %v1442
        %v1507 = vadd.f32 %v1233, %v1443
        %v1508 = vadd.f32 %v1234, %v1444
        %v1509 = vadd.f32 %v1235, %v1445
        %v1510 = vadd.f32 %v1236, %v1446
        %v1511 = vadd.f32 %v1237, %v1447
        %v1512 = vadd.f32 %v1238, %v1448
        %v1513 = vadd.f32 %v1239, %v1449
        %v1514 = vadd.f32 %v1240, %v1450
        %v1515 = vadd.f32 %v1241, %v1451
        %v1516 = vadd.f32 %v1242, %v1452
        %v1517 = vadd.f32 %v1243, %v1453
        %v1518 = vadd.f32 %v1244, %v1454
        %v1519 = vadd.f32 %v1245, %v1455
        %v1520 = vadd.f32 %v1246, %v1456
        %v1521 = vadd.f32 %v1247, %v1457
        %v1522 = vadd.f32 %v1248, %v1458
        %v1523 = vadd.f32 %v1249, %v1459
        %v1524 = vadd.f32 %v1250, %v1460
        %v1525 = vadd.f32 %v1251, %v1461
        %v1526 = vadd.f32 %v1252, %v1462
        %v1527 = vadd.f32 %v1253, %v1463
        %v1528 = vadd.f32 %v1254, %v1464
        %v1529 = vadd.f32 %v1255, %v1465
        %v1530 = vadd.f32 %v1256, %v1466
        %v1531 = vadd.f32 %v1257, %v1467
        %v1532 = vadd.f32 %v1258, %v1468
        %v1533 = vadd.f32 %v1259, %v1469
        %v1534 = vadd.f32 %v1260, %v1470
        %v1535 = vadd.f32 %v1261, %v1471
        %v1536 = vadd.f32 %v1262, %v1472
        %v1537 = vadd.f32 %v1263, %v1473
        %v1538 = vadd.f32 %v1264, %v1474
        %v1539 = vadd.f32 %v1265, %v1475
        %v1540 = vadd.f32 %v1266, %v1476
        %v1541 = vld [vmem:[%s8] ss:$8 sm:$0x3]
        %v1543 = vlaneseq
        %v1544 = vshrl.u32 %v1543, 7
        %v1545 = vsub.s32 0, %v1544
        %v1546 = vrot.slane %v1541, %v1545
        %v1547 = vlaneseq
        %v1548 = vshrl.u32 %v1547, 7
        %v1549 = vsub.s32 1, %v1548
        %v1550 = vrot.slane %v1541, %v1549
        %v1553 = vadd.f32 %v1477, %v1546
        %v1554 = vadd.f32 %v1478, %v1550
        %v1555 = vadd.f32 %v1479, %v1546
        %v1556 = vadd.f32 %v1480, %v1550
        %v1557 = vadd.f32 %v1481, %v1546
        %v1558 = vadd.f32 %v1482, %v1550
        %v1559 = vadd.f32 %v1483, %v1546
        %v1560 = vadd.f32 %v1484, %v1550
        %v1561 = vadd.f32 %v1485, %v1546
        %v1562 = vadd.f32 %v1486, %v1550
        %v1563 = vadd.f32 %v1487, %v1546
        %v1564 = vadd.f32 %v1488, %v1550
        %v1565 = vadd.f32 %v1489, %v1546
        %v1566 = vadd.f32 %v1490, %v1550
        %v1567 = vadd.f32 %v1491, %v1546
        %v1568 = vadd.f32 %v1492, %v1550
        %v1569 = vadd.f32 %v1493, %v1546
        %v1570 = vadd.f32 %v1494, %v1550
        %v1571 = vadd.f32 %v1495, %v1546
        %v1572 = vadd.f32 %v1496, %v1550
        %v1573 = vadd.f32 %v1497, %v1546
        %v1574 = vadd.f32 %v1498, %v1550
        %v1575 = vadd.f32 %v1499, %v1546
        %v1576 = vadd.f32 %v1500, %v1550
        %v1577 = vadd.f32 %v1501, %v1546
        %v1578 = vadd.f32 %v1502, %v1550
        %v1579 = vadd.f32 %v1503, %v1546
        %v1580 = vadd.f32 %v1504, %v1550
        %v1581 = vadd.f32 %v1505, %v1546
        %v1582 = vadd.f32 %v1506, %v1550
        %v1583 = vadd.f32 %v1507, %v1546
        %v1584 = vadd.f32 %v1508, %v1550
        %v1585 = vadd.f32 %v1509, %v1546
        %v1586 = vadd.f32 %v1510, %v1550
        %v1587 = vadd.f32 %v1511, %v1546
        %v1588 = vadd.f32 %v1512, %v1550
        %v1589 = vadd.f32 %v1513, %v1546
        %v1590 = vadd.f32 %v1514, %v1550
        %v1591 = vadd.f32 %v1515, %v1546
        %v1592 = vadd.f32 %v1516, %v1550
        %v1593 = vadd.f32 %v1517, %v1546
        %v1594 = vadd.f32 %v1518, %v1550
        %v1595 = vadd.f32 %v1519, %v1546
        %v1596 = vadd.f32 %v1520, %v1550
        %v1597 = vadd.f32 %v1521, %v1546
        %v1598 = vadd.f32 %v1522, %v1550
        %v1599 = vadd.f32 %v1523, %v1546
        %v1600 = vadd.f32 %v1524, %v1550
        %v1601 = vadd.f32 %v1525, %v1546
        %v1602 = vadd.f32 %v1526, %v1550
        %v1603 = vadd.f32 %v1527, %v1546
        %v1604 = vadd.f32 %v1528, %v1550
        %v1605 = vadd.f32 %v1529, %v1546
        %v1606 = vadd.f32 %v1530, %v1550
        %v1607 = vadd.f32 %v1531, %v1546
        %v1608 = vadd.f32 %v1532, %v1550
        %v1609 = vadd.f32 %v1533, %v1546
        %v1610 = vadd.f32 %v1534, %v1550
        %v1611 = vadd.f32 %v1535, %v1546
        %v1612 = vadd.f32 %v1536, %v1550
        %v1613 = vadd.f32 %v1537, %v1546
        %v1614 = vadd.f32 %v1538, %v1550
        %v1615 = vadd.f32 %v1539, %v1546
        %v1616 = vadd.f32 %v1540, %v1550
        %v1617 = vmax.f32 %v1553, 0.0
        %v1618 = vmax.f32 %v1554, 0.0
        %v1619 = vmax.f32 %v1555, 0.0
        %v1620 = vmax.f32 %v1556, 0.0
        %v1621 = vmax.f32 %v1557, 0.0
        %v1622 = vmax.f32 %v1558, 0.0
        %v1623 = vmax.f32 %v1559, 0.0
        %v1624 = vmax.f32 %v1560, 0.0
        %v1625 = vmax.f32 %v1561, 0.0
        %v1626 = vmax.f32 %v1562, 0.0
        %v1627 = vmax.f32 %v1563, 0.0
        %v1628 = vmax.f32 %v1564, 0.0
        %v1629 = vmax.f32 %v1565, 0.0
        %v1630 = vmax.f32 %v1566, 0.0
        %v1631 = vmax.f32 %v1567, 0.0
        %v1632 = vmax.f32 %v1568, 0.0
        %v1633 = vmax.f32 %v1569, 0.0
        %v1634 = vmax.f32 %v1570, 0.0
        %v1635 = vmax.f32 %v1571, 0.0
        %v1636 = vmax.f32 %v1572, 0.0
        %v1637 = vmax.f32 %v1573, 0.0
        %v1638 = vmax.f32 %v1574, 0.0
        %v1639 = vmax.f32 %v1575, 0.0
        %v1640 = vmax.f32 %v1576, 0.0
        %v1641 = vmax.f32 %v1577, 0.0
        %v1642 = vmax.f32 %v1578, 0.0
        %v1643 = vmax.f32 %v1579, 0.0
        %v1644 = vmax.f32 %v1580, 0.0
        %v1645 = vmax.f32 %v1581, 0.0
        %v1646 = vmax.f32 %v1582, 0.0
        %v1647 = vmax.f32 %v1583, 0.0
        %v1648 = vmax.f32 %v1584, 0.0
        %v1649 = vmax.f32 %v1585, 0.0
        %v1650 = vmax.f32 %v1586, 0.0
        %v1651 = vmax.f32 %v1587, 0.0
        %v1652 = vmax.f32 %v1588, 0.0
        %v1653 = vmax.f32 %v1589, 0.0
        %v1654 = vmax.f32 %v1590, 0.0
        %v1655 = vmax.f32 %v1591, 0.0
        %v1656 = vmax.f32 %v1592, 0.0
        %v1657 = vmax.f32 %v1593, 0.0
        %v1658 = vmax.f32 %v1594, 0.0
        %v1659 = vmax.f32 %v1595, 0.0
        %v1660 = vmax.f32 %v1596, 0.0
        %v1661 = vmax.f32 %v1597, 0.0
        %v1662 = vmax.f32 %v1598, 0.0
        %v1663 = vmax.f32 %v1599, 0.0
        %v1664 = vmax.f32 %v1600, 0.0
        %v1665 = vmax.f32 %v1601, 0.0
        %v1666 = vmax.f32 %v1602, 0.0
        %v1667 = vmax.f32 %v1603, 0.0
        %v1668 = vmax.f32 %v1604, 0.0
        %v1669 = vmax.f32 %v1605, 0.0
        %v1670 = vmax.f32 %v1606, 0.0
        %v1671 = vmax.f32 %v1607, 0.0
        %v1672 = vmax.f32 %v1608, 0.0
        %v1673 = vmax.f32 %v1609, 0.0
        %v1674 = vmax.f32 %v1610, 0.0
        %v1675 = vmax.f32 %v1611, 0.0
        %v1676 = vmax.f32 %v1612, 0.0
        %v1677 = vmax.f32 %v1613, 0.0
        %v1678 = vmax.f32 %v1614, 0.0
        %v1679 = vmax.f32 %v1615, 0.0
        %v1680 = vmax.f32 %v1616, 0.0
        %v1681 = vpack.c.bf16 %v1619, %v1617
        %v1682 = vpack.c.bf16 %v1620, %v1618
        %v1683 = vpack.c.bf16 %v1623, %v1621
        %v1684 = vpack.c.bf16 %v1624, %v1622
        %v1685 = vpack.c.bf16 %v1627, %v1625
        %v1686 = vpack.c.bf16 %v1628, %v1626
        %v1687 = vpack.c.bf16 %v1631, %v1629
        %v1688 = vpack.c.bf16 %v1632, %v1630
        %v1689 = vpack.c.bf16 %v1635, %v1633
        %v1690 = vpack.c.bf16 %v1636, %v1634
        %v1691 = vpack.c.bf16 %v1639, %v1637
        %v1692 = vpack.c.bf16 %v1640, %v1638
        %v1693 = vpack.c.bf16 %v1643, %v1641
        %v1694 = vpack.c.bf16 %v1644, %v1642
        %v1695 = vpack.c.bf16 %v1647, %v1645
        %v1696 = vpack.c.bf16 %v1648, %v1646
        %v1697 = vpack.c.bf16 %v1651, %v1649
        %v1698 = vpack.c.bf16 %v1652, %v1650
        %v1699 = vpack.c.bf16 %v1655, %v1653
        %v1700 = vpack.c.bf16 %v1656, %v1654
        %v1701 = vpack.c.bf16 %v1659, %v1657
        %v1702 = vpack.c.bf16 %v1660, %v1658
        %v1703 = vpack.c.bf16 %v1663, %v1661
        %v1704 = vpack.c.bf16 %v1664, %v1662
        %v1705 = vpack.c.bf16 %v1667, %v1665
        %v1706 = vpack.c.bf16 %v1668, %v1666
        %v1707 = vpack.c.bf16 %v1671, %v1669
        %v1708 = vpack.c.bf16 %v1672, %v1670
        %v1709 = vpack.c.bf16 %v1675, %v1673
        %v1710 = vpack.c.bf16 %v1676, %v1674
        %v1711 = vpack.c.bf16 %v1679, %v1677
        %v1712 = vpack.c.bf16 %v1680, %v1678
        %v1713 = vld [vmem:[#allocation3] sm:$0xff]
        %v1714 = vld [vmem:[#allocation3 + $0x8] sm:$0xff]
        %v1715 = vld [vmem:[#allocation3 + $0x10] sm:$0xff]
        %v1716 = vld [vmem:[#allocation3 + $0x18] sm:$0xff]
        %v1717 = vld [vmem:[#allocation3 + $0x20] sm:$0xff]
        %v1718 = vld [vmem:[#allocation3 + $0x28] sm:$0xff]
        %v1719 = vld [vmem:[#allocation3 + $0x30] sm:$0xff]
        %v1720 = vld [vmem:[#allocation3 + $0x38] sm:$0xff]
        %v1721 = vld [vmem:[#allocation3 + $0x40] sm:$0xff]
        %v1722 = vld [vmem:[#allocation3 + $0x48] sm:$0xff]
        %v1723 = vld [vmem:[#allocation3 + $0x50] sm:$0xff]
        %v1724 = vld [vmem:[#allocation3 + $0x58] sm:$0xff]
        %v1725 = vld [vmem:[#allocation3 + $0x60] sm:$0xff]
        %v1726 = vld [vmem:[#allocation3 + $0x68] sm:$0xff]
        %v1727 = vld [vmem:[#allocation3 + $0x70] sm:$0xff]
        %v1728 = vld [vmem:[#allocation3 + $0x78] sm:$0xff]
        %v1729 = vld [vmem:[#allocation3 + $0x80] sm:$0xff]
        %v1730 = vld [vmem:[#allocation3 + $0x88] sm:$0xff]
        %v1731 = vld [vmem:[#allocation3 + $0x90] sm:$0xff]
        %v1732 = vld [vmem:[#allocation3 + $0x98] sm:$0xff]
        %v1733 = vld [vmem:[#allocation3 + $0xa0] sm:$0xff]
        %v1734 = vld [vmem:[#allocation3 + $0xa8] sm:$0xff]
        %v1735 = vld [vmem:[#allocation3 + $0xb0] sm:$0xff]
        %v1736 = vld [vmem:[#allocation3 + $0xb8] sm:$0xff]
        %v1737 = vld [vmem:[#allocation3 + $0xc0] sm:$0xff]
        %v1738 = vld [vmem:[#allocation3 + $0xc8] sm:$0xff]
        %v1739 = vld [vmem:[#allocation3 + $0xd0] sm:$0xff]
        %v1740 = vld [vmem:[#allocation3 + $0xd8] sm:$0xff]
        %v1741 = vld [vmem:[#allocation3 + $0xe0] sm:$0xff]
        %v1742 = vld [vmem:[#allocation3 + $0xe8] sm:$0xff]
        %v1743 = vld [vmem:[#allocation3 + $0xf0] sm:$0xff]
        %v1744 = vld [vmem:[#allocation3 + $0xf8] sm:$0xff]
        %s1745 = scalar_lea.vmem %s8, 1
        %v1746 = vld [vmem:[%s1745] ss:$8 sm:$0x3]
        %v1748 = vlaneseq
        %v1749 = vshrl.u32 %v1748, 7
        %v1750 = vsub.s32 0, %v1749
        %v1751 = vrot.slane %v1746, %v1750
        %v1752 = vlaneseq
        %v1753 = vshrl.u32 %v1752, 7
        %v1754 = vsub.s32 1, %v1753
        %v1755 = vrot.slane %v1746, %v1754
        %v1790 = vunpack.c.l.b16 %v1713
        %v1791 = vunpack.c.h.b16 %v1713
        %v1792 = vunpack.c.l.b16 %v1714
        %v1793 = vunpack.c.h.b16 %v1714
        %v1794 = vunpack.c.l.b16 %v1715
        %v1795 = vunpack.c.h.b16 %v1715
        %v1796 = vunpack.c.l.b16 %v1716
        %v1797 = vunpack.c.h.b16 %v1716
        %v1798 = vunpack.c.l.b16 %v1717
        %v1799 = vunpack.c.h.b16 %v1717
        %v1800 = vunpack.c.l.b16 %v1718
        %v1801 = vunpack.c.h.b16 %v1718
        %v1802 = vunpack.c.l.b16 %v1719
        %v1803 = vunpack.c.h.b16 %v1719
        %v1804 = vunpack.c.l.b16 %v1720
        %v1805 = vunpack.c.h.b16 %v1720
        %v1806 = vunpack.c.l.b16 %v1721
        %v1807 = vunpack.c.h.b16 %v1721
        %v1808 = vunpack.c.l.b16 %v1722
        %v1809 = vunpack.c.h.b16 %v1722
        %v1810 = vunpack.c.l.b16 %v1723
        %v1811 = vunpack.c.h.b16 %v1723
        %v1812 = vunpack.c.l.b16 %v1724
        %v1813 = vunpack.c.h.b16 %v1724
        %v1814 = vunpack.c.l.b16 %v1725
        %v1815 = vunpack.c.h.b16 %v1725
        %v1816 = vunpack.c.l.b16 %v1726
        %v1817 = vunpack.c.h.b16 %v1726
        %v1818 = vunpack.c.l.b16 %v1727
        %v1819 = vunpack.c.h.b16 %v1727
        %v1820 = vunpack.c.l.b16 %v1728
        %v1821 = vunpack.c.h.b16 %v1728
        %v1822 = vunpack.c.l.b16 %v1729
        %v1823 = vunpack.c.h.b16 %v1729
        %v1824 = vunpack.c.l.b16 %v1730
        %v1825 = vunpack.c.h.b16 %v1730
        %v1826 = vunpack.c.l.b16 %v1731
        %v1827 = vunpack.c.h.b16 %v1731
        %v1828 = vunpack.c.l.b16 %v1732
        %v1829 = vunpack.c.h.b16 %v1732
        %v1830 = vunpack.c.l.b16 %v1733
        %v1831 = vunpack.c.h.b16 %v1733
        %v1832 = vunpack.c.l.b16 %v1734
        %v1833 = vunpack.c.h.b16 %v1734
        %v1834 = vunpack.c.l.b16 %v1735
        %v1835 = vunpack.c.h.b16 %v1735
        %v1836 = vunpack.c.l.b16 %v1736
        %v1837 = vunpack.c.h.b16 %v1736
        %v1838 = vunpack.c.l.b16 %v1737
        %v1839 = vunpack.c.h.b16 %v1737
        %v1840 = vunpack.c.l.b16 %v1738
        %v1841 = vunpack.c.h.b16 %v1738
        %v1842 = vunpack.c.l.b16 %v1739
        %v1843 = vunpack.c.h.b16 %v1739
        %v1844 = vunpack.c.l.b16 %v1740
        %v1845 = vunpack.c.h.b16 %v1740
        %v1846 = vunpack.c.l.b16 %v1741
        %v1847 = vunpack.c.h.b16 %v1741
        %v1848 = vunpack.c.l.b16 %v1742
        %v1849 = vunpack.c.h.b16 %v1742
        %v1850 = vunpack.c.l.b16 %v1743
        %v1851 = vunpack.c.h.b16 %v1743
        %v1852 = vunpack.c.l.b16 %v1744
        %v1853 = vunpack.c.h.b16 %v1744
        %v1854 = vpack.c.b16 %v1792, %v1790
        %v1855 = vpack.c.b16 %v1793, %v1791
        %v1856 = vpack.c.b16 %v1796, %v1794
        %v1857 = vpack.c.b16 %v1797, %v1795
        %v1858 = vpack.c.b16 %v1800, %v1798
        %v1859 = vpack.c.b16 %v1801, %v1799
        %v1860 = vpack.c.b16 %v1804, %v1802
        %v1861 = vpack.c.b16 %v1805, %v1803
        %v1862 = vpack.c.b16 %v1808, %v1806
        %v1863 = vpack.c.b16 %v1809, %v1807
        %v1864 = vpack.c.b16 %v1812, %v1810
        %v1865 = vpack.c.b16 %v1813, %v1811
        %v1866 = vpack.c.b16 %v1816, %v1814
        %v1867 = vpack.c.b16 %v1817, %v1815
        %v1868 = vpack.c.b16 %v1820, %v1818
        %v1869 = vpack.c.b16 %v1821, %v1819
        %v1870 = vpack.c.b16 %v1824, %v1822
        %v1871 = vpack.c.b16 %v1825, %v1823
        %v1872 = vpack.c.b16 %v1828, %v1826
        %v1873 = vpack.c.b16 %v1829, %v1827
        %v1874 = vpack.c.b16 %v1832, %v1830
        %v1875 = vpack.c.b16 %v1833, %v1831
        %v1876 = vpack.c.b16 %v1836, %v1834
        %v1877 = vpack.c.b16 %v1837, %v1835
        %v1878 = vpack.c.b16 %v1840, %v1838
        %v1879 = vpack.c.b16 %v1841, %v1839
        %v1880 = vpack.c.b16 %v1844, %v1842
        %v1881 = vpack.c.b16 %v1845, %v1843
        %v1882 = vpack.c.b16 %v1848, %v1846
        %v1883 = vpack.c.b16 %v1849, %v1847
        %v1884 = vpack.c.b16 %v1852, %v1850
        %v1885 = vpack.c.b16 %v1853, %v1851
        %1918 = vmatprep.subr.bf16.mxu0 %v1855
        %1919 = vmatpush1.bf16.msra.mxu0 %v1854
        %1920 = vmatprep.subr.bf16.mxu0 %v1857
        %1921 = vmatpush1.bf16.msra.mxu0 %v1856
        %1922 = vmatprep.subr.bf16.mxu0 %v1859
        %1923 = vmatpush1.bf16.msra.mxu0 %v1858
        %1924 = vmatprep.subr.bf16.mxu0 %v1861
        %1925 = vmatpush1.bf16.msra.mxu0 %v1860
        %1926 = vmatprep.subr.bf16.mxu0 %v1863
        %1927 = vmatpush1.bf16.msra.mxu0 %v1862
        %1928 = vmatprep.subr.bf16.mxu0 %v1865
        %1929 = vmatpush1.bf16.msra.mxu0 %v1864
        %1930 = vmatprep.subr.bf16.mxu0 %v1867
        %1931 = vmatpush1.bf16.msra.mxu0 %v1866
        %1932 = vmatprep.subr.bf16.mxu0 %v1869
        %1933 = vmatpush1.bf16.msra.mxu0 %v1868
        %1934 = vmatprep.subr.bf16.mxu0 %v1871
        %1935 = vmatpush1.bf16.msra.mxu0 %v1870
        %1936 = vmatprep.subr.bf16.mxu0 %v1873
        %1937 = vmatpush1.bf16.msra.mxu0 %v1872
        %1938 = vmatprep.subr.bf16.mxu0 %v1875
        %1939 = vmatpush1.bf16.msra.mxu0 %v1874
        %1940 = vmatprep.subr.bf16.mxu0 %v1877
        %1941 = vmatpush1.bf16.msra.mxu0 %v1876
        %1942 = vmatprep.subr.bf16.mxu0 %v1879
        %1943 = vmatpush1.bf16.msra.mxu0 %v1878
        %1944 = vmatprep.subr.bf16.mxu0 %v1881
        %1945 = vmatpush1.bf16.msra.mxu0 %v1880
        %1946 = vmatprep.subr.bf16.mxu0 %v1883
        %1947 = vmatpush1.bf16.msra.mxu0 %v1882
        %1948 = vmatprep.subr.bf16.mxu0 %v1885
        %1949 = vmatpush1.bf16.msra.mxu0 %v1884
        %1950 = vmatprep.mubr.bf16.mxu0 %v1682
        %1951 = vmatmul.mubr.bf16.gmra.mrb[0].mxu0 %v1681
        %v1952 = vpop.f32.mrb[0].mxu0
        %v1953 = vadd.f32 %v1751, %v1952
        %v1954 = vpop.f32.mrb[0].mxu0
        %v1955 = vadd.f32 %v1755, %v1954
        %v1956 = vpop.f32.mrb[0].mxu0
        %v1957 = vadd.f32 %v1751, %v1956
        %v1958 = vpop.f32.mrb[0].mxu0
        %v1959 = vadd.f32 %v1755, %v1958
        %1960 = vmatprep.mubr.bf16.mxu0 %v1684
        %1961 = vmatmul.mubr.bf16.gmra.mrb[0].mxu0 %v1683
        %v1962 = vpop.f32.mrb[0].mxu0
        %v1963 = vadd.f32 %v1751, %v1962
        %v1964 = vpop.f32.mrb[0].mxu0
        %v1965 = vadd.f32 %v1755, %v1964
        %v1966 = vpop.f32.mrb[0].mxu0
        %v1967 = vadd.f32 %v1751, %v1966
        %v1968 = vpop.f32.mrb[0].mxu0
        %v1969 = vadd.f32 %v1755, %v1968
        %1970 = vmatprep.mubr.bf16.mxu0 %v1686
        %1971 = vmatmul.mubr.bf16.gmra.mrb[0].mxu0 %v1685
        %v1972 = vpop.f32.mrb[0].mxu0
        %v1973 = vadd.f32 %v1751, %v1972
        %v1974 = vpop.f32.mrb[0].mxu0
        %v1975 = vadd.f32 %v1755, %v1974
        %v1976 = vpop.f32.mrb[0].mxu0
        %v1977 = vadd.f32 %v1751, %v1976
        %v1978 = vpop.f32.mrb[0].mxu0
        %v1979 = vadd.f32 %v1755, %v1978
        %1980 = vmatprep.mubr.bf16.mxu0 %v1688
        %1981 = vmatmul.mubr.bf16.gmra.mrb[0].mxu0 %v1687
        %v1982 = vpop.f32.mrb[0].mxu0
        %v1983 = vadd.f32 %v1751, %v1982
        %v1984 = vpop.f32.mrb[0].mxu0
        %v1985 = vadd.f32 %v1755, %v1984
        %v1986 = vpop.f32.mrb[0].mxu0
        %v1987 = vadd.f32 %v1751, %v1986
        %v1988 = vpop.f32.mrb[0].mxu0
        %v1989 = vadd.f32 %v1755, %v1988
        %1990 = vmatprep.mubr.bf16.mxu0 %v1690
        %1991 = vmatmul.mubr.bf16.gmra.mrb[0].mxu0 %v1689
        %v1992 = vpop.f32.mrb[0].mxu0
        %v1993 = vadd.f32 %v1751, %v1992
        %v1994 = vpop.f32.mrb[0].mxu0
        %v1995 = vadd.f32 %v1755, %v1994
        %v1996 = vpop.f32.mrb[0].mxu0
        %v1997 = vadd.f32 %v1751, %v1996
        %v1998 = vpop.f32.mrb[0].mxu0
        %v1999 = vadd.f32 %v1755, %v1998
        %2000 = vmatprep.mubr.bf16.mxu0 %v1692
        %2001 = vmatmul.mubr.bf16.gmra.mrb[0].mxu0 %v1691
        %v2002 = vpop.f32.mrb[0].mxu0
        %v2003 = vadd.f32 %v1751, %v2002
        %v2004 = vpop.f32.mrb[0].mxu0
        %v2005 = vadd.f32 %v1755, %v2004
        %v2006 = vpop.f32.mrb[0].mxu0
        %v2007 = vadd.f32 %v1751, %v2006
        %v2008 = vpop.f32.mrb[0].mxu0
        %v2009 = vadd.f32 %v1755, %v2008
        %2010 = vmatprep.mubr.bf16.mxu0 %v1694
        %2011 = vmatmul.mubr.bf16.gmra.mrb[0].mxu0 %v1693
        %v2012 = vpop.f32.mrb[0].mxu0
        %v2013 = vadd.f32 %v1751, %v2012
        %v2014 = vpop.f32.mrb[0].mxu0
        %v2015 = vadd.f32 %v1755, %v2014
        %v2016 = vpop.f32.mrb[0].mxu0
        %v2017 = vadd.f32 %v1751, %v2016
        %v2018 = vpop.f32.mrb[0].mxu0
        %v2019 = vadd.f32 %v1755, %v2018
        %2020 = vmatprep.mubr.bf16.mxu0 %v1696
        %2021 = vmatmul.mubr.bf16.gmra.mrb[0].mxu0 %v1695
        %v2022 = vpop.f32.mrb[0].mxu0
        %v2023 = vadd.f32 %v1751, %v2022
        %v2024 = vpop.f32.mrb[0].mxu0
        %v2025 = vadd.f32 %v1755, %v2024
        %v2026 = vpop.f32.mrb[0].mxu0
        %v2027 = vadd.f32 %v1751, %v2026
        %v2028 = vpop.f32.mrb[0].mxu0
        %v2029 = vadd.f32 %v1755, %v2028
        %2030 = vmatprep.mubr.bf16.mxu0 %v1698
        %2031 = vmatmul.mubr.bf16.gmra.mrb[0].mxu0 %v1697
        %v2032 = vpop.f32.mrb[0].mxu0
        %v2033 = vadd.f32 %v1751, %v2032
        %v2034 = vpop.f32.mrb[0].mxu0
        %v2035 = vadd.f32 %v1755, %v2034
        %v2036 = vpop.f32.mrb[0].mxu0
        %v2037 = vadd.f32 %v1751, %v2036
        %v2038 = vpop.f32.mrb[0].mxu0
        %v2039 = vadd.f32 %v1755, %v2038
        %2040 = vmatprep.mubr.bf16.mxu0 %v1700
        %2041 = vmatmul.mubr.bf16.gmra.mrb[0].mxu0 %v1699
        %v2042 = vpop.f32.mrb[0].mxu0
        %v2043 = vadd.f32 %v1751, %v2042
        %v2044 = vpop.f32.mrb[0].mxu0
        %v2045 = vadd.f32 %v1755, %v2044
        %v2046 = vpop.f32.mrb[0].mxu0
        %v2047 = vadd.f32 %v1751, %v2046
        %v2048 = vpop.f32.mrb[0].mxu0
        %v2049 = vadd.f32 %v1755, %v2048
        %2050 = vmatprep.mubr.bf16.mxu0 %v1702
        %2051 = vmatmul.mubr.bf16.gmra.mrb[0].mxu0 %v1701
        %v2052 = vpop.f32.mrb[0].mxu0
        %v2053 = vadd.f32 %v1751, %v2052
        %v2054 = vpop.f32.mrb[0].mxu0
        %v2055 = vadd.f32 %v1755, %v2054
        %v2056 = vpop.f32.mrb[0].mxu0
        %v2057 = vadd.f32 %v1751, %v2056
        %v2058 = vpop.f32.mrb[0].mxu0
        %v2059 = vadd.f32 %v1755, %v2058
        %2060 = vmatprep.mubr.bf16.mxu0 %v1704
        %2061 = vmatmul.mubr.bf16.gmra.mrb[0].mxu0 %v1703
        %v2062 = vpop.f32.mrb[0].mxu0
        %v2063 = vadd.f32 %v1751, %v2062
        %v2064 = vpop.f32.mrb[0].mxu0
        %v2065 = vadd.f32 %v1755, %v2064
        %v2066 = vpop.f32.mrb[0].mxu0
        %v2067 = vadd.f32 %v1751, %v2066
        %v2068 = vpop.f32.mrb[0].mxu0
        %v2069 = vadd.f32 %v1755, %v2068
        %2070 = vmatprep.mubr.bf16.mxu0 %v1706
        %2071 = vmatmul.mubr.bf16.gmra.mrb[0].mxu0 %v1705
        %v2072 = vpop.f32.mrb[0].mxu0
        %v2073 = vadd.f32 %v1751, %v2072
        %v2074 = vpop.f32.mrb[0].mxu0
        %v2075 = vadd.f32 %v1755, %v2074
        %v2076 = vpop.f32.mrb[0].mxu0
        %v2077 = vadd.f32 %v1751, %v2076
        %v2078 = vpop.f32.mrb[0].mxu0
        %v2079 = vadd.f32 %v1755, %v2078
        %2080 = vmatprep.mubr.bf16.mxu0 %v1708
        %2081 = vmatmul.mubr.bf16.gmra.mrb[0].mxu0 %v1707
        %v2082 = vpop.f32.mrb[0].mxu0
        %v2083 = vadd.f32 %v1751, %v2082
        %v2084 = vpop.f32.mrb[0].mxu0
        %v2085 = vadd.f32 %v1755, %v2084
        %v2086 = vpop.f32.mrb[0].mxu0
        %v2087 = vadd.f32 %v1751, %v2086
        %v2088 = vpop.f32.mrb[0].mxu0
        %v2089 = vadd.f32 %v1755, %v2088
        %2090 = vmatprep.mubr.bf16.mxu0 %v1710
        %2091 = vmatmul.mubr.bf16.gmra.mrb[0].mxu0 %v1709
        %v2092 = vpop.f32.mrb[0].mxu0
        %v2093 = vadd.f32 %v1751, %v2092
        %v2094 = vpop.f32.mrb[0].mxu0
        %v2095 = vadd.f32 %v1755, %v2094
        %v2096 = vpop.f32.mrb[0].mxu0
        %v2097 = vadd.f32 %v1751, %v2096
        %v2098 = vpop.f32.mrb[0].mxu0
        %v2099 = vadd.f32 %v1755, %v2098
        %2100 = vmatprep.mubr.bf16.mxu0 %v1712
        %2101 = vmatmul.mubr.bf16.gmra.mrb[0].mxu0 %v1711
        %v2102 = vpop.f32.mrb[0].mxu0
        %v2103 = vadd.f32 %v1751, %v2102
        %v2104 = vpop.f32.mrb[0].mxu0
        %v2105 = vadd.f32 %v1755, %v2104
        %v2106 = vpop.f32.mrb[0].mxu0
        %v2107 = vadd.f32 %v1751, %v2106
        %v2108 = vpop.f32.mrb[0].mxu0
        %v2109 = vadd.f32 %v1755, %v2108
        %2110 = vdwg.mxu0
        %v2111 = vmax.f32 %v1953, 0.0
        %v2112 = vmax.f32 %v1955, 0.0
        %v2113 = vmax.f32 %v1957, 0.0
        %v2114 = vmax.f32 %v1959, 0.0
        %v2115 = vmax.f32 %v1963, 0.0
        %v2116 = vmax.f32 %v1965, 0.0
        %v2117 = vmax.f32 %v1967, 0.0
        %v2118 = vmax.f32 %v1969, 0.0
        %v2119 = vmax.f32 %v1973, 0.0
        %v2120 = vmax.f32 %v1975, 0.0
        %v2121 = vmax.f32 %v1977, 0.0
        %v2122 = vmax.f32 %v1979, 0.0
        %v2123 = vmax.f32 %v1983, 0.0
        %v2124 = vmax.f32 %v1985, 0.0
        %v2125 = vmax.f32 %v1987, 0.0
        %v2126 = vmax.f32 %v1989, 0.0
        %v2127 = vmax.f32 %v1993, 0.0
        %v2128 = vmax.f32 %v1995, 0.0
        %v2129 = vmax.f32 %v1997, 0.0
        %v2130 = vmax.f32 %v1999, 0.0
        %v2131 = vmax.f32 %v2003, 0.0
        %v2132 = vmax.f32 %v2005, 0.0
        %v2133 = vmax.f32 %v2007, 0.0
        %v2134 = vmax.f32 %v2009, 0.0
        %v2135 = vmax.f32 %v2013, 0.0
        %v2136 = vmax.f32 %v2015, 0.0
        %v2137 = vmax.f32 %v2017, 0.0
        %v2138 = vmax.f32 %v2019, 0.0
        %v2139 = vmax.f32 %v2023, 0.0
        %v2140 = vmax.f32 %v2025, 0.0
        %v2141 = vmax.f32 %v2027, 0.0
        %v2142 = vmax.f32 %v2029, 0.0
        %v2143 = vmax.f32 %v2033, 0.0
        %v2144 = vmax.f32 %v2035, 0.0
        %v2145 = vmax.f32 %v2037, 0.0
        %v2146 = vmax.f32 %v2039, 0.0
        %v2147 = vmax.f32 %v2043, 0.0
        %v2148 = vmax.f32 %v2045, 0.0
        %v2149 = vmax.f32 %v2047, 0.0
        %v2150 = vmax.f32 %v2049, 0.0
        %v2151 = vmax.f32 %v2053, 0.0
        %v2152 = vmax.f32 %v2055, 0.0
        %v2153 = vmax.f32 %v2057, 0.0
        %v2154 = vmax.f32 %v2059, 0.0
        %v2155 = vmax.f32 %v2063, 0.0
        %v2156 = vmax.f32 %v2065, 0.0
        %v2157 = vmax.f32 %v2067, 0.0
        %v2158 = vmax.f32 %v2069, 0.0
        %v2159 = vmax.f32 %v2073, 0.0
        %v2160 = vmax.f32 %v2075, 0.0
        %v2161 = vmax.f32 %v2077, 0.0
        %v2162 = vmax.f32 %v2079, 0.0
        %v2163 = vmax.f32 %v2083, 0.0
        %v2164 = vmax.f32 %v2085, 0.0
        %v2165 = vmax.f32 %v2087, 0.0
        %v2166 = vmax.f32 %v2089, 0.0
        %v2167 = vmax.f32 %v2093, 0.0
        %v2168 = vmax.f32 %v2095, 0.0
        %v2169 = vmax.f32 %v2097, 0.0
        %v2170 = vmax.f32 %v2099, 0.0
        %v2171 = vmax.f32 %v2103, 0.0
        %v2172 = vmax.f32 %v2105, 0.0
        %v2173 = vmax.f32 %v2107, 0.0
        %v2174 = vmax.f32 %v2109, 0.0
        %v2175 = vpack.c.bf16 %v2113, %v2111
        %v2176 = vpack.c.bf16 %v2114, %v2112
        %v2177 = vpack.c.bf16 %v2117, %v2115
        %v2178 = vpack.c.bf16 %v2118, %v2116
        %v2179 = vpack.c.bf16 %v2121, %v2119
        %v2180 = vpack.c.bf16 %v2122, %v2120
        %v2181 = vpack.c.bf16 %v2125, %v2123
        %v2182 = vpack.c.bf16 %v2126, %v2124
        %v2183 = vpack.c.bf16 %v2129, %v2127
        %v2184 = vpack.c.bf16 %v2130, %v2128
        %v2185 = vpack.c.bf16 %v2133, %v2131
        %v2186 = vpack.c.bf16 %v2134, %v2132
        %v2187 = vpack.c.bf16 %v2137, %v2135
        %v2188 = vpack.c.bf16 %v2138, %v2136
        %v2189 = vpack.c.bf16 %v2141, %v2139
        %v2190 = vpack.c.bf16 %v2142, %v2140
        %v2191 = vpack.c.bf16 %v2145, %v2143
        %v2192 = vpack.c.bf16 %v2146, %v2144
        %v2193 = vpack.c.bf16 %v2149, %v2147
        %v2194 = vpack.c.bf16 %v2150, %v2148
        %v2195 = vpack.c.bf16 %v2153, %v2151
        %v2196 = vpack.c.bf16 %v2154, %v2152
        %v2197 = vpack.c.bf16 %v2157, %v2155
        %v2198 = vpack.c.bf16 %v2158, %v2156
        %v2199 = vpack.c.bf16 %v2161, %v2159
        %v2200 = vpack.c.bf16 %v2162, %v2160
        %v2201 = vpack.c.bf16 %v2165, %v2163
        %v2202 = vpack.c.bf16 %v2166, %v2164
        %v2203 = vpack.c.bf16 %v2169, %v2167
        %v2204 = vpack.c.bf16 %v2170, %v2168
        %v2205 = vpack.c.bf16 %v2173, %v2171
        %v2206 = vpack.c.bf16 %v2174, %v2172
        %s2207 = scalar_lea.vmem [#allocation3], 256
        %v2208 = vld [vmem:[%s2207] sm:$0xff]
        %v2209 = vld [vmem:[%s2207 + $0x8] sm:$0xff]
        %v2210 = vld [vmem:[%s2207 + $0x10] sm:$0xff]
        %v2211 = vld [vmem:[%s2207 + $0x18] sm:$0xff]
        %v2212 = vld [vmem:[%s2207 + $0x20] sm:$0xff]
        %v2213 = vld [vmem:[%s2207 + $0x28] sm:$0xff]
        %v2214 = vld [vmem:[%s2207 + $0x30] sm:$0xff]
        %v2215 = vld [vmem:[%s2207 + $0x38] sm:$0xff]
        %v2216 = vld [vmem:[%s2207 + $0x40] sm:$0xff]
        %v2217 = vld [vmem:[%s2207 + $0x48] sm:$0xff]
        %v2218 = vld [vmem:[%s2207 + $0x50] sm:$0xff]
        %v2219 = vld [vmem:[%s2207 + $0x58] sm:$0xff]
        %v2220 = vld [vmem:[%s2207 + $0x60] sm:$0xff]
        %v2221 = vld [vmem:[%s2207 + $0x68] sm:$0xff]
        %v2222 = vld [vmem:[%s2207 + $0x70] sm:$0xff]
        %v2223 = vld [vmem:[%s2207 + $0x78] sm:$0xff]
        %v2224 = vld [vmem:[%s2207 + $0x80] sm:$0xff]
        %v2225 = vld [vmem:[%s2207 + $0x88] sm:$0xff]
        %v2226 = vld [vmem:[%s2207 + $0x90] sm:$0xff]
        %v2227 = vld [vmem:[%s2207 + $0x98] sm:$0xff]
        %v2228 = vld [vmem:[%s2207 + $0xa0] sm:$0xff]
        %v2229 = vld [vmem:[%s2207 + $0xa8] sm:$0xff]
        %v2230 = vld [vmem:[%s2207 + $0xb0] sm:$0xff]
        %v2231 = vld [vmem:[%s2207 + $0xb8] sm:$0xff]
        %v2232 = vld [vmem:[%s2207 + $0xc0] sm:$0xff]
        %v2233 = vld [vmem:[%s2207 + $0xc8] sm:$0xff]
        %v2234 = vld [vmem:[%s2207 + $0xd0] sm:$0xff]
        %v2235 = vld [vmem:[%s2207 + $0xd8] sm:$0xff]
        %v2236 = vld [vmem:[%s2207 + $0xe0] sm:$0xff]
        %v2237 = vld [vmem:[%s2207 + $0xe8] sm:$0xff]
        %v2238 = vld [vmem:[%s2207 + $0xf0] sm:$0xff]
        %v2239 = vld [vmem:[%s2207 + $0xf8] sm:$0xff]
        %s2240 = scalar_lea.vmem %s8, 2
        %v2241 = vld [vmem:[%s2240] ss:$8 sm:$0x3]
        %v2243 = vlaneseq
        %v2244 = vshrl.u32 %v2243, 7
        %v2245 = vsub.s32 0, %v2244
        %v2246 = vrot.slane %v2241, %v2245
        %v2247 = vlaneseq
        %v2248 = vshrl.u32 %v2247, 7
        %v2249 = vsub.s32 1, %v2248
        %v2250 = vrot.slane %v2241, %v2249
        %v2285 = vunpack.c.l.b16 %v2208
        %v2286 = vunpack.c.h.b16 %v2208
        %v2287 = vunpack.c.l.b16 %v2209
        %v2288 = vunpack.c.h.b16 %v2209
        %v2289 = vunpack.c.l.b16 %v2210
        %v2290 = vunpack.c.h.b16 %v2210
        %v2291 = vunpack.c.l.b16 %v2211
        %v2292 = vunpack.c.h.b16 %v2211
        %v2293 = vunpack.c.l.b16 %v2212
        %v2294 = vunpack.c.h.b16 %v2212
        %v2295 = vunpack.c.l.b16 %v2213
        %v2296 = vunpack.c.h.b16 %v2213
        %v2297 = vunpack.c.l.b16 %v2214
        %v2298 = vunpack.c.h.b16 %v2214
        %v2299 = vunpack.c.l.b16 %v2215
        %v2300 = vunpack.c.h.b16 %v2215
        %v2301 = vunpack.c.l.b16 %v2216
        %v2302 = vunpack.c.h.b16 %v2216
        %v2303 = vunpack.c.l.b16 %v2217
        %v2304 = vunpack.c.h.b16 %v2217
        %v2305 = vunpack.c.l.b16 %v2218
        %v2306 = vunpack.c.h.b16 %v2218
        %v2307 = vunpack.c.l.b16 %v2219
        %v2308 = vunpack.c.h.b16 %v2219
        %v2309 = vunpack.c.l.b16 %v2220
        %v2310 = vunpack.c.h.b16 %v2220
        %v2311 = vunpack.c.l.b16 %v2221
        %v2312 = vunpack.c.h.b16 %v2221
        %v2313 = vunpack.c.l.b16 %v2222
        %v2314 = vunpack.c.h.b16 %v2222
        %v2315 = vunpack.c.l.b16 %v2223
        %v2316 = vunpack.c.h.b16 %v2223
        %v2317 = vunpack.c.l.b16 %v2224
        %v2318 = vunpack.c.h.b16 %v2224
        %v2319 = vunpack.c.l.b16 %v2225
        %v2320 = vunpack.c.h.b16 %v2225
        %v2321 = vunpack.c.l.b16 %v2226
        %v2322 = vunpack.c.h.b16 %v2226
        %v2323 = vunpack.c.l.b16 %v2227
        %v2324 = vunpack.c.h.b16 %v2227
        %v2325 = vunpack.c.l.b16 %v2228
        %v2326 = vunpack.c.h.b16 %v2228
        %v2327 = vunpack.c.l.b16 %v2229
        %v2328 = vunpack.c.h.b16 %v2229
        %v2329 = vunpack.c.l.b16 %v2230
        %v2330 = vunpack.c.h.b16 %v2230
        %v2331 = vunpack.c.l.b16 %v2231
        %v2332 = vunpack.c.h.b16 %v2231
        %v2333 = vunpack.c.l.b16 %v2232
        %v2334 = vunpack.c.h.b16 %v2232
        %v2335 = vunpack.c.l.b16 %v2233
        %v2336 = vunpack.c.h.b16 %v2233
        %v2337 = vunpack.c.l.b16 %v2234
        %v2338 = vunpack.c.h.b16 %v2234
        %v2339 = vunpack.c.l.b16 %v2235
        %v2340 = vunpack.c.h.b16 %v2235
        %v2341 = vunpack.c.l.b16 %v2236
        %v2342 = vunpack.c.h.b16 %v2236
        %v2343 = vunpack.c.l.b16 %v2237
        %v2344 = vunpack.c.h.b16 %v2237
        %v2345 = vunpack.c.l.b16 %v2238
        %v2346 = vunpack.c.h.b16 %v2238
        %v2347 = vunpack.c.l.b16 %v2239
        %v2348 = vunpack.c.h.b16 %v2239
        %v2349 = vpack.c.b16 %v2287, %v2285
        %v2350 = vpack.c.b16 %v2288, %v2286
        %v2351 = vpack.c.b16 %v2291, %v2289
        %v2352 = vpack.c.b16 %v2292, %v2290
        %v2353 = vpack.c.b16 %v2295, %v2293
        %v2354 = vpack.c.b16 %v2296, %v2294
        %v2355 = vpack.c.b16 %v2299, %v2297
        %v2356 = vpack.c.b16 %v2300, %v2298
        %v2357 = vpack.c.b16 %v2303, %v2301
        %v2358 = vpack.c.b16 %v2304, %v2302
        %v2359 = vpack.c.b16 %v2307, %v2305
        %v2360 = vpack.c.b16 %v2308, %v2306
        %v2361 = vpack.c.b16 %v2311, %v2309
        %v2362 = vpack.c.b16 %v2312, %v2310
        %v2363 = vpack.c.b16 %v2315, %v2313
        %v2364 = vpack.c.b16 %v2316, %v2314
        %v2365 = vpack.c.b16 %v2319, %v2317
        %v2366 = vpack.c.b16 %v2320, %v2318
        %v2367 = vpack.c.b16 %v2323, %v2321
        %v2368 = vpack.c.b16 %v2324, %v2322
        %v2369 = vpack.c.b16 %v2327, %v2325
        %v2370 = vpack.c.b16 %v2328, %v2326
        %v2371 = vpack.c.b16 %v2331, %v2329
        %v2372 = vpack.c.b16 %v2332, %v2330
        %v2373 = vpack.c.b16 %v2335, %v2333
        %v2374 = vpack.c.b16 %v2336, %v2334
        %v2375 = vpack.c.b16 %v2339, %v2337
        %v2376 = vpack.c.b16 %v2340, %v2338
        %v2377 = vpack.c.b16 %v2343, %v2341
        %v2378 = vpack.c.b16 %v2344, %v2342
        %v2379 = vpack.c.b16 %v2347, %v2345
        %v2380 = vpack.c.b16 %v2348, %v2346
        %2413 = vmatprep.subr.bf16.mxu0 %v2350
        %2414 = vmatpush1.bf16.msra.mxu0 %v2349
        %2415 = vmatprep.subr.bf16.mxu0 %v2352
        %2416 = vmatpush1.bf16.msra.mxu0 %v2351
        %2417 = vmatprep.subr.bf16.mxu0 %v2354
        %2418 = vmatpush1.bf16.msra.mxu0 %v2353
        %2419 = vmatprep.subr.bf16.mxu0 %v2356
        %2420 = vmatpush1.bf16.msra.mxu0 %v2355
        %2421 = vmatprep.subr.bf16.mxu0 %v2358
        %2422 = vmatpush1.bf16.msra.mxu0 %v2357
        %2423 = vmatprep.subr.bf16.mxu0 %v2360
        %2424 = vmatpush1.bf16.msra.mxu0 %v2359
        %2425 = vmatprep.subr.bf16.mxu0 %v2362
        %2426 = vmatpush1.bf16.msra.mxu0 %v2361
        %2427 = vmatprep.subr.bf16.mxu0 %v2364
        %2428 = vmatpush1.bf16.msra.mxu0 %v2363
        %2429 = vmatprep.subr.bf16.mxu0 %v2366
        %2430 = vmatpush1.bf16.msra.mxu0 %v2365
        %2431 = vmatprep.subr.bf16.mxu0 %v2368
        %2432 = vmatpush1.bf16.msra.mxu0 %v2367
        %2433 = vmatprep.subr.bf16.mxu0 %v2370
        %2434 = vmatpush1.bf16.msra.mxu0 %v2369
        %2435 = vmatprep.subr.bf16.mxu0 %v2372
        %2436 = vmatpush1.bf16.msra.mxu0 %v2371
        %2437 = vmatprep.subr.bf16.mxu0 %v2374
        %2438 = vmatpush1.bf16.msra.mxu0 %v2373
        %2439 = vmatprep.subr.bf16.mxu0 %v2376
        %2440 = vmatpush1.bf16.msra.mxu0 %v2375
        %2441 = vmatprep.subr.bf16.mxu0 %v2378
        %2442 = vmatpush1.bf16.msra.mxu0 %v2377
        %2443 = vmatprep.subr.bf16.mxu0 %v2380
        %2444 = vmatpush1.bf16.msra.mxu0 %v2379
        %2445 = vmatprep.mubr.bf16.mxu0 %v2176
        %2446 = vmatmul.mubr.bf16.gmra.mrb[0].mxu0 %v2175
        %v2447 = vpop.f32.mrb[0].mxu0
        %v2448 = vadd.f32 %v2246, %v2447
        %v2449 = vpop.f32.mrb[0].mxu0
        %v2450 = vadd.f32 %v2250, %v2449
        %v2451 = vpop.f32.mrb[0].mxu0
        %v2452 = vadd.f32 %v2246, %v2451
        %v2453 = vpop.f32.mrb[0].mxu0
        %v2454 = vadd.f32 %v2250, %v2453
        %2455 = vmatprep.mubr.bf16.mxu0 %v2178
        %2456 = vmatmul.mubr.bf16.gmra.mrb[0].mxu0 %v2177
        %v2457 = vpop.f32.mrb[0].mxu0
        %v2458 = vadd.f32 %v2246, %v2457
        %v2459 = vpop.f32.mrb[0].mxu0
        %v2460 = vadd.f32 %v2250, %v2459
        %v2461 = vpop.f32.mrb[0].mxu0
        %v2462 = vadd.f32 %v2246, %v2461
        %v2463 = vpop.f32.mrb[0].mxu0
        %v2464 = vadd.f32 %v2250, %v2463
        %2465 = vmatprep.mubr.bf16.mxu0 %v2180
        %2466 = vmatmul.mubr.bf16.gmra.mrb[0].mxu0 %v2179
        %v2467 = vpop.f32.mrb[0].mxu0
        %v2468 = vadd.f32 %v2246, %v2467
        %v2469 = vpop.f32.mrb[0].mxu0
        %v2470 = vadd.f32 %v2250, %v2469
        %v2471 = vpop.f32.mrb[0].mxu0
        %v2472 = vadd.f32 %v2246, %v2471
        %v2473 = vpop.f32.mrb[0].mxu0
        %v2474 = vadd.f32 %v2250, %v2473
        %2475 = vmatprep.mubr.bf16.mxu0 %v2182
        %2476 = vmatmul.mubr.bf16.gmra.mrb[0].mxu0 %v2181
        %v2477 = vpop.f32.mrb[0].mxu0
        %v2478 = vadd.f32 %v2246, %v2477
        %v2479 = vpop.f32.mrb[0].mxu0
        %v2480 = vadd.f32 %v2250, %v2479
        %v2481 = vpop.f32.mrb[0].mxu0
        %v2482 = vadd.f32 %v2246, %v2481
        %v2483 = vpop.f32.mrb[0].mxu0
        %v2484 = vadd.f32 %v2250, %v2483
        %2485 = vmatprep.mubr.bf16.mxu0 %v2184
        %2486 = vmatmul.mubr.bf16.gmra.mrb[0].mxu0 %v2183
        %v2487 = vpop.f32.mrb[0].mxu0
        %v2488 = vadd.f32 %v2246, %v2487
        %v2489 = vpop.f32.mrb[0].mxu0
        %v2490 = vadd.f32 %v2250, %v2489
        %v2491 = vpop.f32.mrb[0].mxu0
        %v2492 = vadd.f32 %v2246, %v2491
        %v2493 = vpop.f32.mrb[0].mxu0
        %v2494 = vadd.f32 %v2250, %v2493
        %2495 = vmatprep.mubr.bf16.mxu0 %v2186
        %2496 = vmatmul.mubr.bf16.gmra.mrb[0].mxu0 %v2185
        %v2497 = vpop.f32.mrb[0].mxu0
        %v2498 = vadd.f32 %v2246, %v2497
        %v2499 = vpop.f32.mrb[0].mxu0
        %v2500 = vadd.f32 %v2250, %v2499
        %v2501 = vpop.f32.mrb[0].mxu0
        %v2502 = vadd.f32 %v2246, %v2501
        %v2503 = vpop.f32.mrb[0].mxu0
        %v2504 = vadd.f32 %v2250, %v2503
        %2505 = vmatprep.mubr.bf16.mxu0 %v2188
        %2506 = vmatmul.mubr.bf16.gmra.mrb[0].mxu0 %v2187
        %v2507 = vpop.f32.mrb[0].mxu0
        %v2508 = vadd.f32 %v2246, %v2507
        %v2509 = vpop.f32.mrb[0].mxu0
        %v2510 = vadd.f32 %v2250, %v2509
        %v2511 = vpop.f32.mrb[0].mxu0
        %v2512 = vadd.f32 %v2246, %v2511
        %v2513 = vpop.f32.mrb[0].mxu0
        %v2514 = vadd.f32 %v2250, %v2513
        %2515 = vmatprep.mubr.bf16.mxu0 %v2190
        %2516 = vmatmul.mubr.bf16.gmra.mrb[0].mxu0 %v2189
        %v2517 = vpop.f32.mrb[0].mxu0
        %v2518 = vadd.f32 %v2246, %v2517
        %v2519 = vpop.f32.mrb[0].mxu0
        %v2520 = vadd.f32 %v2250, %v2519
        %v2521 = vpop.f32.mrb[0].mxu0
        %v2522 = vadd.f32 %v2246, %v2521
        %v2523 = vpop.f32.mrb[0].mxu0
        %v2524 = vadd.f32 %v2250, %v2523
        %2525 = vmatprep.mubr.bf16.mxu0 %v2192
        %2526 = vmatmul.mubr.bf16.gmra.mrb[0].mxu0 %v2191
        %v2527 = vpop.f32.mrb[0].mxu0
        %v2528 = vadd.f32 %v2246, %v2527
        %v2529 = vpop.f32.mrb[0].mxu0
        %v2530 = vadd.f32 %v2250, %v2529
        %v2531 = vpop.f32.mrb[0].mxu0
        %v2532 = vadd.f32 %v2246, %v2531
        %v2533 = vpop.f32.mrb[0].mxu0
        %v2534 = vadd.f32 %v2250, %v2533
        %2535 = vmatprep.mubr.bf16.mxu0 %v2194
        %2536 = vmatmul.mubr.bf16.gmra.mrb[0].mxu0 %v2193
        %v2537 = vpop.f32.mrb[0].mxu0
        %v2538 = vadd.f32 %v2246, %v2537
        %v2539 = vpop.f32.mrb[0].mxu0
        %v2540 = vadd.f32 %v2250, %v2539
        %v2541 = vpop.f32.mrb[0].mxu0
        %v2542 = vadd.f32 %v2246, %v2541
        %v2543 = vpop.f32.mrb[0].mxu0
        %v2544 = vadd.f32 %v2250, %v2543
        %2545 = vmatprep.mubr.bf16.mxu0 %v2196
        %2546 = vmatmul.mubr.bf16.gmra.mrb[0].mxu0 %v2195
        %v2547 = vpop.f32.mrb[0].mxu0
        %v2548 = vadd.f32 %v2246, %v2547
        %v2549 = vpop.f32.mrb[0].mxu0
        %v2550 = vadd.f32 %v2250, %v2549
        %v2551 = vpop.f32.mrb[0].mxu0
        %v2552 = vadd.f32 %v2246, %v2551
        %v2553 = vpop.f32.mrb[0].mxu0
        %v2554 = vadd.f32 %v2250, %v2553
        %2555 = vmatprep.mubr.bf16.mxu0 %v2198
        %2556 = vmatmul.mubr.bf16.gmra.mrb[0].mxu0 %v2197
        %v2557 = vpop.f32.mrb[0].mxu0
        %v2558 = vadd.f32 %v2246, %v2557
        %v2559 = vpop.f32.mrb[0].mxu0
        %v2560 = vadd.f32 %v2250, %v2559
        %v2561 = vpop.f32.mrb[0].mxu0
        %v2562 = vadd.f32 %v2246, %v2561
        %v2563 = vpop.f32.mrb[0].mxu0
        %v2564 = vadd.f32 %v2250, %v2563
        %2565 = vmatprep.mubr.bf16.mxu0 %v2200
        %2566 = vmatmul.mubr.bf16.gmra.mrb[0].mxu0 %v2199
        %v2567 = vpop.f32.mrb[0].mxu0
        %v2568 = vadd.f32 %v2246, %v2567
        %v2569 = vpop.f32.mrb[0].mxu0
        %v2570 = vadd.f32 %v2250, %v2569
        %v2571 = vpop.f32.mrb[0].mxu0
        %v2572 = vadd.f32 %v2246, %v2571
        %v2573 = vpop.f32.mrb[0].mxu0
        %v2574 = vadd.f32 %v2250, %v2573
        %2575 = vmatprep.mubr.bf16.mxu0 %v2202
        %2576 = vmatmul.mubr.bf16.gmra.mrb[0].mxu0 %v2201
        %v2577 = vpop.f32.mrb[0].mxu0
        %v2578 = vadd.f32 %v2246, %v2577
        %v2579 = vpop.f32.mrb[0].mxu0
        %v2580 = vadd.f32 %v2250, %v2579
        %v2581 = vpop.f32.mrb[0].mxu0
        %v2582 = vadd.f32 %v2246, %v2581
        %v2583 = vpop.f32.mrb[0].mxu0
        %v2584 = vadd.f32 %v2250, %v2583
        %2585 = vmatprep.mubr.bf16.mxu0 %v2204
        %2586 = vmatmul.mubr.bf16.gmra.mrb[0].mxu0 %v2203
        %v2587 = vpop.f32.mrb[0].mxu0
        %v2588 = vadd.f32 %v2246, %v2587
        %v2589 = vpop.f32.mrb[0].mxu0
        %v2590 = vadd.f32 %v2250, %v2589
        %v2591 = vpop.f32.mrb[0].mxu0
        %v2592 = vadd.f32 %v2246, %v2591
        %v2593 = vpop.f32.mrb[0].mxu0
        %v2594 = vadd.f32 %v2250, %v2593
        %2595 = vmatprep.mubr.bf16.mxu0 %v2206
        %2596 = vmatmul.mubr.bf16.gmra.mrb[0].mxu0 %v2205
        %v2597 = vpop.f32.mrb[0].mxu0
        %v2598 = vadd.f32 %v2246, %v2597
        %v2599 = vpop.f32.mrb[0].mxu0
        %v2600 = vadd.f32 %v2250, %v2599
        %v2601 = vpop.f32.mrb[0].mxu0
        %v2602 = vadd.f32 %v2246, %v2601
        %v2603 = vpop.f32.mrb[0].mxu0
        %v2604 = vadd.f32 %v2250, %v2603
        %2605 = vdwg.mxu0
        %v2606 = vmax.f32 %v2448, 0.0
        %v2607 = vmax.f32 %v2450, 0.0
        %v2608 = vmax.f32 %v2452, 0.0
        %v2609 = vmax.f32 %v2454, 0.0
        %v2610 = vmax.f32 %v2458, 0.0
        %v2611 = vmax.f32 %v2460, 0.0
        %v2612 = vmax.f32 %v2462, 0.0
        %v2613 = vmax.f32 %v2464, 0.0
        %v2614 = vmax.f32 %v2468, 0.0
        %v2615 = vmax.f32 %v2470, 0.0
        %v2616 = vmax.f32 %v2472, 0.0
        %v2617 = vmax.f32 %v2474, 0.0
        %v2618 = vmax.f32 %v2478, 0.0
        %v2619 = vmax.f32 %v2480, 0.0
        %v2620 = vmax.f32 %v2482, 0.0
        %v2621 = vmax.f32 %v2484, 0.0
        %v2622 = vmax.f32 %v2488, 0.0
        %v2623 = vmax.f32 %v2490, 0.0
        %v2624 = vmax.f32 %v2492, 0.0
        %v2625 = vmax.f32 %v2494, 0.0
        %v2626 = vmax.f32 %v2498, 0.0
        %v2627 = vmax.f32 %v2500, 0.0
        %v2628 = vmax.f32 %v2502, 0.0
        %v2629 = vmax.f32 %v2504, 0.0
        %v2630 = vmax.f32 %v2508, 0.0
        %v2631 = vmax.f32 %v2510, 0.0
        %v2632 = vmax.f32 %v2512, 0.0
        %v2633 = vmax.f32 %v2514, 0.0
        %v2634 = vmax.f32 %v2518, 0.0
        %v2635 = vmax.f32 %v2520, 0.0
        %v2636 = vmax.f32 %v2522, 0.0
        %v2637 = vmax.f32 %v2524, 0.0
        %v2638 = vmax.f32 %v2528, 0.0
        %v2639 = vmax.f32 %v2530, 0.0
        %v2640 = vmax.f32 %v2532, 0.0
        %v2641 = vmax.f32 %v2534, 0.0
        %v2642 = vmax.f32 %v2538, 0.0
        %v2643 = vmax.f32 %v2540, 0.0
        %v2644 = vmax.f32 %v2542, 0.0
        %v2645 = vmax.f32 %v2544, 0.0
        %v2646 = vmax.f32 %v2548, 0.0
        %v2647 = vmax.f32 %v2550, 0.0
        %v2648 = vmax.f32 %v2552, 0.0
        %v2649 = vmax.f32 %v2554, 0.0
        %v2650 = vmax.f32 %v2558, 0.0
        %v2651 = vmax.f32 %v2560, 0.0
        %v2652 = vmax.f32 %v2562, 0.0
        %v2653 = vmax.f32 %v2564, 0.0
        %v2654 = vmax.f32 %v2568, 0.0
        %v2655 = vmax.f32 %v2570, 0.0
        %v2656 = vmax.f32 %v2572, 0.0
        %v2657 = vmax.f32 %v2574, 0.0
        %v2658 = vmax.f32 %v2578, 0.0
        %v2659 = vmax.f32 %v2580, 0.0
        %v2660 = vmax.f32 %v2582, 0.0
        %v2661 = vmax.f32 %v2584, 0.0
        %v2662 = vmax.f32 %v2588, 0.0
        %v2663 = vmax.f32 %v2590, 0.0
        %v2664 = vmax.f32 %v2592, 0.0
        %v2665 = vmax.f32 %v2594, 0.0
        %v2666 = vmax.f32 %v2598, 0.0
        %v2667 = vmax.f32 %v2600, 0.0
        %v2668 = vmax.f32 %v2602, 0.0
        %v2669 = vmax.f32 %v2604, 0.0
        %v2670 = vpack.c.bf16 %v2608, %v2606
        %v2671 = vpack.c.bf16 %v2609, %v2607
        %v2672 = vpack.c.bf16 %v2612, %v2610
        %v2673 = vpack.c.bf16 %v2613, %v2611
        %v2674 = vpack.c.bf16 %v2616, %v2614
        %v2675 = vpack.c.bf16 %v2617, %v2615
        %v2676 = vpack.c.bf16 %v2620, %v2618
        %v2677 = vpack.c.bf16 %v2621, %v2619
        %v2678 = vpack.c.bf16 %v2624, %v2622
        %v2679 = vpack.c.bf16 %v2625, %v2623
        %v2680 = vpack.c.bf16 %v2628, %v2626
        %v2681 = vpack.c.bf16 %v2629, %v2627
        %v2682 = vpack.c.bf16 %v2632, %v2630
        %v2683 = vpack.c.bf16 %v2633, %v2631
        %v2684 = vpack.c.bf16 %v2636, %v2634
        %v2685 = vpack.c.bf16 %v2637, %v2635
        %v2686 = vpack.c.bf16 %v2640, %v2638
        %v2687 = vpack.c.bf16 %v2641, %v2639
        %v2688 = vpack.c.bf16 %v2644, %v2642
        %v2689 = vpack.c.bf16 %v2645, %v2643
        %v2690 = vpack.c.bf16 %v2648, %v2646
        %v2691 = vpack.c.bf16 %v2649, %v2647
        %v2692 = vpack.c.bf16 %v2652, %v2650
        %v2693 = vpack.c.bf16 %v2653, %v2651
        %v2694 = vpack.c.bf16 %v2656, %v2654
        %v2695 = vpack.c.bf16 %v2657, %v2655
        %v2696 = vpack.c.bf16 %v2660, %v2658
        %v2697 = vpack.c.bf16 %v2661, %v2659
        %v2698 = vpack.c.bf16 %v2664, %v2662
        %v2699 = vpack.c.bf16 %v2665, %v2663
        %v2700 = vpack.c.bf16 %v2668, %v2666
        %v2701 = vpack.c.bf16 %v2669, %v2667
        %s2702 = scalar_lea.vmem [#allocation3], 512
        %v2703 = vld [vmem:[%s2702] sm:$0xff]
        %v2704 = vld [vmem:[%s2702 + $0x8] sm:$0xff]
        %v2705 = vld [vmem:[%s2702 + $0x10] sm:$0xff]
        %v2706 = vld [vmem:[%s2702 + $0x18] sm:$0xff]
        %v2707 = vld [vmem:[%s2702 + $0x20] sm:$0xff]
        %v2708 = vld [vmem:[%s2702 + $0x28] sm:$0xff]
        %v2709 = vld [vmem:[%s2702 + $0x30] sm:$0xff]
        %v2710 = vld [vmem:[%s2702 + $0x38] sm:$0xff]
        %v2711 = vld [vmem:[%s2702 + $0x40] sm:$0xff]
        %v2712 = vld [vmem:[%s2702 + $0x48] sm:$0xff]
        %v2713 = vld [vmem:[%s2702 + $0x50] sm:$0xff]
        %v2714 = vld [vmem:[%s2702 + $0x58] sm:$0xff]
        %v2715 = vld [vmem:[%s2702 + $0x60] sm:$0xff]
        %v2716 = vld [vmem:[%s2702 + $0x68] sm:$0xff]
        %v2717 = vld [vmem:[%s2702 + $0x70] sm:$0xff]
        %v2718 = vld [vmem:[%s2702 + $0x78] sm:$0xff]
        %v2719 = vld [vmem:[%s2702 + $0x80] sm:$0xff]
        %v2720 = vld [vmem:[%s2702 + $0x88] sm:$0xff]
        %v2721 = vld [vmem:[%s2702 + $0x90] sm:$0xff]
        %v2722 = vld [vmem:[%s2702 + $0x98] sm:$0xff]
        %v2723 = vld [vmem:[%s2702 + $0xa0] sm:$0xff]
        %v2724 = vld [vmem:[%s2702 + $0xa8] sm:$0xff]
        %v2725 = vld [vmem:[%s2702 + $0xb0] sm:$0xff]
        %v2726 = vld [vmem:[%s2702 + $0xb8] sm:$0xff]
        %v2727 = vld [vmem:[%s2702 + $0xc0] sm:$0xff]
        %v2728 = vld [vmem:[%s2702 + $0xc8] sm:$0xff]
        %v2729 = vld [vmem:[%s2702 + $0xd0] sm:$0xff]
        %v2730 = vld [vmem:[%s2702 + $0xd8] sm:$0xff]
        %v2731 = vld [vmem:[%s2702 + $0xe0] sm:$0xff]
        %v2732 = vld [vmem:[%s2702 + $0xe8] sm:$0xff]
        %v2733 = vld [vmem:[%s2702 + $0xf0] sm:$0xff]
        %v2734 = vld [vmem:[%s2702 + $0xf8] sm:$0xff]
        %s2735 = scalar_lea.vmem %s8, 3
        %v2736 = vld [vmem:[%s2735] ss:$8 sm:$0x3]
        %v2738 = vlaneseq
        %v2739 = vshrl.u32 %v2738, 7
        %v2740 = vsub.s32 0, %v2739
        %v2741 = vrot.slane %v2736, %v2740
        %v2742 = vlaneseq
        %v2743 = vshrl.u32 %v2742, 7
        %v2744 = vsub.s32 1, %v2743
        %v2745 = vrot.slane %v2736, %v2744
        %v2780 = vunpack.c.l.b16 %v2703
        %v2781 = vunpack.c.h.b16 %v2703
        %v2782 = vunpack.c.l.b16 %v2704
        %v2783 = vunpack.c.h.b16 %v2704
        %v2784 = vunpack.c.l.b16 %v2705
        %v2785 = vunpack.c.h.b16 %v2705
        %v2786 = vunpack.c.l.b16 %v2706
        %v2787 = vunpack.c.h.b16 %v2706
        %v2788 = vunpack.c.l.b16 %v2707
        %v2789 = vunpack.c.h.b16 %v2707
        %v2790 = vunpack.c.l.b16 %v2708
        %v2791 = vunpack.c.h.b16 %v2708
        %v2792 = vunpack.c.l.b16 %v2709
        %v2793 = vunpack.c.h.b16 %v2709
        %v2794 = vunpack.c.l.b16 %v2710
        %v2795 = vunpack.c.h.b16 %v2710
        %v2796 = vunpack.c.l.b16 %v2711
        %v2797 = vunpack.c.h.b16 %v2711
        %v2798 = vunpack.c.l.b16 %v2712
        %v2799 = vunpack.c.h.b16 %v2712
        %v2800 = vunpack.c.l.b16 %v2713
        %v2801 = vunpack.c.h.b16 %v2713
        %v2802 = vunpack.c.l.b16 %v2714
        %v2803 = vunpack.c.h.b16 %v2714
        %v2804 = vunpack.c.l.b16 %v2715
        %v2805 = vunpack.c.h.b16 %v2715
        %v2806 = vunpack.c.l.b16 %v2716
        %v2807 = vunpack.c.h.b16 %v2716
        %v2808 = vunpack.c.l.b16 %v2717
        %v2809 = vunpack.c.h.b16 %v2717
        %v2810 = vunpack.c.l.b16 %v2718
        %v2811 = vunpack.c.h.b16 %v2718
        %v2812 = vunpack.c.l.b16 %v2719
        %v2813 = vunpack.c.h.b16 %v2719
        %v2814 = vunpack.c.l.b16 %v2720
        %v2815 = vunpack.c.h.b16 %v2720
        %v2816 = vunpack.c.l.b16 %v2721
        %v2817 = vunpack.c.h.b16 %v2721
        %v2818 = vunpack.c.l.b16 %v2722
        %v2819 = vunpack.c.h.b16 %v2722
        %v2820 = vunpack.c.l.b16 %v2723
        %v2821 = vunpack.c.h.b16 %v2723
        %v2822 = vunpack.c.l.b16 %v2724
        %v2823 = vunpack.c.h.b16 %v2724
        %v2824 = vunpack.c.l.b16 %v2725
        %v2825 = vunpack.c.h.b16 %v2725
        %v2826 = vunpack.c.l.b16 %v2726
        %v2827 = vunpack.c.h.b16 %v2726
        %v2828 = vunpack.c.l.b16 %v2727
        %v2829 = vunpack.c.h.b16 %v2727
        %v2830 = vunpack.c.l.b16 %v2728
        %v2831 = vunpack.c.h.b16 %v2728
        %v2832 = vunpack.c.l.b16 %v2729
        %v2833 = vunpack.c.h.b16 %v2729
        %v2834 = vunpack.c.l.b16 %v2730
        %v2835 = vunpack.c.h.b16 %v2730
        %v2836 = vunpack.c.l.b16 %v2731
        %v2837 = vunpack.c.h.b16 %v2731
        %v2838 = vunpack.c.l.b16 %v2732
        %v2839 = vunpack.c.h.b16 %v2732
        %v2840 = vunpack.c.l.b16 %v2733
        %v2841 = vunpack.c.h.b16 %v2733
        %v2842 = vunpack.c.l.b16 %v2734
        %v2843 = vunpack.c.h.b16 %v2734
        %v2844 = vpack.c.b16 %v2782, %v2780
        %v2845 = vpack.c.b16 %v2783, %v2781
        %v2846 = vpack.c.b16 %v2786, %v2784
        %v2847 = vpack.c.b16 %v2787, %v2785
        %v2848 = vpack.c.b16 %v2790, %v2788
        %v2849 = vpack.c.b16 %v2791, %v2789
        %v2850 = vpack.c.b16 %v2794, %v2792
        %v2851 = vpack.c.b16 %v2795, %v2793
        %v2852 = vpack.c.b16 %v2798, %v2796
        %v2853 = vpack.c.b16 %v2799, %v2797
        %v2854 = vpack.c.b16 %v2802, %v2800
        %v2855 = vpack.c.b16 %v2803, %v2801
        %v2856 = vpack.c.b16 %v2806, %v2804
        %v2857 = vpack.c.b16 %v2807, %v2805
        %v2858 = vpack.c.b16 %v2810, %v2808
        %v2859 = vpack.c.b16 %v2811, %v2809
        %v2860 = vpack.c.b16 %v2814, %v2812
        %v2861 = vpack.c.b16 %v2815, %v2813
        %v2862 = vpack.c.b16 %v2818, %v2816
        %v2863 = vpack.c.b16 %v2819, %v2817
        %v2864 = vpack.c.b16 %v2822, %v2820
        %v2865 = vpack.c.b16 %v2823, %v2821
        %v2866 = vpack.c.b16 %v2826, %v2824
        %v2867 = vpack.c.b16 %v2827, %v2825
        %v2868 = vpack.c.b16 %v2830, %v2828
        %v2869 = vpack.c.b16 %v2831, %v2829
        %v2870 = vpack.c.b16 %v2834, %v2832
        %v2871 = vpack.c.b16 %v2835, %v2833
        %v2872 = vpack.c.b16 %v2838, %v2836
        %v2873 = vpack.c.b16 %v2839, %v2837
        %v2874 = vpack.c.b16 %v2842, %v2840
        %v2875 = vpack.c.b16 %v2843, %v2841
        %2908 = vmatprep.subr.bf16.mxu0 %v2845
        %2909 = vmatpush1.bf16.msra.mxu0 %v2844
        %2910 = vmatprep.subr.bf16.mxu0 %v2847
        %2911 = vmatpush1.bf16.msra.mxu0 %v2846
        %2912 = vmatprep.subr.bf16.mxu0 %v2849
        %2913 = vmatpush1.bf16.msra.mxu0 %v2848
        %2914 = vmatprep.subr.bf16.mxu0 %v2851
        %2915 = vmatpush1.bf16.msra.mxu0 %v2850
        %2916 = vmatprep.subr.bf16.mxu0 %v2853
        %2917 = vmatpush1.bf16.msra.mxu0 %v2852
        %2918 = vmatprep.subr.bf16.mxu0 %v2855
        %2919 = vmatpush1.bf16.msra.mxu0 %v2854
        %2920 = vmatprep.subr.bf16.mxu0 %v2857
        %2921 = vmatpush1.bf16.msra.mxu0 %v2856
        %2922 = vmatprep.subr.bf16.mxu0 %v2859
        %2923 = vmatpush1.bf16.msra.mxu0 %v2858
        %2924 = vmatprep.subr.bf16.mxu0 %v2861
        %2925 = vmatpush1.bf16.msra.mxu0 %v2860
        %2926 = vmatprep.subr.bf16.mxu0 %v2863
        %2927 = vmatpush1.bf16.msra.mxu0 %v2862
        %2928 = vmatprep.subr.bf16.mxu0 %v2865
        %2929 = vmatpush1.bf16.msra.mxu0 %v2864
        %2930 = vmatprep.subr.bf16.mxu0 %v2867
        %2931 = vmatpush1.bf16.msra.mxu0 %v2866
        %2932 = vmatprep.subr.bf16.mxu0 %v2869
        %2933 = vmatpush1.bf16.msra.mxu0 %v2868
        %2934 = vmatprep.subr.bf16.mxu0 %v2871
        %2935 = vmatpush1.bf16.msra.mxu0 %v2870
        %2936 = vmatprep.subr.bf16.mxu0 %v2873
        %2937 = vmatpush1.bf16.msra.mxu0 %v2872
        %2938 = vmatprep.subr.bf16.mxu0 %v2875
        %2939 = vmatpush1.bf16.msra.mxu0 %v2874
        %2940 = vmatprep.mubr.bf16.mxu0 %v2671
        %2941 = vmatmul.mubr.bf16.gmra.mrb[0].mxu0 %v2670
        %v2942 = vpop.f32.mrb[0].mxu0
        %v2943 = vadd.f32 %v2741, %v2942
        %v2944 = vpop.f32.mrb[0].mxu0
        %v2945 = vadd.f32 %v2745, %v2944
        %v2946 = vpop.f32.mrb[0].mxu0
        %v2947 = vadd.f32 %v2741, %v2946
        %v2948 = vpop.f32.mrb[0].mxu0
        %v2949 = vadd.f32 %v2745, %v2948
        %2950 = vmatprep.mubr.bf16.mxu0 %v2673
        %2951 = vmatmul.mubr.bf16.gmra.mrb[0].mxu0 %v2672
        %v2952 = vpop.f32.mrb[0].mxu0
        %v2953 = vadd.f32 %v2741, %v2952
        %v2954 = vpop.f32.mrb[0].mxu0
        %v2955 = vadd.f32 %v2745, %v2954
        %v2956 = vpop.f32.mrb[0].mxu0
        %v2957 = vadd.f32 %v2741, %v2956
        %v2958 = vpop.f32.mrb[0].mxu0
        %v2959 = vadd.f32 %v2745, %v2958
        %2960 = vmatprep.mubr.bf16.mxu0 %v2675
        %2961 = vmatmul.mubr.bf16.gmra.mrb[0].mxu0 %v2674
        %v2962 = vpop.f32.mrb[0].mxu0
        %v2963 = vadd.f32 %v2741, %v2962
        %v2964 = vpop.f32.mrb[0].mxu0
        %v2965 = vadd.f32 %v2745, %v2964
        %v2966 = vpop.f32.mrb[0].mxu0
        %v2967 = vadd.f32 %v2741, %v2966
        %v2968 = vpop.f32.mrb[0].mxu0
        %v2969 = vadd.f32 %v2745, %v2968
        %2970 = vmatprep.mubr.bf16.mxu0 %v2677
        %2971 = vmatmul.mubr.bf16.gmra.mrb[0].mxu0 %v2676
        %v2972 = vpop.f32.mrb[0].mxu0
        %v2973 = vadd.f32 %v2741, %v2972
        %v2974 = vpop.f32.mrb[0].mxu0
        %v2975 = vadd.f32 %v2745, %v2974
        %v2976 = vpop.f32.mrb[0].mxu0
        %v2977 = vadd.f32 %v2741, %v2976
        %v2978 = vpop.f32.mrb[0].mxu0
        %v2979 = vadd.f32 %v2745, %v2978
        %2980 = vmatprep.mubr.bf16.mxu0 %v2679
        %2981 = vmatmul.mubr.bf16.gmra.mrb[0].mxu0 %v2678
        %v2982 = vpop.f32.mrb[0].mxu0
        %v2983 = vadd.f32 %v2741, %v2982
        %v2984 = vpop.f32.mrb[0].mxu0
        %v2985 = vadd.f32 %v2745, %v2984
        %v2986 = vpop.f32.mrb[0].mxu0
        %v2987 = vadd.f32 %v2741, %v2986
        %v2988 = vpop.f32.mrb[0].mxu0
        %v2989 = vadd.f32 %v2745, %v2988
        %2990 = vmatprep.mubr.bf16.mxu0 %v2681
        %2991 = vmatmul.mubr.bf16.gmra.mrb[0].mxu0 %v2680
        %v2992 = vpop.f32.mrb[0].mxu0
        %v2993 = vadd.f32 %v2741, %v2992
        %v2994 = vpop.f32.mrb[0].mxu0
        %v2995 = vadd.f32 %v2745, %v2994
        %v2996 = vpop.f32.mrb[0].mxu0
        %v2997 = vadd.f32 %v2741, %v2996
        %v2998 = vpop.f32.mrb[0].mxu0
        %v2999 = vadd.f32 %v2745, %v2998
        %3000 = vmatprep.mubr.bf16.mxu0 %v2683
        %3001 = vmatmul.mubr.bf16.gmra.mrb[0].mxu0 %v2682
        %v3002 = vpop.f32.mrb[0].mxu0
        %v3003 = vadd.f32 %v2741, %v3002
        %v3004 = vpop.f32.mrb[0].mxu0
        %v3005 = vadd.f32 %v2745, %v3004
        %v3006 = vpop.f32.mrb[0].mxu0
        %v3007 = vadd.f32 %v2741, %v3006
        %v3008 = vpop.f32.mrb[0].mxu0
        %v3009 = vadd.f32 %v2745, %v3008
        %3010 = vmatprep.mubr.bf16.mxu0 %v2685
        %3011 = vmatmul.mubr.bf16.gmra.mrb[0].mxu0 %v2684
        %v3012 = vpop.f32.mrb[0].mxu0
        %v3013 = vadd.f32 %v2741, %v3012
        %v3014 = vpop.f32.mrb[0].mxu0
        %v3015 = vadd.f32 %v2745, %v3014
        %v3016 = vpop.f32.mrb[0].mxu0
        %v3017 = vadd.f32 %v2741, %v3016
        %v3018 = vpop.f32.mrb[0].mxu0
        %v3019 = vadd.f32 %v2745, %v3018
        %3020 = vmatprep.mubr.bf16.mxu0 %v2687
        %3021 = vmatmul.mubr.bf16.gmra.mrb[0].mxu0 %v2686
        %v3022 = vpop.f32.mrb[0].mxu0
        %v3023 = vadd.f32 %v2741, %v3022
        %v3024 = vpop.f32.mrb[0].mxu0
        %v3025 = vadd.f32 %v2745, %v3024
        %v3026 = vpop.f32.mrb[0].mxu0
        %v3027 = vadd.f32 %v2741, %v3026
        %v3028 = vpop.f32.mrb[0].mxu0
        %v3029 = vadd.f32 %v2745, %v3028
        %3030 = vmatprep.mubr.bf16.mxu0 %v2689
        %3031 = vmatmul.mubr.bf16.gmra.mrb[0].mxu0 %v2688
        %v3032 = vpop.f32.mrb[0].mxu0
        %v3033 = vadd.f32 %v2741, %v3032
        %v3034 = vpop.f32.mrb[0].mxu0
        %v3035 = vadd.f32 %v2745, %v3034
        %v3036 = vpop.f32.mrb[0].mxu0
        %v3037 = vadd.f32 %v2741, %v3036
        %v3038 = vpop.f32.mrb[0].mxu0
        %v3039 = vadd.f32 %v2745, %v3038
        %3040 = vmatprep.mubr.bf16.mxu0 %v2691
        %3041 = vmatmul.mubr.bf16.gmra.mrb[0].mxu0 %v2690
        %v3042 = vpop.f32.mrb[0].mxu0
        %v3043 = vadd.f32 %v2741, %v3042
        %v3044 = vpop.f32.mrb[0].mxu0
        %v3045 = vadd.f32 %v2745, %v3044
        %v3046 = vpop.f32.mrb[0].mxu0
        %v3047 = vadd.f32 %v2741, %v3046
        %v3048 = vpop.f32.mrb[0].mxu0
        %v3049 = vadd.f32 %v2745, %v3048
        %3050 = vmatprep.mubr.bf16.mxu0 %v2693
        %3051 = vmatmul.mubr.bf16.gmra.mrb[0].mxu0 %v2692
        %v3052 = vpop.f32.mrb[0].mxu0
        %v3053 = vadd.f32 %v2741, %v3052
        %v3054 = vpop.f32.mrb[0].mxu0
        %v3055 = vadd.f32 %v2745, %v3054
        %v3056 = vpop.f32.mrb[0].mxu0
        %v3057 = vadd.f32 %v2741, %v3056
        %v3058 = vpop.f32.mrb[0].mxu0
        %v3059 = vadd.f32 %v2745, %v3058
        %3060 = vmatprep.mubr.bf16.mxu0 %v2695
        %3061 = vmatmul.mubr.bf16.gmra.mrb[0].mxu0 %v2694
        %v3062 = vpop.f32.mrb[0].mxu0
        %v3063 = vadd.f32 %v2741, %v3062
        %v3064 = vpop.f32.mrb[0].mxu0
        %v3065 = vadd.f32 %v2745, %v3064
        %v3066 = vpop.f32.mrb[0].mxu0
        %v3067 = vadd.f32 %v2741, %v3066
        %v3068 = vpop.f32.mrb[0].mxu0
        %v3069 = vadd.f32 %v2745, %v3068
        %3070 = vmatprep.mubr.bf16.mxu0 %v2697
        %3071 = vmatmul.mubr.bf16.gmra.mrb[0].mxu0 %v2696
        %v3072 = vpop.f32.mrb[0].mxu0
        %v3073 = vadd.f32 %v2741, %v3072
        %v3074 = vpop.f32.mrb[0].mxu0
        %v3075 = vadd.f32 %v2745, %v3074
        %v3076 = vpop.f32.mrb[0].mxu0
        %v3077 = vadd.f32 %v2741, %v3076
        %v3078 = vpop.f32.mrb[0].mxu0
        %v3079 = vadd.f32 %v2745, %v3078
        %3080 = vmatprep.mubr.bf16.mxu0 %v2699
        %3081 = vmatmul.mubr.bf16.gmra.mrb[0].mxu0 %v2698
        %v3082 = vpop.f32.mrb[0].mxu0
        %v3083 = vadd.f32 %v2741, %v3082
        %v3084 = vpop.f32.mrb[0].mxu0
        %v3085 = vadd.f32 %v2745, %v3084
        %v3086 = vpop.f32.mrb[0].mxu0
        %v3087 = vadd.f32 %v2741, %v3086
        %v3088 = vpop.f32.mrb[0].mxu0
        %v3089 = vadd.f32 %v2745, %v3088
        %3090 = vmatprep.mubr.bf16.mxu0 %v2701
        %3091 = vmatmul.mubr.bf16.gmra.mrb[0].mxu0 %v2700
        %v3092 = vpop.f32.mrb[0].mxu0
        %v3093 = vadd.f32 %v2741, %v3092
        %v3094 = vpop.f32.mrb[0].mxu0
        %v3095 = vadd.f32 %v2745, %v3094
        %v3096 = vpop.f32.mrb[0].mxu0
        %v3097 = vadd.f32 %v2741, %v3096
        %v3098 = vpop.f32.mrb[0].mxu0
        %v3099 = vadd.f32 %v2745, %v3098
        %3100 = vdwg.mxu0
        %v3101 = vmax.f32 %v2943, 0.0
        %v3102 = vmax.f32 %v2945, 0.0
        %v3103 = vmax.f32 %v2947, 0.0
        %v3104 = vmax.f32 %v2949, 0.0
        %v3105 = vmax.f32 %v2953, 0.0
        %v3106 = vmax.f32 %v2955, 0.0
        %v3107 = vmax.f32 %v2957, 0.0
        %v3108 = vmax.f32 %v2959, 0.0
        %v3109 = vmax.f32 %v2963, 0.0
        %v3110 = vmax.f32 %v2965, 0.0
        %v3111 = vmax.f32 %v2967, 0.0
        %v3112 = vmax.f32 %v2969, 0.0
        %v3113 = vmax.f32 %v2973, 0.0
        %v3114 = vmax.f32 %v2975, 0.0
        %v3115 = vmax.f32 %v2977, 0.0
        %v3116 = vmax.f32 %v2979, 0.0
        %v3117 = vmax.f32 %v2983, 0.0
        %v3118 = vmax.f32 %v2985, 0.0
        %v3119 = vmax.f32 %v2987, 0.0
        %v3120 = vmax.f32 %v2989, 0.0
        %v3121 = vmax.f32 %v2993, 0.0
        %v3122 = vmax.f32 %v2995, 0.0
        %v3123 = vmax.f32 %v2997, 0.0
        %v3124 = vmax.f32 %v2999, 0.0
        %v3125 = vmax.f32 %v3003, 0.0
        %v3126 = vmax.f32 %v3005, 0.0
        %v3127 = vmax.f32 %v3007, 0.0
        %v3128 = vmax.f32 %v3009, 0.0
        %v3129 = vmax.f32 %v3013, 0.0
        %v3130 = vmax.f32 %v3015, 0.0
        %v3131 = vmax.f32 %v3017, 0.0
        %v3132 = vmax.f32 %v3019, 0.0
        %v3133 = vmax.f32 %v3023, 0.0
        %v3134 = vmax.f32 %v3025, 0.0
        %v3135 = vmax.f32 %v3027, 0.0
        %v3136 = vmax.f32 %v3029, 0.0
        %v3137 = vmax.f32 %v3033, 0.0
        %v3138 = vmax.f32 %v3035, 0.0
        %v3139 = vmax.f32 %v3037, 0.0
        %v3140 = vmax.f32 %v3039, 0.0
        %v3141 = vmax.f32 %v3043, 0.0
        %v3142 = vmax.f32 %v3045, 0.0
        %v3143 = vmax.f32 %v3047, 0.0
        %v3144 = vmax.f32 %v3049, 0.0
        %v3145 = vmax.f32 %v3053, 0.0
        %v3146 = vmax.f32 %v3055, 0.0
        %v3147 = vmax.f32 %v3057, 0.0
        %v3148 = vmax.f32 %v3059, 0.0
        %v3149 = vmax.f32 %v3063, 0.0
        %v3150 = vmax.f32 %v3065, 0.0
        %v3151 = vmax.f32 %v3067, 0.0
        %v3152 = vmax.f32 %v3069, 0.0
        %v3153 = vmax.f32 %v3073, 0.0
        %v3154 = vmax.f32 %v3075, 0.0
        %v3155 = vmax.f32 %v3077, 0.0
        %v3156 = vmax.f32 %v3079, 0.0
        %v3157 = vmax.f32 %v3083, 0.0
        %v3158 = vmax.f32 %v3085, 0.0
        %v3159 = vmax.f32 %v3087, 0.0
        %v3160 = vmax.f32 %v3089, 0.0
        %v3161 = vmax.f32 %v3093, 0.0
        %v3162 = vmax.f32 %v3095, 0.0
        %v3163 = vmax.f32 %v3097, 0.0
        %v3164 = vmax.f32 %v3099, 0.0
        %v3165 = vpack.c.bf16 %v3103, %v3101
        %v3166 = vpack.c.bf16 %v3104, %v3102
        %v3167 = vpack.c.bf16 %v3107, %v3105
        %v3168 = vpack.c.bf16 %v3108, %v3106
        %v3169 = vpack.c.bf16 %v3111, %v3109
        %v3170 = vpack.c.bf16 %v3112, %v3110
        %v3171 = vpack.c.bf16 %v3115, %v3113
        %v3172 = vpack.c.bf16 %v3116, %v3114
        %v3173 = vpack.c.bf16 %v3119, %v3117
        %v3174 = vpack.c.bf16 %v3120, %v3118
        %v3175 = vpack.c.bf16 %v3123, %v3121
        %v3176 = vpack.c.bf16 %v3124, %v3122
        %v3177 = vpack.c.bf16 %v3127, %v3125
        %v3178 = vpack.c.bf16 %v3128, %v3126
        %v3179 = vpack.c.bf16 %v3131, %v3129
        %v3180 = vpack.c.bf16 %v3132, %v3130
        %v3181 = vpack.c.bf16 %v3135, %v3133
        %v3182 = vpack.c.bf16 %v3136, %v3134
        %v3183 = vpack.c.bf16 %v3139, %v3137
        %v3184 = vpack.c.bf16 %v3140, %v3138
        %v3185 = vpack.c.bf16 %v3143, %v3141
        %v3186 = vpack.c.bf16 %v3144, %v3142
        %v3187 = vpack.c.bf16 %v3147, %v3145
        %v3188 = vpack.c.bf16 %v3148, %v3146
        %v3189 = vpack.c.bf16 %v3151, %v3149
        %v3190 = vpack.c.bf16 %v3152, %v3150
        %v3191 = vpack.c.bf16 %v3155, %v3153
        %v3192 = vpack.c.bf16 %v3156, %v3154
        %v3193 = vpack.c.bf16 %v3159, %v3157
        %v3194 = vpack.c.bf16 %v3160, %v3158
        %v3195 = vpack.c.bf16 %v3163, %v3161
        %v3196 = vpack.c.bf16 %v3164, %v3162
        %s3197 = scalar_lea.vmem [#allocation3], 768
        %v3198 = vld [vmem:[%s3197] sm:$0xff]
        %v3199 = vld [vmem:[%s3197 + $0x8] sm:$0xff]
        %v3200 = vld [vmem:[%s3197 + $0x10] sm:$0xff]
        %v3201 = vld [vmem:[%s3197 + $0x18] sm:$0xff]
        %v3202 = vld [vmem:[%s3197 + $0x20] sm:$0xff]
        %v3203 = vld [vmem:[%s3197 + $0x28] sm:$0xff]
        %v3204 = vld [vmem:[%s3197 + $0x30] sm:$0xff]
        %v3205 = vld [vmem:[%s3197 + $0x38] sm:$0xff]
        %v3206 = vld [vmem:[%s3197 + $0x40] sm:$0xff]
        %v3207 = vld [vmem:[%s3197 + $0x48] sm:$0xff]
        %v3208 = vld [vmem:[%s3197 + $0x50] sm:$0xff]
        %v3209 = vld [vmem:[%s3197 + $0x58] sm:$0xff]
        %v3210 = vld [vmem:[%s3197 + $0x60] sm:$0xff]
        %v3211 = vld [vmem:[%s3197 + $0x68] sm:$0xff]
        %v3212 = vld [vmem:[%s3197 + $0x70] sm:$0xff]
        %v3213 = vld [vmem:[%s3197 + $0x78] sm:$0xff]
        %v3214 = vld [vmem:[%s3197 + $0x80] sm:$0xff]
        %v3215 = vld [vmem:[%s3197 + $0x88] sm:$0xff]
        %v3216 = vld [vmem:[%s3197 + $0x90] sm:$0xff]
        %v3217 = vld [vmem:[%s3197 + $0x98] sm:$0xff]
        %v3218 = vld [vmem:[%s3197 + $0xa0] sm:$0xff]
        %v3219 = vld [vmem:[%s3197 + $0xa8] sm:$0xff]
        %v3220 = vld [vmem:[%s3197 + $0xb0] sm:$0xff]
        %v3221 = vld [vmem:[%s3197 + $0xb8] sm:$0xff]
        %v3222 = vld [vmem:[%s3197 + $0xc0] sm:$0xff]
        %v3223 = vld [vmem:[%s3197 + $0xc8] sm:$0xff]
        %v3224 = vld [vmem:[%s3197 + $0xd0] sm:$0xff]
        %v3225 = vld [vmem:[%s3197 + $0xd8] sm:$0xff]
        %v3226 = vld [vmem:[%s3197 + $0xe0] sm:$0xff]
        %v3227 = vld [vmem:[%s3197 + $0xe8] sm:$0xff]
        %v3228 = vld [vmem:[%s3197 + $0xf0] sm:$0xff]
        %v3229 = vld [vmem:[%s3197 + $0xf8] sm:$0xff]
        %s3230 = scalar_lea.vmem %s8, 4
        %v3231 = vld [vmem:[%s3230] ss:$8 sm:$0x3]
        %v3233 = vlaneseq
        %v3234 = vshrl.u32 %v3233, 7
        %v3235 = vsub.s32 0, %v3234
        %v3236 = vrot.slane %v3231, %v3235
        %v3237 = vlaneseq
        %v3238 = vshrl.u32 %v3237, 7
        %v3239 = vsub.s32 1, %v3238
        %v3240 = vrot.slane %v3231, %v3239
        %v3275 = vunpack.c.l.b16 %v3198
        %v3276 = vunpack.c.h.b16 %v3198
        %v3277 = vunpack.c.l.b16 %v3199
        %v3278 = vunpack.c.h.b16 %v3199
        %v3279 = vunpack.c.l.b16 %v3200
        %v3280 = vunpack.c.h.b16 %v3200
        %v3281 = vunpack.c.l.b16 %v3201
        %v3282 = vunpack.c.h.b16 %v3201
        %v3283 = vunpack.c.l.b16 %v3202
        %v3284 = vunpack.c.h.b16 %v3202
        %v3285 = vunpack.c.l.b16 %v3203
        %v3286 = vunpack.c.h.b16 %v3203
        %v3287 = vunpack.c.l.b16 %v3204
        %v3288 = vunpack.c.h.b16 %v3204
        %v3289 = vunpack.c.l.b16 %v3205
        %v3290 = vunpack.c.h.b16 %v3205
        %v3291 = vunpack.c.l.b16 %v3206
        %v3292 = vunpack.c.h.b16 %v3206
        %v3293 = vunpack.c.l.b16 %v3207
        %v3294 = vunpack.c.h.b16 %v3207
        %v3295 = vunpack.c.l.b16 %v3208
        %v3296 = vunpack.c.h.b16 %v3208
        %v3297 = vunpack.c.l.b16 %v3209
        %v3298 = vunpack.c.h.b16 %v3209
        %v3299 = vunpack.c.l.b16 %v3210
        %v3300 = vunpack.c.h.b16 %v3210
        %v3301 = vunpack.c.l.b16 %v3211
        %v3302 = vunpack.c.h.b16 %v3211
        %v3303 = vunpack.c.l.b16 %v3212
        %v3304 = vunpack.c.h.b16 %v3212
        %v3305 = vunpack.c.l.b16 %v3213
        %v3306 = vunpack.c.h.b16 %v3213
        %v3307 = vunpack.c.l.b16 %v3214
        %v3308 = vunpack.c.h.b16 %v3214
        %v3309 = vunpack.c.l.b16 %v3215
        %v3310 = vunpack.c.h.b16 %v3215
        %v3311 = vunpack.c.l.b16 %v3216
        %v3312 = vunpack.c.h.b16 %v3216
        %v3313 = vunpack.c.l.b16 %v3217
        %v3314 = vunpack.c.h.b16 %v3217
        %v3315 = vunpack.c.l.b16 %v3218
        %v3316 = vunpack.c.h.b16 %v3218
        %v3317 = vunpack.c.l.b16 %v3219
        %v3318 = vunpack.c.h.b16 %v3219
        %v3319 = vunpack.c.l.b16 %v3220
        %v3320 = vunpack.c.h.b16 %v3220
        %v3321 = vunpack.c.l.b16 %v3221
        %v3322 = vunpack.c.h.b16 %v3221
        %v3323 = vunpack.c.l.b16 %v3222
        %v3324 = vunpack.c.h.b16 %v3222
        %v3325 = vunpack.c.l.b16 %v3223
        %v3326 = vunpack.c.h.b16 %v3223
        %v3327 = vunpack.c.l.b16 %v3224
        %v3328 = vunpack.c.h.b16 %v3224
        %v3329 = vunpack.c.l.b16 %v3225
        %v3330 = vunpack.c.h.b16 %v3225
        %v3331 = vunpack.c.l.b16 %v3226
        %v3332 = vunpack.c.h.b16 %v3226
        %v3333 = vunpack.c.l.b16 %v3227
        %v3334 = vunpack.c.h.b16 %v3227
        %v3335 = vunpack.c.l.b16 %v3228
        %v3336 = vunpack.c.h.b16 %v3228
        %v3337 = vunpack.c.l.b16 %v3229
        %v3338 = vunpack.c.h.b16 %v3229
        %v3339 = vpack.c.b16 %v3277, %v3275
        %v3340 = vpack.c.b16 %v3278, %v3276
        %v3341 = vpack.c.b16 %v3281, %v3279
        %v3342 = vpack.c.b16 %v3282, %v3280
        %v3343 = vpack.c.b16 %v3285, %v3283
        %v3344 = vpack.c.b16 %v3286, %v3284
        %v3345 = vpack.c.b16 %v3289, %v3287
        %v3346 = vpack.c.b16 %v3290, %v3288
        %v3347 = vpack.c.b16 %v3293, %v3291
        %v3348 = vpack.c.b16 %v3294, %v3292
        %v3349 = vpack.c.b16 %v3297, %v3295
        %v3350 = vpack.c.b16 %v3298, %v3296
        %v3351 = vpack.c.b16 %v3301, %v3299
        %v3352 = vpack.c.b16 %v3302, %v3300
        %v3353 = vpack.c.b16 %v3305, %v3303
        %v3354 = vpack.c.b16 %v3306, %v3304
        %v3355 = vpack.c.b16 %v3309, %v3307
        %v3356 = vpack.c.b16 %v3310, %v3308
        %v3357 = vpack.c.b16 %v3313, %v3311
        %v3358 = vpack.c.b16 %v3314, %v3312
        %v3359 = vpack.c.b16 %v3317, %v3315
        %v3360 = vpack.c.b16 %v3318, %v3316
        %v3361 = vpack.c.b16 %v3321, %v3319
        %v3362 = vpack.c.b16 %v3322, %v3320
        %v3363 = vpack.c.b16 %v3325, %v3323
        %v3364 = vpack.c.b16 %v3326, %v3324
        %v3365 = vpack.c.b16 %v3329, %v3327
        %v3366 = vpack.c.b16 %v3330, %v3328
        %v3367 = vpack.c.b16 %v3333, %v3331
        %v3368 = vpack.c.b16 %v3334, %v3332
        %v3369 = vpack.c.b16 %v3337, %v3335
        %v3370 = vpack.c.b16 %v3338, %v3336
        %3403 = vmatprep.subr.bf16.mxu0 %v3340
        %3404 = vmatpush1.bf16.msra.mxu0 %v3339
        %3405 = vmatprep.subr.bf16.mxu0 %v3342
        %3406 = vmatpush1.bf16.msra.mxu0 %v3341
        %3407 = vmatprep.subr.bf16.mxu0 %v3344
        %3408 = vmatpush1.bf16.msra.mxu0 %v3343
        %3409 = vmatprep.subr.bf16.mxu0 %v3346
        %3410 = vmatpush1.bf16.msra.mxu0 %v3345
        %3411 = vmatprep.subr.bf16.mxu0 %v3348
        %3412 = vmatpush1.bf16.msra.mxu0 %v3347
        %3413 = vmatprep.subr.bf16.mxu0 %v3350
        %3414 = vmatpush1.bf16.msra.mxu0 %v3349
        %3415 = vmatprep.subr.bf16.mxu0 %v3352
        %3416 = vmatpush1.bf16.msra.mxu0 %v3351
        %3417 = vmatprep.subr.bf16.mxu0 %v3354
        %3418 = vmatpush1.bf16.msra.mxu0 %v3353
        %3419 = vmatprep.subr.bf16.mxu0 %v3356
        %3420 = vmatpush1.bf16.msra.mxu0 %v3355
        %3421 = vmatprep.subr.bf16.mxu0 %v3358
        %3422 = vmatpush1.bf16.msra.mxu0 %v3357
        %3423 = vmatprep.subr.bf16.mxu0 %v3360
        %3424 = vmatpush1.bf16.msra.mxu0 %v3359
        %3425 = vmatprep.subr.bf16.mxu0 %v3362
        %3426 = vmatpush1.bf16.msra.mxu0 %v3361
        %3427 = vmatprep.subr.bf16.mxu0 %v3364
        %3428 = vmatpush1.bf16.msra.mxu0 %v3363
        %3429 = vmatprep.subr.bf16.mxu0 %v3366
        %3430 = vmatpush1.bf16.msra.mxu0 %v3365
        %3431 = vmatprep.subr.bf16.mxu0 %v3368
        %3432 = vmatpush1.bf16.msra.mxu0 %v3367
        %3433 = vmatprep.subr.bf16.mxu0 %v3370
        %3434 = vmatpush1.bf16.msra.mxu0 %v3369
        %3435 = vmatprep.mubr.bf16.mxu0 %v3166
        %3436 = vmatmul.mubr.bf16.gmra.mrb[0].mxu0 %v3165
        %v3437 = vpop.f32.mrb[0].mxu0
        %v3438 = vadd.f32 %v3236, %v3437
        %v3439 = vpop.f32.mrb[0].mxu0
        %v3440 = vadd.f32 %v3240, %v3439
        %v3441 = vpop.f32.mrb[0].mxu0
        %v3442 = vadd.f32 %v3236, %v3441
        %v3443 = vpop.f32.mrb[0].mxu0
        %v3444 = vadd.f32 %v3240, %v3443
        %3445 = vmatprep.mubr.bf16.mxu0 %v3168
        %3446 = vmatmul.mubr.bf16.gmra.mrb[0].mxu0 %v3167
        %v3447 = vpop.f32.mrb[0].mxu0
        %v3448 = vadd.f32 %v3236, %v3447
        %v3449 = vpop.f32.mrb[0].mxu0
        %v3450 = vadd.f32 %v3240, %v3449
        %v3451 = vpop.f32.mrb[0].mxu0
        %v3452 = vadd.f32 %v3236, %v3451
        %v3453 = vpop.f32.mrb[0].mxu0
        %v3454 = vadd.f32 %v3240, %v3453
        %3455 = vmatprep.mubr.bf16.mxu0 %v3170
        %3456 = vmatmul.mubr.bf16.gmra.mrb[0].mxu0 %v3169
        %v3457 = vpop.f32.mrb[0].mxu0
        %v3458 = vadd.f32 %v3236, %v3457
        %v3459 = vpop.f32.mrb[0].mxu0
        %v3460 = vadd.f32 %v3240, %v3459
        %v3461 = vpop.f32.mrb[0].mxu0
        %v3462 = vadd.f32 %v3236, %v3461
        %v3463 = vpop.f32.mrb[0].mxu0
        %v3464 = vadd.f32 %v3240, %v3463
        %3465 = vmatprep.mubr.bf16.mxu0 %v3172
        %3466 = vmatmul.mubr.bf16.gmra.mrb[0].mxu0 %v3171
        %v3467 = vpop.f32.mrb[0].mxu0
        %v3468 = vadd.f32 %v3236, %v3467
        %v3469 = vpop.f32.mrb[0].mxu0
        %v3470 = vadd.f32 %v3240, %v3469
        %v3471 = vpop.f32.mrb[0].mxu0
        %v3472 = vadd.f32 %v3236, %v3471
        %v3473 = vpop.f32.mrb[0].mxu0
        %v3474 = vadd.f32 %v3240, %v3473
        %3475 = vmatprep.mubr.bf16.mxu0 %v3174
        %3476 = vmatmul.mubr.bf16.gmra.mrb[0].mxu0 %v3173
        %v3477 = vpop.f32.mrb[0].mxu0
        %v3478 = vadd.f32 %v3236, %v3477
        %v3479 = vpop.f32.mrb[0].mxu0
        %v3480 = vadd.f32 %v3240, %v3479
        %v3481 = vpop.f32.mrb[0].mxu0
        %v3482 = vadd.f32 %v3236, %v3481
        %v3483 = vpop.f32.mrb[0].mxu0
        %v3484 = vadd.f32 %v3240, %v3483
        %3485 = vmatprep.mubr.bf16.mxu0 %v3176
        %3486 = vmatmul.mubr.bf16.gmra.mrb[0].mxu0 %v3175
        %v3487 = vpop.f32.mrb[0].mxu0
        %v3488 = vadd.f32 %v3236, %v3487
        %v3489 = vpop.f32.mrb[0].mxu0
        %v3490 = vadd.f32 %v3240, %v3489
        %v3491 = vpop.f32.mrb[0].mxu0
        %v3492 = vadd.f32 %v3236, %v3491
        %v3493 = vpop.f32.mrb[0].mxu0
        %v3494 = vadd.f32 %v3240, %v3493
        %3495 = vmatprep.mubr.bf16.mxu0 %v3178
        %3496 = vmatmul.mubr.bf16.gmra.mrb[0].mxu0 %v3177
        %v3497 = vpop.f32.mrb[0].mxu0
        %v3498 = vadd.f32 %v3236, %v3497
        %v3499 = vpop.f32.mrb[0].mxu0
        %v3500 = vadd.f32 %v3240, %v3499
        %v3501 = vpop.f32.mrb[0].mxu0
        %v3502 = vadd.f32 %v3236, %v3501
        %v3503 = vpop.f32.mrb[0].mxu0
        %v3504 = vadd.f32 %v3240, %v3503
        %3505 = vmatprep.mubr.bf16.mxu0 %v3180
        %3506 = vmatmul.mubr.bf16.gmra.mrb[0].mxu0 %v3179
        %v3507 = vpop.f32.mrb[0].mxu0
        %v3508 = vadd.f32 %v3236, %v3507
        %v3509 = vpop.f32.mrb[0].mxu0
        %v3510 = vadd.f32 %v3240, %v3509
        %v3511 = vpop.f32.mrb[0].mxu0
        %v3512 = vadd.f32 %v3236, %v3511
        %v3513 = vpop.f32.mrb[0].mxu0
        %v3514 = vadd.f32 %v3240, %v3513
        %3515 = vmatprep.mubr.bf16.mxu0 %v3182
        %3516 = vmatmul.mubr.bf16.gmra.mrb[0].mxu0 %v3181
        %v3517 = vpop.f32.mrb[0].mxu0
        %v3518 = vadd.f32 %v3236, %v3517
        %v3519 = vpop.f32.mrb[0].mxu0
        %v3520 = vadd.f32 %v3240, %v3519
        %v3521 = vpop.f32.mrb[0].mxu0
        %v3522 = vadd.f32 %v3236, %v3521
        %v3523 = vpop.f32.mrb[0].mxu0
        %v3524 = vadd.f32 %v3240, %v3523
        %3525 = vmatprep.mubr.bf16.mxu0 %v3184
        %3526 = vmatmul.mubr.bf16.gmra.mrb[0].mxu0 %v3183
        %v3527 = vpop.f32.mrb[0].mxu0
        %v3528 = vadd.f32 %v3236, %v3527
        %v3529 = vpop.f32.mrb[0].mxu0
        %v3530 = vadd.f32 %v3240, %v3529
        %v3531 = vpop.f32.mrb[0].mxu0
        %v3532 = vadd.f32 %v3236, %v3531
        %v3533 = vpop.f32.mrb[0].mxu0
        %v3534 = vadd.f32 %v3240, %v3533
        %3535 = vmatprep.mubr.bf16.mxu0 %v3186
        %3536 = vmatmul.mubr.bf16.gmra.mrb[0].mxu0 %v3185
        %v3537 = vpop.f32.mrb[0].mxu0
        %v3538 = vadd.f32 %v3236, %v3537
        %v3539 = vpop.f32.mrb[0].mxu0
        %v3540 = vadd.f32 %v3240, %v3539
        %v3541 = vpop.f32.mrb[0].mxu0
        %v3542 = vadd.f32 %v3236, %v3541
        %v3543 = vpop.f32.mrb[0].mxu0
        %v3544 = vadd.f32 %v3240, %v3543
        %3545 = vmatprep.mubr.bf16.mxu0 %v3188
        %3546 = vmatmul.mubr.bf16.gmra.mrb[0].mxu0 %v3187
        %v3547 = vpop.f32.mrb[0].mxu0
        %v3548 = vadd.f32 %v3236, %v3547
        %v3549 = vpop.f32.mrb[0].mxu0
        %v3550 = vadd.f32 %v3240, %v3549
        %v3551 = vpop.f32.mrb[0].mxu0
        %v3552 = vadd.f32 %v3236, %v3551
        %v3553 = vpop.f32.mrb[0].mxu0
        %v3554 = vadd.f32 %v3240, %v3553
        %3555 = vmatprep.mubr.bf16.mxu0 %v3190
        %3556 = vmatmul.mubr.bf16.gmra.mrb[0].mxu0 %v3189
        %v3557 = vpop.f32.mrb[0].mxu0
        %v3558 = vadd.f32 %v3236, %v3557
        %v3559 = vpop.f32.mrb[0].mxu0
        %v3560 = vadd.f32 %v3240, %v3559
        %v3561 = vpop.f32.mrb[0].mxu0
        %v3562 = vadd.f32 %v3236, %v3561
        %v3563 = vpop.f32.mrb[0].mxu0
        %v3564 = vadd.f32 %v3240, %v3563
        %3565 = vmatprep.mubr.bf16.mxu0 %v3192
        %3566 = vmatmul.mubr.bf16.gmra.mrb[0].mxu0 %v3191
        %v3567 = vpop.f32.mrb[0].mxu0
        %v3568 = vadd.f32 %v3236, %v3567
        %v3569 = vpop.f32.mrb[0].mxu0
        %v3570 = vadd.f32 %v3240, %v3569
        %v3571 = vpop.f32.mrb[0].mxu0
        %v3572 = vadd.f32 %v3236, %v3571
        %v3573 = vpop.f32.mrb[0].mxu0
        %v3574 = vadd.f32 %v3240, %v3573
        %3575 = vmatprep.mubr.bf16.mxu0 %v3194
        %3576 = vmatmul.mubr.bf16.gmra.mrb[0].mxu0 %v3193
        %v3577 = vpop.f32.mrb[0].mxu0
        %v3578 = vadd.f32 %v3236, %v3577
        %v3579 = vpop.f32.mrb[0].mxu0
        %v3580 = vadd.f32 %v3240, %v3579
        %v3581 = vpop.f32.mrb[0].mxu0
        %v3582 = vadd.f32 %v3236, %v3581
        %v3583 = vpop.f32.mrb[0].mxu0
        %v3584 = vadd.f32 %v3240, %v3583
        %3585 = vmatprep.mubr.bf16.mxu0 %v3196
        %3586 = vmatmul.mubr.bf16.gmra.mrb[0].mxu0 %v3195
        %v3587 = vpop.f32.mrb[0].mxu0
        %v3588 = vadd.f32 %v3236, %v3587
        %v3589 = vpop.f32.mrb[0].mxu0
        %v3590 = vadd.f32 %v3240, %v3589
        %v3591 = vpop.f32.mrb[0].mxu0
        %v3592 = vadd.f32 %v3236, %v3591
        %v3593 = vpop.f32.mrb[0].mxu0
        %v3594 = vadd.f32 %v3240, %v3593
        %3595 = vdwg.mxu0
        %v3596 = vmax.f32 %v3438, 0.0
        %v3597 = vmax.f32 %v3440, 0.0
        %v3598 = vmax.f32 %v3442, 0.0
        %v3599 = vmax.f32 %v3444, 0.0
        %v3600 = vmax.f32 %v3448, 0.0
        %v3601 = vmax.f32 %v3450, 0.0
        %v3602 = vmax.f32 %v3452, 0.0
        %v3603 = vmax.f32 %v3454, 0.0
        %v3604 = vmax.f32 %v3458, 0.0
        %v3605 = vmax.f32 %v3460, 0.0
        %v3606 = vmax.f32 %v3462, 0.0
        %v3607 = vmax.f32 %v3464, 0.0
        %v3608 = vmax.f32 %v3468, 0.0
        %v3609 = vmax.f32 %v3470, 0.0
        %v3610 = vmax.f32 %v3472, 0.0
        %v3611 = vmax.f32 %v3474, 0.0
        %v3612 = vmax.f32 %v3478, 0.0
        %v3613 = vmax.f32 %v3480, 0.0
        %v3614 = vmax.f32 %v3482, 0.0
        %v3615 = vmax.f32 %v3484, 0.0
        %v3616 = vmax.f32 %v3488, 0.0
        %v3617 = vmax.f32 %v3490, 0.0
        %v3618 = vmax.f32 %v3492, 0.0
        %v3619 = vmax.f32 %v3494, 0.0
        %v3620 = vmax.f32 %v3498, 0.0
        %v3621 = vmax.f32 %v3500, 0.0
        %v3622 = vmax.f32 %v3502, 0.0
        %v3623 = vmax.f32 %v3504, 0.0
        %v3624 = vmax.f32 %v3508, 0.0
        %v3625 = vmax.f32 %v3510, 0.0
        %v3626 = vmax.f32 %v3512, 0.0
        %v3627 = vmax.f32 %v3514, 0.0
        %v3628 = vmax.f32 %v3518, 0.0
        %v3629 = vmax.f32 %v3520, 0.0
        %v3630 = vmax.f32 %v3522, 0.0
        %v3631 = vmax.f32 %v3524, 0.0
        %v3632 = vmax.f32 %v3528, 0.0
        %v3633 = vmax.f32 %v3530, 0.0
        %v3634 = vmax.f32 %v3532, 0.0
        %v3635 = vmax.f32 %v3534, 0.0
        %v3636 = vmax.f32 %v3538, 0.0
        %v3637 = vmax.f32 %v3540, 0.0
        %v3638 = vmax.f32 %v3542, 0.0
        %v3639 = vmax.f32 %v3544, 0.0
        %v3640 = vmax.f32 %v3548, 0.0
        %v3641 = vmax.f32 %v3550, 0.0
        %v3642 = vmax.f32 %v3552, 0.0
        %v3643 = vmax.f32 %v3554, 0.0
        %v3644 = vmax.f32 %v3558, 0.0
        %v3645 = vmax.f32 %v3560, 0.0
        %v3646 = vmax.f32 %v3562, 0.0
        %v3647 = vmax.f32 %v3564, 0.0
        %v3648 = vmax.f32 %v3568, 0.0
        %v3649 = vmax.f32 %v3570, 0.0
        %v3650 = vmax.f32 %v3572, 0.0
        %v3651 = vmax.f32 %v3574, 0.0
        %v3652 = vmax.f32 %v3578, 0.0
        %v3653 = vmax.f32 %v3580, 0.0
        %v3654 = vmax.f32 %v3582, 0.0
        %v3655 = vmax.f32 %v3584, 0.0
        %v3656 = vmax.f32 %v3588, 0.0
        %v3657 = vmax.f32 %v3590, 0.0
        %v3658 = vmax.f32 %v3592, 0.0
        %v3659 = vmax.f32 %v3594, 0.0
        %v3660 = vpack.c.bf16 %v3598, %v3596
        %v3661 = vpack.c.bf16 %v3599, %v3597
        %v3662 = vpack.c.bf16 %v3602, %v3600
        %v3663 = vpack.c.bf16 %v3603, %v3601
        %v3664 = vpack.c.bf16 %v3606, %v3604
        %v3665 = vpack.c.bf16 %v3607, %v3605
        %v3666 = vpack.c.bf16 %v3610, %v3608
        %v3667 = vpack.c.bf16 %v3611, %v3609
        %v3668 = vpack.c.bf16 %v3614, %v3612
        %v3669 = vpack.c.bf16 %v3615, %v3613
        %v3670 = vpack.c.bf16 %v3618, %v3616
        %v3671 = vpack.c.bf16 %v3619, %v3617
        %v3672 = vpack.c.bf16 %v3622, %v3620
        %v3673 = vpack.c.bf16 %v3623, %v3621
        %v3674 = vpack.c.bf16 %v3626, %v3624
        %v3675 = vpack.c.bf16 %v3627, %v3625
        %v3676 = vpack.c.bf16 %v3630, %v3628
        %v3677 = vpack.c.bf16 %v3631, %v3629
        %v3678 = vpack.c.bf16 %v3634, %v3632
        %v3679 = vpack.c.bf16 %v3635, %v3633
        %v3680 = vpack.c.bf16 %v3638, %v3636
        %v3681 = vpack.c.bf16 %v3639, %v3637
        %v3682 = vpack.c.bf16 %v3642, %v3640
        %v3683 = vpack.c.bf16 %v3643, %v3641
        %v3684 = vpack.c.bf16 %v3646, %v3644
        %v3685 = vpack.c.bf16 %v3647, %v3645
        %v3686 = vpack.c.bf16 %v3650, %v3648
        %v3687 = vpack.c.bf16 %v3651, %v3649
        %v3688 = vpack.c.bf16 %v3654, %v3652
        %v3689 = vpack.c.bf16 %v3655, %v3653
        %v3690 = vpack.c.bf16 %v3658, %v3656
        %v3691 = vpack.c.bf16 %v3659, %v3657
        %s3692 = scalar_lea.vmem [#allocation3], 1024
        %v3693 = vld [vmem:[%s3692] sm:$0xff]
        %v3694 = vld [vmem:[%s3692 + $0x8] sm:$0xff]
        %v3695 = vld [vmem:[%s3692 + $0x10] sm:$0xff]
        %v3696 = vld [vmem:[%s3692 + $0x18] sm:$0xff]
        %v3697 = vld [vmem:[%s3692 + $0x20] sm:$0xff]
        %v3698 = vld [vmem:[%s3692 + $0x28] sm:$0xff]
        %v3699 = vld [vmem:[%s3692 + $0x30] sm:$0xff]
        %v3700 = vld [vmem:[%s3692 + $0x38] sm:$0xff]
        %v3701 = vld [vmem:[%s3692 + $0x40] sm:$0xff]
        %v3702 = vld [vmem:[%s3692 + $0x48] sm:$0xff]
        %v3703 = vld [vmem:[%s3692 + $0x50] sm:$0xff]
        %v3704 = vld [vmem:[%s3692 + $0x58] sm:$0xff]
        %v3705 = vld [vmem:[%s3692 + $0x60] sm:$0xff]
        %v3706 = vld [vmem:[%s3692 + $0x68] sm:$0xff]
        %v3707 = vld [vmem:[%s3692 + $0x70] sm:$0xff]
        %v3708 = vld [vmem:[%s3692 + $0x78] sm:$0xff]
        %v3709 = vld [vmem:[%s3692 + $0x80] sm:$0xff]
        %v3710 = vld [vmem:[%s3692 + $0x88] sm:$0xff]
        %v3711 = vld [vmem:[%s3692 + $0x90] sm:$0xff]
        %v3712 = vld [vmem:[%s3692 + $0x98] sm:$0xff]
        %v3713 = vld [vmem:[%s3692 + $0xa0] sm:$0xff]
        %v3714 = vld [vmem:[%s3692 + $0xa8] sm:$0xff]
        %v3715 = vld [vmem:[%s3692 + $0xb0] sm:$0xff]
        %v3716 = vld [vmem:[%s3692 + $0xb8] sm:$0xff]
        %v3717 = vld [vmem:[%s3692 + $0xc0] sm:$0xff]
        %v3718 = vld [vmem:[%s3692 + $0xc8] sm:$0xff]
        %v3719 = vld [vmem:[%s3692 + $0xd0] sm:$0xff]
        %v3720 = vld [vmem:[%s3692 + $0xd8] sm:$0xff]
        %v3721 = vld [vmem:[%s3692 + $0xe0] sm:$0xff]
        %v3722 = vld [vmem:[%s3692 + $0xe8] sm:$0xff]
        %v3723 = vld [vmem:[%s3692 + $0xf0] sm:$0xff]
        %v3724 = vld [vmem:[%s3692 + $0xf8] sm:$0xff]
        %s3725 = scalar_lea.vmem %s8, 5
        %v3726 = vld [vmem:[%s3725] ss:$8 sm:$0x3]
        %v3728 = vlaneseq
        %v3729 = vshrl.u32 %v3728, 7
        %v3730 = vsub.s32 0, %v3729
        %v3731 = vrot.slane %v3726, %v3730
        %v3732 = vlaneseq
        %v3733 = vshrl.u32 %v3732, 7
        %v3734 = vsub.s32 1, %v3733
        %v3735 = vrot.slane %v3726, %v3734
        %v3770 = vunpack.c.l.b16 %v3693
        %v3771 = vunpack.c.h.b16 %v3693
        %v3772 = vunpack.c.l.b16 %v3694
        %v3773 = vunpack.c.h.b16 %v3694
        %v3774 = vunpack.c.l.b16 %v3695
        %v3775 = vunpack.c.h.b16 %v3695
        %v3776 = vunpack.c.l.b16 %v3696
        %v3777 = vunpack.c.h.b16 %v3696
        %v3778 = vunpack.c.l.b16 %v3697
        %v3779 = vunpack.c.h.b16 %v3697
        %v3780 = vunpack.c.l.b16 %v3698
        %v3781 = vunpack.c.h.b16 %v3698
        %v3782 = vunpack.c.l.b16 %v3699
        %v3783 = vunpack.c.h.b16 %v3699
        %v3784 = vunpack.c.l.b16 %v3700
        %v3785 = vunpack.c.h.b16 %v3700
        %v3786 = vunpack.c.l.b16 %v3701
        %v3787 = vunpack.c.h.b16 %v3701
        %v3788 = vunpack.c.l.b16 %v3702
        %v3789 = vunpack.c.h.b16 %v3702
        %v3790 = vunpack.c.l.b16 %v3703
        %v3791 = vunpack.c.h.b16 %v3703
        %v3792 = vunpack.c.l.b16 %v3704
        %v3793 = vunpack.c.h.b16 %v3704
        %v3794 = vunpack.c.l.b16 %v3705
        %v3795 = vunpack.c.h.b16 %v3705
        %v3796 = vunpack.c.l.b16 %v3706
        %v3797 = vunpack.c.h.b16 %v3706
        %v3798 = vunpack.c.l.b16 %v3707
        %v3799 = vunpack.c.h.b16 %v3707
        %v3800 = vunpack.c.l.b16 %v3708
        %v3801 = vunpack.c.h.b16 %v3708
        %v3802 = vunpack.c.l.b16 %v3709
        %v3803 = vunpack.c.h.b16 %v3709
        %v3804 = vunpack.c.l.b16 %v3710
        %v3805 = vunpack.c.h.b16 %v3710
        %v3806 = vunpack.c.l.b16 %v3711
        %v3807 = vunpack.c.h.b16 %v3711
        %v3808 = vunpack.c.l.b16 %v3712
        %v3809 = vunpack.c.h.b16 %v3712
        %v3810 = vunpack.c.l.b16 %v3713
        %v3811 = vunpack.c.h.b16 %v3713
        %v3812 = vunpack.c.l.b16 %v3714
        %v3813 = vunpack.c.h.b16 %v3714
        %v3814 = vunpack.c.l.b16 %v3715
        %v3815 = vunpack.c.h.b16 %v3715
        %v3816 = vunpack.c.l.b16 %v3716
        %v3817 = vunpack.c.h.b16 %v3716
        %v3818 = vunpack.c.l.b16 %v3717
        %v3819 = vunpack.c.h.b16 %v3717
        %v3820 = vunpack.c.l.b16 %v3718
        %v3821 = vunpack.c.h.b16 %v3718
        %v3822 = vunpack.c.l.b16 %v3719
        %v3823 = vunpack.c.h.b16 %v3719
        %v3824 = vunpack.c.l.b16 %v3720
        %v3825 = vunpack.c.h.b16 %v3720
        %v3826 = vunpack.c.l.b16 %v3721
        %v3827 = vunpack.c.h.b16 %v3721
        %v3828 = vunpack.c.l.b16 %v3722
        %v3829 = vunpack.c.h.b16 %v3722
        %v3830 = vunpack.c.l.b16 %v3723
        %v3831 = vunpack.c.h.b16 %v3723
        %v3832 = vunpack.c.l.b16 %v3724
        %v3833 = vunpack.c.h.b16 %v3724
        %v3834 = vpack.c.b16 %v3772, %v3770
        %v3835 = vpack.c.b16 %v3773, %v3771
        %v3836 = vpack.c.b16 %v3776, %v3774
        %v3837 = vpack.c.b16 %v3777, %v3775
        %v3838 = vpack.c.b16 %v3780, %v3778
        %v3839 = vpack.c.b16 %v3781, %v3779
        %v3840 = vpack.c.b16 %v3784, %v3782
        %v3841 = vpack.c.b16 %v3785, %v3783
        %v3842 = vpack.c.b16 %v3788, %v3786
        %v3843 = vpack.c.b16 %v3789, %v3787
        %v3844 = vpack.c.b16 %v3792, %v3790
        %v3845 = vpack.c.b16 %v3793, %v3791
        %v3846 = vpack.c.b16 %v3796, %v3794
        %v3847 = vpack.c.b16 %v3797, %v3795
        %v3848 = vpack.c.b16 %v3800, %v3798
        %v3849 = vpack.c.b16 %v3801, %v3799
        %v3850 = vpack.c.b16 %v3804, %v3802
        %v3851 = vpack.c.b16 %v3805, %v3803
        %v3852 = vpack.c.b16 %v3808, %v3806
        %v3853 = vpack.c.b16 %v3809, %v3807
        %v3854 = vpack.c.b16 %v3812, %v3810
        %v3855 = vpack.c.b16 %v3813, %v3811
        %v3856 = vpack.c.b16 %v3816, %v3814
        %v3857 = vpack.c.b16 %v3817, %v3815
        %v3858 = vpack.c.b16 %v3820, %v3818
        %v3859 = vpack.c.b16 %v3821, %v3819
        %v3860 = vpack.c.b16 %v3824, %v3822
        %v3861 = vpack.c.b16 %v3825, %v3823
        %v3862 = vpack.c.b16 %v3828, %v3826
        %v3863 = vpack.c.b16 %v3829, %v3827
        %v3864 = vpack.c.b16 %v3832, %v3830
        %v3865 = vpack.c.b16 %v3833, %v3831
        %3898 = vmatprep.subr.bf16.mxu0 %v3835
        %3899 = vmatpush1.bf16.msra.mxu0 %v3834
        %3900 = vmatprep.subr.bf16.mxu0 %v3837
        %3901 = vmatpush1.bf16.msra.mxu0 %v3836
        %3902 = vmatprep.subr.bf16.mxu0 %v3839
        %3903 = vmatpush1.bf16.msra.mxu0 %v3838
        %3904 = vmatprep.subr.bf16.mxu0 %v3841
        %3905 = vmatpush1.bf16.msra.mxu0 %v3840
        %3906 = vmatprep.subr.bf16.mxu0 %v3843
        %3907 = vmatpush1.bf16.msra.mxu0 %v3842
        %3908 = vmatprep.subr.bf16.mxu0 %v3845
        %3909 = vmatpush1.bf16.msra.mxu0 %v3844
        %3910 = vmatprep.subr.bf16.mxu0 %v3847
        %3911 = vmatpush1.bf16.msra.mxu0 %v3846
        %3912 = vmatprep.subr.bf16.mxu0 %v3849
        %3913 = vmatpush1.bf16.msra.mxu0 %v3848
        %3914 = vmatprep.subr.bf16.mxu0 %v3851
        %3915 = vmatpush1.bf16.msra.mxu0 %v3850
        %3916 = vmatprep.subr.bf16.mxu0 %v3853
        %3917 = vmatpush1.bf16.msra.mxu0 %v3852
        %3918 = vmatprep.subr.bf16.mxu0 %v3855
        %3919 = vmatpush1.bf16.msra.mxu0 %v3854
        %3920 = vmatprep.subr.bf16.mxu0 %v3857
        %3921 = vmatpush1.bf16.msra.mxu0 %v3856
        %3922 = vmatprep.subr.bf16.mxu0 %v3859
        %3923 = vmatpush1.bf16.msra.mxu0 %v3858
        %3924 = vmatprep.subr.bf16.mxu0 %v3861
        %3925 = vmatpush1.bf16.msra.mxu0 %v3860
        %3926 = vmatprep.subr.bf16.mxu0 %v3863
        %3927 = vmatpush1.bf16.msra.mxu0 %v3862
        %3928 = vmatprep.subr.bf16.mxu0 %v3865
        %3929 = vmatpush1.bf16.msra.mxu0 %v3864
        %3930 = vmatprep.mubr.bf16.mxu0 %v3661
        %3931 = vmatmul.mubr.bf16.gmra.mrb[0].mxu0 %v3660
        %v3932 = vpop.f32.mrb[0].mxu0
        %v3933 = vadd.f32 %v3731, %v3932
        %v3934 = vpop.f32.mrb[0].mxu0
        %v3935 = vadd.f32 %v3735, %v3934
        %v3936 = vpop.f32.mrb[0].mxu0
        %v3937 = vadd.f32 %v3731, %v3936
        %v3938 = vpop.f32.mrb[0].mxu0
        %v3939 = vadd.f32 %v3735, %v3938
        %3940 = vmatprep.mubr.bf16.mxu0 %v3663
        %3941 = vmatmul.mubr.bf16.gmra.mrb[0].mxu0 %v3662
        %v3942 = vpop.f32.mrb[0].mxu0
        %v3943 = vadd.f32 %v3731, %v3942
        %v3944 = vpop.f32.mrb[0].mxu0
        %v3945 = vadd.f32 %v3735, %v3944
        %v3946 = vpop.f32.mrb[0].mxu0
        %v3947 = vadd.f32 %v3731, %v3946
        %v3948 = vpop.f32.mrb[0].mxu0
        %v3949 = vadd.f32 %v3735, %v3948
        %3950 = vmatprep.mubr.bf16.mxu0 %v3665
        %3951 = vmatmul.mubr.bf16.gmra.mrb[0].mxu0 %v3664
        %v3952 = vpop.f32.mrb[0].mxu0
        %v3953 = vadd.f32 %v3731, %v3952
        %v3954 = vpop.f32.mrb[0].mxu0
        %v3955 = vadd.f32 %v3735, %v3954
        %v3956 = vpop.f32.mrb[0].mxu0
        %v3957 = vadd.f32 %v3731, %v3956
        %v3958 = vpop.f32.mrb[0].mxu0
        %v3959 = vadd.f32 %v3735, %v3958
        %3960 = vmatprep.mubr.bf16.mxu0 %v3667
        %3961 = vmatmul.mubr.bf16.gmra.mrb[0].mxu0 %v3666
        %v3962 = vpop.f32.mrb[0].mxu0
        %v3963 = vadd.f32 %v3731, %v3962
        %v3964 = vpop.f32.mrb[0].mxu0
        %v3965 = vadd.f32 %v3735, %v3964
        %v3966 = vpop.f32.mrb[0].mxu0
        %v3967 = vadd.f32 %v3731, %v3966
        %v3968 = vpop.f32.mrb[0].mxu0
        %v3969 = vadd.f32 %v3735, %v3968
        %3970 = vmatprep.mubr.bf16.mxu0 %v3669
        %3971 = vmatmul.mubr.bf16.gmra.mrb[0].mxu0 %v3668
        %v3972 = vpop.f32.mrb[0].mxu0
        %v3973 = vadd.f32 %v3731, %v3972
        %v3974 = vpop.f32.mrb[0].mxu0
        %v3975 = vadd.f32 %v3735, %v3974
        %v3976 = vpop.f32.mrb[0].mxu0
        %v3977 = vadd.f32 %v3731, %v3976
        %v3978 = vpop.f32.mrb[0].mxu0
        %v3979 = vadd.f32 %v3735, %v3978
        %3980 = vmatprep.mubr.bf16.mxu0 %v3671
        %3981 = vmatmul.mubr.bf16.gmra.mrb[0].mxu0 %v3670
        %v3982 = vpop.f32.mrb[0].mxu0
        %v3983 = vadd.f32 %v3731, %v3982
        %v3984 = vpop.f32.mrb[0].mxu0
        %v3985 = vadd.f32 %v3735, %v3984
        %v3986 = vpop.f32.mrb[0].mxu0
        %v3987 = vadd.f32 %v3731, %v3986
        %v3988 = vpop.f32.mrb[0].mxu0
        %v3989 = vadd.f32 %v3735, %v3988
        %3990 = vmatprep.mubr.bf16.mxu0 %v3673
        %3991 = vmatmul.mubr.bf16.gmra.mrb[0].mxu0 %v3672
        %v3992 = vpop.f32.mrb[0].mxu0
        %v3993 = vadd.f32 %v3731, %v3992
        %v3994 = vpop.f32.mrb[0].mxu0
        %v3995 = vadd.f32 %v3735, %v3994
        %v3996 = vpop.f32.mrb[0].mxu0
        %v3997 = vadd.f32 %v3731, %v3996
        %v3998 = vpop.f32.mrb[0].mxu0
        %v3999 = vadd.f32 %v3735, %v3998
        %4000 = vmatprep.mubr.bf16.mxu0 %v3675
        %4001 = vmatmul.mubr.bf16.gmra.mrb[0].mxu0 %v3674
        %v4002 = vpop.f32.mrb[0].mxu0
        %v4003 = vadd.f32 %v3731, %v4002
        %v4004 = vpop.f32.mrb[0].mxu0
        %v4005 = vadd.f32 %v3735, %v4004
        %v4006 = vpop.f32.mrb[0].mxu0
        %v4007 = vadd.f32 %v3731, %v4006
        %v4008 = vpop.f32.mrb[0].mxu0
        %v4009 = vadd.f32 %v3735, %v4008
        %4010 = vmatprep.mubr.bf16.mxu0 %v3677
        %4011 = vmatmul.mubr.bf16.gmra.mrb[0].mxu0 %v3676
        %v4012 = vpop.f32.mrb[0].mxu0
        %v4013 = vadd.f32 %v3731, %v4012
        %v4014 = vpop.f32.mrb[0].mxu0
        %v4015 = vadd.f32 %v3735, %v4014
        %v4016 = vpop.f32.mrb[0].mxu0
        %v4017 = vadd.f32 %v3731, %v4016
        %v4018 = vpop.f32.mrb[0].mxu0
        %v4019 = vadd.f32 %v3735, %v4018
        %4020 = vmatprep.mubr.bf16.mxu0 %v3679
        %4021 = vmatmul.mubr.bf16.gmra.mrb[0].mxu0 %v3678
        %v4022 = vpop.f32.mrb[0].mxu0
        %v4023 = vadd.f32 %v3731, %v4022
        %v4024 = vpop.f32.mrb[0].mxu0
        %v4025 = vadd.f32 %v3735, %v4024
        %v4026 = vpop.f32.mrb[0].mxu0
        %v4027 = vadd.f32 %v3731, %v4026
        %v4028 = vpop.f32.mrb[0].mxu0
        %v4029 = vadd.f32 %v3735, %v4028
        %4030 = vmatprep.mubr.bf16.mxu0 %v3681
        %4031 = vmatmul.mubr.bf16.gmra.mrb[0].mxu0 %v3680
        %v4032 = vpop.f32.mrb[0].mxu0
        %v4033 = vadd.f32 %v3731, %v4032
        %v4034 = vpop.f32.mrb[0].mxu0
        %v4035 = vadd.f32 %v3735, %v4034
        %v4036 = vpop.f32.mrb[0].mxu0
        %v4037 = vadd.f32 %v3731, %v4036
        %v4038 = vpop.f32.mrb[0].mxu0
        %v4039 = vadd.f32 %v3735, %v4038
        %4040 = vmatprep.mubr.bf16.mxu0 %v3683
        %4041 = vmatmul.mubr.bf16.gmra.mrb[0].mxu0 %v3682
        %v4042 = vpop.f32.mrb[0].mxu0
        %v4043 = vadd.f32 %v3731, %v4042
        %v4044 = vpop.f32.mrb[0].mxu0
        %v4045 = vadd.f32 %v3735, %v4044
        %v4046 = vpop.f32.mrb[0].mxu0
        %v4047 = vadd.f32 %v3731, %v4046
        %v4048 = vpop.f32.mrb[0].mxu0
        %v4049 = vadd.f32 %v3735, %v4048
        %4050 = vmatprep.mubr.bf16.mxu0 %v3685
        %4051 = vmatmul.mubr.bf16.gmra.mrb[0].mxu0 %v3684
        %v4052 = vpop.f32.mrb[0].mxu0
        %v4053 = vadd.f32 %v3731, %v4052
        %v4054 = vpop.f32.mrb[0].mxu0
        %v4055 = vadd.f32 %v3735, %v4054
        %v4056 = vpop.f32.mrb[0].mxu0
        %v4057 = vadd.f32 %v3731, %v4056
        %v4058 = vpop.f32.mrb[0].mxu0
        %v4059 = vadd.f32 %v3735, %v4058
        %4060 = vmatprep.mubr.bf16.mxu0 %v3687
        %4061 = vmatmul.mubr.bf16.gmra.mrb[0].mxu0 %v3686
        %v4062 = vpop.f32.mrb[0].mxu0
        %v4063 = vadd.f32 %v3731, %v4062
        %v4064 = vpop.f32.mrb[0].mxu0
        %v4065 = vadd.f32 %v3735, %v4064
        %v4066 = vpop.f32.mrb[0].mxu0
        %v4067 = vadd.f32 %v3731, %v4066
        %v4068 = vpop.f32.mrb[0].mxu0
        %v4069 = vadd.f32 %v3735, %v4068
        %4070 = vmatprep.mubr.bf16.mxu0 %v3689
        %4071 = vmatmul.mubr.bf16.gmra.mrb[0].mxu0 %v3688
        %v4072 = vpop.f32.mrb[0].mxu0
        %v4073 = vadd.f32 %v3731, %v4072
        %v4074 = vpop.f32.mrb[0].mxu0
        %v4075 = vadd.f32 %v3735, %v4074
        %v4076 = vpop.f32.mrb[0].mxu0
        %v4077 = vadd.f32 %v3731, %v4076
        %v4078 = vpop.f32.mrb[0].mxu0
        %v4079 = vadd.f32 %v3735, %v4078
        %4080 = vmatprep.mubr.bf16.mxu0 %v3691
        %4081 = vmatmul.mubr.bf16.gmra.mrb[0].mxu0 %v3690
        %v4082 = vpop.f32.mrb[0].mxu0
        %v4083 = vadd.f32 %v3731, %v4082
        %v4084 = vpop.f32.mrb[0].mxu0
        %v4085 = vadd.f32 %v3735, %v4084
        %v4086 = vpop.f32.mrb[0].mxu0
        %v4087 = vadd.f32 %v3731, %v4086
        %v4088 = vpop.f32.mrb[0].mxu0
        %v4089 = vadd.f32 %v3735, %v4088
        %4090 = vdwg.mxu0
        %v4091 = vld [vmem:[%s6] sm:$0x77]
        %v4093 = vlaneseq
        %v4094 = vshrl.u32 %v4093, 7
        %v4095 = vsub.s32 0, %v4094
        %v4096 = vrot.slane %v4091, %v4095
        %v4097 = vlaneseq
        %v4098 = vshrl.u32 %v4097, 7
        %v4099 = vsub.s32 4, %v4098
        %v4100 = vrot.slane %v4091, %v4099
        %v4103 = vlaneseq
        %v4104 = vshrl.u32 %v4103, 7
        %v4105 = vsub.s32 0, %v4104
        %v4106 = vrot.slane %v4096, %v4105
        %v4107 = vlaneseq
        %v4108 = vshrl.u32 %v4107, 7
        %v4109 = vsub.s32 0, %v4108
        %v4110 = vrot.slane %v4100, %v4109
        %v4111 = vmul.f32 %v753, %v4106
        %v4112 = vmul.f32 %v753, %v4110
        %v4113 = vmul.f32 %v758, %v4106
        %v4114 = vmul.f32 %v758, %v4110
        %v4115 = vmul.f32 %v763, %v4106
        %v4116 = vmul.f32 %v763, %v4110
        %v4117 = vmul.f32 %v768, %v4106
        %v4118 = vmul.f32 %v768, %v4110
        %v4119 = vmul.f32 %v773, %v4106
        %v4120 = vmul.f32 %v773, %v4110
        %v4121 = vmul.f32 %v778, %v4106
        %v4122 = vmul.f32 %v778, %v4110
        %v4123 = vmul.f32 %v783, %v4106
        %v4124 = vmul.f32 %v783, %v4110
        %v4125 = vmul.f32 %v788, %v4106
        %v4126 = vmul.f32 %v788, %v4110
        %v4127 = vmul.f32 %v793, %v4106
        %v4128 = vmul.f32 %v793, %v4110
        %v4129 = vmul.f32 %v798, %v4106
        %v4130 = vmul.f32 %v798, %v4110
        %v4131 = vmul.f32 %v803, %v4106
        %v4132 = vmul.f32 %v803, %v4110
        %v4133 = vmul.f32 %v808, %v4106
        %v4134 = vmul.f32 %v808, %v4110
        %v4135 = vmul.f32 %v813, %v4106
        %v4136 = vmul.f32 %v813, %v4110
        %v4137 = vmul.f32 %v818, %v4106
        %v4138 = vmul.f32 %v818, %v4110
        %v4139 = vmul.f32 %v823, %v4106
        %v4140 = vmul.f32 %v823, %v4110
        %v4141 = vmul.f32 %v828, %v4106
        %v4142 = vmul.f32 %v828, %v4110
        %v4143 = vmul.f32 %v833, %v4106
        %v4144 = vmul.f32 %v833, %v4110
        %v4145 = vmul.f32 %v838, %v4106
        %v4146 = vmul.f32 %v838, %v4110
        %v4147 = vmul.f32 %v843, %v4106
        %v4148 = vmul.f32 %v843, %v4110
        %v4149 = vmul.f32 %v848, %v4106
        %v4150 = vmul.f32 %v848, %v4110
        %v4151 = vmul.f32 %v853, %v4106
        %v4152 = vmul.f32 %v853, %v4110
        %v4153 = vmul.f32 %v858, %v4106
        %v4154 = vmul.f32 %v858, %v4110
        %v4155 = vmul.f32 %v863, %v4106
        %v4156 = vmul.f32 %v863, %v4110
        %v4157 = vmul.f32 %v868, %v4106
        %v4158 = vmul.f32 %v868, %v4110
        %v4159 = vmul.f32 %v873, %v4106
        %v4160 = vmul.f32 %v873, %v4110
        %v4161 = vmul.f32 %v878, %v4106
        %v4162 = vmul.f32 %v878, %v4110
        %v4163 = vmul.f32 %v883, %v4106
        %v4164 = vmul.f32 %v883, %v4110
        %v4165 = vmul.f32 %v888, %v4106
        %v4166 = vmul.f32 %v888, %v4110
        %v4167 = vmul.f32 %v893, %v4106
        %v4168 = vmul.f32 %v893, %v4110
        %v4169 = vmul.f32 %v898, %v4106
        %v4170 = vmul.f32 %v898, %v4110
        %v4171 = vmul.f32 %v903, %v4106
        %v4172 = vmul.f32 %v903, %v4110
        %v4173 = vmul.f32 %v908, %v4106
        %v4174 = vmul.f32 %v908, %v4110
        %v4175 = vlaneseq
        %v4176 = vshrl.u32 %v4175, 7
        %v4177 = vsub.s32 1, %v4176
        %v4178 = vrot.slane %v4091, %v4177
        %v4179 = vlaneseq
        %v4180 = vshrl.u32 %v4179, 7
        %v4181 = vsub.s32 5, %v4180
        %v4182 = vrot.slane %v4091, %v4181
        %v4185 = vlaneseq
        %v4186 = vshrl.u32 %v4185, 7
        %v4187 = vsub.s32 1, %v4186
        %v4188 = vrot.slane %v4178, %v4187
        %v4189 = vlaneseq
        %v4190 = vshrl.u32 %v4189, 7
        %v4191 = vsub.s32 1, %v4190
        %v4192 = vrot.slane %v4182, %v4191
        %v4193 = vmul.f32 %v995, %v4188
        %v4194 = vmul.f32 %v995, %v4192
        %v4195 = vmul.f32 %v999, %v4188
        %v4196 = vmul.f32 %v999, %v4192
        %v4197 = vmul.f32 %v1003, %v4188
        %v4198 = vmul.f32 %v1003, %v4192
        %v4199 = vmul.f32 %v1007, %v4188
        %v4200 = vmul.f32 %v1007, %v4192
        %v4201 = vmul.f32 %v1011, %v4188
        %v4202 = vmul.f32 %v1011, %v4192
        %v4203 = vmul.f32 %v1015, %v4188
        %v4204 = vmul.f32 %v1015, %v4192
        %v4205 = vmul.f32 %v1019, %v4188
        %v4206 = vmul.f32 %v1019, %v4192
        %v4207 = vmul.f32 %v1023, %v4188
        %v4208 = vmul.f32 %v1023, %v4192
        %v4209 = vmul.f32 %v1027, %v4188
        %v4210 = vmul.f32 %v1027, %v4192
        %v4211 = vmul.f32 %v1031, %v4188
        %v4212 = vmul.f32 %v1031, %v4192
        %v4213 = vmul.f32 %v1035, %v4188
        %v4214 = vmul.f32 %v1035, %v4192
        %v4215 = vmul.f32 %v1039, %v4188
        %v4216 = vmul.f32 %v1039, %v4192
        %v4217 = vmul.f32 %v1043, %v4188
        %v4218 = vmul.f32 %v1043, %v4192
        %v4219 = vmul.f32 %v1047, %v4188
        %v4220 = vmul.f32 %v1047, %v4192
        %v4221 = vmul.f32 %v1051, %v4188
        %v4222 = vmul.f32 %v1051, %v4192
        %v4223 = vmul.f32 %v1055, %v4188
        %v4224 = vmul.f32 %v1055, %v4192
        %v4225 = vmul.f32 %v1059, %v4188
        %v4226 = vmul.f32 %v1059, %v4192
        %v4227 = vmul.f32 %v1063, %v4188
        %v4228 = vmul.f32 %v1063, %v4192
        %v4229 = vmul.f32 %v1067, %v4188
        %v4230 = vmul.f32 %v1067, %v4192
        %v4231 = vmul.f32 %v1071, %v4188
        %v4232 = vmul.f32 %v1071, %v4192
        %v4233 = vmul.f32 %v1075, %v4188
        %v4234 = vmul.f32 %v1075, %v4192
        %v4235 = vmul.f32 %v1079, %v4188
        %v4236 = vmul.f32 %v1079, %v4192
        %v4237 = vmul.f32 %v1083, %v4188
        %v4238 = vmul.f32 %v1083, %v4192
        %v4239 = vmul.f32 %v1087, %v4188
        %v4240 = vmul.f32 %v1087, %v4192
        %v4241 = vmul.f32 %v1091, %v4188
        %v4242 = vmul.f32 %v1091, %v4192
        %v4243 = vmul.f32 %v1095, %v4188
        %v4244 = vmul.f32 %v1095, %v4192
        %v4245 = vmul.f32 %v1099, %v4188
        %v4246 = vmul.f32 %v1099, %v4192
        %v4247 = vmul.f32 %v1103, %v4188
        %v4248 = vmul.f32 %v1103, %v4192
        %v4249 = vmul.f32 %v1107, %v4188
        %v4250 = vmul.f32 %v1107, %v4192
        %v4251 = vmul.f32 %v1111, %v4188
        %v4252 = vmul.f32 %v1111, %v4192
        %v4253 = vmul.f32 %v1115, %v4188
        %v4254 = vmul.f32 %v1115, %v4192
        %v4255 = vmul.f32 %v1119, %v4188
        %v4256 = vmul.f32 %v1119, %v4192
        %v4257 = vadd.f32 %v4111, %v4193
        %v4258 = vadd.f32 %v4112, %v4194
        %v4259 = vadd.f32 %v4113, %v4195
        %v4260 = vadd.f32 %v4114, %v4196
        %v4261 = vadd.f32 %v4115, %v4197
        %v4262 = vadd.f32 %v4116, %v4198
        %v4263 = vadd.f32 %v4117, %v4199
        %v4264 = vadd.f32 %v4118, %v4200
        %v4265 = vadd.f32 %v4119, %v4201
        %v4266 = vadd.f32 %v4120, %v4202
        %v4267 = vadd.f32 %v4121, %v4203
        %v4268 = vadd.f32 %v4122, %v4204
        %v4269 = vadd.f32 %v4123, %v4205
        %v4270 = vadd.f32 %v4124, %v4206
        %v4271 = vadd.f32 %v4125, %v4207
        %v4272 = vadd.f32 %v4126, %v4208
        %v4273 = vadd.f32 %v4127, %v4209
        %v4274 = vadd.f32 %v4128, %v4210
        %v4275 = vadd.f32 %v4129, %v4211
        %v4276 = vadd.f32 %v4130, %v4212
        %v4277 = vadd.f32 %v4131, %v4213
        %v4278 = vadd.f32 %v4132, %v4214
        %v4279 = vadd.f32 %v4133, %v4215
        %v4280 = vadd.f32 %v4134, %v4216
        %v4281 = vadd.f32 %v4135, %v4217
        %v4282 = vadd.f32 %v4136, %v4218
        %v4283 = vadd.f32 %v4137, %v4219
        %v4284 = vadd.f32 %v4138, %v4220
        %v4285 = vadd.f32 %v4139, %v4221
        %v4286 = vadd.f32 %v4140, %v4222
        %v4287 = vadd.f32 %v4141, %v4223
        %v4288 = vadd.f32 %v4142, %v4224
        %v4289 = vadd.f32 %v4143, %v4225
        %v4290 = vadd.f32 %v4144, %v4226
        %v4291 = vadd.f32 %v4145, %v4227
        %v4292 = vadd.f32 %v4146, %v4228
        %v4293 = vadd.f32 %v4147, %v4229
        %v4294 = vadd.f32 %v4148, %v4230
        %v4295 = vadd.f32 %v4149, %v4231
        %v4296 = vadd.f32 %v4150, %v4232
        %v4297 = vadd.f32 %v4151, %v4233
        %v4298 = vadd.f32 %v4152, %v4234
        %v4299 = vadd.f32 %v4153, %v4235
        %v4300 = vadd.f32 %v4154, %v4236
        %v4301 = vadd.f32 %v4155, %v4237
        %v4302 = vadd.f32 %v4156, %v4238
        %v4303 = vadd.f32 %v4157, %v4239
        %v4304 = vadd.f32 %v4158, %v4240
        %v4305 = vadd.f32 %v4159, %v4241
        %v4306 = vadd.f32 %v4160, %v4242
        %v4307 = vadd.f32 %v4161, %v4243
        %v4308 = vadd.f32 %v4162, %v4244
        %v4309 = vadd.f32 %v4163, %v4245
        %v4310 = vadd.f32 %v4164, %v4246
        %v4311 = vadd.f32 %v4165, %v4247
        %v4312 = vadd.f32 %v4166, %v4248
        %v4313 = vadd.f32 %v4167, %v4249
        %v4314 = vadd.f32 %v4168, %v4250
        %v4315 = vadd.f32 %v4169, %v4251
        %v4316 = vadd.f32 %v4170, %v4252
        %v4317 = vadd.f32 %v4171, %v4253
        %v4318 = vadd.f32 %v4172, %v4254
        %v4319 = vadd.f32 %v4173, %v4255
        %v4320 = vadd.f32 %v4174, %v4256
        %v4321 = vlaneseq
        %v4322 = vshrl.u32 %v4321, 7
        %v4323 = vsub.s32 2, %v4322
        %v4324 = vrot.slane %v4091, %v4323
        %v4325 = vlaneseq
        %v4326 = vshrl.u32 %v4325, 7
        %v4327 = vsub.s32 6, %v4326
        %v4328 = vrot.slane %v4091, %v4327
        %v4331 = vlaneseq
        %v4332 = vshrl.u32 %v4331, 7
        %v4333 = vsub.s32 2, %v4332
        %v4334 = vrot.slane %v4324, %v4333
        %v4335 = vlaneseq
        %v4336 = vshrl.u32 %v4335, 7
        %v4337 = vsub.s32 2, %v4336
        %v4338 = vrot.slane %v4328, %v4337
        %v4339 = vmul.f32 %v1269, %v4334
        %v4340 = vmul.f32 %v1269, %v4338
        %v4341 = vmul.f32 %v1273, %v4334
        %v4342 = vmul.f32 %v1273, %v4338
        %v4343 = vmul.f32 %v1277, %v4334
        %v4344 = vmul.f32 %v1277, %v4338
        %v4345 = vmul.f32 %v1281, %v4334
        %v4346 = vmul.f32 %v1281, %v4338
        %v4347 = vmul.f32 %v1285, %v4334
        %v4348 = vmul.f32 %v1285, %v4338
        %v4349 = vmul.f32 %v1289, %v4334
        %v4350 = vmul.f32 %v1289, %v4338
        %v4351 = vmul.f32 %v1293, %v4334
        %v4352 = vmul.f32 %v1293, %v4338
        %v4353 = vmul.f32 %v1297, %v4334
        %v4354 = vmul.f32 %v1297, %v4338
        %v4355 = vmul.f32 %v1301, %v4334
        %v4356 = vmul.f32 %v1301, %v4338
        %v4357 = vmul.f32 %v1305, %v4334
        %v4358 = vmul.f32 %v1305, %v4338
        %v4359 = vmul.f32 %v1309, %v4334
        %v4360 = vmul.f32 %v1309, %v4338
        %v4361 = vmul.f32 %v1313, %v4334
        %v4362 = vmul.f32 %v1313, %v4338
        %v4363 = vmul.f32 %v1317, %v4334
        %v4364 = vmul.f32 %v1317, %v4338
        %v4365 = vmul.f32 %v1321, %v4334
        %v4366 = vmul.f32 %v1321, %v4338
        %v4367 = vmul.f32 %v1325, %v4334
        %v4368 = vmul.f32 %v1325, %v4338
        %v4369 = vmul.f32 %v1329, %v4334
        %v4370 = vmul.f32 %v1329, %v4338
        %v4371 = vmul.f32 %v1333, %v4334
        %v4372 = vmul.f32 %v1333, %v4338
        %v4373 = vmul.f32 %v1337, %v4334
        %v4374 = vmul.f32 %v1337, %v4338
        %v4375 = vmul.f32 %v1341, %v4334
        %v4376 = vmul.f32 %v1341, %v4338
        %v4377 = vmul.f32 %v1345, %v4334
        %v4378 = vmul.f32 %v1345, %v4338
        %v4379 = vmul.f32 %v1349, %v4334
        %v4380 = vmul.f32 %v1349, %v4338
        %v4381 = vmul.f32 %v1353, %v4334
        %v4382 = vmul.f32 %v1353, %v4338
        %v4383 = vmul.f32 %v1357, %v4334
        %v4384 = vmul.f32 %v1357, %v4338
        %v4385 = vmul.f32 %v1361, %v4334
        %v4386 = vmul.f32 %v1361, %v4338
        %v4387 = vmul.f32 %v1365, %v4334
        %v4388 = vmul.f32 %v1365, %v4338
        %v4389 = vmul.f32 %v1369, %v4334
        %v4390 = vmul.f32 %v1369, %v4338
        %v4391 = vmul.f32 %v1373, %v4334
        %v4392 = vmul.f32 %v1373, %v4338
        %v4393 = vmul.f32 %v1377, %v4334
        %v4394 = vmul.f32 %v1377, %v4338
        %v4395 = vmul.f32 %v1381, %v4334
        %v4396 = vmul.f32 %v1381, %v4338
        %v4397 = vmul.f32 %v1385, %v4334
        %v4398 = vmul.f32 %v1385, %v4338
        %v4399 = vmul.f32 %v1389, %v4334
        %v4400 = vmul.f32 %v1389, %v4338
        %v4401 = vmul.f32 %v1393, %v4334
        %v4402 = vmul.f32 %v1393, %v4338
        %v4403 = vadd.f32 %v4257, %v4339
        %v4404 = vadd.f32 %v4258, %v4340
        %v4405 = vadd.f32 %v4259, %v4341
        %v4406 = vadd.f32 %v4260, %v4342
        %v4407 = vadd.f32 %v4261, %v4343
        %v4408 = vadd.f32 %v4262, %v4344
        %v4409 = vadd.f32 %v4263, %v4345
        %v4410 = vadd.f32 %v4264, %v4346
        %v4411 = vadd.f32 %v4265, %v4347
        %v4412 = vadd.f32 %v4266, %v4348
        %v4413 = vadd.f32 %v4267, %v4349
        %v4414 = vadd.f32 %v4268, %v4350
        %v4415 = vadd.f32 %v4269, %v4351
        %v4416 = vadd.f32 %v4270, %v4352
        %v4417 = vadd.f32 %v4271, %v4353
        %v4418 = vadd.f32 %v4272, %v4354
        %v4419 = vadd.f32 %v4273, %v4355
        %v4420 = vadd.f32 %v4274, %v4356
        %v4421 = vadd.f32 %v4275, %v4357
        %v4422 = vadd.f32 %v4276, %v4358
        %v4423 = vadd.f32 %v4277, %v4359
        %v4424 = vadd.f32 %v4278, %v4360
        %v4425 = vadd.f32 %v4279, %v4361
        %v4426 = vadd.f32 %v4280, %v4362
        %v4427 = vadd.f32 %v4281, %v4363
        %v4428 = vadd.f32 %v4282, %v4364
        %v4429 = vadd.f32 %v4283, %v4365
        %v4430 = vadd.f32 %v4284, %v4366
        %v4431 = vadd.f32 %v4285, %v4367
        %v4432 = vadd.f32 %v4286, %v4368
        %v4433 = vadd.f32 %v4287, %v4369
        %v4434 = vadd.f32 %v4288, %v4370
        %v4435 = vadd.f32 %v4289, %v4371
        %v4436 = vadd.f32 %v4290, %v4372
        %v4437 = vadd.f32 %v4291, %v4373
        %v4438 = vadd.f32 %v4292, %v4374
        %v4439 = vadd.f32 %v4293, %v4375
        %v4440 = vadd.f32 %v4294, %v4376
        %v4441 = vadd.f32 %v4295, %v4377
        %v4442 = vadd.f32 %v4296, %v4378
        %v4443 = vadd.f32 %v4297, %v4379
        %v4444 = vadd.f32 %v4298, %v4380
        %v4445 = vadd.f32 %v4299, %v4381
        %v4446 = vadd.f32 %v4300, %v4382
        %v4447 = vadd.f32 %v4301, %v4383
        %v4448 = vadd.f32 %v4302, %v4384
        %v4449 = vadd.f32 %v4303, %v4385
        %v4450 = vadd.f32 %v4304, %v4386
        %v4451 = vadd.f32 %v4305, %v4387
        %v4452 = vadd.f32 %v4306, %v4388
        %v4453 = vadd.f32 %v4307, %v4389
        %v4454 = vadd.f32 %v4308, %v4390
        %v4455 = vadd.f32 %v4309, %v4391
        %v4456 = vadd.f32 %v4310, %v4392
        %v4457 = vadd.f32 %v4311, %v4393
        %v4458 = vadd.f32 %v4312, %v4394
        %v4459 = vadd.f32 %v4313, %v4395
        %v4460 = vadd.f32 %v4314, %v4396
        %v4461 = vadd.f32 %v4315, %v4397
        %v4462 = vadd.f32 %v4316, %v4398
        %v4463 = vadd.f32 %v4317, %v4399
        %v4464 = vadd.f32 %v4318, %v4400
        %v4465 = vadd.f32 %v4319, %v4401
        %v4466 = vadd.f32 %v4320, %v4402
        %v4467 = vadd.f32 %v3933, %v4403
        %v4468 = vadd.f32 %v3935, %v4404
        %v4469 = vadd.f32 %v3937, %v4405
        %v4470 = vadd.f32 %v3939, %v4406
        %v4471 = vadd.f32 %v3943, %v4407
        %v4472 = vadd.f32 %v3945, %v4408
        %v4473 = vadd.f32 %v3947, %v4409
        %v4474 = vadd.f32 %v3949, %v4410
        %v4475 = vadd.f32 %v3953, %v4411
        %v4476 = vadd.f32 %v3955, %v4412
        %v4477 = vadd.f32 %v3957, %v4413
        %v4478 = vadd.f32 %v3959, %v4414
        %v4479 = vadd.f32 %v3963, %v4415
        %v4480 = vadd.f32 %v3965, %v4416
        %v4481 = vadd.f32 %v3967, %v4417
        %v4482 = vadd.f32 %v3969, %v4418
        %v4483 = vadd.f32 %v3973, %v4419
        %v4484 = vadd.f32 %v3975, %v4420
        %v4485 = vadd.f32 %v3977, %v4421
        %v4486 = vadd.f32 %v3979, %v4422
        %v4487 = vadd.f32 %v3983, %v4423
        %v4488 = vadd.f32 %v3985, %v4424
        %v4489 = vadd.f32 %v3987, %v4425
        %v4490 = vadd.f32 %v3989, %v4426
        %v4491 = vadd.f32 %v3993, %v4427
        %v4492 = vadd.f32 %v3995, %v4428
        %v4493 = vadd.f32 %v3997, %v4429
        %v4494 = vadd.f32 %v3999, %v4430
        %v4495 = vadd.f32 %v4003, %v4431
        %v4496 = vadd.f32 %v4005, %v4432
        %v4497 = vadd.f32 %v4007, %v4433
        %v4498 = vadd.f32 %v4009, %v4434
        %v4499 = vadd.f32 %v4013, %v4435
        %v4500 = vadd.f32 %v4015, %v4436
        %v4501 = vadd.f32 %v4017, %v4437
        %v4502 = vadd.f32 %v4019, %v4438
        %v4503 = vadd.f32 %v4023, %v4439
        %v4504 = vadd.f32 %v4025, %v4440
        %v4505 = vadd.f32 %v4027, %v4441
        %v4506 = vadd.f32 %v4029, %v4442
        %v4507 = vadd.f32 %v4033, %v4443
        %v4508 = vadd.f32 %v4035, %v4444
        %v4509 = vadd.f32 %v4037, %v4445
        %v4510 = vadd.f32 %v4039, %v4446
        %v4511 = vadd.f32 %v4043, %v4447
        %v4512 = vadd.f32 %v4045, %v4448
        %v4513 = vadd.f32 %v4047, %v4449
        %v4514 = vadd.f32 %v4049, %v4450
        %v4515 = vadd.f32 %v4053, %v4451
        %v4516 = vadd.f32 %v4055, %v4452
        %v4517 = vadd.f32 %v4057, %v4453
        %v4518 = vadd.f32 %v4059, %v4454
        %v4519 = vadd.f32 %v4063, %v4455
        %v4520 = vadd.f32 %v4065, %v4456
        %v4521 = vadd.f32 %v4067, %v4457
        %v4522 = vadd.f32 %v4069, %v4458
        %v4523 = vadd.f32 %v4073, %v4459
        %v4524 = vadd.f32 %v4075, %v4460
        %v4525 = vadd.f32 %v4077, %v4461
        %v4526 = vadd.f32 %v4079, %v4462
        %v4527 = vadd.f32 %v4083, %v4463
        %v4528 = vadd.f32 %v4085, %v4464
        %v4529 = vadd.f32 %v4087, %v4465
        %v4530 = vadd.f32 %v4089, %v4466
        %v4531 = vmax.f32 %v4467, 0.0
        %v4532 = vmax.f32 %v4468, 0.0
        %v4533 = vmax.f32 %v4469, 0.0
        %v4534 = vmax.f32 %v4470, 0.0
        %v4535 = vmax.f32 %v4471, 0.0
        %v4536 = vmax.f32 %v4472, 0.0
        %v4537 = vmax.f32 %v4473, 0.0
        %v4538 = vmax.f32 %v4474, 0.0
        %v4539 = vmax.f32 %v4475, 0.0
        %v4540 = vmax.f32 %v4476, 0.0
        %v4541 = vmax.f32 %v4477, 0.0
        %v4542 = vmax.f32 %v4478, 0.0
        %v4543 = vmax.f32 %v4479, 0.0
        %v4544 = vmax.f32 %v4480, 0.0
        %v4545 = vmax.f32 %v4481, 0.0
        %v4546 = vmax.f32 %v4482, 0.0
        %v4547 = vmax.f32 %v4483, 0.0
        %v4548 = vmax.f32 %v4484, 0.0
        %v4549 = vmax.f32 %v4485, 0.0
        %v4550 = vmax.f32 %v4486, 0.0
        %v4551 = vmax.f32 %v4487, 0.0
        %v4552 = vmax.f32 %v4488, 0.0
        %v4553 = vmax.f32 %v4489, 0.0
        %v4554 = vmax.f32 %v4490, 0.0
        %v4555 = vmax.f32 %v4491, 0.0
        %v4556 = vmax.f32 %v4492, 0.0
        %v4557 = vmax.f32 %v4493, 0.0
        %v4558 = vmax.f32 %v4494, 0.0
        %v4559 = vmax.f32 %v4495, 0.0
        %v4560 = vmax.f32 %v4496, 0.0
        %v4561 = vmax.f32 %v4497, 0.0
        %v4562 = vmax.f32 %v4498, 0.0
        %v4563 = vmax.f32 %v4499, 0.0
        %v4564 = vmax.f32 %v4500, 0.0
        %v4565 = vmax.f32 %v4501, 0.0
        %v4566 = vmax.f32 %v4502, 0.0
        %v4567 = vmax.f32 %v4503, 0.0
        %v4568 = vmax.f32 %v4504, 0.0
        %v4569 = vmax.f32 %v4505, 0.0
        %v4570 = vmax.f32 %v4506, 0.0
        %v4571 = vmax.f32 %v4507, 0.0
        %v4572 = vmax.f32 %v4508, 0.0
        %v4573 = vmax.f32 %v4509, 0.0
        %v4574 = vmax.f32 %v4510, 0.0
        %v4575 = vmax.f32 %v4511, 0.0
        %v4576 = vmax.f32 %v4512, 0.0
        %v4577 = vmax.f32 %v4513, 0.0
        %v4578 = vmax.f32 %v4514, 0.0
        %v4579 = vmax.f32 %v4515, 0.0
        %v4580 = vmax.f32 %v4516, 0.0
        %v4581 = vmax.f32 %v4517, 0.0
        %v4582 = vmax.f32 %v4518, 0.0
        %v4583 = vmax.f32 %v4519, 0.0
        %v4584 = vmax.f32 %v4520, 0.0
        %v4585 = vmax.f32 %v4521, 0.0
        %v4586 = vmax.f32 %v4522, 0.0
        %v4587 = vmax.f32 %v4523, 0.0
        %v4588 = vmax.f32 %v4524, 0.0
        %v4589 = vmax.f32 %v4525, 0.0
        %v4590 = vmax.f32 %v4526, 0.0
        %v4591 = vmax.f32 %v4527, 0.0
        %v4592 = vmax.f32 %v4528, 0.0
        %v4593 = vmax.f32 %v4529, 0.0
        %v4594 = vmax.f32 %v4530, 0.0
        %v4595 = vpack.c.bf16 %v4533, %v4531
        %v4596 = vpack.c.bf16 %v4534, %v4532
        %v4597 = vpack.c.bf16 %v4537, %v4535
        %v4598 = vpack.c.bf16 %v4538, %v4536
        %v4599 = vpack.c.bf16 %v4541, %v4539
        %v4600 = vpack.c.bf16 %v4542, %v4540
        %v4601 = vpack.c.bf16 %v4545, %v4543
        %v4602 = vpack.c.bf16 %v4546, %v4544
        %v4603 = vpack.c.bf16 %v4549, %v4547
        %v4604 = vpack.c.bf16 %v4550, %v4548
        %v4605 = vpack.c.bf16 %v4553, %v4551
        %v4606 = vpack.c.bf16 %v4554, %v4552
        %v4607 = vpack.c.bf16 %v4557, %v4555
        %v4608 = vpack.c.bf16 %v4558, %v4556
        %v4609 = vpack.c.bf16 %v4561, %v4559
        %v4610 = vpack.c.bf16 %v4562, %v4560
        %v4611 = vpack.c.bf16 %v4565, %v4563
        %v4612 = vpack.c.bf16 %v4566, %v4564
        %v4613 = vpack.c.bf16 %v4569, %v4567
        %v4614 = vpack.c.bf16 %v4570, %v4568
        %v4615 = vpack.c.bf16 %v4573, %v4571
        %v4616 = vpack.c.bf16 %v4574, %v4572
        %v4617 = vpack.c.bf16 %v4577, %v4575
        %v4618 = vpack.c.bf16 %v4578, %v4576
        %v4619 = vpack.c.bf16 %v4581, %v4579
        %v4620 = vpack.c.bf16 %v4582, %v4580
        %v4621 = vpack.c.bf16 %v4585, %v4583
        %v4622 = vpack.c.bf16 %v4586, %v4584
        %v4623 = vpack.c.bf16 %v4589, %v4587
        %v4624 = vpack.c.bf16 %v4590, %v4588
        %v4625 = vpack.c.bf16 %v4593, %v4591
        %v4626 = vpack.c.bf16 %v4594, %v4592
        %s4627 = scalar_lea.vmem [#allocation3], 1280
        %v4628 = vld [vmem:[%s4627] sm:$0xff]
        %v4629 = vld [vmem:[%s4627 + $0x8] sm:$0xff]
        %v4630 = vld [vmem:[%s4627 + $0x10] sm:$0xff]
        %v4631 = vld [vmem:[%s4627 + $0x18] sm:$0xff]
        %v4632 = vld [vmem:[%s4627 + $0x20] sm:$0xff]
        %v4633 = vld [vmem:[%s4627 + $0x28] sm:$0xff]
        %v4634 = vld [vmem:[%s4627 + $0x30] sm:$0xff]
        %v4635 = vld [vmem:[%s4627 + $0x38] sm:$0xff]
        %v4636 = vld [vmem:[%s4627 + $0x40] sm:$0xff]
        %v4637 = vld [vmem:[%s4627 + $0x48] sm:$0xff]
        %v4638 = vld [vmem:[%s4627 + $0x50] sm:$0xff]
        %v4639 = vld [vmem:[%s4627 + $0x58] sm:$0xff]
        %v4640 = vld [vmem:[%s4627 + $0x60] sm:$0xff]
        %v4641 = vld [vmem:[%s4627 + $0x68] sm:$0xff]
        %v4642 = vld [vmem:[%s4627 + $0x70] sm:$0xff]
        %v4643 = vld [vmem:[%s4627 + $0x78] sm:$0xff]
        %v4644 = vld [vmem:[%s4627 + $0x80] sm:$0xff]
        %v4645 = vld [vmem:[%s4627 + $0x88] sm:$0xff]
        %v4646 = vld [vmem:[%s4627 + $0x90] sm:$0xff]
        %v4647 = vld [vmem:[%s4627 + $0x98] sm:$0xff]
        %v4648 = vld [vmem:[%s4627 + $0xa0] sm:$0xff]
        %v4649 = vld [vmem:[%s4627 + $0xa8] sm:$0xff]
        %v4650 = vld [vmem:[%s4627 + $0xb0] sm:$0xff]
        %v4651 = vld [vmem:[%s4627 + $0xb8] sm:$0xff]
        %v4652 = vld [vmem:[%s4627 + $0xc0] sm:$0xff]
        %v4653 = vld [vmem:[%s4627 + $0xc8] sm:$0xff]
        %v4654 = vld [vmem:[%s4627 + $0xd0] sm:$0xff]
        %v4655 = vld [vmem:[%s4627 + $0xd8] sm:$0xff]
        %v4656 = vld [vmem:[%s4627 + $0xe0] sm:$0xff]
        %v4657 = vld [vmem:[%s4627 + $0xe8] sm:$0xff]
        %v4658 = vld [vmem:[%s4627 + $0xf0] sm:$0xff]
        %v4659 = vld [vmem:[%s4627 + $0xf8] sm:$0xff]
        %s4660 = scalar_lea.vmem %s8, 6
        %v4661 = vld [vmem:[%s4660] ss:$8 sm:$0x3]
        %v4663 = vlaneseq
        %v4664 = vshrl.u32 %v4663, 7
        %v4665 = vsub.s32 0, %v4664
        %v4666 = vrot.slane %v4661, %v4665
        %v4667 = vlaneseq
        %v4668 = vshrl.u32 %v4667, 7
        %v4669 = vsub.s32 1, %v4668
        %v4670 = vrot.slane %v4661, %v4669
        %v4705 = vunpack.c.l.b16 %v4628
        %v4706 = vunpack.c.h.b16 %v4628
        %v4707 = vunpack.c.l.b16 %v4629
        %v4708 = vunpack.c.h.b16 %v4629
        %v4709 = vunpack.c.l.b16 %v4630
        %v4710 = vunpack.c.h.b16 %v4630
        %v4711 = vunpack.c.l.b16 %v4631
        %v4712 = vunpack.c.h.b16 %v4631
        %v4713 = vunpack.c.l.b16 %v4632
        %v4714 = vunpack.c.h.b16 %v4632
        %v4715 = vunpack.c.l.b16 %v4633
        %v4716 = vunpack.c.h.b16 %v4633
        %v4717 = vunpack.c.l.b16 %v4634
        %v4718 = vunpack.c.h.b16 %v4634
        %v4719 = vunpack.c.l.b16 %v4635
        %v4720 = vunpack.c.h.b16 %v4635
        %v4721 = vunpack.c.l.b16 %v4636
        %v4722 = vunpack.c.h.b16 %v4636
        %v4723 = vunpack.c.l.b16 %v4637
        %v4724 = vunpack.c.h.b16 %v4637
        %v4725 = vunpack.c.l.b16 %v4638
        %v4726 = vunpack.c.h.b16 %v4638
        %v4727 = vunpack.c.l.b16 %v4639
        %v4728 = vunpack.c.h.b16 %v4639
        %v4729 = vunpack.c.l.b16 %v4640
        %v4730 = vunpack.c.h.b16 %v4640
        %v4731 = vunpack.c.l.b16 %v4641
        %v4732 = vunpack.c.h.b16 %v4641
        %v4733 = vunpack.c.l.b16 %v4642
        %v4734 = vunpack.c.h.b16 %v4642
        %v4735 = vunpack.c.l.b16 %v4643
        %v4736 = vunpack.c.h.b16 %v4643
        %v4737 = vunpack.c.l.b16 %v4644
        %v4738 = vunpack.c.h.b16 %v4644
        %v4739 = vunpack.c.l.b16 %v4645
        %v4740 = vunpack.c.h.b16 %v4645
        %v4741 = vunpack.c.l.b16 %v4646
        %v4742 = vunpack.c.h.b16 %v4646
        %v4743 = vunpack.c.l.b16 %v4647
        %v4744 = vunpack.c.h.b16 %v4647
        %v4745 = vunpack.c.l.b16 %v4648
        %v4746 = vunpack.c.h.b16 %v4648
        %v4747 = vunpack.c.l.b16 %v4649
        %v4748 = vunpack.c.h.b16 %v4649
        %v4749 = vunpack.c.l.b16 %v4650
        %v4750 = vunpack.c.h.b16 %v4650
        %v4751 = vunpack.c.l.b16 %v4651
        %v4752 = vunpack.c.h.b16 %v4651
        %v4753 = vunpack.c.l.b16 %v4652
        %v4754 = vunpack.c.h.b16 %v4652
        %v4755 = vunpack.c.l.b16 %v4653
        %v4756 = vunpack.c.h.b16 %v4653
        %v4757 = vunpack.c.l.b16 %v4654
        %v4758 = vunpack.c.h.b16 %v4654
        %v4759 = vunpack.c.l.b16 %v4655
        %v4760 = vunpack.c.h.b16 %v4655
        %v4761 = vunpack.c.l.b16 %v4656
        %v4762 = vunpack.c.h.b16 %v4656
        %v4763 = vunpack.c.l.b16 %v4657
        %v4764 = vunpack.c.h.b16 %v4657
        %v4765 = vunpack.c.l.b16 %v4658
        %v4766 = vunpack.c.h.b16 %v4658
        %v4767 = vunpack.c.l.b16 %v4659
        %v4768 = vunpack.c.h.b16 %v4659
        %v4769 = vpack.c.b16 %v4707, %v4705
        %v4770 = vpack.c.b16 %v4708, %v4706
        %v4771 = vpack.c.b16 %v4711, %v4709
        %v4772 = vpack.c.b16 %v4712, %v4710
        %v4773 = vpack.c.b16 %v4715, %v4713
        %v4774 = vpack.c.b16 %v4716, %v4714
        %v4775 = vpack.c.b16 %v4719, %v4717
        %v4776 = vpack.c.b16 %v4720, %v4718
        %v4777 = vpack.c.b16 %v4723, %v4721
        %v4778 = vpack.c.b16 %v4724, %v4722
        %v4779 = vpack.c.b16 %v4727, %v4725
        %v4780 = vpack.c.b16 %v4728, %v4726
        %v4781 = vpack.c.b16 %v4731, %v4729
        %v4782 = vpack.c.b16 %v4732, %v4730
        %v4783 = vpack.c.b16 %v4735, %v4733
        %v4784 = vpack.c.b16 %v4736, %v4734
        %v4785 = vpack.c.b16 %v4739, %v4737
        %v4786 = vpack.c.b16 %v4740, %v4738
        %v4787 = vpack.c.b16 %v4743, %v4741
        %v4788 = vpack.c.b16 %v4744, %v4742
        %v4789 = vpack.c.b16 %v4747, %v4745
        %v4790 = vpack.c.b16 %v4748, %v4746
        %v4791 = vpack.c.b16 %v4751, %v4749
        %v4792 = vpack.c.b16 %v4752, %v4750
        %v4793 = vpack.c.b16 %v4755, %v4753
        %v4794 = vpack.c.b16 %v4756, %v4754
        %v4795 = vpack.c.b16 %v4759, %v4757
        %v4796 = vpack.c.b16 %v4760, %v4758
        %v4797 = vpack.c.b16 %v4763, %v4761
        %v4798 = vpack.c.b16 %v4764, %v4762
        %v4799 = vpack.c.b16 %v4767, %v4765
        %v4800 = vpack.c.b16 %v4768, %v4766
        %4833 = vmatprep.subr.bf16.mxu0 %v4770
        %4834 = vmatpush1.bf16.msra.mxu0 %v4769
        %4835 = vmatprep.subr.bf16.mxu0 %v4772
        %4836 = vmatpush1.bf16.msra.mxu0 %v4771
        %4837 = vmatprep.subr.bf16.mxu0 %v4774
        %4838 = vmatpush1.bf16.msra.mxu0 %v4773
        %4839 = vmatprep.subr.bf16.mxu0 %v4776
        %4840 = vmatpush1.bf16.msra.mxu0 %v4775
        %4841 = vmatprep.subr.bf16.mxu0 %v4778
        %4842 = vmatpush1.bf16.msra.mxu0 %v4777
        %4843 = vmatprep.subr.bf16.mxu0 %v4780
        %4844 = vmatpush1.bf16.msra.mxu0 %v4779
        %4845 = vmatprep.subr.bf16.mxu0 %v4782
        %4846 = vmatpush1.bf16.msra.mxu0 %v4781
        %4847 = vmatprep.subr.bf16.mxu0 %v4784
        %4848 = vmatpush1.bf16.msra.mxu0 %v4783
        %4849 = vmatprep.subr.bf16.mxu0 %v4786
        %4850 = vmatpush1.bf16.msra.mxu0 %v4785
        %4851 = vmatprep.subr.bf16.mxu0 %v4788
        %4852 = vmatpush1.bf16.msra.mxu0 %v4787
        %4853 = vmatprep.subr.bf16.mxu0 %v4790
        %4854 = vmatpush1.bf16.msra.mxu0 %v4789
        %4855 = vmatprep.subr.bf16.mxu0 %v4792
        %4856 = vmatpush1.bf16.msra.mxu0 %v4791
        %4857 = vmatprep.subr.bf16.mxu0 %v4794
        %4858 = vmatpush1.bf16.msra.mxu0 %v4793
        %4859 = vmatprep.subr.bf16.mxu0 %v4796
        %4860 = vmatpush1.bf16.msra.mxu0 %v4795
        %4861 = vmatprep.subr.bf16.mxu0 %v4798
        %4862 = vmatpush1.bf16.msra.mxu0 %v4797
        %4863 = vmatprep.subr.bf16.mxu0 %v4800
        %4864 = vmatpush1.bf16.msra.mxu0 %v4799
        %4865 = vmatprep.mubr.bf16.mxu0 %v4596
        %4866 = vmatmul.mubr.bf16.gmra.mrb[0].mxu0 %v4595
        %v4867 = vpop.f32.mrb[0].mxu0
        %v4868 = vadd.f32 %v4666, %v4867
        %v4869 = vpop.f32.mrb[0].mxu0
        %v4870 = vadd.f32 %v4670, %v4869
        %v4871 = vpop.f32.mrb[0].mxu0
        %v4872 = vadd.f32 %v4666, %v4871
        %v4873 = vpop.f32.mrb[0].mxu0
        %v4874 = vadd.f32 %v4670, %v4873
        %4875 = vmatprep.mubr.bf16.mxu0 %v4598
        %4876 = vmatmul.mubr.bf16.gmra.mrb[0].mxu0 %v4597
        %v4877 = vpop.f32.mrb[0].mxu0
        %v4878 = vadd.f32 %v4666, %v4877
        %v4879 = vpop.f32.mrb[0].mxu0
        %v4880 = vadd.f32 %v4670, %v4879
        %v4881 = vpop.f32.mrb[0].mxu0
        %v4882 = vadd.f32 %v4666, %v4881
        %v4883 = vpop.f32.mrb[0].mxu0
        %v4884 = vadd.f32 %v4670, %v4883
        %4885 = vmatprep.mubr.bf16.mxu0 %v4600
        %4886 = vmatmul.mubr.bf16.gmra.mrb[0].mxu0 %v4599
        %v4887 = vpop.f32.mrb[0].mxu0
        %v4888 = vadd.f32 %v4666, %v4887
        %v4889 = vpop.f32.mrb[0].mxu0
        %v4890 = vadd.f32 %v4670, %v4889
        %v4891 = vpop.f32.mrb[0].mxu0
        %v4892 = vadd.f32 %v4666, %v4891
        %v4893 = vpop.f32.mrb[0].mxu0
        %v4894 = vadd.f32 %v4670, %v4893
        %4895 = vmatprep.mubr.bf16.mxu0 %v4602
        %4896 = vmatmul.mubr.bf16.gmra.mrb[0].mxu0 %v4601
        %v4897 = vpop.f32.mrb[0].mxu0
        %v4898 = vadd.f32 %v4666, %v4897
        %v4899 = vpop.f32.mrb[0].mxu0
        %v4900 = vadd.f32 %v4670, %v4899
        %v4901 = vpop.f32.mrb[0].mxu0
        %v4902 = vadd.f32 %v4666, %v4901
        %v4903 = vpop.f32.mrb[0].mxu0
        %v4904 = vadd.f32 %v4670, %v4903
        %4905 = vmatprep.mubr.bf16.mxu0 %v4604
        %4906 = vmatmul.mubr.bf16.gmra.mrb[0].mxu0 %v4603
        %v4907 = vpop.f32.mrb[0].mxu0
        %v4908 = vadd.f32 %v4666, %v4907
        %v4909 = vpop.f32.mrb[0].mxu0
        %v4910 = vadd.f32 %v4670, %v4909
        %v4911 = vpop.f32.mrb[0].mxu0
        %v4912 = vadd.f32 %v4666, %v4911
        %v4913 = vpop.f32.mrb[0].mxu0
        %v4914 = vadd.f32 %v4670, %v4913
        %4915 = vmatprep.mubr.bf16.mxu0 %v4606
        %4916 = vmatmul.mubr.bf16.gmra.mrb[0].mxu0 %v4605
        %v4917 = vpop.f32.mrb[0].mxu0
        %v4918 = vadd.f32 %v4666, %v4917
        %v4919 = vpop.f32.mrb[0].mxu0
        %v4920 = vadd.f32 %v4670, %v4919
        %v4921 = vpop.f32.mrb[0].mxu0
        %v4922 = vadd.f32 %v4666, %v4921
        %v4923 = vpop.f32.mrb[0].mxu0
        %v4924 = vadd.f32 %v4670, %v4923
        %4925 = vmatprep.mubr.bf16.mxu0 %v4608
        %4926 = vmatmul.mubr.bf16.gmra.mrb[0].mxu0 %v4607
        %v4927 = vpop.f32.mrb[0].mxu0
        %v4928 = vadd.f32 %v4666, %v4927
        %v4929 = vpop.f32.mrb[0].mxu0
        %v4930 = vadd.f32 %v4670, %v4929
        %v4931 = vpop.f32.mrb[0].mxu0
        %v4932 = vadd.f32 %v4666, %v4931
        %v4933 = vpop.f32.mrb[0].mxu0
        %v4934 = vadd.f32 %v4670, %v4933
        %4935 = vmatprep.mubr.bf16.mxu0 %v4610
        %4936 = vmatmul.mubr.bf16.gmra.mrb[0].mxu0 %v4609
        %v4937 = vpop.f32.mrb[0].mxu0
        %v4938 = vadd.f32 %v4666, %v4937
        %v4939 = vpop.f32.mrb[0].mxu0
        %v4940 = vadd.f32 %v4670, %v4939
        %v4941 = vpop.f32.mrb[0].mxu0
        %v4942 = vadd.f32 %v4666, %v4941
        %v4943 = vpop.f32.mrb[0].mxu0
        %v4944 = vadd.f32 %v4670, %v4943
        %4945 = vmatprep.mubr.bf16.mxu0 %v4612
        %4946 = vmatmul.mubr.bf16.gmra.mrb[0].mxu0 %v4611
        %v4947 = vpop.f32.mrb[0].mxu0
        %v4948 = vadd.f32 %v4666, %v4947
        %v4949 = vpop.f32.mrb[0].mxu0
        %v4950 = vadd.f32 %v4670, %v4949
        %v4951 = vpop.f32.mrb[0].mxu0
        %v4952 = vadd.f32 %v4666, %v4951
        %v4953 = vpop.f32.mrb[0].mxu0
        %v4954 = vadd.f32 %v4670, %v4953
        %4955 = vmatprep.mubr.bf16.mxu0 %v4614
        %4956 = vmatmul.mubr.bf16.gmra.mrb[0].mxu0 %v4613
        %v4957 = vpop.f32.mrb[0].mxu0
        %v4958 = vadd.f32 %v4666, %v4957
        %v4959 = vpop.f32.mrb[0].mxu0
        %v4960 = vadd.f32 %v4670, %v4959
        %v4961 = vpop.f32.mrb[0].mxu0
        %v4962 = vadd.f32 %v4666, %v4961
        %v4963 = vpop.f32.mrb[0].mxu0
        %v4964 = vadd.f32 %v4670, %v4963
        %4965 = vmatprep.mubr.bf16.mxu0 %v4616
        %4966 = vmatmul.mubr.bf16.gmra.mrb[0].mxu0 %v4615
        %v4967 = vpop.f32.mrb[0].mxu0
        %v4968 = vadd.f32 %v4666, %v4967
        %v4969 = vpop.f32.mrb[0].mxu0
        %v4970 = vadd.f32 %v4670, %v4969
        %v4971 = vpop.f32.mrb[0].mxu0
        %v4972 = vadd.f32 %v4666, %v4971
        %v4973 = vpop.f32.mrb[0].mxu0
        %v4974 = vadd.f32 %v4670, %v4973
        %4975 = vmatprep.mubr.bf16.mxu0 %v4618
        %4976 = vmatmul.mubr.bf16.gmra.mrb[0].mxu0 %v4617
        %v4977 = vpop.f32.mrb[0].mxu0
        %v4978 = vadd.f32 %v4666, %v4977
        %v4979 = vpop.f32.mrb[0].mxu0
        %v4980 = vadd.f32 %v4670, %v4979
        %v4981 = vpop.f32.mrb[0].mxu0
        %v4982 = vadd.f32 %v4666, %v4981
        %v4983 = vpop.f32.mrb[0].mxu0
        %v4984 = vadd.f32 %v4670, %v4983
        %4985 = vmatprep.mubr.bf16.mxu0 %v4620
        %4986 = vmatmul.mubr.bf16.gmra.mrb[0].mxu0 %v4619
        %v4987 = vpop.f32.mrb[0].mxu0
        %v4988 = vadd.f32 %v4666, %v4987
        %v4989 = vpop.f32.mrb[0].mxu0
        %v4990 = vadd.f32 %v4670, %v4989
        %v4991 = vpop.f32.mrb[0].mxu0
        %v4992 = vadd.f32 %v4666, %v4991
        %v4993 = vpop.f32.mrb[0].mxu0
        %v4994 = vadd.f32 %v4670, %v4993
        %4995 = vmatprep.mubr.bf16.mxu0 %v4622
        %4996 = vmatmul.mubr.bf16.gmra.mrb[0].mxu0 %v4621
        %v4997 = vpop.f32.mrb[0].mxu0
        %v4998 = vadd.f32 %v4666, %v4997
        %v4999 = vpop.f32.mrb[0].mxu0
        %v5000 = vadd.f32 %v4670, %v4999
        %v5001 = vpop.f32.mrb[0].mxu0
        %v5002 = vadd.f32 %v4666, %v5001
        %v5003 = vpop.f32.mrb[0].mxu0
        %v5004 = vadd.f32 %v4670, %v5003
        %5005 = vmatprep.mubr.bf16.mxu0 %v4624
        %5006 = vmatmul.mubr.bf16.gmra.mrb[0].mxu0 %v4623
        %v5007 = vpop.f32.mrb[0].mxu0
        %v5008 = vadd.f32 %v4666, %v5007
        %v5009 = vpop.f32.mrb[0].mxu0
        %v5010 = vadd.f32 %v4670, %v5009
        %v5011 = vpop.f32.mrb[0].mxu0
        %v5012 = vadd.f32 %v4666, %v5011
        %v5013 = vpop.f32.mrb[0].mxu0
        %v5014 = vadd.f32 %v4670, %v5013
        %5015 = vmatprep.mubr.bf16.mxu0 %v4626
        %5016 = vmatmul.mubr.bf16.gmra.mrb[0].mxu0 %v4625
        %v5017 = vpop.f32.mrb[0].mxu0
        %v5018 = vadd.f32 %v4666, %v5017
        %v5019 = vpop.f32.mrb[0].mxu0
        %v5020 = vadd.f32 %v4670, %v5019
        %v5021 = vpop.f32.mrb[0].mxu0
        %v5022 = vadd.f32 %v4666, %v5021
        %v5023 = vpop.f32.mrb[0].mxu0
        %v5024 = vadd.f32 %v4670, %v5023
        %5025 = vdwg.mxu0
        %v5026 = vmax.f32 %v4868, 0.0
        %v5027 = vmax.f32 %v4870, 0.0
        %v5028 = vmax.f32 %v4872, 0.0
        %v5029 = vmax.f32 %v4874, 0.0
        %v5030 = vmax.f32 %v4878, 0.0
        %v5031 = vmax.f32 %v4880, 0.0
        %v5032 = vmax.f32 %v4882, 0.0
        %v5033 = vmax.f32 %v4884, 0.0
        %v5034 = vmax.f32 %v4888, 0.0
        %v5035 = vmax.f32 %v4890, 0.0
        %v5036 = vmax.f32 %v4892, 0.0
        %v5037 = vmax.f32 %v4894, 0.0
        %v5038 = vmax.f32 %v4898, 0.0
        %v5039 = vmax.f32 %v4900, 0.0
        %v5040 = vmax.f32 %v4902, 0.0
        %v5041 = vmax.f32 %v4904, 0.0
        %v5042 = vmax.f32 %v4908, 0.0
        %v5043 = vmax.f32 %v4910, 0.0
        %v5044 = vmax.f32 %v4912, 0.0
        %v5045 = vmax.f32 %v4914, 0.0
        %v5046 = vmax.f32 %v4918, 0.0
        %v5047 = vmax.f32 %v4920, 0.0
        %v5048 = vmax.f32 %v4922, 0.0
        %v5049 = vmax.f32 %v4924, 0.0
        %v5050 = vmax.f32 %v4928, 0.0
        %v5051 = vmax.f32 %v4930, 0.0
        %v5052 = vmax.f32 %v4932, 0.0
        %v5053 = vmax.f32 %v4934, 0.0
        %v5054 = vmax.f32 %v4938, 0.0
        %v5055 = vmax.f32 %v4940, 0.0
        %v5056 = vmax.f32 %v4942, 0.0
        %v5057 = vmax.f32 %v4944, 0.0
        %v5058 = vmax.f32 %v4948, 0.0
        %v5059 = vmax.f32 %v4950, 0.0
        %v5060 = vmax.f32 %v4952, 0.0
        %v5061 = vmax.f32 %v4954, 0.0
        %v5062 = vmax.f32 %v4958, 0.0
        %v5063 = vmax.f32 %v4960, 0.0
        %v5064 = vmax.f32 %v4962, 0.0
        %v5065 = vmax.f32 %v4964, 0.0
        %v5066 = vmax.f32 %v4968, 0.0
        %v5067 = vmax.f32 %v4970, 0.0
        %v5068 = vmax.f32 %v4972, 0.0
        %v5069 = vmax.f32 %v4974, 0.0
        %v5070 = vmax.f32 %v4978, 0.0
        %v5071 = vmax.f32 %v4980, 0.0
        %v5072 = vmax.f32 %v4982, 0.0
        %v5073 = vmax.f32 %v4984, 0.0
        %v5074 = vmax.f32 %v4988, 0.0
        %v5075 = vmax.f32 %v4990, 0.0
        %v5076 = vmax.f32 %v4992, 0.0
        %v5077 = vmax.f32 %v4994, 0.0
        %v5078 = vmax.f32 %v4998, 0.0
        %v5079 = vmax.f32 %v5000, 0.0
        %v5080 = vmax.f32 %v5002, 0.0
        %v5081 = vmax.f32 %v5004, 0.0
        %v5082 = vmax.f32 %v5008, 0.0
        %v5083 = vmax.f32 %v5010, 0.0
        %v5084 = vmax.f32 %v5012, 0.0
        %v5085 = vmax.f32 %v5014, 0.0
        %v5086 = vmax.f32 %v5018, 0.0
        %v5087 = vmax.f32 %v5020, 0.0
        %v5088 = vmax.f32 %v5022, 0.0
        %v5089 = vmax.f32 %v5024, 0.0
        %v5090 = vpack.c.bf16 %v5028, %v5026
        %v5091 = vpack.c.bf16 %v5029, %v5027
        %v5092 = vpack.c.bf16 %v5032, %v5030
        %v5093 = vpack.c.bf16 %v5033, %v5031
        %v5094 = vpack.c.bf16 %v5036, %v5034
        %v5095 = vpack.c.bf16 %v5037, %v5035
        %v5096 = vpack.c.bf16 %v5040, %v5038
        %v5097 = vpack.c.bf16 %v5041, %v5039
        %v5098 = vpack.c.bf16 %v5044, %v5042
        %v5099 = vpack.c.bf16 %v5045, %v5043
        %v5100 = vpack.c.bf16 %v5048, %v5046
        %v5101 = vpack.c.bf16 %v5049, %v5047
        %v5102 = vpack.c.bf16 %v5052, %v5050
        %v5103 = vpack.c.bf16 %v5053, %v5051
        %v5104 = vpack.c.bf16 %v5056, %v5054
        %v5105 = vpack.c.bf16 %v5057, %v5055
        %v5106 = vpack.c.bf16 %v5060, %v5058
        %v5107 = vpack.c.bf16 %v5061, %v5059
        %v5108 = vpack.c.bf16 %v5064, %v5062
        %v5109 = vpack.c.bf16 %v5065, %v5063
        %v5110 = vpack.c.bf16 %v5068, %v5066
        %v5111 = vpack.c.bf16 %v5069, %v5067
        %v5112 = vpack.c.bf16 %v5072, %v5070
        %v5113 = vpack.c.bf16 %v5073, %v5071
        %v5114 = vpack.c.bf16 %v5076, %v5074
        %v5115 = vpack.c.bf16 %v5077, %v5075
        %v5116 = vpack.c.bf16 %v5080, %v5078
        %v5117 = vpack.c.bf16 %v5081, %v5079
        %v5118 = vpack.c.bf16 %v5084, %v5082
        %v5119 = vpack.c.bf16 %v5085, %v5083
        %v5120 = vpack.c.bf16 %v5088, %v5086
        %v5121 = vpack.c.bf16 %v5089, %v5087
        %s5122 = scalar_lea.vmem [#allocation3], 1536
        %v5123 = vld [vmem:[%s5122] sm:$0xff]
        %v5124 = vld [vmem:[%s5122 + $0x8] sm:$0xff]
        %v5125 = vld [vmem:[%s5122 + $0x10] sm:$0xff]
        %v5126 = vld [vmem:[%s5122 + $0x18] sm:$0xff]
        %v5127 = vld [vmem:[%s5122 + $0x20] sm:$0xff]
        %v5128 = vld [vmem:[%s5122 + $0x28] sm:$0xff]
        %v5129 = vld [vmem:[%s5122 + $0x30] sm:$0xff]
        %v5130 = vld [vmem:[%s5122 + $0x38] sm:$0xff]
        %v5131 = vld [vmem:[%s5122 + $0x40] sm:$0xff]
        %v5132 = vld [vmem:[%s5122 + $0x48] sm:$0xff]
        %v5133 = vld [vmem:[%s5122 + $0x50] sm:$0xff]
        %v5134 = vld [vmem:[%s5122 + $0x58] sm:$0xff]
        %v5135 = vld [vmem:[%s5122 + $0x60] sm:$0xff]
        %v5136 = vld [vmem:[%s5122 + $0x68] sm:$0xff]
        %v5137 = vld [vmem:[%s5122 + $0x70] sm:$0xff]
        %v5138 = vld [vmem:[%s5122 + $0x78] sm:$0xff]
        %v5139 = vld [vmem:[%s5122 + $0x80] sm:$0xff]
        %v5140 = vld [vmem:[%s5122 + $0x88] sm:$0xff]
        %v5141 = vld [vmem:[%s5122 + $0x90] sm:$0xff]
        %v5142 = vld [vmem:[%s5122 + $0x98] sm:$0xff]
        %v5143 = vld [vmem:[%s5122 + $0xa0] sm:$0xff]
        %v5144 = vld [vmem:[%s5122 + $0xa8] sm:$0xff]
        %v5145 = vld [vmem:[%s5122 + $0xb0] sm:$0xff]
        %v5146 = vld [vmem:[%s5122 + $0xb8] sm:$0xff]
        %v5147 = vld [vmem:[%s5122 + $0xc0] sm:$0xff]
        %v5148 = vld [vmem:[%s5122 + $0xc8] sm:$0xff]
        %v5149 = vld [vmem:[%s5122 + $0xd0] sm:$0xff]
        %v5150 = vld [vmem:[%s5122 + $0xd8] sm:$0xff]
        %v5151 = vld [vmem:[%s5122 + $0xe0] sm:$0xff]
        %v5152 = vld [vmem:[%s5122 + $0xe8] sm:$0xff]
        %v5153 = vld [vmem:[%s5122 + $0xf0] sm:$0xff]
        %v5154 = vld [vmem:[%s5122 + $0xf8] sm:$0xff]
        %s5155 = scalar_lea.vmem %s8, 7
        %v5156 = vld [vmem:[%s5155] ss:$8 sm:$0x3]
        %v5158 = vlaneseq
        %v5159 = vshrl.u32 %v5158, 7
        %v5160 = vsub.s32 0, %v5159
        %v5161 = vrot.slane %v5156, %v5160
        %v5162 = vlaneseq
        %v5163 = vshrl.u32 %v5162, 7
        %v5164 = vsub.s32 1, %v5163
        %v5165 = vrot.slane %v5156, %v5164
        %v5200 = vunpack.c.l.b16 %v5123
        %v5201 = vunpack.c.h.b16 %v5123
        %v5202 = vunpack.c.l.b16 %v5124
        %v5203 = vunpack.c.h.b16 %v5124
        %v5204 = vunpack.c.l.b16 %v5125
        %v5205 = vunpack.c.h.b16 %v5125
        %v5206 = vunpack.c.l.b16 %v5126
        %v5207 = vunpack.c.h.b16 %v5126
        %v5208 = vunpack.c.l.b16 %v5127
        %v5209 = vunpack.c.h.b16 %v5127
        %v5210 = vunpack.c.l.b16 %v5128
        %v5211 = vunpack.c.h.b16 %v5128
        %v5212 = vunpack.c.l.b16 %v5129
        %v5213 = vunpack.c.h.b16 %v5129
        %v5214 = vunpack.c.l.b16 %v5130
        %v5215 = vunpack.c.h.b16 %v5130
        %v5216 = vunpack.c.l.b16 %v5131
        %v5217 = vunpack.c.h.b16 %v5131
        %v5218 = vunpack.c.l.b16 %v5132
        %v5219 = vunpack.c.h.b16 %v5132
        %v5220 = vunpack.c.l.b16 %v5133
        %v5221 = vunpack.c.h.b16 %v5133
        %v5222 = vunpack.c.l.b16 %v5134
        %v5223 = vunpack.c.h.b16 %v5134
        %v5224 = vunpack.c.l.b16 %v5135
        %v5225 = vunpack.c.h.b16 %v5135
        %v5226 = vunpack.c.l.b16 %v5136
        %v5227 = vunpack.c.h.b16 %v5136
        %v5228 = vunpack.c.l.b16 %v5137
        %v5229 = vunpack.c.h.b16 %v5137
        %v5230 = vunpack.c.l.b16 %v5138
        %v5231 = vunpack.c.h.b16 %v5138
        %v5232 = vunpack.c.l.b16 %v5139
        %v5233 = vunpack.c.h.b16 %v5139
        %v5234 = vunpack.c.l.b16 %v5140
        %v5235 = vunpack.c.h.b16 %v5140
        %v5236 = vunpack.c.l.b16 %v5141
        %v5237 = vunpack.c.h.b16 %v5141
        %v5238 = vunpack.c.l.b16 %v5142
        %v5239 = vunpack.c.h.b16 %v5142
        %v5240 = vunpack.c.l.b16 %v5143
        %v5241 = vunpack.c.h.b16 %v5143
        %v5242 = vunpack.c.l.b16 %v5144
        %v5243 = vunpack.c.h.b16 %v5144
        %v5244 = vunpack.c.l.b16 %v5145
        %v5245 = vunpack.c.h.b16 %v5145
        %v5246 = vunpack.c.l.b16 %v5146
        %v5247 = vunpack.c.h.b16 %v5146
        %v5248 = vunpack.c.l.b16 %v5147
        %v5249 = vunpack.c.h.b16 %v5147
        %v5250 = vunpack.c.l.b16 %v5148
        %v5251 = vunpack.c.h.b16 %v5148
        %v5252 = vunpack.c.l.b16 %v5149
        %v5253 = vunpack.c.h.b16 %v5149
        %v5254 = vunpack.c.l.b16 %v5150
        %v5255 = vunpack.c.h.b16 %v5150
        %v5256 = vunpack.c.l.b16 %v5151
        %v5257 = vunpack.c.h.b16 %v5151
        %v5258 = vunpack.c.l.b16 %v5152
        %v5259 = vunpack.c.h.b16 %v5152
        %v5260 = vunpack.c.l.b16 %v5153
        %v5261 = vunpack.c.h.b16 %v5153
        %v5262 = vunpack.c.l.b16 %v5154
        %v5263 = vunpack.c.h.b16 %v5154
        %v5264 = vpack.c.b16 %v5202, %v5200
        %v5265 = vpack.c.b16 %v5203, %v5201
        %v5266 = vpack.c.b16 %v5206, %v5204
        %v5267 = vpack.c.b16 %v5207, %v5205
        %v5268 = vpack.c.b16 %v5210, %v5208
        %v5269 = vpack.c.b16 %v5211, %v5209
        %v5270 = vpack.c.b16 %v5214, %v5212
        %v5271 = vpack.c.b16 %v5215, %v5213
        %v5272 = vpack.c.b16 %v5218, %v5216
        %v5273 = vpack.c.b16 %v5219, %v5217
        %v5274 = vpack.c.b16 %v5222, %v5220
        %v5275 = vpack.c.b16 %v5223, %v5221
        %v5276 = vpack.c.b16 %v5226, %v5224
        %v5277 = vpack.c.b16 %v5227, %v5225
        %v5278 = vpack.c.b16 %v5230, %v5228
        %v5279 = vpack.c.b16 %v5231, %v5229
        %v5280 = vpack.c.b16 %v5234, %v5232
        %v5281 = vpack.c.b16 %v5235, %v5233
        %v5282 = vpack.c.b16 %v5238, %v5236
        %v5283 = vpack.c.b16 %v5239, %v5237
        %v5284 = vpack.c.b16 %v5242, %v5240
        %v5285 = vpack.c.b16 %v5243, %v5241
        %v5286 = vpack.c.b16 %v5246, %v5244
        %v5287 = vpack.c.b16 %v5247, %v5245
        %v5288 = vpack.c.b16 %v5250, %v5248
        %v5289 = vpack.c.b16 %v5251, %v5249
        %v5290 = vpack.c.b16 %v5254, %v5252
        %v5291 = vpack.c.b16 %v5255, %v5253
        %v5292 = vpack.c.b16 %v5258, %v5256
        %v5293 = vpack.c.b16 %v5259, %v5257
        %v5294 = vpack.c.b16 %v5262, %v5260
        %v5295 = vpack.c.b16 %v5263, %v5261
        %5328 = vmatprep.subr.bf16.mxu0 %v5265
        %5329 = vmatpush1.bf16.msra.mxu0 %v5264
        %5330 = vmatprep.subr.bf16.mxu0 %v5267
        %5331 = vmatpush1.bf16.msra.mxu0 %v5266
        %5332 = vmatprep.subr.bf16.mxu0 %v5269
        %5333 = vmatpush1.bf16.msra.mxu0 %v5268
        %5334 = vmatprep.subr.bf16.mxu0 %v5271
        %5335 = vmatpush1.bf16.msra.mxu0 %v5270
        %5336 = vmatprep.subr.bf16.mxu0 %v5273
        %5337 = vmatpush1.bf16.msra.mxu0 %v5272
        %5338 = vmatprep.subr.bf16.mxu0 %v5275
        %5339 = vmatpush1.bf16.msra.mxu0 %v5274
        %5340 = vmatprep.subr.bf16.mxu0 %v5277
        %5341 = vmatpush1.bf16.msra.mxu0 %v5276
        %5342 = vmatprep.subr.bf16.mxu0 %v5279
        %5343 = vmatpush1.bf16.msra.mxu0 %v5278
        %5344 = vmatprep.subr.bf16.mxu0 %v5281
        %5345 = vmatpush1.bf16.msra.mxu0 %v5280
        %5346 = vmatprep.subr.bf16.mxu0 %v5283
        %5347 = vmatpush1.bf16.msra.mxu0 %v5282
        %5348 = vmatprep.subr.bf16.mxu0 %v5285
        %5349 = vmatpush1.bf16.msra.mxu0 %v5284
        %5350 = vmatprep.subr.bf16.mxu0 %v5287
        %5351 = vmatpush1.bf16.msra.mxu0 %v5286
        %5352 = vmatprep.subr.bf16.mxu0 %v5289
        %5353 = vmatpush1.bf16.msra.mxu0 %v5288
        %5354 = vmatprep.subr.bf16.mxu0 %v5291
        %5355 = vmatpush1.bf16.msra.mxu0 %v5290
        %5356 = vmatprep.subr.bf16.mxu0 %v5293
        %5357 = vmatpush1.bf16.msra.mxu0 %v5292
        %5358 = vmatprep.subr.bf16.mxu0 %v5295
        %5359 = vmatpush1.bf16.msra.mxu0 %v5294
        %5360 = vmatprep.mubr.bf16.mxu0 %v5091
        %5361 = vmatmul.mubr.bf16.gmra.mrb[0].mxu0 %v5090
        %v5362 = vpop.f32.mrb[0].mxu0
        %v5363 = vadd.f32 %v5161, %v5362
        %v5364 = vpop.f32.mrb[0].mxu0
        %v5365 = vadd.f32 %v5165, %v5364
        %v5366 = vpop.f32.mrb[0].mxu0
        %v5367 = vadd.f32 %v5161, %v5366
        %v5368 = vpop.f32.mrb[0].mxu0
        %v5369 = vadd.f32 %v5165, %v5368
        %5370 = vmatprep.mubr.bf16.mxu0 %v5093
        %5371 = vmatmul.mubr.bf16.gmra.mrb[0].mxu0 %v5092
        %v5372 = vpop.f32.mrb[0].mxu0
        %v5373 = vadd.f32 %v5161, %v5372
        %v5374 = vpop.f32.mrb[0].mxu0
        %v5375 = vadd.f32 %v5165, %v5374
        %v5376 = vpop.f32.mrb[0].mxu0
        %v5377 = vadd.f32 %v5161, %v5376
        %v5378 = vpop.f32.mrb[0].mxu0
        %v5379 = vadd.f32 %v5165, %v5378
        %5380 = vmatprep.mubr.bf16.mxu0 %v5095
        %5381 = vmatmul.mubr.bf16.gmra.mrb[0].mxu0 %v5094
        %v5382 = vpop.f32.mrb[0].mxu0
        %v5383 = vadd.f32 %v5161, %v5382
        %v5384 = vpop.f32.mrb[0].mxu0
        %v5385 = vadd.f32 %v5165, %v5384
        %v5386 = vpop.f32.mrb[0].mxu0
        %v5387 = vadd.f32 %v5161, %v5386
        %v5388 = vpop.f32.mrb[0].mxu0
        %v5389 = vadd.f32 %v5165, %v5388
        %5390 = vmatprep.mubr.bf16.mxu0 %v5097
        %5391 = vmatmul.mubr.bf16.gmra.mrb[0].mxu0 %v5096
        %v5392 = vpop.f32.mrb[0].mxu0
        %v5393 = vadd.f32 %v5161, %v5392
        %v5394 = vpop.f32.mrb[0].mxu0
        %v5395 = vadd.f32 %v5165, %v5394
        %v5396 = vpop.f32.mrb[0].mxu0
        %v5397 = vadd.f32 %v5161, %v5396
        %v5398 = vpop.f32.mrb[0].mxu0
        %v5399 = vadd.f32 %v5165, %v5398
        %5400 = vmatprep.mubr.bf16.mxu0 %v5099
        %5401 = vmatmul.mubr.bf16.gmra.mrb[0].mxu0 %v5098
        %v5402 = vpop.f32.mrb[0].mxu0
        %v5403 = vadd.f32 %v5161, %v5402
        %v5404 = vpop.f32.mrb[0].mxu0
        %v5405 = vadd.f32 %v5165, %v5404
        %v5406 = vpop.f32.mrb[0].mxu0
        %v5407 = vadd.f32 %v5161, %v5406
        %v5408 = vpop.f32.mrb[0].mxu0
        %v5409 = vadd.f32 %v5165, %v5408
        %5410 = vmatprep.mubr.bf16.mxu0 %v5101
        %5411 = vmatmul.mubr.bf16.gmra.mrb[0].mxu0 %v5100
        %v5412 = vpop.f32.mrb[0].mxu0
        %v5413 = vadd.f32 %v5161, %v5412
        %v5414 = vpop.f32.mrb[0].mxu0
        %v5415 = vadd.f32 %v5165, %v5414
        %v5416 = vpop.f32.mrb[0].mxu0
        %v5417 = vadd.f32 %v5161, %v5416
        %v5418 = vpop.f32.mrb[0].mxu0
        %v5419 = vadd.f32 %v5165, %v5418
        %5420 = vmatprep.mubr.bf16.mxu0 %v5103
        %5421 = vmatmul.mubr.bf16.gmra.mrb[0].mxu0 %v5102
        %v5422 = vpop.f32.mrb[0].mxu0
        %v5423 = vadd.f32 %v5161, %v5422
        %v5424 = vpop.f32.mrb[0].mxu0
        %v5425 = vadd.f32 %v5165, %v5424
        %v5426 = vpop.f32.mrb[0].mxu0
        %v5427 = vadd.f32 %v5161, %v5426
        %v5428 = vpop.f32.mrb[0].mxu0
        %v5429 = vadd.f32 %v5165, %v5428
        %5430 = vmatprep.mubr.bf16.mxu0 %v5105
        %5431 = vmatmul.mubr.bf16.gmra.mrb[0].mxu0 %v5104
        %v5432 = vpop.f32.mrb[0].mxu0
        %v5433 = vadd.f32 %v5161, %v5432
        %v5434 = vpop.f32.mrb[0].mxu0
        %v5435 = vadd.f32 %v5165, %v5434
        %v5436 = vpop.f32.mrb[0].mxu0
        %v5437 = vadd.f32 %v5161, %v5436
        %v5438 = vpop.f32.mrb[0].mxu0
        %v5439 = vadd.f32 %v5165, %v5438
        %5440 = vmatprep.mubr.bf16.mxu0 %v5107
        %5441 = vmatmul.mubr.bf16.gmra.mrb[0].mxu0 %v5106
        %v5442 = vpop.f32.mrb[0].mxu0
        %v5443 = vadd.f32 %v5161, %v5442
        %v5444 = vpop.f32.mrb[0].mxu0
        %v5445 = vadd.f32 %v5165, %v5444
        %v5446 = vpop.f32.mrb[0].mxu0
        %v5447 = vadd.f32 %v5161, %v5446
        %v5448 = vpop.f32.mrb[0].mxu0
        %v5449 = vadd.f32 %v5165, %v5448
        %5450 = vmatprep.mubr.bf16.mxu0 %v5109
        %5451 = vmatmul.mubr.bf16.gmra.mrb[0].mxu0 %v5108
        %v5452 = vpop.f32.mrb[0].mxu0
        %v5453 = vadd.f32 %v5161, %v5452
        %v5454 = vpop.f32.mrb[0].mxu0
        %v5455 = vadd.f32 %v5165, %v5454
        %v5456 = vpop.f32.mrb[0].mxu0
        %v5457 = vadd.f32 %v5161, %v5456
        %v5458 = vpop.f32.mrb[0].mxu0
        %v5459 = vadd.f32 %v5165, %v5458
        %5460 = vmatprep.mubr.bf16.mxu0 %v5111
        %5461 = vmatmul.mubr.bf16.gmra.mrb[0].mxu0 %v5110
        %v5462 = vpop.f32.mrb[0].mxu0
        %v5463 = vadd.f32 %v5161, %v5462
        %v5464 = vpop.f32.mrb[0].mxu0
        %v5465 = vadd.f32 %v5165, %v5464
        %v5466 = vpop.f32.mrb[0].mxu0
        %v5467 = vadd.f32 %v5161, %v5466
        %v5468 = vpop.f32.mrb[0].mxu0
        %v5469 = vadd.f32 %v5165, %v5468
        %5470 = vmatprep.mubr.bf16.mxu0 %v5113
        %5471 = vmatmul.mubr.bf16.gmra.mrb[0].mxu0 %v5112
        %v5472 = vpop.f32.mrb[0].mxu0
        %v5473 = vadd.f32 %v5161, %v5472
        %v5474 = vpop.f32.mrb[0].mxu0
        %v5475 = vadd.f32 %v5165, %v5474
        %v5476 = vpop.f32.mrb[0].mxu0
        %v5477 = vadd.f32 %v5161, %v5476
        %v5478 = vpop.f32.mrb[0].mxu0
        %v5479 = vadd.f32 %v5165, %v5478
        %5480 = vmatprep.mubr.bf16.mxu0 %v5115
        %5481 = vmatmul.mubr.bf16.gmra.mrb[0].mxu0 %v5114
        %v5482 = vpop.f32.mrb[0].mxu0
        %v5483 = vadd.f32 %v5161, %v5482
        %v5484 = vpop.f32.mrb[0].mxu0
        %v5485 = vadd.f32 %v5165, %v5484
        %v5486 = vpop.f32.mrb[0].mxu0
        %v5487 = vadd.f32 %v5161, %v5486
        %v5488 = vpop.f32.mrb[0].mxu0
        %v5489 = vadd.f32 %v5165, %v5488
        %5490 = vmatprep.mubr.bf16.mxu0 %v5117
        %5491 = vmatmul.mubr.bf16.gmra.mrb[0].mxu0 %v5116
        %v5492 = vpop.f32.mrb[0].mxu0
        %v5493 = vadd.f32 %v5161, %v5492
        %v5494 = vpop.f32.mrb[0].mxu0
        %v5495 = vadd.f32 %v5165, %v5494
        %v5496 = vpop.f32.mrb[0].mxu0
        %v5497 = vadd.f32 %v5161, %v5496
        %v5498 = vpop.f32.mrb[0].mxu0
        %v5499 = vadd.f32 %v5165, %v5498
        %5500 = vmatprep.mubr.bf16.mxu0 %v5119
        %5501 = vmatmul.mubr.bf16.gmra.mrb[0].mxu0 %v5118
        %v5502 = vpop.f32.mrb[0].mxu0
        %v5503 = vadd.f32 %v5161, %v5502
        %v5504 = vpop.f32.mrb[0].mxu0
        %v5505 = vadd.f32 %v5165, %v5504
        %v5506 = vpop.f32.mrb[0].mxu0
        %v5507 = vadd.f32 %v5161, %v5506
        %v5508 = vpop.f32.mrb[0].mxu0
        %v5509 = vadd.f32 %v5165, %v5508
        %5510 = vmatprep.mubr.bf16.mxu0 %v5121
        %5511 = vmatmul.mubr.bf16.gmra.mrb[0].mxu0 %v5120
        %v5512 = vpop.f32.mrb[0].mxu0
        %v5513 = vadd.f32 %v5161, %v5512
        %v5514 = vpop.f32.mrb[0].mxu0
        %v5515 = vadd.f32 %v5165, %v5514
        %v5516 = vpop.f32.mrb[0].mxu0
        %v5517 = vadd.f32 %v5161, %v5516
        %v5518 = vpop.f32.mrb[0].mxu0
        %v5519 = vadd.f32 %v5165, %v5518
        %5520 = vdwg.mxu0
        %v5521 = vmax.f32 %v5363, 0.0
        %v5522 = vmax.f32 %v5365, 0.0
        %v5523 = vmax.f32 %v5367, 0.0
        %v5524 = vmax.f32 %v5369, 0.0
        %v5525 = vmax.f32 %v5373, 0.0
        %v5526 = vmax.f32 %v5375, 0.0
        %v5527 = vmax.f32 %v5377, 0.0
        %v5528 = vmax.f32 %v5379, 0.0
        %v5529 = vmax.f32 %v5383, 0.0
        %v5530 = vmax.f32 %v5385, 0.0
        %v5531 = vmax.f32 %v5387, 0.0
        %v5532 = vmax.f32 %v5389, 0.0
        %v5533 = vmax.f32 %v5393, 0.0
        %v5534 = vmax.f32 %v5395, 0.0
        %v5535 = vmax.f32 %v5397, 0.0
        %v5536 = vmax.f32 %v5399, 0.0
        %v5537 = vmax.f32 %v5403, 0.0
        %v5538 = vmax.f32 %v5405, 0.0
        %v5539 = vmax.f32 %v5407, 0.0
        %v5540 = vmax.f32 %v5409, 0.0
        %v5541 = vmax.f32 %v5413, 0.0
        %v5542 = vmax.f32 %v5415, 0.0
        %v5543 = vmax.f32 %v5417, 0.0
        %v5544 = vmax.f32 %v5419, 0.0
        %v5545 = vmax.f32 %v5423, 0.0
        %v5546 = vmax.f32 %v5425, 0.0
        %v5547 = vmax.f32 %v5427, 0.0
        %v5548 = vmax.f32 %v5429, 0.0
        %v5549 = vmax.f32 %v5433, 0.0
        %v5550 = vmax.f32 %v5435, 0.0
        %v5551 = vmax.f32 %v5437, 0.0
        %v5552 = vmax.f32 %v5439, 0.0
        %v5553 = vmax.f32 %v5443, 0.0
        %v5554 = vmax.f32 %v5445, 0.0
        %v5555 = vmax.f32 %v5447, 0.0
        %v5556 = vmax.f32 %v5449, 0.0
        %v5557 = vmax.f32 %v5453, 0.0
        %v5558 = vmax.f32 %v5455, 0.0
        %v5559 = vmax.f32 %v5457, 0.0
        %v5560 = vmax.f32 %v5459, 0.0
        %v5561 = vmax.f32 %v5463, 0.0
        %v5562 = vmax.f32 %v5465, 0.0
        %v5563 = vmax.f32 %v5467, 0.0
        %v5564 = vmax.f32 %v5469, 0.0
        %v5565 = vmax.f32 %v5473, 0.0
        %v5566 = vmax.f32 %v5475, 0.0
        %v5567 = vmax.f32 %v5477, 0.0
        %v5568 = vmax.f32 %v5479, 0.0
        %v5569 = vmax.f32 %v5483, 0.0
        %v5570 = vmax.f32 %v5485, 0.0
        %v5571 = vmax.f32 %v5487, 0.0
        %v5572 = vmax.f32 %v5489, 0.0
        %v5573 = vmax.f32 %v5493, 0.0
        %v5574 = vmax.f32 %v5495, 0.0
        %v5575 = vmax.f32 %v5497, 0.0
        %v5576 = vmax.f32 %v5499, 0.0
        %v5577 = vmax.f32 %v5503, 0.0
        %v5578 = vmax.f32 %v5505, 0.0
        %v5579 = vmax.f32 %v5507, 0.0
        %v5580 = vmax.f32 %v5509, 0.0
        %v5581 = vmax.f32 %v5513, 0.0
        %v5582 = vmax.f32 %v5515, 0.0
        %v5583 = vmax.f32 %v5517, 0.0
        %v5584 = vmax.f32 %v5519, 0.0
        %v5585 = vpack.c.bf16 %v5523, %v5521
        %v5586 = vpack.c.bf16 %v5524, %v5522
        %v5587 = vpack.c.bf16 %v5527, %v5525
        %v5588 = vpack.c.bf16 %v5528, %v5526
        %v5589 = vpack.c.bf16 %v5531, %v5529
        %v5590 = vpack.c.bf16 %v5532, %v5530
        %v5591 = vpack.c.bf16 %v5535, %v5533
        %v5592 = vpack.c.bf16 %v5536, %v5534
        %v5593 = vpack.c.bf16 %v5539, %v5537
        %v5594 = vpack.c.bf16 %v5540, %v5538
        %v5595 = vpack.c.bf16 %v5543, %v5541
        %v5596 = vpack.c.bf16 %v5544, %v5542
        %v5597 = vpack.c.bf16 %v5547, %v5545
        %v5598 = vpack.c.bf16 %v5548, %v5546
        %v5599 = vpack.c.bf16 %v5551, %v5549
        %v5600 = vpack.c.bf16 %v5552, %v5550
        %v5601 = vpack.c.bf16 %v5555, %v5553
        %v5602 = vpack.c.bf16 %v5556, %v5554
        %v5603 = vpack.c.bf16 %v5559, %v5557
        %v5604 = vpack.c.bf16 %v5560, %v5558
        %v5605 = vpack.c.bf16 %v5563, %v5561
        %v5606 = vpack.c.bf16 %v5564, %v5562
        %v5607 = vpack.c.bf16 %v5567, %v5565
        %v5608 = vpack.c.bf16 %v5568, %v5566
        %v5609 = vpack.c.bf16 %v5571, %v5569
        %v5610 = vpack.c.bf16 %v5572, %v5570
        %v5611 = vpack.c.bf16 %v5575, %v5573
        %v5612 = vpack.c.bf16 %v5576, %v5574
        %v5613 = vpack.c.bf16 %v5579, %v5577
        %v5614 = vpack.c.bf16 %v5580, %v5578
        %v5615 = vpack.c.bf16 %v5583, %v5581
        %v5616 = vpack.c.bf16 %v5584, %v5582
        %v5617 = vld [vmem:[%s9] sm:$0xff]
        %v5618 = vld [vmem:[%s9 + $0x8] sm:$0xff]
        %v5619 = vld [vmem:[%s9 + $0x10] sm:$0xff]
        %v5620 = vld [vmem:[%s9 + $0x18] sm:$0xff]
        %v5621 = vld [vmem:[%s9 + $0x20] sm:$0xff]
        %v5622 = vld [vmem:[%s9 + $0x28] sm:$0xff]
        %v5623 = vld [vmem:[%s9 + $0x30] sm:$0xff]
        %v5624 = vld [vmem:[%s9 + $0x38] sm:$0xff]
        %v5625 = vld [vmem:[%s9 + $0x40] sm:$0xff]
        %v5626 = vld [vmem:[%s9 + $0x48] sm:$0xff]
        %v5627 = vld [vmem:[%s9 + $0x50] sm:$0xff]
        %v5628 = vld [vmem:[%s9 + $0x58] sm:$0xff]
        %v5629 = vld [vmem:[%s9 + $0x60] sm:$0xff]
        %v5630 = vld [vmem:[%s9 + $0x68] sm:$0xff]
        %v5631 = vld [vmem:[%s9 + $0x70] sm:$0xff]
        %v5632 = vld [vmem:[%s9 + $0x78] sm:$0xff]
        %v5633 = vld [vmem:[%s9 + $0x80] sm:$0xff]
        %v5634 = vld [vmem:[%s9 + $0x88] sm:$0xff]
        %v5635 = vld [vmem:[%s9 + $0x90] sm:$0xff]
        %v5636 = vld [vmem:[%s9 + $0x98] sm:$0xff]
        %v5637 = vld [vmem:[%s9 + $0xa0] sm:$0xff]
        %v5638 = vld [vmem:[%s9 + $0xa8] sm:$0xff]
        %v5639 = vld [vmem:[%s9 + $0xb0] sm:$0xff]
        %v5640 = vld [vmem:[%s9 + $0xb8] sm:$0xff]
        %v5641 = vld [vmem:[%s9 + $0xc0] sm:$0xff]
        %v5642 = vld [vmem:[%s9 + $0xc8] sm:$0xff]
        %v5643 = vld [vmem:[%s9 + $0xd0] sm:$0xff]
        %v5644 = vld [vmem:[%s9 + $0xd8] sm:$0xff]
        %v5645 = vld [vmem:[%s9 + $0xe0] sm:$0xff]
        %v5646 = vld [vmem:[%s9 + $0xe8] sm:$0xff]
        %v5647 = vld [vmem:[%s9 + $0xf0] sm:$0xff]
        %v5648 = vld [vmem:[%s9 + $0xf8] sm:$0xff]
        %v5649 = vld [vmem:[%s10] sm:$0x3]
        %v5651 = vlaneseq
        %v5652 = vshrl.u32 %v5651, 7
        %v5653 = vsub.s32 0, %v5652
        %v5654 = vrot.slane %v5649, %v5653
        %v5655 = vlaneseq
        %v5656 = vshrl.u32 %v5655, 7
        %v5657 = vsub.s32 1, %v5656
        %v5658 = vrot.slane %v5649, %v5657
        %v5693 = vunpack.c.l.b16 %v5617
        %v5694 = vunpack.c.h.b16 %v5617
        %v5695 = vunpack.c.l.b16 %v5618
        %v5696 = vunpack.c.h.b16 %v5618
        %v5697 = vunpack.c.l.b16 %v5619
        %v5698 = vunpack.c.h.b16 %v5619
        %v5699 = vunpack.c.l.b16 %v5620
        %v5700 = vunpack.c.h.b16 %v5620
        %v5701 = vunpack.c.l.b16 %v5621
        %v5702 = vunpack.c.h.b16 %v5621
        %v5703 = vunpack.c.l.b16 %v5622
        %v5704 = vunpack.c.h.b16 %v5622
        %v5705 = vunpack.c.l.b16 %v5623
        %v5706 = vunpack.c.h.b16 %v5623
        %v5707 = vunpack.c.l.b16 %v5624
        %v5708 = vunpack.c.h.b16 %v5624
        %v5709 = vunpack.c.l.b16 %v5625
        %v5710 = vunpack.c.h.b16 %v5625
        %v5711 = vunpack.c.l.b16 %v5626
        %v5712 = vunpack.c.h.b16 %v5626
        %v5713 = vunpack.c.l.b16 %v5627
        %v5714 = vunpack.c.h.b16 %v5627
        %v5715 = vunpack.c.l.b16 %v5628
        %v5716 = vunpack.c.h.b16 %v5628
        %v5717 = vunpack.c.l.b16 %v5629
        %v5718 = vunpack.c.h.b16 %v5629
        %v5719 = vunpack.c.l.b16 %v5630
        %v5720 = vunpack.c.h.b16 %v5630
        %v5721 = vunpack.c.l.b16 %v5631
        %v5722 = vunpack.c.h.b16 %v5631
        %v5723 = vunpack.c.l.b16 %v5632
        %v5724 = vunpack.c.h.b16 %v5632
        %v5725 = vunpack.c.l.b16 %v5633
        %v5726 = vunpack.c.h.b16 %v5633
        %v5727 = vunpack.c.l.b16 %v5634
        %v5728 = vunpack.c.h.b16 %v5634
        %v5729 = vunpack.c.l.b16 %v5635
        %v5730 = vunpack.c.h.b16 %v5635
        %v5731 = vunpack.c.l.b16 %v5636
        %v5732 = vunpack.c.h.b16 %v5636
        %v5733 = vunpack.c.l.b16 %v5637
        %v5734 = vunpack.c.h.b16 %v5637
        %v5735 = vunpack.c.l.b16 %v5638
        %v5736 = vunpack.c.h.b16 %v5638
        %v5737 = vunpack.c.l.b16 %v5639
        %v5738 = vunpack.c.h.b16 %v5639
        %v5739 = vunpack.c.l.b16 %v5640
        %v5740 = vunpack.c.h.b16 %v5640
        %v5741 = vunpack.c.l.b16 %v5641
        %v5742 = vunpack.c.h.b16 %v5641
        %v5743 = vunpack.c.l.b16 %v5642
        %v5744 = vunpack.c.h.b16 %v5642
        %v5745 = vunpack.c.l.b16 %v5643
        %v5746 = vunpack.c.h.b16 %v5643
        %v5747 = vunpack.c.l.b16 %v5644
        %v5748 = vunpack.c.h.b16 %v5644
        %v5749 = vunpack.c.l.b16 %v5645
        %v5750 = vunpack.c.h.b16 %v5645
        %v5751 = vunpack.c.l.b16 %v5646
        %v5752 = vunpack.c.h.b16 %v5646
        %v5753 = vunpack.c.l.b16 %v5647
        %v5754 = vunpack.c.h.b16 %v5647
        %v5755 = vunpack.c.l.b16 %v5648
        %v5756 = vunpack.c.h.b16 %v5648
        %v5757 = vpack.c.b16 %v5695, %v5693
        %v5758 = vpack.c.b16 %v5696, %v5694
        %v5759 = vpack.c.b16 %v5699, %v5697
        %v5760 = vpack.c.b16 %v5700, %v5698
        %v5761 = vpack.c.b16 %v5703, %v5701
        %v5762 = vpack.c.b16 %v5704, %v5702
        %v5763 = vpack.c.b16 %v5707, %v5705
        %v5764 = vpack.c.b16 %v5708, %v5706
        %v5765 = vpack.c.b16 %v5711, %v5709
        %v5766 = vpack.c.b16 %v5712, %v5710
        %v5767 = vpack.c.b16 %v5715, %v5713
        %v5768 = vpack.c.b16 %v5716, %v5714
        %v5769 = vpack.c.b16 %v5719, %v5717
        %v5770 = vpack.c.b16 %v5720, %v5718
        %v5771 = vpack.c.b16 %v5723, %v5721
        %v5772 = vpack.c.b16 %v5724, %v5722
        %v5773 = vpack.c.b16 %v5727, %v5725
        %v5774 = vpack.c.b16 %v5728, %v5726
        %v5775 = vpack.c.b16 %v5731, %v5729
        %v5776 = vpack.c.b16 %v5732, %v5730
        %v5777 = vpack.c.b16 %v5735, %v5733
        %v5778 = vpack.c.b16 %v5736, %v5734
        %v5779 = vpack.c.b16 %v5739, %v5737
        %v5780 = vpack.c.b16 %v5740, %v5738
        %v5781 = vpack.c.b16 %v5743, %v5741
        %v5782 = vpack.c.b16 %v5744, %v5742
        %v5783 = vpack.c.b16 %v5747, %v5745
        %v5784 = vpack.c.b16 %v5748, %v5746
        %v5785 = vpack.c.b16 %v5751, %v5749
        %v5786 = vpack.c.b16 %v5752, %v5750
        %v5787 = vpack.c.b16 %v5755, %v5753
        %v5788 = vpack.c.b16 %v5756, %v5754
        %5821 = vmatprep.subr.bf16.mxu0 %v5758
        %5822 = vmatpush1.bf16.msra.mxu0 %v5757
        %5823 = vmatprep.subr.bf16.mxu0 %v5760
        %5824 = vmatpush1.bf16.msra.mxu0 %v5759
        %5825 = vmatprep.subr.bf16.mxu0 %v5762
        %5826 = vmatpush1.bf16.msra.mxu0 %v5761
        %5827 = vmatprep.subr.bf16.mxu0 %v5764
        %5828 = vmatpush1.bf16.msra.mxu0 %v5763
        %5829 = vmatprep.subr.bf16.mxu0 %v5766
        %5830 = vmatpush1.bf16.msra.mxu0 %v5765
        %5831 = vmatprep.subr.bf16.mxu0 %v5768
        %5832 = vmatpush1.bf16.msra.mxu0 %v5767
        %5833 = vmatprep.subr.bf16.mxu0 %v5770
        %5834 = vmatpush1.bf16.msra.mxu0 %v5769
        %5835 = vmatprep.subr.bf16.mxu0 %v5772
        %5836 = vmatpush1.bf16.msra.mxu0 %v5771
        %5837 = vmatprep.subr.bf16.mxu0 %v5774
        %5838 = vmatpush1.bf16.msra.mxu0 %v5773
        %5839 = vmatprep.subr.bf16.mxu0 %v5776
        %5840 = vmatpush1.bf16.msra.mxu0 %v5775
        %5841 = vmatprep.subr.bf16.mxu0 %v5778
        %5842 = vmatpush1.bf16.msra.mxu0 %v5777
        %5843 = vmatprep.subr.bf16.mxu0 %v5780
        %5844 = vmatpush1.bf16.msra.mxu0 %v5779
        %5845 = vmatprep.subr.bf16.mxu0 %v5782
        %5846 = vmatpush1.bf16.msra.mxu0 %v5781
        %5847 = vmatprep.subr.bf16.mxu0 %v5784
        %5848 = vmatpush1.bf16.msra.mxu0 %v5783
        %5849 = vmatprep.subr.bf16.mxu0 %v5786
        %5850 = vmatpush1.bf16.msra.mxu0 %v5785
        %5851 = vmatprep.subr.bf16.mxu0 %v5788
        %5852 = vmatpush1.bf16.msra.mxu0 %v5787
        %5853 = vmatprep.mubr.bf16.mxu0 %v5586
        %5854 = vmatmul.mubr.bf16.gmra.mrb[0].mxu0 %v5585
        %v5855 = vpop.f32.mrb[0].mxu0
        %v5856 = vadd.f32 %v5654, %v5855
        %v5857 = vpop.f32.mrb[0].mxu0
        %v5858 = vadd.f32 %v5658, %v5857
        %v5859 = vpop.f32.mrb[0].mxu0
        %v5860 = vadd.f32 %v5654, %v5859
        %v5861 = vpop.f32.mrb[0].mxu0
        %v5862 = vadd.f32 %v5658, %v5861
        %5863 = vmatprep.mubr.bf16.mxu0 %v5588
        %5864 = vmatmul.mubr.bf16.gmra.mrb[0].mxu0 %v5587
        %v5865 = vpop.f32.mrb[0].mxu0
        %v5866 = vadd.f32 %v5654, %v5865
        %v5867 = vpop.f32.mrb[0].mxu0
        %v5868 = vadd.f32 %v5658, %v5867
        %v5869 = vpop.f32.mrb[0].mxu0
        %v5870 = vadd.f32 %v5654, %v5869
        %v5871 = vpop.f32.mrb[0].mxu0
        %v5872 = vadd.f32 %v5658, %v5871
        %5873 = vmatprep.mubr.bf16.mxu0 %v5590
        %5874 = vmatmul.mubr.bf16.gmra.mrb[0].mxu0 %v5589
        %v5875 = vpop.f32.mrb[0].mxu0
        %v5876 = vadd.f32 %v5654, %v5875
        %v5877 = vpop.f32.mrb[0].mxu0
        %v5878 = vadd.f32 %v5658, %v5877
        %v5879 = vpop.f32.mrb[0].mxu0
        %v5880 = vadd.f32 %v5654, %v5879
        %v5881 = vpop.f32.mrb[0].mxu0
        %v5882 = vadd.f32 %v5658, %v5881
        %5883 = vmatprep.mubr.bf16.mxu0 %v5592
        %5884 = vmatmul.mubr.bf16.gmra.mrb[0].mxu0 %v5591
        %v5885 = vpop.f32.mrb[0].mxu0
        %v5886 = vadd.f32 %v5654, %v5885
        %v5887 = vpop.f32.mrb[0].mxu0
        %v5888 = vadd.f32 %v5658, %v5887
        %v5889 = vpop.f32.mrb[0].mxu0
        %v5890 = vadd.f32 %v5654, %v5889
        %v5891 = vpop.f32.mrb[0].mxu0
        %v5892 = vadd.f32 %v5658, %v5891
        %5893 = vmatprep.mubr.bf16.mxu0 %v5594
        %5894 = vmatmul.mubr.bf16.gmra.mrb[0].mxu0 %v5593
        %v5895 = vpop.f32.mrb[0].mxu0
        %v5896 = vadd.f32 %v5654, %v5895
        %v5897 = vpop.f32.mrb[0].mxu0
        %v5898 = vadd.f32 %v5658, %v5897
        %v5899 = vpop.f32.mrb[0].mxu0
        %v5900 = vadd.f32 %v5654, %v5899
        %v5901 = vpop.f32.mrb[0].mxu0
        %v5902 = vadd.f32 %v5658, %v5901
        %5903 = vmatprep.mubr.bf16.mxu0 %v5596
        %5904 = vmatmul.mubr.bf16.gmra.mrb[0].mxu0 %v5595
        %v5905 = vpop.f32.mrb[0].mxu0
        %v5906 = vadd.f32 %v5654, %v5905
        %v5907 = vpop.f32.mrb[0].mxu0
        %v5908 = vadd.f32 %v5658, %v5907
        %v5909 = vpop.f32.mrb[0].mxu0
        %v5910 = vadd.f32 %v5654, %v5909
        %v5911 = vpop.f32.mrb[0].mxu0
        %v5912 = vadd.f32 %v5658, %v5911
        %5913 = vmatprep.mubr.bf16.mxu0 %v5598
        %5914 = vmatmul.mubr.bf16.gmra.mrb[0].mxu0 %v5597
        %v5915 = vpop.f32.mrb[0].mxu0
        %v5916 = vadd.f32 %v5654, %v5915
        %v5917 = vpop.f32.mrb[0].mxu0
        %v5918 = vadd.f32 %v5658, %v5917
        %v5919 = vpop.f32.mrb[0].mxu0
        %v5920 = vadd.f32 %v5654, %v5919
        %v5921 = vpop.f32.mrb[0].mxu0
        %v5922 = vadd.f32 %v5658, %v5921
        %5923 = vmatprep.mubr.bf16.mxu0 %v5600
        %5924 = vmatmul.mubr.bf16.gmra.mrb[0].mxu0 %v5599
        %v5925 = vpop.f32.mrb[0].mxu0
        %v5926 = vadd.f32 %v5654, %v5925
        %v5927 = vpop.f32.mrb[0].mxu0
        %v5928 = vadd.f32 %v5658, %v5927
        %v5929 = vpop.f32.mrb[0].mxu0
        %v5930 = vadd.f32 %v5654, %v5929
        %v5931 = vpop.f32.mrb[0].mxu0
        %v5932 = vadd.f32 %v5658, %v5931
        %5933 = vmatprep.mubr.bf16.mxu0 %v5602
        %5934 = vmatmul.mubr.bf16.gmra.mrb[0].mxu0 %v5601
        %v5935 = vpop.f32.mrb[0].mxu0
        %v5936 = vadd.f32 %v5654, %v5935
        %v5937 = vpop.f32.mrb[0].mxu0
        %v5938 = vadd.f32 %v5658, %v5937
        %v5939 = vpop.f32.mrb[0].mxu0
        %v5940 = vadd.f32 %v5654, %v5939
        %v5941 = vpop.f32.mrb[0].mxu0
        %v5942 = vadd.f32 %v5658, %v5941
        %5943 = vmatprep.mubr.bf16.mxu0 %v5604
        %5944 = vmatmul.mubr.bf16.gmra.mrb[0].mxu0 %v5603
        %v5945 = vpop.f32.mrb[0].mxu0
        %v5946 = vadd.f32 %v5654, %v5945
        %v5947 = vpop.f32.mrb[0].mxu0
        %v5948 = vadd.f32 %v5658, %v5947
        %v5949 = vpop.f32.mrb[0].mxu0
        %v5950 = vadd.f32 %v5654, %v5949
        %v5951 = vpop.f32.mrb[0].mxu0
        %v5952 = vadd.f32 %v5658, %v5951
        %5953 = vmatprep.mubr.bf16.mxu0 %v5606
        %5954 = vmatmul.mubr.bf16.gmra.mrb[0].mxu0 %v5605
        %v5955 = vpop.f32.mrb[0].mxu0
        %v5956 = vadd.f32 %v5654, %v5955
        %v5957 = vpop.f32.mrb[0].mxu0
        %v5958 = vadd.f32 %v5658, %v5957
        %v5959 = vpop.f32.mrb[0].mxu0
        %v5960 = vadd.f32 %v5654, %v5959
        %v5961 = vpop.f32.mrb[0].mxu0
        %v5962 = vadd.f32 %v5658, %v5961
        %5963 = vmatprep.mubr.bf16.mxu0 %v5608
        %5964 = vmatmul.mubr.bf16.gmra.mrb[0].mxu0 %v5607
        %v5965 = vpop.f32.mrb[0].mxu0
        %v5966 = vadd.f32 %v5654, %v5965
        %v5967 = vpop.f32.mrb[0].mxu0
        %v5968 = vadd.f32 %v5658, %v5967
        %v5969 = vpop.f32.mrb[0].mxu0
        %v5970 = vadd.f32 %v5654, %v5969
        %v5971 = vpop.f32.mrb[0].mxu0
        %v5972 = vadd.f32 %v5658, %v5971
        %5973 = vmatprep.mubr.bf16.mxu0 %v5610
        %5974 = vmatmul.mubr.bf16.gmra.mrb[0].mxu0 %v5609
        %v5975 = vpop.f32.mrb[0].mxu0
        %v5976 = vadd.f32 %v5654, %v5975
        %v5977 = vpop.f32.mrb[0].mxu0
        %v5978 = vadd.f32 %v5658, %v5977
        %v5979 = vpop.f32.mrb[0].mxu0
        %v5980 = vadd.f32 %v5654, %v5979
        %v5981 = vpop.f32.mrb[0].mxu0
        %v5982 = vadd.f32 %v5658, %v5981
        %5983 = vmatprep.mubr.bf16.mxu0 %v5612
        %5984 = vmatmul.mubr.bf16.gmra.mrb[0].mxu0 %v5611
        %v5985 = vpop.f32.mrb[0].mxu0
        %v5986 = vadd.f32 %v5654, %v5985
        %v5987 = vpop.f32.mrb[0].mxu0
        %v5988 = vadd.f32 %v5658, %v5987
        %v5989 = vpop.f32.mrb[0].mxu0
        %v5990 = vadd.f32 %v5654, %v5989
        %v5991 = vpop.f32.mrb[0].mxu0
        %v5992 = vadd.f32 %v5658, %v5991
        %5993 = vmatprep.mubr.bf16.mxu0 %v5614
        %5994 = vmatmul.mubr.bf16.gmra.mrb[0].mxu0 %v5613
        %v5995 = vpop.f32.mrb[0].mxu0
        %v5996 = vadd.f32 %v5654, %v5995
        %v5997 = vpop.f32.mrb[0].mxu0
        %v5998 = vadd.f32 %v5658, %v5997
        %v5999 = vpop.f32.mrb[0].mxu0
        %v6000 = vadd.f32 %v5654, %v5999
        %v6001 = vpop.f32.mrb[0].mxu0
        %v6002 = vadd.f32 %v5658, %v6001
        %6003 = vmatprep.mubr.bf16.mxu0 %v5616
        %6004 = vmatmul.mubr.bf16.gmra.mrb[0].mxu0 %v5615
        %v6005 = vpop.f32.mrb[0].mxu0
        %v6006 = vadd.f32 %v5654, %v6005
        %v6007 = vpop.f32.mrb[0].mxu0
        %v6008 = vadd.f32 %v5658, %v6007
        %v6009 = vpop.f32.mrb[0].mxu0
        %v6010 = vadd.f32 %v5654, %v6009
        %v6011 = vpop.f32.mrb[0].mxu0
        %v6012 = vadd.f32 %v5658, %v6011
        %6013 = vdwg.mxu0
        %v6014 = vpack.c.bf16 %v5860, %v5856
        %v6015 = vpack.c.bf16 %v5862, %v5858
        %v6016 = vpack.c.bf16 %v5870, %v5866
        %v6017 = vpack.c.bf16 %v5872, %v5868
        %v6018 = vpack.c.bf16 %v5880, %v5876
        %v6019 = vpack.c.bf16 %v5882, %v5878
        %v6020 = vpack.c.bf16 %v5890, %v5886
        %v6021 = vpack.c.bf16 %v5892, %v5888
        %v6022 = vpack.c.bf16 %v5900, %v5896
        %v6023 = vpack.c.bf16 %v5902, %v5898
        %v6024 = vpack.c.bf16 %v5910, %v5906
        %v6025 = vpack.c.bf16 %v5912, %v5908
        %v6026 = vpack.c.bf16 %v5920, %v5916
        %v6027 = vpack.c.bf16 %v5922, %v5918
        %v6028 = vpack.c.bf16 %v5930, %v5926
        %v6029 = vpack.c.bf16 %v5932, %v5928
        %v6030 = vpack.c.bf16 %v5940, %v5936
        %v6031 = vpack.c.bf16 %v5942, %v5938
        %v6032 = vpack.c.bf16 %v5950, %v5946
        %v6033 = vpack.c.bf16 %v5952, %v5948
        %v6034 = vpack.c.bf16 %v5960, %v5956
        %v6035 = vpack.c.bf16 %v5962, %v5958
        %v6036 = vpack.c.bf16 %v5970, %v5966
        %v6037 = vpack.c.bf16 %v5972, %v5968
        %v6038 = vpack.c.bf16 %v5980, %v5976
        %v6039 = vpack.c.bf16 %v5982, %v5978
        %v6040 = vpack.c.bf16 %v5990, %v5986
        %v6041 = vpack.c.bf16 %v5992, %v5988
        %v6042 = vpack.c.bf16 %v6000, %v5996
        %v6043 = vpack.c.bf16 %v6002, %v5998
        %v6044 = vpack.c.bf16 %v6010, %v6006
        %v6045 = vpack.c.bf16 %v6012, %v6008
        %v6046 = vld [vmem:[%s13] sm:$0xf]
        %v6047 = vld [vmem:[%s13 + $0x4] sm:$0xf]
        %v6048 = vld [vmem:[%s13 + $0x8] sm:$0xf]
        %v6049 = vld [vmem:[%s13 + $0xc] sm:$0xf]
        %v6050 = vld [vmem:[%s13 + $0x10] sm:$0xf]
        %v6051 = vld [vmem:[%s13 + $0x14] sm:$0xf]
        %v6052 = vld [vmem:[%s13 + $0x18] sm:$0xf]
        %v6053 = vld [vmem:[%s13 + $0x1c] sm:$0xf]
        %v6054 = vld [vmem:[%s13 + $0x20] sm:$0xf]
        %v6055 = vld [vmem:[%s13 + $0x24] sm:$0xf]
        %v6056 = vld [vmem:[%s13 + $0x28] sm:$0xf]
        %v6057 = vld [vmem:[%s13 + $0x2c] sm:$0xf]
        %v6058 = vld [vmem:[%s13 + $0x30] sm:$0xf]
        %v6059 = vld [vmem:[%s13 + $0x34] sm:$0xf]
        %v6060 = vld [vmem:[%s13 + $0x38] sm:$0xf]
        %v6061 = vld [vmem:[%s13 + $0x3c] sm:$0xf]
        %v6062 = vld [vmem:[%s13 + $0x40] sm:$0xf]
        %v6063 = vld [vmem:[%s13 + $0x44] sm:$0xf]
        %v6064 = vld [vmem:[%s13 + $0x48] sm:$0xf]
        %v6065 = vld [vmem:[%s13 + $0x4c] sm:$0xf]
        %v6066 = vld [vmem:[%s13 + $0x50] sm:$0xf]
        %v6067 = vld [vmem:[%s13 + $0x54] sm:$0xf]
        %v6068 = vld [vmem:[%s13 + $0x58] sm:$0xf]
        %v6069 = vld [vmem:[%s13 + $0x5c] sm:$0xf]
        %v6070 = vld [vmem:[%s13 + $0x60] sm:$0xf]
        %v6071 = vld [vmem:[%s13 + $0x64] sm:$0xf]
        %v6072 = vld [vmem:[%s13 + $0x68] sm:$0xf]
        %v6073 = vld [vmem:[%s13 + $0x6c] sm:$0xf]
        %v6074 = vld [vmem:[%s13 + $0x70] sm:$0xf]
        %v6075 = vld [vmem:[%s13 + $0x74] sm:$0xf]
        %v6076 = vld [vmem:[%s13 + $0x78] sm:$0xf]
        %v6077 = vld [vmem:[%s13 + $0x7c] sm:$0xf]
        %v6078 = vld [vmem:[%s14] sm:$0x7]
        %6079 = vset.pattern.permute.xlu0 3
        %6080 = vperm.xlu0 %6079, %v717
        %v6081 = vpop.permute.xlu0 %6080
        %6083 = vset.pattern.permute.xlu0 3
        %6084 = vperm.xlu0 %6083, %v718
        %v6085 = vpop.permute.xlu0 %6084
        %6087 = vset.pattern.permute.xlu0 3
        %6088 = vperm.xlu0 %6087, %v719
        %v6089 = vpop.permute.xlu0 %6088
        %6091 = vset.pattern.permute.xlu0 3
        %6092 = vperm.xlu0 %6091, %v720
        %v6093 = vpop.permute.xlu0 %6092
        %6095 = vset.pattern.permute.xlu0 3
        %6096 = vperm.xlu0 %6095, %v721
        %v6097 = vpop.permute.xlu0 %6096
        %6099 = vset.pattern.permute.xlu0 3
        %6100 = vperm.xlu0 %6099, %v722
        %v6101 = vpop.permute.xlu0 %6100
        %6103 = vset.pattern.permute.xlu0 3
        %6104 = vperm.xlu0 %6103, %v723
        %v6105 = vpop.permute.xlu0 %6104
        %6107 = vset.pattern.permute.xlu0 3
        %6108 = vperm.xlu0 %6107, %v724
        %v6109 = vpop.permute.xlu0 %6108
        %6111 = vset.pattern.permute.xlu0 3
        %6112 = vperm.xlu0 %6111, %v725
        %v6113 = vpop.permute.xlu0 %6112
        %6115 = vset.pattern.permute.xlu0 3
        %6116 = vperm.xlu0 %6115, %v726
        %v6117 = vpop.permute.xlu0 %6116
        %6119 = vset.pattern.permute.xlu0 3
        %6120 = vperm.xlu0 %6119, %v727
        %v6121 = vpop.permute.xlu0 %6120
        %6123 = vset.pattern.permute.xlu0 3
        %6124 = vperm.xlu0 %6123, %v728
        %v6125 = vpop.permute.xlu0 %6124
        %6127 = vset.pattern.permute.xlu0 3
        %6128 = vperm.xlu0 %6127, %v729
        %v6129 = vpop.permute.xlu0 %6128
        %6131 = vset.pattern.permute.xlu0 3
        %6132 = vperm.xlu0 %6131, %v730
        %v6133 = vpop.permute.xlu0 %6132
        %6135 = vset.pattern.permute.xlu0 3
        %6136 = vperm.xlu0 %6135, %v731
        %v6137 = vpop.permute.xlu0 %6136
        %6139 = vset.pattern.permute.xlu0 3
        %6140 = vperm.xlu0 %6139, %v732
        %v6141 = vpop.permute.xlu0 %6140
        %6143 = vset.pattern.permute.xlu0 3
        %6144 = vperm.xlu0 %6143, %v733
        %v6145 = vpop.permute.xlu0 %6144
        %6147 = vset.pattern.permute.xlu0 3
        %6148 = vperm.xlu0 %6147, %v734
        %v6149 = vpop.permute.xlu0 %6148
        %6151 = vset.pattern.permute.xlu0 3
        %6152 = vperm.xlu0 %6151, %v735
        %v6153 = vpop.permute.xlu0 %6152
        %6155 = vset.pattern.permute.xlu0 3
        %6156 = vperm.xlu0 %6155, %v736
        %v6157 = vpop.permute.xlu0 %6156
        %6159 = vset.pattern.permute.xlu0 3
        %6160 = vperm.xlu0 %6159, %v737
        %v6161 = vpop.permute.xlu0 %6160
        %6163 = vset.pattern.permute.xlu0 3
        %6164 = vperm.xlu0 %6163, %v738
        %v6165 = vpop.permute.xlu0 %6164
        %6167 = vset.pattern.permute.xlu0 3
        %6168 = vperm.xlu0 %6167, %v739
        %v6169 = vpop.permute.xlu0 %6168
        %6171 = vset.pattern.permute.xlu0 3
        %6172 = vperm.xlu0 %6171, %v740
        %v6173 = vpop.permute.xlu0 %6172
        %6175 = vset.pattern.permute.xlu0 3
        %6176 = vperm.xlu0 %6175, %v741
        %v6177 = vpop.permute.xlu0 %6176
        %6179 = vset.pattern.permute.xlu0 3
        %6180 = vperm.xlu0 %6179, %v742
        %v6181 = vpop.permute.xlu0 %6180
        %6183 = vset.pattern.permute.xlu0 3
        %6184 = vperm.xlu0 %6183, %v743
        %v6185 = vpop.permute.xlu0 %6184
        %6187 = vset.pattern.permute.xlu0 3
        %6188 = vperm.xlu0 %6187, %v744
        %v6189 = vpop.permute.xlu0 %6188
        %6191 = vset.pattern.permute.xlu0 3
        %6192 = vperm.xlu0 %6191, %v745
        %v6193 = vpop.permute.xlu0 %6192
        %6195 = vset.pattern.permute.xlu0 3
        %6196 = vperm.xlu0 %6195, %v746
        %v6197 = vpop.permute.xlu0 %6196
        %6199 = vset.pattern.permute.xlu0 3
        %6200 = vperm.xlu0 %6199, %v747
        %v6201 = vpop.permute.xlu0 %6200
        %6203 = vset.pattern.permute.xlu0 3
        %6204 = vperm.xlu0 %6203, %v748
        %v6205 = vpop.permute.xlu0 %6204
        %v6207 = vlaneseq
        %v6208 = vshrl.u32 %v6207, 7
        %v6209 = vsub.s32 0, %v6208
        %v6210 = vrot.slane %v6078, %v6209
        %v6211 = vmul.f32 %v6081, %v6210
        %v6212 = vmul.f32 %v6085, %v6210
        %v6213 = vmul.f32 %v6089, %v6210
        %v6214 = vmul.f32 %v6093, %v6210
        %v6215 = vmul.f32 %v6097, %v6210
        %v6216 = vmul.f32 %v6101, %v6210
        %v6217 = vmul.f32 %v6105, %v6210
        %v6218 = vmul.f32 %v6109, %v6210
        %v6219 = vmul.f32 %v6113, %v6210
        %v6220 = vmul.f32 %v6117, %v6210
        %v6221 = vmul.f32 %v6121, %v6210
        %v6222 = vmul.f32 %v6125, %v6210
        %v6223 = vmul.f32 %v6129, %v6210
        %v6224 = vmul.f32 %v6133, %v6210
        %v6225 = vmul.f32 %v6137, %v6210
        %v6226 = vmul.f32 %v6141, %v6210
        %v6227 = vmul.f32 %v6145, %v6210
        %v6228 = vmul.f32 %v6149, %v6210
        %v6229 = vmul.f32 %v6153, %v6210
        %v6230 = vmul.f32 %v6157, %v6210
        %v6231 = vmul.f32 %v6161, %v6210
        %v6232 = vmul.f32 %v6165, %v6210
        %v6233 = vmul.f32 %v6169, %v6210
        %v6234 = vmul.f32 %v6173, %v6210
        %v6235 = vmul.f32 %v6177, %v6210
        %v6236 = vmul.f32 %v6181, %v6210
        %v6237 = vmul.f32 %v6185, %v6210
        %v6238 = vmul.f32 %v6189, %v6210
        %v6239 = vmul.f32 %v6193, %v6210
        %v6240 = vmul.f32 %v6197, %v6210
        %v6241 = vmul.f32 %v6201, %v6210
        %v6242 = vmul.f32 %v6205, %v6210
        %6243 = vset.pattern.permute.xlu0 4
        %6244 = vperm.xlu0 %6243, %v717
        %v6245 = vpop.permute.xlu0 %6244
        %6247 = vset.pattern.permute.xlu0 4
        %6248 = vperm.xlu0 %6247, %v718
        %v6249 = vpop.permute.xlu0 %6248
        %6251 = vset.pattern.permute.xlu0 4
        %6252 = vperm.xlu0 %6251, %v719
        %v6253 = vpop.permute.xlu0 %6252
        %6255 = vset.pattern.permute.xlu0 4
        %6256 = vperm.xlu0 %6255, %v720
        %v6257 = vpop.permute.xlu0 %6256
        %6259 = vset.pattern.permute.xlu0 4
        %6260 = vperm.xlu0 %6259, %v721
        %v6261 = vpop.permute.xlu0 %6260
        %6263 = vset.pattern.permute.xlu0 4
        %6264 = vperm.xlu0 %6263, %v722
        %v6265 = vpop.permute.xlu0 %6264
        %6267 = vset.pattern.permute.xlu0 4
        %6268 = vperm.xlu0 %6267, %v723
        %v6269 = vpop.permute.xlu0 %6268
        %6271 = vset.pattern.permute.xlu0 4
        %6272 = vperm.xlu0 %6271, %v724
        %v6273 = vpop.permute.xlu0 %6272
        %6275 = vset.pattern.permute.xlu0 4
        %6276 = vperm.xlu0 %6275, %v725
        %v6277 = vpop.permute.xlu0 %6276
        %6279 = vset.pattern.permute.xlu0 4
        %6280 = vperm.xlu0 %6279, %v726
        %v6281 = vpop.permute.xlu0 %6280
        %6283 = vset.pattern.permute.xlu0 4
        %6284 = vperm.xlu0 %6283, %v727
        %v6285 = vpop.permute.xlu0 %6284
        %6287 = vset.pattern.permute.xlu0 4
        %6288 = vperm.xlu0 %6287, %v728
        %v6289 = vpop.permute.xlu0 %6288
        %6291 = vset.pattern.permute.xlu0 4
        %6292 = vperm.xlu0 %6291, %v729
        %v6293 = vpop.permute.xlu0 %6292
        %6295 = vset.pattern.permute.xlu0 4
        %6296 = vperm.xlu0 %6295, %v730
        %v6297 = vpop.permute.xlu0 %6296
        %6299 = vset.pattern.permute.xlu0 4
        %6300 = vperm.xlu0 %6299, %v731
        %v6301 = vpop.permute.xlu0 %6300
        %6303 = vset.pattern.permute.xlu0 4
        %6304 = vperm.xlu0 %6303, %v732
        %v6305 = vpop.permute.xlu0 %6304
        %6307 = vset.pattern.permute.xlu0 4
        %6308 = vperm.xlu0 %6307, %v733
        %v6309 = vpop.permute.xlu0 %6308
        %6311 = vset.pattern.permute.xlu0 4
        %6312 = vperm.xlu0 %6311, %v734
        %v6313 = vpop.permute.xlu0 %6312
        %6315 = vset.pattern.permute.xlu0 4
        %6316 = vperm.xlu0 %6315, %v735
        %v6317 = vpop.permute.xlu0 %6316
        %6319 = vset.pattern.permute.xlu0 4
        %6320 = vperm.xlu0 %6319, %v736
        %v6321 = vpop.permute.xlu0 %6320
        %6323 = vset.pattern.permute.xlu0 4
        %6324 = vperm.xlu0 %6323, %v737
        %v6325 = vpop.permute.xlu0 %6324
        %6327 = vset.pattern.permute.xlu0 4
        %6328 = vperm.xlu0 %6327, %v738
        %v6329 = vpop.permute.xlu0 %6328
        %6331 = vset.pattern.permute.xlu0 4
        %6332 = vperm.xlu0 %6331, %v739
        %v6333 = vpop.permute.xlu0 %6332
        %6335 = vset.pattern.permute.xlu0 4
        %6336 = vperm.xlu0 %6335, %v740
        %v6337 = vpop.permute.xlu0 %6336
        %6339 = vset.pattern.permute.xlu0 4
        %6340 = vperm.xlu0 %6339, %v741
        %v6341 = vpop.permute.xlu0 %6340
        %6343 = vset.pattern.permute.xlu0 4
        %6344 = vperm.xlu0 %6343, %v742
        %v6345 = vpop.permute.xlu0 %6344
        %6347 = vset.pattern.permute.xlu0 4
        %6348 = vperm.xlu0 %6347, %v743
        %v6349 = vpop.permute.xlu0 %6348
        %6351 = vset.pattern.permute.xlu0 4
        %6352 = vperm.xlu0 %6351, %v744
        %v6353 = vpop.permute.xlu0 %6352
        %6355 = vset.pattern.permute.xlu0 4
        %6356 = vperm.xlu0 %6355, %v745
        %v6357 = vpop.permute.xlu0 %6356
        %6359 = vset.pattern.permute.xlu0 4
        %6360 = vperm.xlu0 %6359, %v746
        %v6361 = vpop.permute.xlu0 %6360
        %6363 = vset.pattern.permute.xlu0 4
        %6364 = vperm.xlu0 %6363, %v747
        %v6365 = vpop.permute.xlu0 %6364
        %6367 = vset.pattern.permute.xlu0 4
        %6368 = vperm.xlu0 %6367, %v748
        %v6369 = vpop.permute.xlu0 %6368
        %v6371 = vlaneseq
        %v6372 = vshrl.u32 %v6371, 7
        %v6373 = vsub.s32 1, %v6372
        %v6374 = vrot.slane %v6078, %v6373
        %v6375 = vmul.f32 %v6245, %v6374
        %v6376 = vmul.f32 %v6249, %v6374
        %v6377 = vmul.f32 %v6253, %v6374
        %v6378 = vmul.f32 %v6257, %v6374
        %v6379 = vmul.f32 %v6261, %v6374
        %v6380 = vmul.f32 %v6265, %v6374
        %v6381 = vmul.f32 %v6269, %v6374
        %v6382 = vmul.f32 %v6273, %v6374
        %v6383 = vmul.f32 %v6277, %v6374
        %v6384 = vmul.f32 %v6281, %v6374
        %v6385 = vmul.f32 %v6285, %v6374
        %v6386 = vmul.f32 %v6289, %v6374
        %v6387 = vmul.f32 %v6293, %v6374
        %v6388 = vmul.f32 %v6297, %v6374
        %v6389 = vmul.f32 %v6301, %v6374
        %v6390 = vmul.f32 %v6305, %v6374
        %v6391 = vmul.f32 %v6309, %v6374
        %v6392 = vmul.f32 %v6313, %v6374
        %v6393 = vmul.f32 %v6317, %v6374
        %v6394 = vmul.f32 %v6321, %v6374
        %v6395 = vmul.f32 %v6325, %v6374
        %v6396 = vmul.f32 %v6329, %v6374
        %v6397 = vmul.f32 %v6333, %v6374
        %v6398 = vmul.f32 %v6337, %v6374
        %v6399 = vmul.f32 %v6341, %v6374
        %v6400 = vmul.f32 %v6345, %v6374
        %v6401 = vmul.f32 %v6349, %v6374
        %v6402 = vmul.f32 %v6353, %v6374
        %v6403 = vmul.f32 %v6357, %v6374
        %v6404 = vmul.f32 %v6361, %v6374
        %v6405 = vmul.f32 %v6365, %v6374
        %v6406 = vmul.f32 %v6369, %v6374
        %v6407 = vadd.f32 %v6211, %v6375
        %v6408 = vadd.f32 %v6212, %v6376
        %v6409 = vadd.f32 %v6213, %v6377
        %v6410 = vadd.f32 %v6214, %v6378
        %v6411 = vadd.f32 %v6215, %v6379
        %v6412 = vadd.f32 %v6216, %v6380
        %v6413 = vadd.f32 %v6217, %v6381
        %v6414 = vadd.f32 %v6218, %v6382
        %v6415 = vadd.f32 %v6219, %v6383
        %v6416 = vadd.f32 %v6220, %v6384
        %v6417 = vadd.f32 %v6221, %v6385
        %v6418 = vadd.f32 %v6222, %v6386
        %v6419 = vadd.f32 %v6223, %v6387
        %v6420 = vadd.f32 %v6224, %v6388
        %v6421 = vadd.f32 %v6225, %v6389
        %v6422 = vadd.f32 %v6226, %v6390
        %v6423 = vadd.f32 %v6227, %v6391
        %v6424 = vadd.f32 %v6228, %v6392
        %v6425 = vadd.f32 %v6229, %v6393
        %v6426 = vadd.f32 %v6230, %v6394
        %v6427 = vadd.f32 %v6231, %v6395
        %v6428 = vadd.f32 %v6232, %v6396
        %v6429 = vadd.f32 %v6233, %v6397
        %v6430 = vadd.f32 %v6234, %v6398
        %v6431 = vadd.f32 %v6235, %v6399
        %v6432 = vadd.f32 %v6236, %v6400
        %v6433 = vadd.f32 %v6237, %v6401
        %v6434 = vadd.f32 %v6238, %v6402
        %v6435 = vadd.f32 %v6239, %v6403
        %v6436 = vadd.f32 %v6240, %v6404
        %v6437 = vadd.f32 %v6241, %v6405
        %v6438 = vadd.f32 %v6242, %v6406
        %6439 = vset.pattern.permute.xlu0 5
        %6440 = vperm.xlu0 %6439, %v717
        %v6441 = vpop.permute.xlu0 %6440
        %6443 = vset.pattern.permute.xlu0 5
        %6444 = vperm.xlu0 %6443, %v718
        %v6445 = vpop.permute.xlu0 %6444
        %6447 = vset.pattern.permute.xlu0 5
        %6448 = vperm.xlu0 %6447, %v719
        %v6449 = vpop.permute.xlu0 %6448
        %6451 = vset.pattern.permute.xlu0 5
        %6452 = vperm.xlu0 %6451, %v720
        %v6453 = vpop.permute.xlu0 %6452
        %6455 = vset.pattern.permute.xlu0 5
        %6456 = vperm.xlu0 %6455, %v721
        %v6457 = vpop.permute.xlu0 %6456
        %6459 = vset.pattern.permute.xlu0 5
        %6460 = vperm.xlu0 %6459, %v722
        %v6461 = vpop.permute.xlu0 %6460
        %6463 = vset.pattern.permute.xlu0 5
        %6464 = vperm.xlu0 %6463, %v723
        %v6465 = vpop.permute.xlu0 %6464
        %6467 = vset.pattern.permute.xlu0 5
        %6468 = vperm.xlu0 %6467, %v724
        %v6469 = vpop.permute.xlu0 %6468
        %6471 = vset.pattern.permute.xlu0 5
        %6472 = vperm.xlu0 %6471, %v725
        %v6473 = vpop.permute.xlu0 %6472
        %6475 = vset.pattern.permute.xlu0 5
        %6476 = vperm.xlu0 %6475, %v726
        %v6477 = vpop.permute.xlu0 %6476
        %6479 = vset.pattern.permute.xlu0 5
        %6480 = vperm.xlu0 %6479, %v727
        %v6481 = vpop.permute.xlu0 %6480
        %6483 = vset.pattern.permute.xlu0 5
        %6484 = vperm.xlu0 %6483, %v728
        %v6485 = vpop.permute.xlu0 %6484
        %6487 = vset.pattern.permute.xlu0 5
        %6488 = vperm.xlu0 %6487, %v729
        %v6489 = vpop.permute.xlu0 %6488
        %6491 = vset.pattern.permute.xlu0 5
        %6492 = vperm.xlu0 %6491, %v730
        %v6493 = vpop.permute.xlu0 %6492
        %6495 = vset.pattern.permute.xlu0 5
        %6496 = vperm.xlu0 %6495, %v731
        %v6497 = vpop.permute.xlu0 %6496
        %6499 = vset.pattern.permute.xlu0 5
        %6500 = vperm.xlu0 %6499, %v732
        %v6501 = vpop.permute.xlu0 %6500
        %6503 = vset.pattern.permute.xlu0 5
        %6504 = vperm.xlu0 %6503, %v733
        %v6505 = vpop.permute.xlu0 %6504
        %6507 = vset.pattern.permute.xlu0 5
        %6508 = vperm.xlu0 %6507, %v734
        %v6509 = vpop.permute.xlu0 %6508
        %6511 = vset.pattern.permute.xlu0 5
        %6512 = vperm.xlu0 %6511, %v735
        %v6513 = vpop.permute.xlu0 %6512
        %6515 = vset.pattern.permute.xlu0 5
        %6516 = vperm.xlu0 %6515, %v736
        %v6517 = vpop.permute.xlu0 %6516
        %6519 = vset.pattern.permute.xlu0 5
        %6520 = vperm.xlu0 %6519, %v737
        %v6521 = vpop.permute.xlu0 %6520
        %6523 = vset.pattern.permute.xlu0 5
        %6524 = vperm.xlu0 %6523, %v738
        %v6525 = vpop.permute.xlu0 %6524
        %6527 = vset.pattern.permute.xlu0 5
        %6528 = vperm.xlu0 %6527, %v739
        %v6529 = vpop.permute.xlu0 %6528
        %6531 = vset.pattern.permute.xlu0 5
        %6532 = vperm.xlu0 %6531, %v740
        %v6533 = vpop.permute.xlu0 %6532
        %6535 = vset.pattern.permute.xlu0 5
        %6536 = vperm.xlu0 %6535, %v741
        %v6537 = vpop.permute.xlu0 %6536
        %6539 = vset.pattern.permute.xlu0 5
        %6540 = vperm.xlu0 %6539, %v742
        %v6541 = vpop.permute.xlu0 %6540
        %6543 = vset.pattern.permute.xlu0 5
        %6544 = vperm.xlu0 %6543, %v743
        %v6545 = vpop.permute.xlu0 %6544
        %6547 = vset.pattern.permute.xlu0 5
        %6548 = vperm.xlu0 %6547, %v744
        %v6549 = vpop.permute.xlu0 %6548
        %6551 = vset.pattern.permute.xlu0 5
        %6552 = vperm.xlu0 %6551, %v745
        %v6553 = vpop.permute.xlu0 %6552
        %6555 = vset.pattern.permute.xlu0 5
        %6556 = vperm.xlu0 %6555, %v746
        %v6557 = vpop.permute.xlu0 %6556
        %6559 = vset.pattern.permute.xlu0 5
        %6560 = vperm.xlu0 %6559, %v747
        %v6561 = vpop.permute.xlu0 %6560
        %6563 = vset.pattern.permute.xlu0 5
        %6564 = vperm.xlu0 %6563, %v748
        %v6565 = vpop.permute.xlu0 %6564
        %v6567 = vlaneseq
        %v6568 = vshrl.u32 %v6567, 7
        %v6569 = vsub.s32 2, %v6568
        %v6570 = vrot.slane %v6078, %v6569
        %v6571 = vmul.f32 %v6441, %v6570
        %v6572 = vmul.f32 %v6445, %v6570
        %v6573 = vmul.f32 %v6449, %v6570
        %v6574 = vmul.f32 %v6453, %v6570
        %v6575 = vmul.f32 %v6457, %v6570
        %v6576 = vmul.f32 %v6461, %v6570
        %v6577 = vmul.f32 %v6465, %v6570
        %v6578 = vmul.f32 %v6469, %v6570
        %v6579 = vmul.f32 %v6473, %v6570
        %v6580 = vmul.f32 %v6477, %v6570
        %v6581 = vmul.f32 %v6481, %v6570
        %v6582 = vmul.f32 %v6485, %v6570
        %v6583 = vmul.f32 %v6489, %v6570
        %v6584 = vmul.f32 %v6493, %v6570
        %v6585 = vmul.f32 %v6497, %v6570
        %v6586 = vmul.f32 %v6501, %v6570
        %v6587 = vmul.f32 %v6505, %v6570
        %v6588 = vmul.f32 %v6509, %v6570
        %v6589 = vmul.f32 %v6513, %v6570
        %v6590 = vmul.f32 %v6517, %v6570
        %v6591 = vmul.f32 %v6521, %v6570
        %v6592 = vmul.f32 %v6525, %v6570
        %v6593 = vmul.f32 %v6529, %v6570
        %v6594 = vmul.f32 %v6533, %v6570
        %v6595 = vmul.f32 %v6537, %v6570
        %v6596 = vmul.f32 %v6541, %v6570
        %v6597 = vmul.f32 %v6545, %v6570
        %v6598 = vmul.f32 %v6549, %v6570
        %v6599 = vmul.f32 %v6553, %v6570
        %v6600 = vmul.f32 %v6557, %v6570
        %v6601 = vmul.f32 %v6561, %v6570
        %v6602 = vmul.f32 %v6565, %v6570
        %v6603 = vadd.f32 %v6407, %v6571
        %v6604 = vadd.f32 %v6408, %v6572
        %v6605 = vadd.f32 %v6409, %v6573
        %v6606 = vadd.f32 %v6410, %v6574
        %v6607 = vadd.f32 %v6411, %v6575
        %v6608 = vadd.f32 %v6412, %v6576
        %v6609 = vadd.f32 %v6413, %v6577
        %v6610 = vadd.f32 %v6414, %v6578
        %v6611 = vadd.f32 %v6415, %v6579
        %v6612 = vadd.f32 %v6416, %v6580
        %v6613 = vadd.f32 %v6417, %v6581
        %v6614 = vadd.f32 %v6418, %v6582
        %v6615 = vadd.f32 %v6419, %v6583
        %v6616 = vadd.f32 %v6420, %v6584
        %v6617 = vadd.f32 %v6421, %v6585
        %v6618 = vadd.f32 %v6422, %v6586
        %v6619 = vadd.f32 %v6423, %v6587
        %v6620 = vadd.f32 %v6424, %v6588
        %v6621 = vadd.f32 %v6425, %v6589
        %v6622 = vadd.f32 %v6426, %v6590
        %v6623 = vadd.f32 %v6427, %v6591
        %v6624 = vadd.f32 %v6428, %v6592
        %v6625 = vadd.f32 %v6429, %v6593
        %v6626 = vadd.f32 %v6430, %v6594
        %v6627 = vadd.f32 %v6431, %v6595
        %v6628 = vadd.f32 %v6432, %v6596
        %v6629 = vadd.f32 %v6433, %v6597
        %v6630 = vadd.f32 %v6434, %v6598
        %v6631 = vadd.f32 %v6435, %v6599
        %v6632 = vadd.f32 %v6436, %v6600
        %v6633 = vadd.f32 %v6437, %v6601
        %v6634 = vadd.f32 %v6438, %v6602
        %v6667 = vunpack.c.l.b16 %v6046
        %v6668 = vunpack.c.l.b16 %v6047
        %v6669 = vunpack.c.l.b16 %v6048
        %v6670 = vunpack.c.l.b16 %v6049
        %v6671 = vunpack.c.l.b16 %v6050
        %v6672 = vunpack.c.l.b16 %v6051
        %v6673 = vunpack.c.l.b16 %v6052
        %v6674 = vunpack.c.l.b16 %v6053
        %v6675 = vunpack.c.l.b16 %v6054
        %v6676 = vunpack.c.l.b16 %v6055
        %v6677 = vunpack.c.l.b16 %v6056
        %v6678 = vunpack.c.l.b16 %v6057
        %v6679 = vunpack.c.l.b16 %v6058
        %v6680 = vunpack.c.l.b16 %v6059
        %v6681 = vunpack.c.l.b16 %v6060
        %v6682 = vunpack.c.l.b16 %v6061
        %v6683 = vunpack.c.l.b16 %v6062
        %v6684 = vunpack.c.l.b16 %v6063
        %v6685 = vunpack.c.l.b16 %v6064
        %v6686 = vunpack.c.l.b16 %v6065
        %v6687 = vunpack.c.l.b16 %v6066
        %v6688 = vunpack.c.l.b16 %v6067
        %v6689 = vunpack.c.l.b16 %v6068
        %v6690 = vunpack.c.l.b16 %v6069
        %v6691 = vunpack.c.l.b16 %v6070
        %v6692 = vunpack.c.l.b16 %v6071
        %v6693 = vunpack.c.l.b16 %v6072
        %v6694 = vunpack.c.l.b16 %v6073
        %v6695 = vunpack.c.l.b16 %v6074
        %v6696 = vunpack.c.l.b16 %v6075
        %v6697 = vunpack.c.l.b16 %v6076
        %v6698 = vunpack.c.l.b16 %v6077
        %v6699 = vpack.c.b16 %v6668, %v6667
        %v6700 = vpack.c.b16 %v6670, %v6669
        %v6701 = vpack.c.b16 %v6672, %v6671
        %v6702 = vpack.c.b16 %v6674, %v6673
        %v6703 = vpack.c.b16 %v6676, %v6675
        %v6704 = vpack.c.b16 %v6678, %v6677
        %v6705 = vpack.c.b16 %v6680, %v6679
        %v6706 = vpack.c.b16 %v6682, %v6681
        %v6707 = vpack.c.b16 %v6684, %v6683
        %v6708 = vpack.c.b16 %v6686, %v6685
        %v6709 = vpack.c.b16 %v6688, %v6687
        %v6710 = vpack.c.b16 %v6690, %v6689
        %v6711 = vpack.c.b16 %v6692, %v6691
        %v6712 = vpack.c.b16 %v6694, %v6693
        %v6713 = vpack.c.b16 %v6696, %v6695
        %v6714 = vpack.c.b16 %v6698, %v6697
        %6731 = vmatprep.subr.bf16.mxu0 0
        %6732 = vmatpush1.bf16.msra.mxu0 %v6699
        %6733 = vmatprep.subr.bf16.mxu0 0
        %6734 = vmatpush1.bf16.msra.mxu0 %v6700
        %6735 = vmatprep.subr.bf16.mxu0 0
        %6736 = vmatpush1.bf16.msra.mxu0 %v6701
        %6737 = vmatprep.subr.bf16.mxu0 0
        %6738 = vmatpush1.bf16.msra.mxu0 %v6702
        %6739 = vmatprep.subr.bf16.mxu0 0
        %6740 = vmatpush1.bf16.msra.mxu0 %v6703
        %6741 = vmatprep.subr.bf16.mxu0 0
        %6742 = vmatpush1.bf16.msra.mxu0 %v6704
        %6743 = vmatprep.subr.bf16.mxu0 0
        %6744 = vmatpush1.bf16.msra.mxu0 %v6705
        %6745 = vmatprep.subr.bf16.mxu0 0
        %6746 = vmatpush1.bf16.msra.mxu0 %v6706
        %6747 = vmatprep.subr.bf16.mxu0 0
        %6748 = vmatpush1.bf16.msra.mxu0 %v6707
        %6749 = vmatprep.subr.bf16.mxu0 0
        %6750 = vmatpush1.bf16.msra.mxu0 %v6708
        %6751 = vmatprep.subr.bf16.mxu0 0
        %6752 = vmatpush1.bf16.msra.mxu0 %v6709
        %6753 = vmatprep.subr.bf16.mxu0 0
        %6754 = vmatpush1.bf16.msra.mxu0 %v6710
        %6755 = vmatprep.subr.bf16.mxu0 0
        %6756 = vmatpush1.bf16.msra.mxu0 %v6711
        %6757 = vmatprep.subr.bf16.mxu0 0
        %6758 = vmatpush1.bf16.msra.mxu0 %v6712
        %6759 = vmatprep.subr.bf16.mxu0 0
        %6760 = vmatpush1.bf16.msra.mxu0 %v6713
        %6761 = vmatprep.subr.bf16.mxu0 0
        %6762 = vmatpush1.bf16.msra.mxu0 %v6714
        %6763 = vmatprep.mubr.bf16.mxu0 %v6015
        %6764 = vmatmul.mubr.bf16.gmra.mrb[0].mxu0 %v6014
        %v6765 = vpop.f32.mrb[0].mxu0
        %v6766 = vadd.f32 %v6603, %v6765
        %v6767 = vpop.f32.mrb[0].mxu0
        %v6768 = vpop.f32.mrb[0].mxu0
        %v6769 = vadd.f32 %v6604, %v6768
        %v6770 = vpop.f32.mrb[0].mxu0
        %6771 = vmatprep.mubr.bf16.mxu0 %v6017
        %6772 = vmatmul.mubr.bf16.gmra.mrb[0].mxu0 %v6016
        %v6773 = vpop.f32.mrb[0].mxu0
        %v6774 = vadd.f32 %v6605, %v6773
        %v6775 = vpop.f32.mrb[0].mxu0
        %v6776 = vpop.f32.mrb[0].mxu0
        %v6777 = vadd.f32 %v6606, %v6776
        %v6778 = vpop.f32.mrb[0].mxu0
        %6779 = vmatprep.mubr.bf16.mxu0 %v6019
        %6780 = vmatmul.mubr.bf16.gmra.mrb[0].mxu0 %v6018
        %v6781 = vpop.f32.mrb[0].mxu0
        %v6782 = vadd.f32 %v6607, %v6781
        %v6783 = vpop.f32.mrb[0].mxu0
        %v6784 = vpop.f32.mrb[0].mxu0
        %v6785 = vadd.f32 %v6608, %v6784
        %v6786 = vpop.f32.mrb[0].mxu0
        %6787 = vmatprep.mubr.bf16.mxu0 %v6021
        %6788 = vmatmul.mubr.bf16.gmra.mrb[0].mxu0 %v6020
        %v6789 = vpop.f32.mrb[0].mxu0
        %v6790 = vadd.f32 %v6609, %v6789
        %v6791 = vpop.f32.mrb[0].mxu0
        %v6792 = vpop.f32.mrb[0].mxu0
        %v6793 = vadd.f32 %v6610, %v6792
        %v6794 = vpop.f32.mrb[0].mxu0
        %6795 = vmatprep.mubr.bf16.mxu0 %v6023
        %6796 = vmatmul.mubr.bf16.gmra.mrb[0].mxu0 %v6022
        %v6797 = vpop.f32.mrb[0].mxu0
        %v6798 = vadd.f32 %v6611, %v6797
        %v6799 = vpop.f32.mrb[0].mxu0
        %v6800 = vpop.f32.mrb[0].mxu0
        %v6801 = vadd.f32 %v6612, %v6800
        %v6802 = vpop.f32.mrb[0].mxu0
        %6803 = vmatprep.mubr.bf16.mxu0 %v6025
        %6804 = vmatmul.mubr.bf16.gmra.mrb[0].mxu0 %v6024
        %v6805 = vpop.f32.mrb[0].mxu0
        %v6806 = vadd.f32 %v6613, %v6805
        %v6807 = vpop.f32.mrb[0].mxu0
        %v6808 = vpop.f32.mrb[0].mxu0
        %v6809 = vadd.f32 %v6614, %v6808
        %v6810 = vpop.f32.mrb[0].mxu0
        %6811 = vmatprep.mubr.bf16.mxu0 %v6027
        %6812 = vmatmul.mubr.bf16.gmra.mrb[0].mxu0 %v6026
        %v6813 = vpop.f32.mrb[0].mxu0
        %v6814 = vadd.f32 %v6615, %v6813
        %v6815 = vpop.f32.mrb[0].mxu0
        %v6816 = vpop.f32.mrb[0].mxu0
        %v6817 = vadd.f32 %v6616, %v6816
        %v6818 = vpop.f32.mrb[0].mxu0
        %6819 = vmatprep.mubr.bf16.mxu0 %v6029
        %6820 = vmatmul.mubr.bf16.gmra.mrb[0].mxu0 %v6028
        %v6821 = vpop.f32.mrb[0].mxu0
        %v6822 = vadd.f32 %v6617, %v6821
        %v6823 = vpop.f32.mrb[0].mxu0
        %v6824 = vpop.f32.mrb[0].mxu0
        %v6825 = vadd.f32 %v6618, %v6824
        %v6826 = vpop.f32.mrb[0].mxu0
        %6827 = vmatprep.mubr.bf16.mxu0 %v6031
        %6828 = vmatmul.mubr.bf16.gmra.mrb[0].mxu0 %v6030
        %v6829 = vpop.f32.mrb[0].mxu0
        %v6830 = vadd.f32 %v6619, %v6829
        %v6831 = vpop.f32.mrb[0].mxu0
        %v6832 = vpop.f32.mrb[0].mxu0
        %v6833 = vadd.f32 %v6620, %v6832
        %v6834 = vpop.f32.mrb[0].mxu0
        %6835 = vmatprep.mubr.bf16.mxu0 %v6033
        %6836 = vmatmul.mubr.bf16.gmra.mrb[0].mxu0 %v6032
        %v6837 = vpop.f32.mrb[0].mxu0
        %v6838 = vadd.f32 %v6621, %v6837
        %v6839 = vpop.f32.mrb[0].mxu0
        %v6840 = vpop.f32.mrb[0].mxu0
        %v6841 = vadd.f32 %v6622, %v6840
        %v6842 = vpop.f32.mrb[0].mxu0
        %6843 = vmatprep.mubr.bf16.mxu0 %v6035
        %6844 = vmatmul.mubr.bf16.gmra.mrb[0].mxu0 %v6034
        %v6845 = vpop.f32.mrb[0].mxu0
        %v6846 = vadd.f32 %v6623, %v6845
        %v6847 = vpop.f32.mrb[0].mxu0
        %v6848 = vpop.f32.mrb[0].mxu0
        %v6849 = vadd.f32 %v6624, %v6848
        %v6850 = vpop.f32.mrb[0].mxu0
        %6851 = vmatprep.mubr.bf16.mxu0 %v6037
        %6852 = vmatmul.mubr.bf16.gmra.mrb[0].mxu0 %v6036
        %v6853 = vpop.f32.mrb[0].mxu0
        %v6854 = vadd.f32 %v6625, %v6853
        %v6855 = vpop.f32.mrb[0].mxu0
        %v6856 = vpop.f32.mrb[0].mxu0
        %v6857 = vadd.f32 %v6626, %v6856
        %v6858 = vpop.f32.mrb[0].mxu0
        %6859 = vmatprep.mubr.bf16.mxu0 %v6039
        %6860 = vmatmul.mubr.bf16.gmra.mrb[0].mxu0 %v6038
        %v6861 = vpop.f32.mrb[0].mxu0
        %v6862 = vadd.f32 %v6627, %v6861
        %v6863 = vpop.f32.mrb[0].mxu0
        %v6864 = vpop.f32.mrb[0].mxu0
        %v6865 = vadd.f32 %v6628, %v6864
        %v6866 = vpop.f32.mrb[0].mxu0
        %6867 = vmatprep.mubr.bf16.mxu0 %v6041
        %6868 = vmatmul.mubr.bf16.gmra.mrb[0].mxu0 %v6040
        %v6869 = vpop.f32.mrb[0].mxu0
        %v6870 = vadd.f32 %v6629, %v6869
        %v6871 = vpop.f32.mrb[0].mxu0
        %v6872 = vpop.f32.mrb[0].mxu0
        %v6873 = vadd.f32 %v6630, %v6872
        %v6874 = vpop.f32.mrb[0].mxu0
        %6875 = vmatprep.mubr.bf16.mxu0 %v6043
        %6876 = vmatmul.mubr.bf16.gmra.mrb[0].mxu0 %v6042
        %v6877 = vpop.f32.mrb[0].mxu0
        %v6878 = vadd.f32 %v6631, %v6877
        %v6879 = vpop.f32.mrb[0].mxu0
        %v6880 = vpop.f32.mrb[0].mxu0
        %v6881 = vadd.f32 %v6632, %v6880
        %v6882 = vpop.f32.mrb[0].mxu0
        %6883 = vmatprep.mubr.bf16.mxu0 %v6045
        %6884 = vmatmul.mubr.bf16.gmra.mrb[0].mxu0 %v6044
        %v6885 = vpop.f32.mrb[0].mxu0
        %v6886 = vadd.f32 %v6633, %v6885
        %v6887 = vpop.f32.mrb[0].mxu0
        %v6888 = vpop.f32.mrb[0].mxu0
        %v6889 = vadd.f32 %v6634, %v6888
        %v6890 = vpop.f32.mrb[0].mxu0
        %6891 = vdwg.mxu0
        %v6892 = vld [vmem:[%s15] sm:$0x1]
        %v6894 = vlaneseq
        %v6895 = vshrl.u32 %v6894, 7
        %v6896 = vsub.s32 0, %v6895
        %v6897 = vrot.slane %v6892, %v6896
        %v6899 = vadd.f32 %v6766, %v6897
        %v6900 = vadd.f32 %v6769, %v6897
        %v6901 = vadd.f32 %v6774, %v6897
        %v6902 = vadd.f32 %v6777, %v6897
        %v6903 = vadd.f32 %v6782, %v6897
        %v6904 = vadd.f32 %v6785, %v6897
        %v6905 = vadd.f32 %v6790, %v6897
        %v6906 = vadd.f32 %v6793, %v6897
        %v6907 = vadd.f32 %v6798, %v6897
        %v6908 = vadd.f32 %v6801, %v6897
        %v6909 = vadd.f32 %v6806, %v6897
        %v6910 = vadd.f32 %v6809, %v6897
        %v6911 = vadd.f32 %v6814, %v6897
        %v6912 = vadd.f32 %v6817, %v6897
        %v6913 = vadd.f32 %v6822, %v6897
        %v6914 = vadd.f32 %v6825, %v6897
        %v6915 = vadd.f32 %v6830, %v6897
        %v6916 = vadd.f32 %v6833, %v6897
        %v6917 = vadd.f32 %v6838, %v6897
        %v6918 = vadd.f32 %v6841, %v6897
        %v6919 = vadd.f32 %v6846, %v6897
        %v6920 = vadd.f32 %v6849, %v6897
        %v6921 = vadd.f32 %v6854, %v6897
        %v6922 = vadd.f32 %v6857, %v6897
        %v6923 = vadd.f32 %v6862, %v6897
        %v6924 = vadd.f32 %v6865, %v6897
        %v6925 = vadd.f32 %v6870, %v6897
        %v6926 = vadd.f32 %v6873, %v6897
        %v6927 = vadd.f32 %v6878, %v6897
        %v6928 = vadd.f32 %v6881, %v6897
        %v6929 = vadd.f32 %v6886, %v6897
        %v6930 = vadd.f32 %v6889, %v6897
        %v6931 = vmax.f32 %v6899, 0.0
        %v6932 = vmax.f32 %v6900, 0.0
        %v6933 = vmax.f32 %v6901, 0.0
        %v6934 = vmax.f32 %v6902, 0.0
        %v6935 = vmax.f32 %v6903, 0.0
        %v6936 = vmax.f32 %v6904, 0.0
        %v6937 = vmax.f32 %v6905, 0.0
        %v6938 = vmax.f32 %v6906, 0.0
        %v6939 = vmax.f32 %v6907, 0.0
        %v6940 = vmax.f32 %v6908, 0.0
        %v6941 = vmax.f32 %v6909, 0.0
        %v6942 = vmax.f32 %v6910, 0.0
        %v6943 = vmax.f32 %v6911, 0.0
        %v6944 = vmax.f32 %v6912, 0.0
        %v6945 = vmax.f32 %v6913, 0.0
        %v6946 = vmax.f32 %v6914, 0.0
        %v6947 = vmax.f32 %v6915, 0.0
        %v6948 = vmax.f32 %v6916, 0.0
        %v6949 = vmax.f32 %v6917, 0.0
        %v6950 = vmax.f32 %v6918, 0.0
        %v6951 = vmax.f32 %v6919, 0.0
        %v6952 = vmax.f32 %v6920, 0.0
        %v6953 = vmax.f32 %v6921, 0.0
        %v6954 = vmax.f32 %v6922, 0.0
        %v6955 = vmax.f32 %v6923, 0.0
        %v6956 = vmax.f32 %v6924, 0.0
        %v6957 = vmax.f32 %v6925, 0.0
        %v6958 = vmax.f32 %v6926, 0.0
        %v6959 = vmax.f32 %v6927, 0.0
        %v6960 = vmax.f32 %v6928, 0.0
        %v6961 = vmax.f32 %v6929, 0.0
        %v6962 = vmax.f32 %v6930, 0.0
        %v6963 = vpack.c.bf16 %v6932, %v6931
        %v6964 = vpack.c.bf16 %v6934, %v6933
        %v6965 = vpack.c.bf16 %v6936, %v6935
        %v6966 = vpack.c.bf16 %v6938, %v6937
        %v6967 = vpack.c.bf16 %v6940, %v6939
        %v6968 = vpack.c.bf16 %v6942, %v6941
        %v6969 = vpack.c.bf16 %v6944, %v6943
        %v6970 = vpack.c.bf16 %v6946, %v6945
        %v6971 = vpack.c.bf16 %v6948, %v6947
        %v6972 = vpack.c.bf16 %v6950, %v6949
        %v6973 = vpack.c.bf16 %v6952, %v6951
        %v6974 = vpack.c.bf16 %v6954, %v6953
        %v6975 = vpack.c.bf16 %v6956, %v6955
        %v6976 = vpack.c.bf16 %v6958, %v6957
        %v6977 = vpack.c.bf16 %v6960, %v6959
        %v6978 = vpack.c.bf16 %v6962, %v6961
        %v6979 = vld [vmem:[%s16] sm:$0xf]
        %v6980 = vld [vmem:[%s16 + $0x4] sm:$0xf]
        %v6981 = vld [vmem:[%s16 + $0x8] sm:$0xf]
        %v6982 = vld [vmem:[%s16 + $0xc] sm:$0xf]
        %v6983 = vld [vmem:[%s16 + $0x10] sm:$0xf]
        %v6984 = vld [vmem:[%s16 + $0x14] sm:$0xf]
        %v6985 = vld [vmem:[%s16 + $0x18] sm:$0xf]
        %v6986 = vld [vmem:[%s16 + $0x1c] sm:$0xf]
        %v6987 = vld [vmem:[%s16 + $0x20] sm:$0xf]
        %v6988 = vld [vmem:[%s16 + $0x24] sm:$0xf]
        %v6989 = vld [vmem:[%s16 + $0x28] sm:$0xf]
        %v6990 = vld [vmem:[%s16 + $0x2c] sm:$0xf]
        %v6991 = vld [vmem:[%s16 + $0x30] sm:$0xf]
        %v6992 = vld [vmem:[%s16 + $0x34] sm:$0xf]
        %v6993 = vld [vmem:[%s16 + $0x38] sm:$0xf]
        %v6994 = vld [vmem:[%s16 + $0x3c] sm:$0xf]
        %v6995 = vld [vmem:[%s17] sm:$0x1]
        %v6997 = vlaneseq
        %v6998 = vshrl.u32 %v6997, 7
        %v6999 = vsub.s32 0, %v6998
        %v7000 = vrot.slane %v6995, %v6999
        %v7018 = vunpack.c.l.b16 %v6979
        %v7019 = vunpack.c.l.b16 %v6980
        %v7020 = vunpack.c.l.b16 %v6981
        %v7021 = vunpack.c.l.b16 %v6982
        %v7022 = vunpack.c.l.b16 %v6983
        %v7023 = vunpack.c.l.b16 %v6984
        %v7024 = vunpack.c.l.b16 %v6985
        %v7025 = vunpack.c.l.b16 %v6986
        %v7026 = vunpack.c.l.b16 %v6987
        %v7027 = vunpack.c.l.b16 %v6988
        %v7028 = vunpack.c.l.b16 %v6989
        %v7029 = vunpack.c.l.b16 %v6990
        %v7030 = vunpack.c.l.b16 %v6991
        %v7031 = vunpack.c.l.b16 %v6992
        %v7032 = vunpack.c.l.b16 %v6993
        %v7033 = vunpack.c.l.b16 %v6994
        %v7034 = vpack.c.b16 %v7019, %v7018
        %v7035 = vpack.c.b16 %v7021, %v7020
        %v7036 = vpack.c.b16 %v7023, %v7022
        %v7037 = vpack.c.b16 %v7025, %v7024
        %v7038 = vpack.c.b16 %v7027, %v7026
        %v7039 = vpack.c.b16 %v7029, %v7028
        %v7040 = vpack.c.b16 %v7031, %v7030
        %v7041 = vpack.c.b16 %v7033, %v7032
        %7050 = vmatprep.subr.bf16.mxu0 0
        %7051 = vmatpush1.bf16.msra.mxu0 %v7034
        %7052 = vmatprep.subr.bf16.mxu0 0
        %7053 = vmatpush1.bf16.msra.mxu0 %v7035
        %7054 = vmatprep.subr.bf16.mxu0 0
        %7055 = vmatpush1.bf16.msra.mxu0 %v7036
        %7056 = vmatprep.subr.bf16.mxu0 0
        %7057 = vmatpush1.bf16.msra.mxu0 %v7037
        %7058 = vmatprep.subr.bf16.mxu0 0
        %7059 = vmatpush1.bf16.msra.mxu0 %v7038
        %7060 = vmatprep.subr.bf16.mxu0 0
        %7061 = vmatpush1.bf16.msra.mxu0 %v7039
        %7062 = vmatprep.subr.bf16.mxu0 0
        %7063 = vmatpush1.bf16.msra.mxu0 %v7040
        %7064 = vmatprep.subr.bf16.mxu0 0
        %7065 = vmatpush1.bf16.msra.mxu0 %v7041
        %7066 = vmatprep.subr.bf16.mxu0 0
        %7067 = vmatpush1.bf16.msra.mxu0 0
        %7068 = vmatprep.subr.bf16.mxu0 0
        %7069 = vmatpush1.bf16.msra.mxu0 0
        %7070 = vmatprep.subr.bf16.mxu0 0
        %7071 = vmatpush1.bf16.msra.mxu0 0
        %7072 = vmatprep.subr.bf16.mxu0 0
        %7073 = vmatpush1.bf16.msra.mxu0 0
        %7074 = vmatprep.subr.bf16.mxu0 0
        %7075 = vmatpush1.bf16.msra.mxu0 0
        %7076 = vmatprep.subr.bf16.mxu0 0
        %7077 = vmatpush1.bf16.msra.mxu0 0
        %7078 = vmatprep.subr.bf16.mxu0 0
        %7079 = vmatpush1.bf16.msra.mxu0 0
        %7080 = vmatprep.subr.bf16.mxu0 0
        %7081 = vmatpush1.bf16.msra.mxu0 0
        %7082 = vmatprep.mubr.bf16.mxu0 0
        %7083 = vmatmul.mubr.bf16.gmra.mrb[0].mxu0 %v6963
        %v7084 = vpop.f32.mrb[0].mxu0
        %v7085 = vadd.f32 %v7000, %v7084
        %v7086 = vpop.f32.mrb[0].mxu0
        %v7087 = vpop.f32.mrb[0].mxu0
        %v7088 = vadd.f32 %v7000, %v7087
        %v7089 = vpop.f32.mrb[0].mxu0
        %7090 = vmatprep.mubr.bf16.mxu0 0
        %7091 = vmatmul.mubr.bf16.gmra.mrb[0].mxu0 %v6964
        %v7092 = vpop.f32.mrb[0].mxu0
        %v7093 = vadd.f32 %v7000, %v7092
        %v7094 = vpop.f32.mrb[0].mxu0
        %v7095 = vpop.f32.mrb[0].mxu0
        %v7096 = vadd.f32 %v7000, %v7095
        %v7097 = vpop.f32.mrb[0].mxu0
        %7098 = vmatprep.mubr.bf16.mxu0 0
        %7099 = vmatmul.mubr.bf16.gmra.mrb[0].mxu0 %v6965
        %v7100 = vpop.f32.mrb[0].mxu0
        %v7101 = vadd.f32 %v7000, %v7100
        %v7102 = vpop.f32.mrb[0].mxu0
        %v7103 = vpop.f32.mrb[0].mxu0
        %v7104 = vadd.f32 %v7000, %v7103
        %v7105 = vpop.f32.mrb[0].mxu0
        %7106 = vmatprep.mubr.bf16.mxu0 0
        %7107 = vmatmul.mubr.bf16.gmra.mrb[0].mxu0 %v6966
        %v7108 = vpop.f32.mrb[0].mxu0
        %v7109 = vadd.f32 %v7000, %v7108
        %v7110 = vpop.f32.mrb[0].mxu0
        %v7111 = vpop.f32.mrb[0].mxu0
        %v7112 = vadd.f32 %v7000, %v7111
        %v7113 = vpop.f32.mrb[0].mxu0
        %7114 = vmatprep.mubr.bf16.mxu0 0
        %7115 = vmatmul.mubr.bf16.gmra.mrb[0].mxu0 %v6967
        %v7116 = vpop.f32.mrb[0].mxu0
        %v7117 = vadd.f32 %v7000, %v7116
        %v7118 = vpop.f32.mrb[0].mxu0
        %v7119 = vpop.f32.mrb[0].mxu0
        %v7120 = vadd.f32 %v7000, %v7119
        %v7121 = vpop.f32.mrb[0].mxu0
        %7122 = vmatprep.mubr.bf16.mxu0 0
        %7123 = vmatmul.mubr.bf16.gmra.mrb[0].mxu0 %v6968
        %v7124 = vpop.f32.mrb[0].mxu0
        %v7125 = vadd.f32 %v7000, %v7124
        %v7126 = vpop.f32.mrb[0].mxu0
        %v7127 = vpop.f32.mrb[0].mxu0
        %v7128 = vadd.f32 %v7000, %v7127
        %v7129 = vpop.f32.mrb[0].mxu0
        %7130 = vmatprep.mubr.bf16.mxu0 0
        %7131 = vmatmul.mubr.bf16.gmra.mrb[0].mxu0 %v6969
        %v7132 = vpop.f32.mrb[0].mxu0
        %v7133 = vadd.f32 %v7000, %v7132
        %v7134 = vpop.f32.mrb[0].mxu0
        %v7135 = vpop.f32.mrb[0].mxu0
        %v7136 = vadd.f32 %v7000, %v7135
        %v7137 = vpop.f32.mrb[0].mxu0
        %7138 = vmatprep.mubr.bf16.mxu0 0
        %7139 = vmatmul.mubr.bf16.gmra.mrb[0].mxu0 %v6970
        %v7140 = vpop.f32.mrb[0].mxu0
        %v7141 = vadd.f32 %v7000, %v7140
        %v7142 = vpop.f32.mrb[0].mxu0
        %v7143 = vpop.f32.mrb[0].mxu0
        %v7144 = vadd.f32 %v7000, %v7143
        %v7145 = vpop.f32.mrb[0].mxu0
        %7146 = vmatprep.mubr.bf16.mxu0 0
        %7147 = vmatmul.mubr.bf16.gmra.mrb[0].mxu0 %v6971
        %v7148 = vpop.f32.mrb[0].mxu0
        %v7149 = vadd.f32 %v7000, %v7148
        %v7150 = vpop.f32.mrb[0].mxu0
        %v7151 = vpop.f32.mrb[0].mxu0
        %v7152 = vadd.f32 %v7000, %v7151
        %v7153 = vpop.f32.mrb[0].mxu0
        %7154 = vmatprep.mubr.bf16.mxu0 0
        %7155 = vmatmul.mubr.bf16.gmra.mrb[0].mxu0 %v6972
        %v7156 = vpop.f32.mrb[0].mxu0
        %v7157 = vadd.f32 %v7000, %v7156
        %v7158 = vpop.f32.mrb[0].mxu0
        %v7159 = vpop.f32.mrb[0].mxu0
        %v7160 = vadd.f32 %v7000, %v7159
        %v7161 = vpop.f32.mrb[0].mxu0
        %7162 = vmatprep.mubr.bf16.mxu0 0
        %7163 = vmatmul.mubr.bf16.gmra.mrb[0].mxu0 %v6973
        %v7164 = vpop.f32.mrb[0].mxu0
        %v7165 = vadd.f32 %v7000, %v7164
        %v7166 = vpop.f32.mrb[0].mxu0
        %v7167 = vpop.f32.mrb[0].mxu0
        %v7168 = vadd.f32 %v7000, %v7167
        %v7169 = vpop.f32.mrb[0].mxu0
        %7170 = vmatprep.mubr.bf16.mxu0 0
        %7171 = vmatmul.mubr.bf16.gmra.mrb[0].mxu0 %v6974
        %v7172 = vpop.f32.mrb[0].mxu0
        %v7173 = vadd.f32 %v7000, %v7172
        %v7174 = vpop.f32.mrb[0].mxu0
        %v7175 = vpop.f32.mrb[0].mxu0
        %v7176 = vadd.f32 %v7000, %v7175
        %v7177 = vpop.f32.mrb[0].mxu0
        %7178 = vmatprep.mubr.bf16.mxu0 0
        %7179 = vmatmul.mubr.bf16.gmra.mrb[0].mxu0 %v6975
        %v7180 = vpop.f32.mrb[0].mxu0
        %v7181 = vadd.f32 %v7000, %v7180
        %v7182 = vpop.f32.mrb[0].mxu0
        %v7183 = vpop.f32.mrb[0].mxu0
        %v7184 = vadd.f32 %v7000, %v7183
        %v7185 = vpop.f32.mrb[0].mxu0
        %7186 = vmatprep.mubr.bf16.mxu0 0
        %7187 = vmatmul.mubr.bf16.gmra.mrb[0].mxu0 %v6976
        %v7188 = vpop.f32.mrb[0].mxu0
        %v7189 = vadd.f32 %v7000, %v7188
        %v7190 = vpop.f32.mrb[0].mxu0
        %v7191 = vpop.f32.mrb[0].mxu0
        %v7192 = vadd.f32 %v7000, %v7191
        %v7193 = vpop.f32.mrb[0].mxu0
        %7194 = vmatprep.mubr.bf16.mxu0 0
        %7195 = vmatmul.mubr.bf16.gmra.mrb[0].mxu0 %v6977
        %v7196 = vpop.f32.mrb[0].mxu0
        %v7197 = vadd.f32 %v7000, %v7196
        %v7198 = vpop.f32.mrb[0].mxu0
        %v7199 = vpop.f32.mrb[0].mxu0
        %v7200 = vadd.f32 %v7000, %v7199
        %v7201 = vpop.f32.mrb[0].mxu0
        %7202 = vmatprep.mubr.bf16.mxu0 0
        %7203 = vmatmul.mubr.bf16.gmra.mrb[0].mxu0 %v6978
        %v7204 = vpop.f32.mrb[0].mxu0
        %v7205 = vadd.f32 %v7000, %v7204
        %v7206 = vpop.f32.mrb[0].mxu0
        %v7207 = vpop.f32.mrb[0].mxu0
        %v7208 = vadd.f32 %v7000, %v7207
        %v7209 = vpop.f32.mrb[0].mxu0
        %7210 = vdwg.mxu0
        %v7211 = vld [vmem:[%s11] sm:$0x3]
        %v7213 = vlaneseq
        %v7214 = vshrl.u32 %v7213, 7
        %v7215 = vsub.s32 0, %v7214
        %v7216 = vrot.slane %v7211, %v7215
        %v7217 = vlaneseq
        %v7218 = vshrl.u32 %v7217, 7
        %v7219 = vsub.s32 1, %v7218
        %v7220 = vrot.slane %v7211, %v7219
        %v7223 = vmul.f32 %v5521, %v7216
        %v7224 = vmul.f32 %v5522, %v7220
        %v7225 = vmul.f32 %v5523, %v7216
        %v7226 = vmul.f32 %v5524, %v7220
        %v7227 = vmul.f32 %v5525, %v7216
        %v7228 = vmul.f32 %v5526, %v7220
        %v7229 = vmul.f32 %v5527, %v7216
        %v7230 = vmul.f32 %v5528, %v7220
        %v7231 = vmul.f32 %v5529, %v7216
        %v7232 = vmul.f32 %v5530, %v7220
        %v7233 = vmul.f32 %v5531, %v7216
        %v7234 = vmul.f32 %v5532, %v7220
        %v7235 = vmul.f32 %v5533, %v7216
        %v7236 = vmul.f32 %v5534, %v7220
        %v7237 = vmul.f32 %v5535, %v7216
        %v7238 = vmul.f32 %v5536, %v7220
        %v7239 = vmul.f32 %v5537, %v7216
        %v7240 = vmul.f32 %v5538, %v7220
        %v7241 = vmul.f32 %v5539, %v7216
        %v7242 = vmul.f32 %v5540, %v7220
        %v7243 = vmul.f32 %v5541, %v7216
        %v7244 = vmul.f32 %v5542, %v7220
        %v7245 = vmul.f32 %v5543, %v7216
        %v7246 = vmul.f32 %v5544, %v7220
        %v7247 = vmul.f32 %v5545, %v7216
        %v7248 = vmul.f32 %v5546, %v7220
        %v7249 = vmul.f32 %v5547, %v7216
        %v7250 = vmul.f32 %v5548, %v7220
        %v7251 = vmul.f32 %v5549, %v7216
        %v7252 = vmul.f32 %v5550, %v7220
        %v7253 = vmul.f32 %v5551, %v7216
        %v7254 = vmul.f32 %v5552, %v7220
        %v7255 = vmul.f32 %v5553, %v7216
        %v7256 = vmul.f32 %v5554, %v7220
        %v7257 = vmul.f32 %v5555, %v7216
        %v7258 = vmul.f32 %v5556, %v7220
        %v7259 = vmul.f32 %v5557, %v7216
        %v7260 = vmul.f32 %v5558, %v7220
        %v7261 = vmul.f32 %v5559, %v7216
        %v7262 = vmul.f32 %v5560, %v7220
        %v7263 = vmul.f32 %v5561, %v7216
        %v7264 = vmul.f32 %v5562, %v7220
        %v7265 = vmul.f32 %v5563, %v7216
        %v7266 = vmul.f32 %v5564, %v7220
        %v7267 = vmul.f32 %v5565, %v7216
        %v7268 = vmul.f32 %v5566, %v7220
        %v7269 = vmul.f32 %v5567, %v7216
        %v7270 = vmul.f32 %v5568, %v7220
        %v7271 = vmul.f32 %v5569, %v7216
        %v7272 = vmul.f32 %v5570, %v7220
        %v7273 = vmul.f32 %v5571, %v7216
        %v7274 = vmul.f32 %v5572, %v7220
        %v7275 = vmul.f32 %v5573, %v7216
        %v7276 = vmul.f32 %v5574, %v7220
        %v7277 = vmul.f32 %v5575, %v7216
        %v7278 = vmul.f32 %v5576, %v7220
        %v7279 = vmul.f32 %v5577, %v7216
        %v7280 = vmul.f32 %v5578, %v7220
        %v7281 = vmul.f32 %v5579, %v7216
        %v7282 = vmul.f32 %v5580, %v7220
        %v7283 = vmul.f32 %v5581, %v7216
        %v7284 = vmul.f32 %v5582, %v7220
        %v7285 = vmul.f32 %v5583, %v7216
        %v7286 = vmul.f32 %v5584, %v7220
        %v7287 = vadd.f32 %v7223, %v7224
        %7288 = vadd.xlane.f32.xlu0 %v7287
        %v7289 = vpop.xlane.xlu0 %7288
        %v7290 = vadd.f32 %v7225, %v7226
        %7291 = vadd.xlane.f32.xlu0 %v7290
        %v7292 = vpop.xlane.xlu0 %7291
        %v7293 = vadd.f32 %v7227, %v7228
        %7294 = vadd.xlane.f32.xlu0 %v7293
        %v7295 = vpop.xlane.xlu0 %7294
        %v7296 = vadd.f32 %v7229, %v7230
        %7297 = vadd.xlane.f32.xlu0 %v7296
        %v7298 = vpop.xlane.xlu0 %7297
        %v7299 = vadd.f32 %v7231, %v7232
        %7300 = vadd.xlane.f32.xlu0 %v7299
        %v7301 = vpop.xlane.xlu0 %7300
        %v7302 = vadd.f32 %v7233, %v7234
        %7303 = vadd.xlane.f32.xlu0 %v7302
        %v7304 = vpop.xlane.xlu0 %7303
        %v7305 = vadd.f32 %v7235, %v7236
        %7306 = vadd.xlane.f32.xlu0 %v7305
        %v7307 = vpop.xlane.xlu0 %7306
        %v7308 = vadd.f32 %v7237, %v7238
        %7309 = vadd.xlane.f32.xlu0 %v7308
        %v7310 = vpop.xlane.xlu0 %7309
        %v7311 = vadd.f32 %v7239, %v7240
        %7312 = vadd.xlane.f32.xlu0 %v7311
        %v7313 = vpop.xlane.xlu0 %7312
        %v7314 = vadd.f32 %v7241, %v7242
        %7315 = vadd.xlane.f32.xlu0 %v7314
        %v7316 = vpop.xlane.xlu0 %7315
        %v7317 = vadd.f32 %v7243, %v7244
        %7318 = vadd.xlane.f32.xlu0 %v7317
        %v7319 = vpop.xlane.xlu0 %7318
        %v7320 = vadd.f32 %v7245, %v7246
        %7321 = vadd.xlane.f32.xlu0 %v7320
        %v7322 = vpop.xlane.xlu0 %7321
        %v7323 = vadd.f32 %v7247, %v7248
        %7324 = vadd.xlane.f32.xlu0 %v7323
        %v7325 = vpop.xlane.xlu0 %7324
        %v7326 = vadd.f32 %v7249, %v7250
        %7327 = vadd.xlane.f32.xlu0 %v7326
        %v7328 = vpop.xlane.xlu0 %7327
        %v7329 = vadd.f32 %v7251, %v7252
        %7330 = vadd.xlane.f32.xlu0 %v7329
        %v7331 = vpop.xlane.xlu0 %7330
        %v7332 = vadd.f32 %v7253, %v7254
        %7333 = vadd.xlane.f32.xlu0 %v7332
        %v7334 = vpop.xlane.xlu0 %7333
        %v7335 = vadd.f32 %v7255, %v7256
        %7336 = vadd.xlane.f32.xlu0 %v7335
        %v7337 = vpop.xlane.xlu0 %7336
        %v7338 = vadd.f32 %v7257, %v7258
        %7339 = vadd.xlane.f32.xlu0 %v7338
        %v7340 = vpop.xlane.xlu0 %7339
        %v7341 = vadd.f32 %v7259, %v7260
        %7342 = vadd.xlane.f32.xlu0 %v7341
        %v7343 = vpop.xlane.xlu0 %7342
        %v7344 = vadd.f32 %v7261, %v7262
        %7345 = vadd.xlane.f32.xlu0 %v7344
        %v7346 = vpop.xlane.xlu0 %7345
        %v7347 = vadd.f32 %v7263, %v7264
        %7348 = vadd.xlane.f32.xlu0 %v7347
        %v7349 = vpop.xlane.xlu0 %7348
        %v7350 = vadd.f32 %v7265, %v7266
        %7351 = vadd.xlane.f32.xlu0 %v7350
        %v7352 = vpop.xlane.xlu0 %7351
        %v7353 = vadd.f32 %v7267, %v7268
        %7354 = vadd.xlane.f32.xlu0 %v7353
        %v7355 = vpop.xlane.xlu0 %7354
        %v7356 = vadd.f32 %v7269, %v7270
        %7357 = vadd.xlane.f32.xlu0 %v7356
        %v7358 = vpop.xlane.xlu0 %7357
        %v7359 = vadd.f32 %v7271, %v7272
        %7360 = vadd.xlane.f32.xlu0 %v7359
        %v7361 = vpop.xlane.xlu0 %7360
        %v7362 = vadd.f32 %v7273, %v7274
        %7363 = vadd.xlane.f32.xlu0 %v7362
        %v7364 = vpop.xlane.xlu0 %7363
        %v7365 = vadd.f32 %v7275, %v7276
        %7366 = vadd.xlane.f32.xlu0 %v7365
        %v7367 = vpop.xlane.xlu0 %7366
        %v7368 = vadd.f32 %v7277, %v7278
        %7369 = vadd.xlane.f32.xlu0 %v7368
        %v7370 = vpop.xlane.xlu0 %7369
        %v7371 = vadd.f32 %v7279, %v7280
        %7372 = vadd.xlane.f32.xlu0 %v7371
        %v7373 = vpop.xlane.xlu0 %7372
        %v7374 = vadd.f32 %v7281, %v7282
        %7375 = vadd.xlane.f32.xlu0 %v7374
        %v7376 = vpop.xlane.xlu0 %7375
        %v7377 = vadd.f32 %v7283, %v7284
        %7378 = vadd.xlane.f32.xlu0 %v7377
        %v7379 = vpop.xlane.xlu0 %7378
        %v7380 = vadd.f32 %v7285, %v7286
        %7381 = vadd.xlane.f32.xlu0 %v7380
        %v7382 = vpop.xlane.xlu0 %7381
        %v7383 = vld [vmem:[#allocation2] sm:$0x1]
        %v7385 = vlaneseq
        %v7386 = vshrl.u32 %v7385, 7
        %v7387 = vsub.s32 0, %v7386
        %v7388 = vrot.slane %v7383, %v7387
        %7389 = vset.pattern.permute.xlu0 0
        %7390 = vperm.xlu0 %7389, %v7388
        %v7391 = vpop.permute.xlu0 %7390
        %v7393 = vadd.f32 %v7289, %v7391
        %v7394 = vadd.f32 %v7292, %v7391
        %v7395 = vadd.f32 %v7295, %v7391
        %v7396 = vadd.f32 %v7298, %v7391
        %v7397 = vadd.f32 %v7301, %v7391
        %v7398 = vadd.f32 %v7304, %v7391
        %v7399 = vadd.f32 %v7307, %v7391
        %v7400 = vadd.f32 %v7310, %v7391
        %v7401 = vadd.f32 %v7313, %v7391
        %v7402 = vadd.f32 %v7316, %v7391
        %v7403 = vadd.f32 %v7319, %v7391
        %v7404 = vadd.f32 %v7322, %v7391
        %v7405 = vadd.f32 %v7325, %v7391
        %v7406 = vadd.f32 %v7328, %v7391
        %v7407 = vadd.f32 %v7331, %v7391
        %v7408 = vadd.f32 %v7334, %v7391
        %v7409 = vadd.f32 %v7337, %v7391
        %v7410 = vadd.f32 %v7340, %v7391
        %v7411 = vadd.f32 %v7343, %v7391
        %v7412 = vadd.f32 %v7346, %v7391
        %v7413 = vadd.f32 %v7349, %v7391
        %v7414 = vadd.f32 %v7352, %v7391
        %v7415 = vadd.f32 %v7355, %v7391
        %v7416 = vadd.f32 %v7358, %v7391
        %v7417 = vadd.f32 %v7361, %v7391
        %v7418 = vadd.f32 %v7364, %v7391
        %v7419 = vadd.f32 %v7367, %v7391
        %v7420 = vadd.f32 %v7370, %v7391
        %v7421 = vadd.f32 %v7373, %v7391
        %v7422 = vadd.f32 %v7376, %v7391
        %v7423 = vadd.f32 %v7379, %v7391
        %v7424 = vadd.f32 %v7382, %v7391
        %v7425 = vld [vmem:[%s707] sm:$0xff]
        %v7426 = vld [vmem:[%s715] sm:$0xff]
        %v7427 = vmul.f32 %v7426, %v7426
        %vm7428 = vcmask 23552
        %v7429 = vsel %vm7428, %v7427, 0.0
        %7430 = vadd.xlane.f32.xlu0 %v7429
        %v7431 = vpop.xlane.xlu0 %7430
        %v7432 = vrsqrt.pop %v7431
        %v7433 = vmul.f32 %v7431, %v7432
        %vm7434 = vcmp.eq.f32.partialorder %v7431, inf
        %v7435 = vsel %vm7434, %v7431, %v7433
        %vm7436 = vcmp.eq.f32.partialorder %v7431, 0.0
        %v7437 = vand.u32 %v7431, 2147483648
        %v7438 = vsel %vm7436, %v7437, %v7435
        %v7439 = vld [vmem:[%s711] sm:$0xff]
        %v7440 = vsub.f32 %v7439, %v7425
        %v7441 = vmul.f32 %v7440, %v7438
        %v7442 = vmax.f32 %v7393, 0.0
        %v7443 = vmax.f32 %v7394, 0.0
        %v7444 = vmax.f32 %v7395, 0.0
        %v7445 = vmax.f32 %v7396, 0.0
        %v7446 = vmax.f32 %v7397, 0.0
        %v7447 = vmax.f32 %v7398, 0.0
        %v7448 = vmax.f32 %v7399, 0.0
        %v7449 = vmax.f32 %v7400, 0.0
        %v7450 = vmax.f32 %v7401, 0.0
        %v7451 = vmax.f32 %v7402, 0.0
        %v7452 = vmax.f32 %v7403, 0.0
        %v7453 = vmax.f32 %v7404, 0.0
        %v7454 = vmax.f32 %v7405, 0.0
        %v7455 = vmax.f32 %v7406, 0.0
        %v7456 = vmax.f32 %v7407, 0.0
        %v7457 = vmax.f32 %v7408, 0.0
        %v7458 = vmax.f32 %v7409, 0.0
        %v7459 = vmax.f32 %v7410, 0.0
        %v7460 = vmax.f32 %v7411, 0.0
        %v7461 = vmax.f32 %v7412, 0.0
        %v7462 = vmax.f32 %v7413, 0.0
        %v7463 = vmax.f32 %v7414, 0.0
        %v7464 = vmax.f32 %v7415, 0.0
        %v7465 = vmax.f32 %v7416, 0.0
        %v7466 = vmax.f32 %v7417, 0.0
        %v7467 = vmax.f32 %v7418, 0.0
        %v7468 = vmax.f32 %v7419, 0.0
        %v7469 = vmax.f32 %v7420, 0.0
        %v7470 = vmax.f32 %v7421, 0.0
        %v7471 = vmax.f32 %v7422, 0.0
        %v7472 = vmax.f32 %v7423, 0.0
        %v7473 = vmax.f32 %v7424, 0.0
        %v7474 = vsub.f32 0.0, %v7442
        %v7475 = vsub.f32 0.0, %v7443
        %v7476 = vsub.f32 0.0, %v7444
        %v7477 = vsub.f32 0.0, %v7445
        %v7478 = vsub.f32 0.0, %v7446
        %v7479 = vsub.f32 0.0, %v7447
        %v7480 = vsub.f32 0.0, %v7448
        %v7481 = vsub.f32 0.0, %v7449
        %v7482 = vsub.f32 0.0, %v7450
        %v7483 = vsub.f32 0.0, %v7451
        %v7484 = vsub.f32 0.0, %v7452
        %v7485 = vsub.f32 0.0, %v7453
        %v7486 = vsub.f32 0.0, %v7454
        %v7487 = vsub.f32 0.0, %v7455
        %v7488 = vsub.f32 0.0, %v7456
        %v7489 = vsub.f32 0.0, %v7457
        %v7490 = vsub.f32 0.0, %v7458
        %v7491 = vsub.f32 0.0, %v7459
        %v7492 = vsub.f32 0.0, %v7460
        %v7493 = vsub.f32 0.0, %v7461
        %v7494 = vsub.f32 0.0, %v7462
        %v7495 = vsub.f32 0.0, %v7463
        %v7496 = vsub.f32 0.0, %v7464
        %v7497 = vsub.f32 0.0, %v7465
        %v7498 = vsub.f32 0.0, %v7466
        %v7499 = vsub.f32 0.0, %v7467
        %v7500 = vsub.f32 0.0, %v7468
        %v7501 = vsub.f32 0.0, %v7469
        %v7502 = vsub.f32 0.0, %v7470
        %v7503 = vsub.f32 0.0, %v7471
        %v7504 = vsub.f32 0.0, %v7472
        %v7505 = vsub.f32 0.0, %v7473
        %v7507 = vlaneseq
        %v7508 = vshrl.u32 %v7507, 7
        %v7509 = vsub.s32 0, %v7508
        %v7510 = vrot.slane %v7441, %v7509
        %7512 = vbcast.lane.b32.xlu0 %v7510, 256
        %v7513 = vpop.permute.xlu0 %7512
        %s7515 = sor.u32 256, 8
        %7516 = vbcast.lane.b32.xlu0 %v7510, %s7515
        %v7517 = vpop.permute.xlu0 %7516
        %s7519 = sor.u32 256, 16
        %7520 = vbcast.lane.b32.xlu0 %v7510, %s7519
        %v7521 = vpop.permute.xlu0 %7520
        %s7523 = sor.u32 256, 24
        %7524 = vbcast.lane.b32.xlu0 %v7510, %s7523
        %v7525 = vpop.permute.xlu0 %7524
        %v7526 = vlaneseq
        %v7527 = vshrl.u32 %v7526, 7
        %v7528 = vsub.s32 1, %v7527
        %v7529 = vrot.slane %v7441, %v7528
        %7531 = vbcast.lane.b32.xlu0 %v7529, 256
        %v7532 = vpop.permute.xlu0 %7531
        %s7534 = sor.u32 256, 8
        %7535 = vbcast.lane.b32.xlu0 %v7529, %s7534
        %v7536 = vpop.permute.xlu0 %7535
        %s7538 = sor.u32 256, 16
        %7539 = vbcast.lane.b32.xlu0 %v7529, %s7538
        %v7540 = vpop.permute.xlu0 %7539
        %s7542 = sor.u32 256, 24
        %7543 = vbcast.lane.b32.xlu0 %v7529, %s7542
        %v7544 = vpop.permute.xlu0 %7543
        %v7545 = vlaneseq
        %v7546 = vshrl.u32 %v7545, 7
        %v7547 = vsub.s32 2, %v7546
        %v7548 = vrot.slane %v7441, %v7547
        %7550 = vbcast.lane.b32.xlu0 %v7548, 256
        %v7551 = vpop.permute.xlu0 %7550
        %s7553 = sor.u32 256, 8
        %7554 = vbcast.lane.b32.xlu0 %v7548, %s7553
        %v7555 = vpop.permute.xlu0 %7554
        %s7557 = sor.u32 256, 16
        %7558 = vbcast.lane.b32.xlu0 %v7548, %s7557
        %v7559 = vpop.permute.xlu0 %7558
        %s7561 = sor.u32 256, 24
        %7562 = vbcast.lane.b32.xlu0 %v7548, %s7561
        %v7563 = vpop.permute.xlu0 %7562
        %v7564 = vlaneseq
        %v7565 = vshrl.u32 %v7564, 7
        %v7566 = vsub.s32 3, %v7565
        %v7567 = vrot.slane %v7441, %v7566
        %7569 = vbcast.lane.b32.xlu0 %v7567, 256
        %v7570 = vpop.permute.xlu0 %7569
        %s7572 = sor.u32 256, 8
        %7573 = vbcast.lane.b32.xlu0 %v7567, %s7572
        %v7574 = vpop.permute.xlu0 %7573
        %s7576 = sor.u32 256, 16
        %7577 = vbcast.lane.b32.xlu0 %v7567, %s7576
        %v7578 = vpop.permute.xlu0 %7577
        %s7580 = sor.u32 256, 24
        %7581 = vbcast.lane.b32.xlu0 %v7567, %s7580
        %v7582 = vpop.permute.xlu0 %7581
        %v7583 = vlaneseq
        %v7584 = vshrl.u32 %v7583, 7
        %v7585 = vsub.s32 4, %v7584
        %v7586 = vrot.slane %v7441, %v7585
        %7588 = vbcast.lane.b32.xlu0 %v7586, 256
        %v7589 = vpop.permute.xlu0 %7588
        %s7591 = sor.u32 256, 8
        %7592 = vbcast.lane.b32.xlu0 %v7586, %s7591
        %v7593 = vpop.permute.xlu0 %7592
        %s7595 = sor.u32 256, 16
        %7596 = vbcast.lane.b32.xlu0 %v7586, %s7595
        %v7597 = vpop.permute.xlu0 %7596
        %s7599 = sor.u32 256, 24
        %7600 = vbcast.lane.b32.xlu0 %v7586, %s7599
        %v7601 = vpop.permute.xlu0 %7600
        %v7602 = vlaneseq
        %v7603 = vshrl.u32 %v7602, 7
        %v7604 = vsub.s32 5, %v7603
        %v7605 = vrot.slane %v7441, %v7604
        %7607 = vbcast.lane.b32.xlu0 %v7605, 256
        %v7608 = vpop.permute.xlu0 %7607
        %s7610 = sor.u32 256, 8
        %7611 = vbcast.lane.b32.xlu0 %v7605, %s7610
        %v7612 = vpop.permute.xlu0 %7611
        %s7614 = sor.u32 256, 16
        %7615 = vbcast.lane.b32.xlu0 %v7605, %s7614
        %v7616 = vpop.permute.xlu0 %7615
        %s7618 = sor.u32 256, 24
        %7619 = vbcast.lane.b32.xlu0 %v7605, %s7618
        %v7620 = vpop.permute.xlu0 %7619
        %v7621 = vlaneseq
        %v7622 = vshrl.u32 %v7621, 7
        %v7623 = vsub.s32 6, %v7622
        %v7624 = vrot.slane %v7441, %v7623
        %7626 = vbcast.lane.b32.xlu0 %v7624, 256
        %v7627 = vpop.permute.xlu0 %7626
        %s7629 = sor.u32 256, 8
        %7630 = vbcast.lane.b32.xlu0 %v7624, %s7629
        %v7631 = vpop.permute.xlu0 %7630
        %s7633 = sor.u32 256, 16
        %7634 = vbcast.lane.b32.xlu0 %v7624, %s7633
        %v7635 = vpop.permute.xlu0 %7634
        %s7637 = sor.u32 256, 24
        %7638 = vbcast.lane.b32.xlu0 %v7624, %s7637
        %v7639 = vpop.permute.xlu0 %7638
        %v7640 = vlaneseq
        %v7641 = vshrl.u32 %v7640, 7
        %v7642 = vsub.s32 7, %v7641
        %v7643 = vrot.slane %v7441, %v7642
        %7645 = vbcast.lane.b32.xlu0 %v7643, 256
        %v7646 = vpop.permute.xlu0 %7645
        %s7648 = sor.u32 256, 8
        %7649 = vbcast.lane.b32.xlu0 %v7643, %s7648
        %v7650 = vpop.permute.xlu0 %7649
        %s7652 = sor.u32 256, 16
        %7653 = vbcast.lane.b32.xlu0 %v7643, %s7652
        %v7654 = vpop.permute.xlu0 %7653
        %s7656 = sor.u32 256, 24
        %7657 = vbcast.lane.b32.xlu0 %v7643, %s7656
        %v7658 = vpop.permute.xlu0 %7657
        %v7691 = vmul.f32 %v7474, %v7513
        %v7692 = vmul.f32 %v7475, %v7517
        %v7693 = vmul.f32 %v7476, %v7521
        %v7694 = vmul.f32 %v7477, %v7525
        %v7695 = vmul.f32 %v7478, %v7532
        %v7696 = vmul.f32 %v7479, %v7536
        %v7697 = vmul.f32 %v7480, %v7540
        %v7698 = vmul.f32 %v7481, %v7544
        %v7699 = vmul.f32 %v7482, %v7551
        %v7700 = vmul.f32 %v7483, %v7555
        %v7701 = vmul.f32 %v7484, %v7559
        %v7702 = vmul.f32 %v7485, %v7563
        %v7703 = vmul.f32 %v7486, %v7570
        %v7704 = vmul.f32 %v7487, %v7574
        %v7705 = vmul.f32 %v7488, %v7578
        %v7706 = vmul.f32 %v7489, %v7582
        %v7707 = vmul.f32 %v7490, %v7589
        %v7708 = vmul.f32 %v7491, %v7593
        %v7709 = vmul.f32 %v7492, %v7597
        %v7710 = vmul.f32 %v7493, %v7601
        %v7711 = vmul.f32 %v7494, %v7608
        %v7712 = vmul.f32 %v7495, %v7612
        %v7713 = vmul.f32 %v7496, %v7616
        %v7714 = vmul.f32 %v7497, %v7620
        %v7715 = vmul.f32 %v7498, %v7627
        %v7716 = vmul.f32 %v7499, %v7631
        %v7717 = vmul.f32 %v7500, %v7635
        %v7718 = vmul.f32 %v7501, %v7639
        %v7719 = vmul.f32 %v7502, %v7646
        %v7720 = vmul.f32 %v7503, %v7650
        %v7721 = vmul.f32 %v7504, %v7654
        %v7722 = vmul.f32 %v7505, %v7658
        %v7723 = vmul.f32 %v7691, 1.442695
        %v7724 = vpow.pop %v7723
        %v7725 = vmul.f32 %v7692, 1.442695
        %v7726 = vpow.pop %v7725
        %v7727 = vmul.f32 %v7693, 1.442695
        %v7728 = vpow.pop %v7727
        %v7729 = vmul.f32 %v7694, 1.442695
        %v7730 = vpow.pop %v7729
        %v7731 = vmul.f32 %v7695, 1.442695
        %v7732 = vpow.pop %v7731
        %v7733 = vmul.f32 %v7696, 1.442695
        %v7734 = vpow.pop %v7733
        %v7735 = vmul.f32 %v7697, 1.442695
        %v7736 = vpow.pop %v7735
        %v7737 = vmul.f32 %v7698, 1.442695
        %v7738 = vpow.pop %v7737
        %v7739 = vmul.f32 %v7699, 1.442695
        %v7740 = vpow.pop %v7739
        %v7741 = vmul.f32 %v7700, 1.442695
        %v7742 = vpow.pop %v7741
        %v7743 = vmul.f32 %v7701, 1.442695
        %v7744 = vpow.pop %v7743
        %v7745 = vmul.f32 %v7702, 1.442695
        %v7746 = vpow.pop %v7745
        %v7747 = vmul.f32 %v7703, 1.442695
        %v7748 = vpow.pop %v7747
        %v7749 = vmul.f32 %v7704, 1.442695
        %v7750 = vpow.pop %v7749
        %v7751 = vmul.f32 %v7705, 1.442695
        %v7752 = vpow.pop %v7751
        %v7753 = vmul.f32 %v7706, 1.442695
        %v7754 = vpow.pop %v7753
        %v7755 = vmul.f32 %v7707, 1.442695
        %v7756 = vpow.pop %v7755
        %v7757 = vmul.f32 %v7708, 1.442695
        %v7758 = vpow.pop %v7757
        %v7759 = vmul.f32 %v7709, 1.442695
        %v7760 = vpow.pop %v7759
        %v7761 = vmul.f32 %v7710, 1.442695
        %v7762 = vpow.pop %v7761
        %v7763 = vmul.f32 %v7711, 1.442695
        %v7764 = vpow.pop %v7763
        %v7765 = vmul.f32 %v7712, 1.442695
        %v7766 = vpow.pop %v7765
        %v7767 = vmul.f32 %v7713, 1.442695
        %v7768 = vpow.pop %v7767
        %v7769 = vmul.f32 %v7714, 1.442695
        %v7770 = vpow.pop %v7769
        %v7771 = vmul.f32 %v7715, 1.442695
        %v7772 = vpow.pop %v7771
        %v7773 = vmul.f32 %v7716, 1.442695
        %v7774 = vpow.pop %v7773
        %v7775 = vmul.f32 %v7717, 1.442695
        %v7776 = vpow.pop %v7775
        %v7777 = vmul.f32 %v7718, 1.442695
        %v7778 = vpow.pop %v7777
        %v7779 = vmul.f32 %v7719, 1.442695
        %v7780 = vpow.pop %v7779
        %v7781 = vmul.f32 %v7720, 1.442695
        %v7782 = vpow.pop %v7781
        %v7783 = vmul.f32 %v7721, 1.442695
        %v7784 = vpow.pop %v7783
        %v7785 = vmul.f32 %v7722, 1.442695
        %v7786 = vpow.pop %v7785
        %v7787 = vsub.f32 1.0, %v7724
        %v7788 = vsub.f32 1.0, %v7726
        %v7789 = vsub.f32 1.0, %v7728
        %v7790 = vsub.f32 1.0, %v7730
        %v7791 = vsub.f32 1.0, %v7732
        %v7792 = vsub.f32 1.0, %v7734
        %v7793 = vsub.f32 1.0, %v7736
        %v7794 = vsub.f32 1.0, %v7738
        %v7795 = vsub.f32 1.0, %v7740
        %v7796 = vsub.f32 1.0, %v7742
        %v7797 = vsub.f32 1.0, %v7744
        %v7798 = vsub.f32 1.0, %v7746
        %v7799 = vsub.f32 1.0, %v7748
        %v7800 = vsub.f32 1.0, %v7750
        %v7801 = vsub.f32 1.0, %v7752
        %v7802 = vsub.f32 1.0, %v7754
        %v7803 = vsub.f32 1.0, %v7756
        %v7804 = vsub.f32 1.0, %v7758
        %v7805 = vsub.f32 1.0, %v7760
        %v7806 = vsub.f32 1.0, %v7762
        %v7807 = vsub.f32 1.0, %v7764
        %v7808 = vsub.f32 1.0, %v7766
        %v7809 = vsub.f32 1.0, %v7768
        %v7810 = vsub.f32 1.0, %v7770
        %v7811 = vsub.f32 1.0, %v7772
        %v7812 = vsub.f32 1.0, %v7774
        %v7813 = vsub.f32 1.0, %v7776
        %v7814 = vsub.f32 1.0, %v7778
        %v7815 = vsub.f32 1.0, %v7780
        %v7816 = vsub.f32 1.0, %v7782
        %v7817 = vsub.f32 1.0, %v7784
        %v7818 = vsub.f32 1.0, %v7786
        %v7819 = vlaneseq
        %v7820 = vand.u32 %v7819, 127
        %vm7821 = vcmp.eq.s32.totalorder %v7820, 31
        %7854 = vset.pattern.permute.xlu0 0
        %7855 = vperm.xlu0 %7854, %v7787
        %v7856 = vpop.permute.xlu0 %7855
        %7857 = vset.pattern.permute.xlu0 0
        %7858 = vperm.xlu0 %7857, %v7788
        %v7859 = vpop.permute.xlu0 %7858
        %7860 = vset.pattern.permute.xlu0 0
        %7861 = vperm.xlu0 %7860, %v7789
        %v7862 = vpop.permute.xlu0 %7861
        %7863 = vset.pattern.permute.xlu0 0
        %7864 = vperm.xlu0 %7863, %v7790
        %v7865 = vpop.permute.xlu0 %7864
        %7866 = vset.pattern.permute.xlu0 0
        %7867 = vperm.xlu0 %7866, %v7791
        %v7868 = vpop.permute.xlu0 %7867
        %7869 = vset.pattern.permute.xlu0 0
        %7870 = vperm.xlu0 %7869, %v7792
        %v7871 = vpop.permute.xlu0 %7870
        %7872 = vset.pattern.permute.xlu0 0
        %7873 = vperm.xlu0 %7872, %v7793
        %v7874 = vpop.permute.xlu0 %7873
        %7875 = vset.pattern.permute.xlu0 0
        %7876 = vperm.xlu0 %7875, %v7794
        %v7877 = vpop.permute.xlu0 %7876
        %7878 = vset.pattern.permute.xlu0 0
        %7879 = vperm.xlu0 %7878, %v7795
        %v7880 = vpop.permute.xlu0 %7879
        %7881 = vset.pattern.permute.xlu0 0
        %7882 = vperm.xlu0 %7881, %v7796
        %v7883 = vpop.permute.xlu0 %7882
        %7884 = vset.pattern.permute.xlu0 0
        %7885 = vperm.xlu0 %7884, %v7797
        %v7886 = vpop.permute.xlu0 %7885
        %7887 = vset.pattern.permute.xlu0 0
        %7888 = vperm.xlu0 %7887, %v7798
        %v7889 = vpop.permute.xlu0 %7888
        %7890 = vset.pattern.permute.xlu0 0
        %7891 = vperm.xlu0 %7890, %v7799
        %v7892 = vpop.permute.xlu0 %7891
        %7893 = vset.pattern.permute.xlu0 0
        %7894 = vperm.xlu0 %7893, %v7800
        %v7895 = vpop.permute.xlu0 %7894
        %7896 = vset.pattern.permute.xlu0 0
        %7897 = vperm.xlu0 %7896, %v7801
        %v7898 = vpop.permute.xlu0 %7897
        %7899 = vset.pattern.permute.xlu0 0
        %7900 = vperm.xlu0 %7899, %v7802
        %v7901 = vpop.permute.xlu0 %7900
        %7902 = vset.pattern.permute.xlu0 0
        %7903 = vperm.xlu0 %7902, %v7803
        %v7904 = vpop.permute.xlu0 %7903
        %7905 = vset.pattern.permute.xlu0 0
        %7906 = vperm.xlu0 %7905, %v7804
        %v7907 = vpop.permute.xlu0 %7906
        %7908 = vset.pattern.permute.xlu0 0
        %7909 = vperm.xlu0 %7908, %v7805
        %v7910 = vpop.permute.xlu0 %7909
        %7911 = vset.pattern.permute.xlu0 0
        %7912 = vperm.xlu0 %7911, %v7806
        %v7913 = vpop.permute.xlu0 %7912
        %7914 = vset.pattern.permute.xlu0 0
        %7915 = vperm.xlu0 %7914, %v7807
        %v7916 = vpop.permute.xlu0 %7915
        %7917 = vset.pattern.permute.xlu0 0
        %7918 = vperm.xlu0 %7917, %v7808
        %v7919 = vpop.permute.xlu0 %7918
        %7920 = vset.pattern.permute.xlu0 0
        %7921 = vperm.xlu0 %7920, %v7809
        %v7922 = vpop.permute.xlu0 %7921
        %7923 = vset.pattern.permute.xlu0 0
        %7924 = vperm.xlu0 %7923, %v7810
        %v7925 = vpop.permute.xlu0 %7924
        %7926 = vset.pattern.permute.xlu0 0
        %7927 = vperm.xlu0 %7926, %v7811
        %v7928 = vpop.permute.xlu0 %7927
        %7929 = vset.pattern.permute.xlu0 0
        %7930 = vperm.xlu0 %7929, %v7812
        %v7931 = vpop.permute.xlu0 %7930
        %7932 = vset.pattern.permute.xlu0 0
        %7933 = vperm.xlu0 %7932, %v7813
        %v7934 = vpop.permute.xlu0 %7933
        %7935 = vset.pattern.permute.xlu0 0
        %7936 = vperm.xlu0 %7935, %v7814
        %v7937 = vpop.permute.xlu0 %7936
        %7938 = vset.pattern.permute.xlu0 0
        %7939 = vperm.xlu0 %7938, %v7815
        %v7940 = vpop.permute.xlu0 %7939
        %7941 = vset.pattern.permute.xlu0 0
        %7942 = vperm.xlu0 %7941, %v7816
        %v7943 = vpop.permute.xlu0 %7942
        %7944 = vset.pattern.permute.xlu0 0
        %7945 = vperm.xlu0 %7944, %v7817
        %v7946 = vpop.permute.xlu0 %7945
        %7947 = vset.pattern.permute.xlu0 0
        %7948 = vperm.xlu0 %7947, %v7818
        %v7949 = vpop.permute.xlu0 %7948
        %v7950 = vlaneseq
        %v7951 = vshrl.u32 %v7950, 7
        %v7952 = vsub.s32 %v7820, %v7951
        %v7953 = vrot.slane %v7856, %v7952
        %v7954 = vadd.s32 %v7820, 4294967288
        %v7955 = vlaneseq
        %v7956 = vshrl.u32 %v7955, 7
        %v7957 = vsub.s32 %v7954, %v7956
        %v7958 = vrot.slane %v7859, %v7957
        %vm7959 = vcmask 130112
        %v7960 = vsel %vm7959, %v7958, %v7953
        %v7961 = vadd.s32 %v7820, 4294967280
        %v7962 = vlaneseq
        %v7963 = vshrl.u32 %v7962, 7
        %v7964 = vsub.s32 %v7961, %v7963
        %v7965 = vrot.slane %v7862, %v7964
        %vm7966 = vcmask 195712
        %v7967 = vsel %vm7966, %v7965, %v7960
        %v7968 = vadd.s32 %v7820, 4294967272
        %v7969 = vlaneseq
        %v7970 = vshrl.u32 %v7969, 7
        %v7971 = vsub.s32 %v7968, %v7970
        %v7972 = vrot.slane %v7865, %v7971
        %vm7973 = vcmask 261312
        %v7974 = vsel %vm7973, %v7972, %v7967
        %v7975 = vlaneseq
        %v7976 = vshrl.u32 %v7975, 7
        %v7977 = vsub.s32 %v7820, %v7976
        %v7978 = vrot.slane %v7868, %v7977
        %v7979 = vlaneseq
        %v7980 = vshrl.u32 %v7979, 7
        %v7981 = vsub.s32 %v7954, %v7980
        %v7982 = vrot.slane %v7871, %v7981
        %v7983 = vsel %vm7959, %v7982, %v7978
        %v7984 = vlaneseq
        %v7985 = vshrl.u32 %v7984, 7
        %v7986 = vsub.s32 %v7961, %v7985
        %v7987 = vrot.slane %v7874, %v7986
        %v7988 = vsel %vm7966, %v7987, %v7983
        %v7989 = vlaneseq
        %v7990 = vshrl.u32 %v7989, 7
        %v7991 = vsub.s32 %v7968, %v7990
        %v7992 = vrot.slane %v7877, %v7991
        %v7993 = vsel %vm7973, %v7992, %v7988
        %v7994 = vlaneseq
        %v7995 = vshrl.u32 %v7994, 7
        %v7996 = vsub.s32 %v7820, %v7995
        %v7997 = vrot.slane %v7880, %v7996
        %v7998 = vlaneseq
        %v7999 = vshrl.u32 %v7998, 7
        %v8000 = vsub.s32 %v7954, %v7999
        %v8001 = vrot.slane %v7883, %v8000
        %v8002 = vsel %vm7959, %v8001, %v7997
        %v8003 = vlaneseq
        %v8004 = vshrl.u32 %v8003, 7
        %v8005 = vsub.s32 %v7961, %v8004
        %v8006 = vrot.slane %v7886, %v8005
        %v8007 = vsel %vm7966, %v8006, %v8002
        %v8008 = vlaneseq
        %v8009 = vshrl.u32 %v8008, 7
        %v8010 = vsub.s32 %v7968, %v8009
        %v8011 = vrot.slane %v7889, %v8010
        %v8012 = vsel %vm7973, %v8011, %v8007
        %v8013 = vlaneseq
        %v8014 = vshrl.u32 %v8013, 7
        %v8015 = vsub.s32 %v7820, %v8014
        %v8016 = vrot.slane %v7892, %v8015
        %v8017 = vlaneseq
        %v8018 = vshrl.u32 %v8017, 7
        %v8019 = vsub.s32 %v7954, %v8018
        %v8020 = vrot.slane %v7895, %v8019
        %v8021 = vsel %vm7959, %v8020, %v8016
        %v8022 = vlaneseq
        %v8023 = vshrl.u32 %v8022, 7
        %v8024 = vsub.s32 %v7961, %v8023
        %v8025 = vrot.slane %v7898, %v8024
        %v8026 = vsel %vm7966, %v8025, %v8021
        %v8027 = vlaneseq
        %v8028 = vshrl.u32 %v8027, 7
        %v8029 = vsub.s32 %v7968, %v8028
        %v8030 = vrot.slane %v7901, %v8029
        %v8031 = vsel %vm7973, %v8030, %v8026
        %v8032 = vlaneseq
        %v8033 = vshrl.u32 %v8032, 7
        %v8034 = vsub.s32 %v7820, %v8033
        %v8035 = vrot.slane %v7904, %v8034
        %v8036 = vlaneseq
        %v8037 = vshrl.u32 %v8036, 7
        %v8038 = vsub.s32 %v7954, %v8037
        %v8039 = vrot.slane %v7907, %v8038
        %v8040 = vsel %vm7959, %v8039, %v8035
        %v8041 = vlaneseq
        %v8042 = vshrl.u32 %v8041, 7
        %v8043 = vsub.s32 %v7961, %v8042
        %v8044 = vrot.slane %v7910, %v8043
        %v8045 = vsel %vm7966, %v8044, %v8040
        %v8046 = vlaneseq
        %v8047 = vshrl.u32 %v8046, 7
        %v8048 = vsub.s32 %v7968, %v8047
        %v8049 = vrot.slane %v7913, %v8048
        %v8050 = vsel %vm7973, %v8049, %v8045
        %v8051 = vlaneseq
        %v8052 = vshrl.u32 %v8051, 7
        %v8053 = vsub.s32 %v7820, %v8052
        %v8054 = vrot.slane %v7916, %v8053
        %v8055 = vlaneseq
        %v8056 = vshrl.u32 %v8055, 7
        %v8057 = vsub.s32 %v7954, %v8056
        %v8058 = vrot.slane %v7919, %v8057
        %v8059 = vsel %vm7959, %v8058, %v8054
        %v8060 = vlaneseq
        %v8061 = vshrl.u32 %v8060, 7
        %v8062 = vsub.s32 %v7961, %v8061
        %v8063 = vrot.slane %v7922, %v8062
        %v8064 = vsel %vm7966, %v8063, %v8059
        %v8065 = vlaneseq
        %v8066 = vshrl.u32 %v8065, 7
        %v8067 = vsub.s32 %v7968, %v8066
        %v8068 = vrot.slane %v7925, %v8067
        %v8069 = vsel %vm7973, %v8068, %v8064
        %v8070 = vlaneseq
        %v8071 = vshrl.u32 %v8070, 7
        %v8072 = vsub.s32 %v7820, %v8071
        %v8073 = vrot.slane %v7928, %v8072
        %v8074 = vlaneseq
        %v8075 = vshrl.u32 %v8074, 7
        %v8076 = vsub.s32 %v7954, %v8075
        %v8077 = vrot.slane %v7931, %v8076
        %v8078 = vsel %vm7959, %v8077, %v8073
        %v8079 = vlaneseq
        %v8080 = vshrl.u32 %v8079, 7
        %v8081 = vsub.s32 %v7961, %v8080
        %v8082 = vrot.slane %v7934, %v8081
        %v8083 = vsel %vm7966, %v8082, %v8078
        %v8084 = vlaneseq
        %v8085 = vshrl.u32 %v8084, 7
        %v8086 = vsub.s32 %v7968, %v8085
        %v8087 = vrot.slane %v7937, %v8086
        %v8088 = vsel %vm7973, %v8087, %v8083
        %v8089 = vlaneseq
        %v8090 = vshrl.u32 %v8089, 7
        %v8091 = vsub.s32 %v7820, %v8090
        %v8092 = vrot.slane %v7940, %v8091
        %v8093 = vlaneseq
        %v8094 = vshrl.u32 %v8093, 7
        %v8095 = vsub.s32 %v7954, %v8094
        %v8096 = vrot.slane %v7943, %v8095
        %v8097 = vsel %vm7959, %v8096, %v8092
        %v8098 = vlaneseq
        %v8099 = vshrl.u32 %v8098, 7
        %v8100 = vsub.s32 %v7961, %v8099
        %v8101 = vrot.slane %v7946, %v8100
        %v8102 = vsel %vm7966, %v8101, %v8097
        %v8103 = vlaneseq
        %v8104 = vshrl.u32 %v8103, 7
        %v8105 = vsub.s32 %v7968, %v8104
        %v8106 = vrot.slane %v7949, %v8105
        %v8107 = vsel %vm7973, %v8106, %v8102
        %vm8108 = vcmask 1041409
        %v8109 = vsel %vm8108, %v7993, %v7974
        %vm8110 = vcmask 1042434
        %v8111 = vsel %vm8110, %v8012, %v8109
        %vm8112 = vcmask 1043459
        %v8113 = vsel %vm8112, %v8031, %v8111
        %vm8114 = vcmask 1044484
        %v8115 = vsel %vm8114, %v8050, %v8113
        %vm8116 = vcmask 1045509
        %v8117 = vsel %vm8116, %v8069, %v8115
        %vm8118 = vcmask 1046534
        %v8119 = vsel %vm8118, %v8088, %v8117
        %vm8120 = vcmask 1047559
        %v8121 = vsel %vm8120, %v8107, %v8119
        %v8123 = vsel %vm7821, 1.0, %v8121
        %v8124 = vsub.f32 1.0, %v8123
        %v8125 = vmax.f32 %v8124, 1e-30
        %v8126 = vlog2.pop %v8125
        %v8127 = vmul.f32 %v8126, 0.6931472
        %v8128 = vld [vmem:[%s4] sm:$0xff]
        %v8129 = vld [vmem:[%s4 + $0x8] sm:$0xff]
        %v8130 = vld [vmem:[%s4 + $0x10] sm:$0xff]
        %v8131 = vld [vmem:[%s4 + $0x18] sm:$0xff]
        %vm8132 = vcmask 261120
        %v8134 = vsel %vm8132, %v8127, 0
        %8136 = vmatprep.subr.mxu0 0.0
        %8137 = vmatpush1.msra.mxu0 %v8128
        %8138 = vmatprep.subr.mxu0 0.0
        %8139 = vmatpush1.msra.mxu0 %v8129
        %8140 = vmatprep.subr.mxu0 0.0
        %8141 = vmatpush1.msra.mxu0 %v8130
        %8142 = vmatprep.subr.mxu0 0.0
        %8143 = vmatpush1.msra.mxu0 %v8131
        %8144 = vmatprep.subr.mxu0 0.0
        %8145 = vmatpush1.msra.mxu0 0.0
        %8146 = vmatprep.subr.mxu0 0.0
        %8147 = vmatpush1.msra.mxu0 0.0
        %8148 = vmatprep.subr.mxu0 0.0
        %8149 = vmatpush1.msra.mxu0 0.0
        %8150 = vmatprep.subr.mxu0 0.0
        %8151 = vmatpush1.msra.mxu0 0.0
        %8152 = vmatprep.subr.mxu0 0.0
        %8153 = vmatpush1.msra.mxu0 0.0
        %8154 = vmatprep.subr.mxu0 0.0
        %8155 = vmatpush1.msra.mxu0 0.0
        %8156 = vmatprep.subr.mxu0 0.0
        %8157 = vmatpush1.msra.mxu0 0.0
        %8158 = vmatprep.subr.mxu0 0.0
        %8159 = vmatpush1.msra.mxu0 0.0
        %8160 = vmatprep.subr.mxu0 0.0
        %8161 = vmatpush1.msra.mxu0 0.0
        %8162 = vmatprep.subr.mxu0 0.0
        %8163 = vmatpush1.msra.mxu0 0.0
        %8164 = vmatprep.subr.mxu0 0.0
        %8165 = vmatpush1.msra.mxu0 0.0
        %8166 = vmatprep.subr.mxu0 0.0
        %8167 = vmatpush1.msra.mxu0 0.0
        %8168 = vmatprep.subr.mxu0 0.0
        %8169 = vmatpush1.msra.mxu0 0.0
        %8170 = vmatprep.subr.mxu0 0.0
        %8171 = vmatpush1.msra.mxu0 0.0
        %8172 = vmatprep.subr.mxu0 0.0
        %8173 = vmatpush1.msra.mxu0 0.0
        %8174 = vmatprep.subr.mxu0 0.0
        %8175 = vmatpush1.msra.mxu0 0.0
        %8176 = vmatprep.subr.mxu0 0.0
        %8177 = vmatpush1.msra.mxu0 0.0
        %8178 = vmatprep.subr.mxu0 0.0
        %8179 = vmatpush1.msra.mxu0 0.0
        %8180 = vmatprep.subr.mxu0 0.0
        %8181 = vmatpush1.msra.mxu0 0.0
        %8182 = vmatprep.subr.mxu0 0.0
        %8183 = vmatpush1.msra.mxu0 0.0
        %8184 = vmatprep.subr.mxu0 0.0
        %8185 = vmatpush1.msra.mxu0 0.0
        %8186 = vmatprep.subr.mxu0 0.0
        %8187 = vmatpush1.msra.mxu0 0.0
        %8188 = vmatprep.subr.mxu0 0.0
        %8189 = vmatpush1.msra.mxu0 0.0
        %8190 = vmatprep.subr.mxu0 0.0
        %8191 = vmatpush1.msra.mxu0 0.0
        %8192 = vmatprep.subr.mxu0 0.0
        %8193 = vmatpush1.msra.mxu0 0.0
        %8194 = vmatprep.subr.mxu0 0.0
        %8195 = vmatpush1.msra.mxu0 0.0
        %8196 = vmatprep.subr.mxu0 0.0
        %8197 = vmatpush1.msra.mxu0 0.0
        %8198 = vmatprep.subr.mxu0 0.0
        %8199 = vmatpush1.msra.mxu0 0.0
        %8200 = vmatprep.mubr.f32.mxu0 0.0
        %8201 = vmatmul.mubr.f32.gmra.mrb[0].mxu0 %v8134
        %v8202 = vpop.f32.mrb[0].mxu0
        %v8203 = vadd.f32 0.0, %v8202
        %v8204 = vpop.f32.mrb[0].mxu0
        %8205 = vdwg.mxu0
        %v8206 = vmul.f32 %v8203, 1.442695
        %v8207 = vpow.pop %v8206
        %v8208 = vmul.f32 %v8123, %v8207
        %v8209 = vlaneseq
        %v8210 = vshrl.u32 %v8209, 7
        %v8211 = vsub.s32 0, %v8210
        %v8212 = vrot.slane %v8208, %v8211
        %8214 = vbcast.lane.b32.xlu0 %v8212, 256
        %v8215 = vpop.permute.xlu0 %8214
        %s8217 = sor.u32 256, 8
        %8218 = vbcast.lane.b32.xlu0 %v8212, %s8217
        %v8219 = vpop.permute.xlu0 %8218
        %s8221 = sor.u32 256, 16
        %8222 = vbcast.lane.b32.xlu0 %v8212, %s8221
        %v8223 = vpop.permute.xlu0 %8222
        %s8225 = sor.u32 256, 24
        %8226 = vbcast.lane.b32.xlu0 %v8212, %s8225
        %v8227 = vpop.permute.xlu0 %8226
        %v8228 = vlaneseq
        %v8229 = vshrl.u32 %v8228, 7
        %v8230 = vsub.s32 1, %v8229
        %v8231 = vrot.slane %v8208, %v8230
        %8233 = vbcast.lane.b32.xlu0 %v8231, 256
        %v8234 = vpop.permute.xlu0 %8233
        %s8236 = sor.u32 256, 8
        %8237 = vbcast.lane.b32.xlu0 %v8231, %s8236
        %v8238 = vpop.permute.xlu0 %8237
        %s8240 = sor.u32 256, 16
        %8241 = vbcast.lane.b32.xlu0 %v8231, %s8240
        %v8242 = vpop.permute.xlu0 %8241
        %s8244 = sor.u32 256, 24
        %8245 = vbcast.lane.b32.xlu0 %v8231, %s8244
        %v8246 = vpop.permute.xlu0 %8245
        %v8247 = vlaneseq
        %v8248 = vshrl.u32 %v8247, 7
        %v8249 = vsub.s32 2, %v8248
        %v8250 = vrot.slane %v8208, %v8249
        %8252 = vbcast.lane.b32.xlu0 %v8250, 256
        %v8253 = vpop.permute.xlu0 %8252
        %s8255 = sor.u32 256, 8
        %8256 = vbcast.lane.b32.xlu0 %v8250, %s8255
        %v8257 = vpop.permute.xlu0 %8256
        %s8259 = sor.u32 256, 16
        %8260 = vbcast.lane.b32.xlu0 %v8250, %s8259
        %v8261 = vpop.permute.xlu0 %8260
        %s8263 = sor.u32 256, 24
        %8264 = vbcast.lane.b32.xlu0 %v8250, %s8263
        %v8265 = vpop.permute.xlu0 %8264
        %v8266 = vlaneseq
        %v8267 = vshrl.u32 %v8266, 7
        %v8268 = vsub.s32 3, %v8267
        %v8269 = vrot.slane %v8208, %v8268
        %8271 = vbcast.lane.b32.xlu0 %v8269, 256
        %v8272 = vpop.permute.xlu0 %8271
        %s8274 = sor.u32 256, 8
        %8275 = vbcast.lane.b32.xlu0 %v8269, %s8274
        %v8276 = vpop.permute.xlu0 %8275
        %s8278 = sor.u32 256, 16
        %8279 = vbcast.lane.b32.xlu0 %v8269, %s8278
        %v8280 = vpop.permute.xlu0 %8279
        %s8282 = sor.u32 256, 24
        %8283 = vbcast.lane.b32.xlu0 %v8269, %s8282
        %v8284 = vpop.permute.xlu0 %8283
        %v8285 = vlaneseq
        %v8286 = vshrl.u32 %v8285, 7
        %v8287 = vsub.s32 4, %v8286
        %v8288 = vrot.slane %v8208, %v8287
        %8290 = vbcast.lane.b32.xlu0 %v8288, 256
        %v8291 = vpop.permute.xlu0 %8290
        %s8293 = sor.u32 256, 8
        %8294 = vbcast.lane.b32.xlu0 %v8288, %s8293
        %v8295 = vpop.permute.xlu0 %8294
        %s8297 = sor.u32 256, 16
        %8298 = vbcast.lane.b32.xlu0 %v8288, %s8297
        %v8299 = vpop.permute.xlu0 %8298
        %s8301 = sor.u32 256, 24
        %8302 = vbcast.lane.b32.xlu0 %v8288, %s8301
        %v8303 = vpop.permute.xlu0 %8302
        %v8304 = vlaneseq
        %v8305 = vshrl.u32 %v8304, 7
        %v8306 = vsub.s32 5, %v8305
        %v8307 = vrot.slane %v8208, %v8306
        %8309 = vbcast.lane.b32.xlu0 %v8307, 256
        %v8310 = vpop.permute.xlu0 %8309
        %s8312 = sor.u32 256, 8
        %8313 = vbcast.lane.b32.xlu0 %v8307, %s8312
        %v8314 = vpop.permute.xlu0 %8313
        %s8316 = sor.u32 256, 16
        %8317 = vbcast.lane.b32.xlu0 %v8307, %s8316
        %v8318 = vpop.permute.xlu0 %8317
        %s8320 = sor.u32 256, 24
        %8321 = vbcast.lane.b32.xlu0 %v8307, %s8320
        %v8322 = vpop.permute.xlu0 %8321
        %v8323 = vlaneseq
        %v8324 = vshrl.u32 %v8323, 7
        %v8325 = vsub.s32 6, %v8324
        %v8326 = vrot.slane %v8208, %v8325
        %8328 = vbcast.lane.b32.xlu0 %v8326, 256
        %v8329 = vpop.permute.xlu0 %8328
        %s8331 = sor.u32 256, 8
        %8332 = vbcast.lane.b32.xlu0 %v8326, %s8331
        %v8333 = vpop.permute.xlu0 %8332
        %s8335 = sor.u32 256, 16
        %8336 = vbcast.lane.b32.xlu0 %v8326, %s8335
        %v8337 = vpop.permute.xlu0 %8336
        %s8339 = sor.u32 256, 24
        %8340 = vbcast.lane.b32.xlu0 %v8326, %s8339
        %v8341 = vpop.permute.xlu0 %8340
        %v8342 = vlaneseq
        %v8343 = vshrl.u32 %v8342, 7
        %v8344 = vsub.s32 7, %v8343
        %v8345 = vrot.slane %v8208, %v8344
        %8347 = vbcast.lane.b32.xlu0 %v8345, 256
        %v8348 = vpop.permute.xlu0 %8347
        %s8350 = sor.u32 256, 8
        %8351 = vbcast.lane.b32.xlu0 %v8345, %s8350
        %v8352 = vpop.permute.xlu0 %8351
        %s8354 = sor.u32 256, 16
        %8355 = vbcast.lane.b32.xlu0 %v8345, %s8354
        %v8356 = vpop.permute.xlu0 %8355
        %s8358 = sor.u32 256, 24
        %8359 = vbcast.lane.b32.xlu0 %v8345, %s8358
        %v8360 = vpop.permute.xlu0 %8359
        %v8361 = vxor.u32 %v7085, 2147483648
        %v8362 = vxor.u32 %v7088, 2147483648
        %v8363 = vxor.u32 %v7093, 2147483648
        %v8364 = vxor.u32 %v7096, 2147483648
        %v8365 = vxor.u32 %v7101, 2147483648
        %v8366 = vxor.u32 %v7104, 2147483648
        %v8367 = vxor.u32 %v7109, 2147483648
        %v8368 = vxor.u32 %v7112, 2147483648
        %v8369 = vxor.u32 %v7117, 2147483648
        %v8370 = vxor.u32 %v7120, 2147483648
        %v8371 = vxor.u32 %v7125, 2147483648
        %v8372 = vxor.u32 %v7128, 2147483648
        %v8373 = vxor.u32 %v7133, 2147483648
        %v8374 = vxor.u32 %v7136, 2147483648
        %v8375 = vxor.u32 %v7141, 2147483648
        %v8376 = vxor.u32 %v7144, 2147483648
        %v8377 = vxor.u32 %v7149, 2147483648
        %v8378 = vxor.u32 %v7152, 2147483648
        %v8379 = vxor.u32 %v7157, 2147483648
        %v8380 = vxor.u32 %v7160, 2147483648
        %v8381 = vxor.u32 %v7165, 2147483648
        %v8382 = vxor.u32 %v7168, 2147483648
        %v8383 = vxor.u32 %v7173, 2147483648
        %v8384 = vxor.u32 %v7176, 2147483648
        %v8385 = vxor.u32 %v7181, 2147483648
        %v8386 = vxor.u32 %v7184, 2147483648
        %v8387 = vxor.u32 %v7189, 2147483648
        %v8388 = vxor.u32 %v7192, 2147483648
        %v8389 = vxor.u32 %v7197, 2147483648
        %v8390 = vxor.u32 %v7200, 2147483648
        %v8391 = vxor.u32 %v7205, 2147483648
        %v8392 = vxor.u32 %v7208, 2147483648
        %v8393 = vmul.f32 %v8361, 1.442695
        %v8394 = vpow.pop %v8393
        %v8395 = vmul.f32 %v8362, 1.442695
        %v8396 = vpow.pop %v8395
        %v8397 = vmul.f32 %v8363, 1.442695
        %v8398 = vpow.pop %v8397
        %v8399 = vmul.f32 %v8364, 1.442695
        %v8400 = vpow.pop %v8399
        %v8401 = vmul.f32 %v8365, 1.442695
        %v8402 = vpow.pop %v8401
        %v8403 = vmul.f32 %v8366, 1.442695
        %v8404 = vpow.pop %v8403
        %v8405 = vmul.f32 %v8367, 1.442695
        %v8406 = vpow.pop %v8405
        %v8407 = vmul.f32 %v8368, 1.442695
        %v8408 = vpow.pop %v8407
        %v8409 = vmul.f32 %v8369, 1.442695
        %v8410 = vpow.pop %v8409
        %v8411 = vmul.f32 %v8370, 1.442695
        %v8412 = vpow.pop %v8411
        %v8413 = vmul.f32 %v8371, 1.442695
        %v8414 = vpow.pop %v8413
        %v8415 = vmul.f32 %v8372, 1.442695
        %v8416 = vpow.pop %v8415
        %v8417 = vmul.f32 %v8373, 1.442695
        %v8418 = vpow.pop %v8417
        %v8419 = vmul.f32 %v8374, 1.442695
        %v8420 = vpow.pop %v8419
        %v8421 = vmul.f32 %v8375, 1.442695
        %v8422 = vpow.pop %v8421
        %v8423 = vmul.f32 %v8376, 1.442695
        %v8424 = vpow.pop %v8423
        %v8425 = vmul.f32 %v8377, 1.442695
        %v8426 = vpow.pop %v8425
        %v8427 = vmul.f32 %v8378, 1.442695
        %v8428 = vpow.pop %v8427
        %v8429 = vmul.f32 %v8379, 1.442695
        %v8430 = vpow.pop %v8429
        %v8431 = vmul.f32 %v8380, 1.442695
        %v8432 = vpow.pop %v8431
        %v8433 = vmul.f32 %v8381, 1.442695
        %v8434 = vpow.pop %v8433
        %v8435 = vmul.f32 %v8382, 1.442695
        %v8436 = vpow.pop %v8435
        %v8437 = vmul.f32 %v8383, 1.442695
        %v8438 = vpow.pop %v8437
        %v8439 = vmul.f32 %v8384, 1.442695
        %v8440 = vpow.pop %v8439
        %v8441 = vmul.f32 %v8385, 1.442695
        %v8442 = vpow.pop %v8441
        %v8443 = vmul.f32 %v8386, 1.442695
        %v8444 = vpow.pop %v8443
        %v8445 = vmul.f32 %v8387, 1.442695
        %v8446 = vpow.pop %v8445
        %v8447 = vmul.f32 %v8388, 1.442695
        %v8448 = vpow.pop %v8447
        %v8449 = vmul.f32 %v8389, 1.442695
        %v8450 = vpow.pop %v8449
        %v8451 = vmul.f32 %v8390, 1.442695
        %v8452 = vpow.pop %v8451
        %v8453 = vmul.f32 %v8391, 1.442695
        %v8454 = vpow.pop %v8453
        %v8455 = vmul.f32 %v8392, 1.442695
        %v8456 = vpow.pop %v8455
        %v8457 = vadd.f32 %v8394, 1.0
        %v8458 = vadd.f32 %v8396, 1.0
        %v8459 = vadd.f32 %v8398, 1.0
        %v8460 = vadd.f32 %v8400, 1.0
        %v8461 = vadd.f32 %v8402, 1.0
        %v8462 = vadd.f32 %v8404, 1.0
        %v8463 = vadd.f32 %v8406, 1.0
        %v8464 = vadd.f32 %v8408, 1.0
        %v8465 = vadd.f32 %v8410, 1.0
        %v8466 = vadd.f32 %v8412, 1.0
        %v8467 = vadd.f32 %v8414, 1.0
        %v8468 = vadd.f32 %v8416, 1.0
        %v8469 = vadd.f32 %v8418, 1.0
        %v8470 = vadd.f32 %v8420, 1.0
        %v8471 = vadd.f32 %v8422, 1.0
        %v8472 = vadd.f32 %v8424, 1.0
        %v8473 = vadd.f32 %v8426, 1.0
        %v8474 = vadd.f32 %v8428, 1.0
        %v8475 = vadd.f32 %v8430, 1.0
        %v8476 = vadd.f32 %v8432, 1.0
        %v8477 = vadd.f32 %v8434, 1.0
        %v8478 = vadd.f32 %v8436, 1.0
        %v8479 = vadd.f32 %v8438, 1.0
        %v8480 = vadd.f32 %v8440, 1.0
        %v8481 = vadd.f32 %v8442, 1.0
        %v8482 = vadd.f32 %v8444, 1.0
        %v8483 = vadd.f32 %v8446, 1.0
        %v8484 = vadd.f32 %v8448, 1.0
        %v8485 = vadd.f32 %v8450, 1.0
        %v8486 = vadd.f32 %v8452, 1.0
        %v8487 = vadd.f32 %v8454, 1.0
        %v8488 = vadd.f32 %v8456, 1.0
        %v8489 = vrcp.pop %v8457
        %v8490 = vmul.f32 1.0, %v8489
        %v8491 = vrcp.pop %v8458
        %v8492 = vmul.f32 1.0, %v8491
        %v8493 = vrcp.pop %v8459
        %v8494 = vmul.f32 1.0, %v8493
        %v8495 = vrcp.pop %v8460
        %v8496 = vmul.f32 1.0, %v8495
        %v8497 = vrcp.pop %v8461
        %v8498 = vmul.f32 1.0, %v8497
        %v8499 = vrcp.pop %v8462
        %v8500 = vmul.f32 1.0, %v8499
        %v8501 = vrcp.pop %v8463
        %v8502 = vmul.f32 1.0, %v8501
        %v8503 = vrcp.pop %v8464
        %v8504 = vmul.f32 1.0, %v8503
        %v8505 = vrcp.pop %v8465
        %v8506 = vmul.f32 1.0, %v8505
        %v8507 = vrcp.pop %v8466
        %v8508 = vmul.f32 1.0, %v8507
        %v8509 = vrcp.pop %v8467
        %v8510 = vmul.f32 1.0, %v8509
        %v8511 = vrcp.pop %v8468
        %v8512 = vmul.f32 1.0, %v8511
        %v8513 = vrcp.pop %v8469
        %v8514 = vmul.f32 1.0, %v8513
        %v8515 = vrcp.pop %v8470
        %v8516 = vmul.f32 1.0, %v8515
        %v8517 = vrcp.pop %v8471
        %v8518 = vmul.f32 1.0, %v8517
        %v8519 = vrcp.pop %v8472
        %v8520 = vmul.f32 1.0, %v8519
        %v8521 = vrcp.pop %v8473
        %v8522 = vmul.f32 1.0, %v8521
        %v8523 = vrcp.pop %v8474
        %v8524 = vmul.f32 1.0, %v8523
        %v8525 = vrcp.pop %v8475
        %v8526 = vmul.f32 1.0, %v8525
        %v8527 = vrcp.pop %v8476
        %v8528 = vmul.f32 1.0, %v8527
        %v8529 = vrcp.pop %v8477
        %v8530 = vmul.f32 1.0, %v8529
        %v8531 = vrcp.pop %v8478
        %v8532 = vmul.f32 1.0, %v8531
        %v8533 = vrcp.pop %v8479
        %v8534 = vmul.f32 1.0, %v8533
        %v8535 = vrcp.pop %v8480
        %v8536 = vmul.f32 1.0, %v8535
        %v8537 = vrcp.pop %v8481
        %v8538 = vmul.f32 1.0, %v8537
        %v8539 = vrcp.pop %v8482
        %v8540 = vmul.f32 1.0, %v8539
        %v8541 = vrcp.pop %v8483
        %v8542 = vmul.f32 1.0, %v8541
        %v8543 = vrcp.pop %v8484
        %v8544 = vmul.f32 1.0, %v8543
        %v8545 = vrcp.pop %v8485
        %v8546 = vmul.f32 1.0, %v8545
        %v8547 = vrcp.pop %v8486
        %v8548 = vmul.f32 1.0, %v8547
        %v8549 = vrcp.pop %v8487
        %v8550 = vmul.f32 1.0, %v8549
        %v8551 = vrcp.pop %v8488
        %v8552 = vmul.f32 1.0, %v8551
        %v8553 = vmul.f32 %v8215, %v8490
        %v8554 = vmul.f32 %v8219, %v8492
        %v8555 = vmul.f32 %v8223, %v8494
        %v8556 = vmul.f32 %v8227, %v8496
        %v8557 = vmul.f32 %v8234, %v8498
        %v8558 = vmul.f32 %v8238, %v8500
        %v8559 = vmul.f32 %v8242, %v8502
        %v8560 = vmul.f32 %v8246, %v8504
        %v8561 = vmul.f32 %v8253, %v8506
        %v8562 = vmul.f32 %v8257, %v8508
        %v8563 = vmul.f32 %v8261, %v8510
        %v8564 = vmul.f32 %v8265, %v8512
        %v8565 = vmul.f32 %v8272, %v8514
        %v8566 = vmul.f32 %v8276, %v8516
        %v8567 = vmul.f32 %v8280, %v8518
        %v8568 = vmul.f32 %v8284, %v8520
        %v8569 = vmul.f32 %v8291, %v8522
        %v8570 = vmul.f32 %v8295, %v8524
        %v8571 = vmul.f32 %v8299, %v8526
        %v8572 = vmul.f32 %v8303, %v8528
        %v8573 = vmul.f32 %v8310, %v8530
        %v8574 = vmul.f32 %v8314, %v8532
        %v8575 = vmul.f32 %v8318, %v8534
        %v8576 = vmul.f32 %v8322, %v8536
        %v8577 = vmul.f32 %v8329, %v8538
        %v8578 = vmul.f32 %v8333, %v8540
        %v8579 = vmul.f32 %v8337, %v8542
        %v8580 = vmul.f32 %v8341, %v8544
        %v8581 = vmul.f32 %v8348, %v8546
        %v8582 = vmul.f32 %v8352, %v8548
        %v8583 = vmul.f32 %v8356, %v8550
        %v8584 = vmul.f32 %v8360, %v8552
        %v8585 = vadd.f32 %v8553, %v8554
        %v8586 = vadd.f32 %v8585, %v8555
        %v8587 = vadd.f32 %v8586, %v8556
        %v8588 = vrot.slane %v8587, 4
        %v8589 = vadd.f32 %v8587, %v8588
        %v8590 = vrot.slane %v8589, 2
        %v8591 = vadd.f32 %v8589, %v8590
        %v8592 = vrot.slane %v8591, 1
        %v8593 = vadd.f32 %v8591, %v8592
        %v8594 = vadd.f32 %v8557, %v8558
        %v8595 = vadd.f32 %v8594, %v8559
        %v8596 = vadd.f32 %v8595, %v8560
        %v8597 = vrot.slane %v8596, 4
        %v8598 = vadd.f32 %v8596, %v8597
        %v8599 = vrot.slane %v8598, 2
        %v8600 = vadd.f32 %v8598, %v8599
        %v8601 = vrot.slane %v8600, 1
        %v8602 = vadd.f32 %v8600, %v8601
        %v8603 = vadd.f32 %v8561, %v8562
        %v8604 = vadd.f32 %v8603, %v8563
        %v8605 = vadd.f32 %v8604, %v8564
        %v8606 = vrot.slane %v8605, 4
        %v8607 = vadd.f32 %v8605, %v8606
        %v8608 = vrot.slane %v8607, 2
        %v8609 = vadd.f32 %v8607, %v8608
        %v8610 = vrot.slane %v8609, 1
        %v8611 = vadd.f32 %v8609, %v8610
        %v8612 = vadd.f32 %v8565, %v8566
        %v8613 = vadd.f32 %v8612, %v8567
        %v8614 = vadd.f32 %v8613, %v8568
        %v8615 = vrot.slane %v8614, 4
        %v8616 = vadd.f32 %v8614, %v8615
        %v8617 = vrot.slane %v8616, 2
        %v8618 = vadd.f32 %v8616, %v8617
        %v8619 = vrot.slane %v8618, 1
        %v8620 = vadd.f32 %v8618, %v8619
        %v8621 = vadd.f32 %v8569, %v8570
        %v8622 = vadd.f32 %v8621, %v8571
        %v8623 = vadd.f32 %v8622, %v8572
        %v8624 = vrot.slane %v8623, 4
        %v8625 = vadd.f32 %v8623, %v8624
        %v8626 = vrot.slane %v8625, 2
        %v8627 = vadd.f32 %v8625, %v8626
        %v8628 = vrot.slane %v8627, 1
        %v8629 = vadd.f32 %v8627, %v8628
        %v8630 = vadd.f32 %v8573, %v8574
        %v8631 = vadd.f32 %v8630, %v8575
        %v8632 = vadd.f32 %v8631, %v8576
        %v8633 = vrot.slane %v8632, 4
        %v8634 = vadd.f32 %v8632, %v8633
        %v8635 = vrot.slane %v8634, 2
        %v8636 = vadd.f32 %v8634, %v8635
        %v8637 = vrot.slane %v8636, 1
        %v8638 = vadd.f32 %v8636, %v8637
        %v8639 = vadd.f32 %v8577, %v8578
        %v8640 = vadd.f32 %v8639, %v8579
        %v8641 = vadd.f32 %v8640, %v8580
        %v8642 = vrot.slane %v8641, 4
        %v8643 = vadd.f32 %v8641, %v8642
        %v8644 = vrot.slane %v8643, 2
        %v8645 = vadd.f32 %v8643, %v8644
        %v8646 = vrot.slane %v8645, 1
        %v8647 = vadd.f32 %v8645, %v8646
        %v8648 = vadd.f32 %v8581, %v8582
        %v8649 = vadd.f32 %v8648, %v8583
        %v8650 = vadd.f32 %v8649, %v8584
        %v8651 = vrot.slane %v8650, 4
        %v8652 = vadd.f32 %v8650, %v8651
        %v8653 = vrot.slane %v8652, 2
        %v8654 = vadd.f32 %v8652, %v8653
        %v8655 = vrot.slane %v8654, 1
        %v8656 = vadd.f32 %v8654, %v8655
        %v8657 = vmul.f32 %v8208, %v7425
        %v8658 = vsel %vm8132, %v8657, 0.0
        %8659 = vadd.xlane.f32.xlu0 %v8658
        %v8660 = vpop.xlane.xlu0 %8659
        %v8661 = vsel %vm8132, %v8208, 0.0
        %8662 = vadd.xlane.f32.xlu0 %v8661
        %v8663 = vpop.xlane.xlu0 %8662
        %vm8664 = vcmp.eq.s32.totalorder %v7820, 3
        %v8673 = vsel %vm8108, %v8602, %v8593
        %v8674 = vsel %vm8110, %v8611, %v8673
        %v8675 = vsel %vm8112, %v8620, %v8674
        %v8676 = vsel %vm8114, %v8629, %v8675
        %v8677 = vsel %vm8116, %v8638, %v8676
        %v8678 = vsel %vm8118, %v8647, %v8677
        %v8679 = vsel %vm8120, %v8656, %v8678
        %v8681 = vsel %vm8664, %v8660, %v8679
        %vm8682 = vcmp.eq.s32.totalorder %v7820, 4
        %v8683 = vsel %vm8682, %v8663, %v8681
        %8684 = vst [vmem:[%s683] sm:$0xff] %v8683
        %8685 = vst.msk [vmem:[%s690] sm:$0xff] %vm8132, %v8208
        %v8686 = vmul.f32 %v8215, %v5856
        %v8687 = vmul.f32 %v8215, %v5858
        %v8688 = vmul.f32 %v8219, %v5860
        %v8689 = vmul.f32 %v8219, %v5862
        %v8690 = vmul.f32 %v8223, %v5866
        %v8691 = vmul.f32 %v8223, %v5868
        %v8692 = vmul.f32 %v8227, %v5870
        %v8693 = vmul.f32 %v8227, %v5872
        %v8694 = vmul.f32 %v8234, %v5876
        %v8695 = vmul.f32 %v8234, %v5878
        %v8696 = vmul.f32 %v8238, %v5880
        %v8697 = vmul.f32 %v8238, %v5882
        %v8698 = vmul.f32 %v8242, %v5886
        %v8699 = vmul.f32 %v8242, %v5888
        %v8700 = vmul.f32 %v8246, %v5890
        %v8701 = vmul.f32 %v8246, %v5892
        %v8702 = vmul.f32 %v8253, %v5896
        %v8703 = vmul.f32 %v8253, %v5898
        %v8704 = vmul.f32 %v8257, %v5900
        %v8705 = vmul.f32 %v8257, %v5902
        %v8706 = vmul.f32 %v8261, %v5906
        %v8707 = vmul.f32 %v8261, %v5908
        %v8708 = vmul.f32 %v8265, %v5910
        %v8709 = vmul.f32 %v8265, %v5912
        %v8710 = vmul.f32 %v8272, %v5916
        %v8711 = vmul.f32 %v8272, %v5918
        %v8712 = vmul.f32 %v8276, %v5920
        %v8713 = vmul.f32 %v8276, %v5922
        %v8714 = vmul.f32 %v8280, %v5926
        %v8715 = vmul.f32 %v8280, %v5928
        %v8716 = vmul.f32 %v8284, %v5930
        %v8717 = vmul.f32 %v8284, %v5932
        %v8718 = vmul.f32 %v8291, %v5936
        %v8719 = vmul.f32 %v8291, %v5938
        %v8720 = vmul.f32 %v8295, %v5940
        %v8721 = vmul.f32 %v8295, %v5942
        %v8722 = vmul.f32 %v8299, %v5946
        %v8723 = vmul.f32 %v8299, %v5948
        %v8724 = vmul.f32 %v8303, %v5950
        %v8725 = vmul.f32 %v8303, %v5952
        %v8726 = vmul.f32 %v8310, %v5956
        %v8727 = vmul.f32 %v8310, %v5958
        %v8728 = vmul.f32 %v8314, %v5960
        %v8729 = vmul.f32 %v8314, %v5962
        %v8730 = vmul.f32 %v8318, %v5966
        %v8731 = vmul.f32 %v8318, %v5968
        %v8732 = vmul.f32 %v8322, %v5970
        %v8733 = vmul.f32 %v8322, %v5972
        %v8734 = vmul.f32 %v8329, %v5976
        %v8735 = vmul.f32 %v8329, %v5978
        %v8736 = vmul.f32 %v8333, %v5980
        %v8737 = vmul.f32 %v8333, %v5982
        %v8738 = vmul.f32 %v8337, %v5986
        %v8739 = vmul.f32 %v8337, %v5988
        %v8740 = vmul.f32 %v8341, %v5990
        %v8741 = vmul.f32 %v8341, %v5992
        %v8742 = vmul.f32 %v8348, %v5996
        %v8743 = vmul.f32 %v8348, %v5998
        %v8744 = vmul.f32 %v8352, %v6000
        %v8745 = vmul.f32 %v8352, %v6002
        %v8746 = vmul.f32 %v8356, %v6006
        %v8747 = vmul.f32 %v8356, %v6008
        %v8748 = vmul.f32 %v8360, %v6010
        %v8749 = vmul.f32 %v8360, %v6012
        %v8750 = vadd.f32 %v8686, %v8688
        %v8751 = vadd.f32 %v8750, %v8690
        %v8752 = vadd.f32 %v8751, %v8692
        %v8753 = vrot.slane %v8752, 4
        %v8754 = vadd.f32 %v8752, %v8753
        %v8755 = vrot.slane %v8754, 2
        %v8756 = vadd.f32 %v8754, %v8755
        %v8757 = vrot.slane %v8756, 1
        %v8758 = vadd.f32 %v8756, %v8757
        %v8759 = vadd.f32 %v8687, %v8689
        %v8760 = vadd.f32 %v8759, %v8691
        %v8761 = vadd.f32 %v8760, %v8693
        %v8762 = vrot.slane %v8761, 4
        %v8763 = vadd.f32 %v8761, %v8762
        %v8764 = vrot.slane %v8763, 2
        %v8765 = vadd.f32 %v8763, %v8764
        %v8766 = vrot.slane %v8765, 1
        %v8767 = vadd.f32 %v8765, %v8766
        %v8768 = vadd.f32 %v8694, %v8696
        %v8769 = vadd.f32 %v8768, %v8698
        %v8770 = vadd.f32 %v8769, %v8700
        %v8771 = vrot.slane %v8770, 4
        %v8772 = vadd.f32 %v8770, %v8771
        %v8773 = vrot.slane %v8772, 2
        %v8774 = vadd.f32 %v8772, %v8773
        %v8775 = vrot.slane %v8774, 1
        %v8776 = vadd.f32 %v8774, %v8775
        %v8777 = vadd.f32 %v8695, %v8697
        %v8778 = vadd.f32 %v8777, %v8699
        %v8779 = vadd.f32 %v8778, %v8701
        %v8780 = vrot.slane %v8779, 4
        %v8781 = vadd.f32 %v8779, %v8780
        %v8782 = vrot.slane %v8781, 2
        %v8783 = vadd.f32 %v8781, %v8782
        %v8784 = vrot.slane %v8783, 1
        %v8785 = vadd.f32 %v8783, %v8784
        %v8786 = vadd.f32 %v8702, %v8704
        %v8787 = vadd.f32 %v8786, %v8706
        %v8788 = vadd.f32 %v8787, %v8708
        %v8789 = vrot.slane %v8788, 4
        %v8790 = vadd.f32 %v8788, %v8789
        %v8791 = vrot.slane %v8790, 2
        %v8792 = vadd.f32 %v8790, %v8791
        %v8793 = vrot.slane %v8792, 1
        %v8794 = vadd.f32 %v8792, %v8793
        %v8795 = vadd.f32 %v8703, %v8705
        %v8796 = vadd.f32 %v8795, %v8707
        %v8797 = vadd.f32 %v8796, %v8709
        %v8798 = vrot.slane %v8797, 4
        %v8799 = vadd.f32 %v8797, %v8798
        %v8800 = vrot.slane %v8799, 2
        %v8801 = vadd.f32 %v8799, %v8800
        %v8802 = vrot.slane %v8801, 1
        %v8803 = vadd.f32 %v8801, %v8802
        %v8804 = vadd.f32 %v8710, %v8712
        %v8805 = vadd.f32 %v8804, %v8714
        %v8806 = vadd.f32 %v8805, %v8716
        %v8807 = vrot.slane %v8806, 4
        %v8808 = vadd.f32 %v8806, %v8807
        %v8809 = vrot.slane %v8808, 2
        %v8810 = vadd.f32 %v8808, %v8809
        %v8811 = vrot.slane %v8810, 1
        %v8812 = vadd.f32 %v8810, %v8811
        %v8813 = vadd.f32 %v8711, %v8713
        %v8814 = vadd.f32 %v8813, %v8715
        %v8815 = vadd.f32 %v8814, %v8717
        %v8816 = vrot.slane %v8815, 4
        %v8817 = vadd.f32 %v8815, %v8816
        %v8818 = vrot.slane %v8817, 2
        %v8819 = vadd.f32 %v8817, %v8818
        %v8820 = vrot.slane %v8819, 1
        %v8821 = vadd.f32 %v8819, %v8820
        %v8822 = vadd.f32 %v8718, %v8720
        %v8823 = vadd.f32 %v8822, %v8722
        %v8824 = vadd.f32 %v8823, %v8724
        %v8825 = vrot.slane %v8824, 4
        %v8826 = vadd.f32 %v8824, %v8825
        %v8827 = vrot.slane %v8826, 2
        %v8828 = vadd.f32 %v8826, %v8827
        %v8829 = vrot.slane %v8828, 1
        %v8830 = vadd.f32 %v8828, %v8829
        %v8831 = vadd.f32 %v8719, %v8721
        %v8832 = vadd.f32 %v8831, %v8723
        %v8833 = vadd.f32 %v8832, %v8725
        %v8834 = vrot.slane %v8833, 4
        %v8835 = vadd.f32 %v8833, %v8834
        %v8836 = vrot.slane %v8835, 2
        %v8837 = vadd.f32 %v8835, %v8836
        %v8838 = vrot.slane %v8837, 1
        %v8839 = vadd.f32 %v8837, %v8838
        %v8840 = vadd.f32 %v8726, %v8728
        %v8841 = vadd.f32 %v8840, %v8730
        %v8842 = vadd.f32 %v8841, %v8732
        %v8843 = vrot.slane %v8842, 4
        %v8844 = vadd.f32 %v8842, %v8843
        %v8845 = vrot.slane %v8844, 2
        %v8846 = vadd.f32 %v8844, %v8845
        %v8847 = vrot.slane %v8846, 1
        %v8848 = vadd.f32 %v8846, %v8847
        %v8849 = vadd.f32 %v8727, %v8729
        %v8850 = vadd.f32 %v8849, %v8731
        %v8851 = vadd.f32 %v8850, %v8733
        %v8852 = vrot.slane %v8851, 4
        %v8853 = vadd.f32 %v8851, %v8852
        %v8854 = vrot.slane %v8853, 2
        %v8855 = vadd.f32 %v8853, %v8854
        %v8856 = vrot.slane %v8855, 1
        %v8857 = vadd.f32 %v8855, %v8856
        %v8858 = vadd.f32 %v8734, %v8736
        %v8859 = vadd.f32 %v8858, %v8738
        %v8860 = vadd.f32 %v8859, %v8740
        %v8861 = vrot.slane %v8860, 4
        %v8862 = vadd.f32 %v8860, %v8861
        %v8863 = vrot.slane %v8862, 2
        %v8864 = vadd.f32 %v8862, %v8863
        %v8865 = vrot.slane %v8864, 1
        %v8866 = vadd.f32 %v8864, %v8865
        %v8867 = vadd.f32 %v8735, %v8737
        %v8868 = vadd.f32 %v8867, %v8739
        %v8869 = vadd.f32 %v8868, %v8741
        %v8870 = vrot.slane %v8869, 4
        %v8871 = vadd.f32 %v8869, %v8870
        %v8872 = vrot.slane %v8871, 2
        %v8873 = vadd.f32 %v8871, %v8872
        %v8874 = vrot.slane %v8873, 1
        %v8875 = vadd.f32 %v8873, %v8874
        %v8876 = vadd.f32 %v8742, %v8744
        %v8877 = vadd.f32 %v8876, %v8746
        %v8878 = vadd.f32 %v8877, %v8748
        %v8879 = vrot.slane %v8878, 4
        %v8880 = vadd.f32 %v8878, %v8879
        %v8881 = vrot.slane %v8880, 2
        %v8882 = vadd.f32 %v8880, %v8881
        %v8883 = vrot.slane %v8882, 1
        %v8884 = vadd.f32 %v8882, %v8883
        %v8885 = vadd.f32 %v8743, %v8745
        %v8886 = vadd.f32 %v8885, %v8747
        %v8887 = vadd.f32 %v8886, %v8749
        %v8888 = vrot.slane %v8887, 4
        %v8889 = vadd.f32 %v8887, %v8888
        %v8890 = vrot.slane %v8889, 2
        %v8891 = vadd.f32 %v8889, %v8890
        %v8892 = vrot.slane %v8891, 1
        %v8893 = vadd.f32 %v8891, %v8892
        %v8910 = vsel %vm8108, %v8776, %v8758
        %v8911 = vsel %vm8110, %v8794, %v8910
        %v8912 = vsel %vm8112, %v8812, %v8911
        %v8913 = vsel %vm8114, %v8830, %v8912
        %v8914 = vsel %vm8116, %v8848, %v8913
        %v8915 = vsel %vm8118, %v8866, %v8914
        %v8916 = vsel %vm8120, %v8884, %v8915
        %v8917 = vsel %vm8108, %v8785, %v8767
        %v8918 = vsel %vm8110, %v8803, %v8917
        %v8919 = vsel %vm8112, %v8821, %v8918
        %v8920 = vsel %vm8114, %v8839, %v8919
        %v8921 = vsel %vm8116, %v8857, %v8920
        %v8922 = vsel %vm8118, %v8875, %v8921
        %v8923 = vsel %vm8120, %v8893, %v8922
        %8926 = vst [vmem:[%s697] sm:$0xff] %v8916
        %8927 = vst [vmem:[%s697 + $0x8] sm:$0xff] %v8923
        %s8928 = sand.u32 %s447, 1
        %s8929 = scalar_lea.sflag [#allocation5], %s8928
        %s8930 = sand.u32 %s447, 1
        %s8931 = smul.addr %s8930, 8
        %s8932 = scalar_lea.vmem [#allocation6], %s8931
        %s8933 = sand.u32 %s41, 1
        %s8934 = scalar_lea.sflag [#allocation8], %s8933
        %s8935 = sand.u32 %s473, 1
        %s8936 = smul.addr %s8935, 8
        %s8937 = scalar_lea.vmem [#allocation7], %s8936
        %s8938 = sand.u32 %s41, 1
        %s8939 = scalar_lea.sflag [#allocation8], %s8938
        %s8940 = sand.u32 %s499, 1
        %s8941 = smul.addr %s8940, 16
        %s8942 = scalar_lea.vmem [#allocation9], %s8941
        // Predicated region
        $region97: #{tpu_custom_call.1} parent=91 // pred_check
          %p8943 = pneg %p457
        $region98: #{tpu_custom_call.1} parent=91 // pred_check_branch
          %8945 = sbr.rel (%p8943) target = $region100
        $region99: #{tpu_custom_call.1} parent=91 // pred_region
          %s8947 = ssub.s32 128, 128
          %8948 = vsyncadd %s8929, %s8947
          %s8949 = smul.addr %s41, 128
          %s8950 = scalar_lea.hbm %s18, %s8949
          %s8952 = sshll.u32 %s8932, 4
          %s8953 = int_to_ptr.vmem [resolvable:$true] %s8952
          %8955 = dma.vmem_to_hbm [thread:$0]  %s8953, 128, %s8950, %s8929
        $region100: #{tpu_custom_call.1} parent=91 // pred_fallthru
          _
        // Predicated region
        $region101: #{tpu_custom_call.1} parent=91 // pred_check
          %p8956 = pneg %p483
        $region102: #{tpu_custom_call.1} parent=91 // pred_check_branch
          %8958 = sbr.rel (%p8956) target = $region104
        $region103: #{tpu_custom_call.1} parent=91 // pred_region
          %s8960 = ssub.s32 128, 128
          %8961 = vsyncadd %s8934, %s8960
          %s8962 = smul.addr %s41, 128
          %s8963 = scalar_lea.hbm %s19, %s8962
          %s8965 = sshll.u32 %s8937, 4
          %s8966 = int_to_ptr.vmem [resolvable:$true] %s8965
          %8968 = dma.vmem_to_hbm [thread:$0]  %s8966, 128, %s8963, %s8934
        $region104: #{tpu_custom_call.1} parent=91 // pred_fallthru
          _
        // Predicated region
        $region105: #{tpu_custom_call.1} parent=91 // pred_check
          %p8969 = pneg %p509
        $region106: #{tpu_custom_call.1} parent=91 // pred_check_branch
          %8971 = sbr.rel (%p8969) target = $region108
        $region107: #{tpu_custom_call.1} parent=91 // pred_region
          %s8973 = ssub.s32 256, 256
          %8974 = vsyncadd %s8939, %s8973
          %s8975 = smul.addr %s41, 2
          %s8976 = smul.addr %s8975, 128
          %s8977 = scalar_lea.hbm %s20, %s8976
          %s8979 = sshll.u32 %s8942, 4
          %s8980 = int_to_ptr.vmem [resolvable:$true] %s8979
          %8982 = dma.vmem_to_hbm [thread:$0]  %s8980, 256, %s8977, %s8939
        $region108: #{tpu_custom_call.1} parent=91 // pred_fallthru
          _
      $region92: #{tpu_custom_call.1} parent=5 // pred_fallthru
        _
      %p8983 = scmp.le.s32.totalorder 2, %s36
      // Predicated region
      $region109: #{tpu_custom_call.1} parent=5 // pred_check
        %p8984 = pneg %p8983
      $region110: #{tpu_custom_call.1} parent=5 // pred_check_branch
        %8986 = sbr.rel (%p8984) target = $region112
      $region111: #{tpu_custom_call.1} parent=5 // pred_region
        %s8987 = ssub.s32 %s36, 2
        // Predicated region
        $region113: #{tpu_custom_call.1} parent=111 // pred_check
          %p8988 = pneg %p463
        $region114: #{tpu_custom_call.1} parent=111 // pred_check_branch
          %8990 = sbr.rel (%p8988) target = $region116
        $region115: #{tpu_custom_call.1} parent=111 // pred_region
          %s8991 = sand.u32 %s448, 1
          %s8992 = scalar_lea.sflag [#allocation5], %s8991
          %s8993 = sand.u32 %s448, 1
          %s8994 = smul.addr %s8993, 8
          %s8995 = scalar_lea.vmem [#allocation6], %s8994
          %8996 = dma.done %s8992, 128
        $region116: #{tpu_custom_call.1} parent=111 // pred_fallthru
          _
        // Predicated region
        $region117: #{tpu_custom_call.1} parent=111 // pred_check
          %p8997 = pneg %p489
        $region118: #{tpu_custom_call.1} parent=111 // pred_check_branch
          %8999 = sbr.rel (%p8997) target = $region120
        $region119: #{tpu_custom_call.1} parent=111 // pred_region
          %s9000 = sand.u32 %s42, 1
          %s9001 = scalar_lea.sflag [#allocation8], %s9000
          %s9002 = sand.u32 %s474, 1
          %s9003 = smul.addr %s9002, 8
          %s9004 = scalar_lea.vmem [#allocation7], %s9003
          %9005 = dma.done %s9001, 128
        $region120: #{tpu_custom_call.1} parent=111 // pred_fallthru
          _
        // Predicated region
        $region121: #{tpu_custom_call.1} parent=111 // pred_check
          %p9006 = pneg %p515
        $region122: #{tpu_custom_call.1} parent=111 // pred_check_branch
          %9008 = sbr.rel (%p9006) target = $region124
        $region123: #{tpu_custom_call.1} parent=111 // pred_region
          %s9009 = sand.u32 %s42, 1
          %s9010 = scalar_lea.sflag [#allocation8], %s9009
          %s9011 = sand.u32 %s500, 1
          %s9012 = smul.addr %s9011, 16
          %s9013 = scalar_lea.vmem [#allocation9], %s9012
          %9014 = dma.done %s9010, 256
        $region124: #{tpu_custom_call.1} parent=111 // pred_fallthru
          _
      $region112: #{tpu_custom_call.1} parent=5 // pred_fallthru
        _
    $region6: #{tpu_custom_call.1} parent=1 // loop_footer
      %s40 = sadd.s32 1, %s36
    $region7: #{tpu_custom_call.1} parent=1 // loop_footer_branch
      %35 = sbr.rel target = $region3
    $region8: #{tpu_custom_call.1} parent=1 // loop_exit
      _
    %9015 = vsyncpa [#allocation4], 1
    %s9016 = scalar_lea.sflag [#allocation4], 1
    %9017 = vsyncpa %s9016, 1
    %9018 = vsyncpa [#allocation5], 1
    %s9019 = scalar_lea.sflag [#allocation5], 1
    %9020 = vsyncpa %s9019, 1
    %9021 = vsyncpa [#allocation8], 1
    %s9022 = scalar_lea.sflag [#allocation8], 1
    %9023 = vsyncpa %s9022, 1

</llo_original>
